<compile_context>
chip_gen: v5e
topology: v5e:2x2
jax: 0.10.0
libtpu: 0.0.40
codegen_flags: <defaults>
</compile_context>

<pallas_src>
import functools

import jax
import jax.numpy as jnp
from jax.experimental import pallas as pl
from jax.experimental.pallas import tpu as pltpu

# ---------------- synthetic "flags" consistent with DecTxt ----------------
BATCH = 2
LATENT_DIM = 32        # flags.class_dim
EMB_DIM = 128          # flags.txt_emb_dim
TXT_LEN = 32           # flags.txt_len
VOCAB_SIZE = 128       # flags.vocab_size
BN_EPS = 1e-5

# dec layers after the prepend/delete dance in DecTxt.__init__ (first -> last):
#   ConvT(latent->512, k=4,     s=1,     p=0)     + ReLU            (BN deleted)
#   ConvT(512->256,    k=(1,4), s=(1,2), p=(0,1)) + BN(256) + ReLU
#   ConvT(256->128,    k=(1,4), s=(1,2), p=(0,1)) + BN(128) + ReLU
#   ConvT(128->64,     k=4,     s=2,     p=1)     + BN(64)  + ReLU
#   ConvT(64->32,      k=4,     s=2,     p=1)     + BN(32)  + ReLU
#   ConvT(32->1,       k=4,     s=2,     p=1)     + ReLU            (BN deleted)
# spatial: 1x1 -> 4x4 -> 4x8 -> 4x16 -> 8x32 -> 16x64 -> 32x128
LAYERS = [
    # (C_in, C_out, (kh, kw), (sh, sw), (ph, pw), has_bn)
    (LATENT_DIM, 512, (4, 4), (1, 1), (0, 0), False),
    (512, 256, (1, 4), (1, 2), (0, 1), True),
    (256, 128, (1, 4), (1, 2), (0, 1), True),
    (128, 64, (4, 4), (2, 2), (1, 1), True),
    (64, 32, (4, 4), (2, 2), (1, 1), True),
    (32, 1, (4, 4), (2, 2), (1, 1), False),
]


# --------------------------- Pallas kernel ---------------------------------
def _gemm_kernel(x_ref, w_ref, *rest, prologue, out_bias, act):
    """[optional prologue: relu(x + b_prev)] -> bf16 GEMM (f32 acc)
    -> [optional out bias] -> [optional sigmoid]."""
    out_ref = rest[-1]
    bias_refs = rest[:-1]
    bi = 0

    x = x_ref[...]
    if prologue:
        # previous layer's bias + ReLU, in f32 (v5e has no bf16 VPU).
        x = jnp.maximum(x.astype(jnp.float32) + bias_refs[bi][...], 0.0)
        bi += 1

    acc = jnp.dot(x.astype(jnp.bfloat16), w_ref[...],
                  preferred_element_type=jnp.float32)

    if out_bias:
        acc = acc + bias_refs[bi][...]
        bi += 1

    if act == "sigmoid":
        # numerically stable sigmoid; reciprocal on the EUP, clamped to [0, 1].
        e = jnp.exp(-jnp.abs(acc))
        acc = jnp.where(acc >= 0.0, 1.0, e) * pl.reciprocal(1.0 + e, approx=True)
        acc = jnp.minimum(acc, 1.0)

    out_ref[...] = acc.astype(out_ref.dtype)


def fused_gemm(x, w, *, bprev=None, bout=None, act=None, out_dtype=jnp.bfloat16):
    """out = [sigmoid]( relu(x + bprev)? @ w + bout? ), unpadded full blocks.

    x: (M, K) bf16, w: (K, N) bf16, bprev: (K,) f32, bout: (N,) f32.
    """
    m, k = x.shape
    k2, n = w.shape
    assert k == k2

    # Split large-M GEMMs into 2 parallel row tiles (keeps both v7x cores busy).
    mt = 2 if (m >= 1024 and m % 32 == 0) else 1
    bm = m // mt

    inputs = [x, w]
    in_specs = [
        pl.BlockSpec((bm, k), lambda i: (i, 0)),
        pl.BlockSpec((k, n), lambda i: (0, 0)),
    ]
    if bprev is not None:
        inputs.append(bprev.astype(jnp.float32).reshape(1, k))
        in_specs.append(pl.BlockSpec((1, k), lambda i: (0, 0)))
    if bout is not None:
        inputs.append(bout.astype(jnp.float32).reshape(1, n))
        in_specs.append(pl.BlockSpec((1, n), lambda i: (0, 0)))

    kernel = functools.partial(
        _gemm_kernel, prologue=bprev is not None,
        out_bias=bout is not None, act=act)

    return pl.pallas_call(
        kernel,
        out_shape=jax.ShapeDtypeStruct((m, n), out_dtype),
        grid=(mt,),
        in_specs=in_specs,
        out_specs=pl.BlockSpec((bm, n), lambda i: (i, 0)),
        compiler_params=pltpu.CompilerParams(
            dimension_semantics=("parallel",)),
    )(*inputs)


# ------------------- XLA glue: per-tap overlap-add (KB scale) ---------------
def _overlap_add(y_flat, b, hi, wi, kh, kw, sh, sw, ph, pw, cout):
    """Scatter-accumulate per-tap ConvTranspose2d partial sums.

    y_flat: (b*hi*wi, kh*kw*cout), rows ordered (b, y, x), cols (ky, kx, co).
    Returns pre-bias / pre-activation output of shape (b, ho, wo, cout).
    """
    ho = (hi - 1) * sh + kh - 2 * ph
    wo = (wi - 1) * sw + kw - 2 * pw
    y = y_flat.reshape(b, hi, wi, kh, kw, cout)

    # ---- width direction (kw=4, sw=2 phase trick; or pass-through) ----
    if (kw, sw) == (1, 1):
        t = y[:, :, :, :, 0, :]                       # (b, hi, wi, kh, cout)
    else:
        assert (kw, sw) == (4, 2)
        phases = []
        for r in (0, 1):
            a = y[:, :, :, :, r, :]                   # lands at n = xi
            c = y[:, :, :, :, r + 2, :]               # lands at n = xi + 1
            a = jnp.pad(a, ((0, 0), (0, 0), (0, 1), (0, 0), (0, 0)))
            c = jnp.pad(c, ((0, 0), (0, 0), (1, 0), (0, 0), (0, 0)))
            phases.append(a + c)
        t = jnp.stack(phases, axis=3)                 # (b, hi, wi+1, 2, kh, cout)
        t = t.reshape(b, hi, 2 * (wi + 1), kh, cout)
        t = t[:, :, pw:pw + wo, :, :]

    # ---- height direction ----
    if (kh, sh) == (1, 1):
        u = t[:, :, :, 0, :]                          # (b, hi, wo, cout)
    else:
        assert (kh, sh) == (4, 2)
        phases = []
        for r in (0, 1):
            a = t[:, :, :, r, :]
            c = t[:, :, :, r + 2, :]
            a = jnp.pad(a, ((0, 0), (0, 1), (0, 0), (0, 0)))
            c = jnp.pad(c, ((0, 0), (1, 0), (0, 0), (0, 0)))
            phases.append(a + c)
        u = jnp.stack(phases, axis=2)                 # (b, hi+1, 2, wo, cout)
        u = u.reshape(b, 2 * (hi + 1), wo, cout)
        u = u[:, ph:ph + ho, :, :]
    return u


# --------------------------- params ----------------------------------------
def _fold_bn(w, bias, bn, eps=BN_EPS):
    """Fold inference-mode BatchNorm into ConvTranspose weight/bias."""
    if bn is None:
        return w, bias
    gamma, beta, rmean, rvar = bn
    s = gamma * jax.lax.rsqrt(rvar + eps)
    return w * s[None, :, None, None], (bias - rmean) * s + beta


def init_params(key):
    dec, dec_ref = [], []
    for (ci, co, (kh, kw), _, _, has_bn) in LAYERS:
        key, k1, k2 = jax.random.split(key, 3)
        fan = float(ci * kh * kw)
        w = jax.random.normal(k1, (ci, co, kh, kw), jnp.float32) * (fan ** -0.5)
        b = 0.01 * jax.random.normal(k2, (co,), jnp.float32)
        bn = None
        if has_bn:
            bn = (jnp.ones((co,), jnp.float32), jnp.zeros((co,), jnp.float32),
                  jnp.zeros((co,), jnp.float32), jnp.ones((co,), jnp.float32))
        w_f, b_f = _fold_bn(w, b, bn)
        w_bf = w_f.astype(jnp.bfloat16)
        # per-tap GEMM weight: (Cin, kh*kw*Cout), columns ordered (ky, kx, co)
        w_taps = jnp.transpose(w_bf, (0, 2, 3, 1)).reshape(ci, kh * kw * co)
        dec.append((w_taps, b_f))
        dec_ref.append((w_bf.astype(jnp.float32), b_f))

    key, k1, k2 = jax.random.split(key, 3)
    w_lin = jax.random.normal(k1, (VOCAB_SIZE, EMB_DIM), jnp.float32) * (EMB_DIM ** -0.5)
    b_lin = 0.01 * jax.random.normal(k2, (VOCAB_SIZE,), jnp.float32)
    w_lin_t = w_lin.T.astype(jnp.bfloat16)

    params = {"dec": tuple(dec), "w_lin_t": w_lin_t, "b_lin": b_lin}
    ref_params = {"dec": tuple(dec_ref),
                  "w_lin_t": w_lin_t.astype(jnp.float32), "b_lin": b_lin}
    return params, ref_params


# --------------------------- model ------------------------------------------
def dec_txt_forward(z, params):
    """Matches DecTxt.forward(_, z): returns (x_hat,), shape (B*txt_len, vocab)."""
    B = z.shape[0]
    dec = params["dec"]

    # Layer 1 (1x1 spatial input): single dense GEMM z @ (latent, kh*kw*512).
    (_, co, (kh, kw), _, _, _) = LAYERS[0]
    w1, b1 = dec[0]
    y = fused_gemm(z.astype(jnp.bfloat16), w1)          # (B, kh*kw*co), pre-bias
    x = y.reshape(B * kh * kw, co)                      # rows = (b, y, x)
    hi, wi = kh, kw
    prev_bias = b1                                      # bias+ReLU deferred

    for li in range(1, len(LAYERS)):
        (_, cout, (kh, kw), (sh, sw), (ph, pw), _) = LAYERS[li]
        w_t, b_l = dec[li]
        # prologue applies previous layer's bias + ReLU inside the kernel.
        y = fused_gemm(x, w_t, bprev=prev_bias)         # (B*hi*wi, kh*kw*cout)
        u = _overlap_add(y, B, hi, wi, kh, kw, sh, sw, ph, pw, cout)
        hi, wi = u.shape[1], u.shape[2]
        x = u.reshape(B * hi * wi, cout)
        prev_bias = b_l

    assert (hi, wi, cout) == (TXT_LEN, EMB_DIM, 1)
    # last conv has C == 1, so this NHWC flatten matches NCHW .view(-1, emb_dim)
    feats = x.reshape(B * TXT_LEN, EMB_DIM)
    bprev = jnp.broadcast_to(prev_bias, (EMB_DIM,))     # Cout==1 scalar bias
    x_hat = fused_gemm(feats, params["w_lin_t"], bprev=bprev,
                       bout=params["b_lin"], act="sigmoid",
                       out_dtype=jnp.float32)
    return (x_hat,)


# ------------------ pure-XLA f32 reference (for correctness) ----------------
def dec_txt_reference(z, ref_params):
    B = z.shape[0]
    x = z.reshape(B, 1, 1, LATENT_DIM).astype(jnp.float32)
    for (w, bias), (_, _, (kh, kw), (sh, sw), (ph, pw), _) in zip(
            ref_params["dec"], LAYERS):
        # ConvTranspose2d == dilated-input conv with spatially flipped kernel.
        w_hwio = jnp.transpose(w[:, :, ::-1, ::-1], (2, 3, 0, 1))
        x = jax.lax.conv_general_dilated(
            x, w_hwio, window_strides=(1, 1),
            padding=((kh - 1 - ph, kh - 1 - ph), (kw - 1 - pw, kw - 1 - pw)),
            lhs_dilation=(sh, sw),
            dimension_numbers=("NHWC", "HWIO", "NHWC"))
        x = jax.nn.relu(x + bias)
    feats = x.reshape(-1, EMB_DIM)
    return jax.nn.sigmoid(feats @ ref_params["w_lin_t"] + ref_params["b_lin"])


# --------------------------- main --------------------------------------------
if __name__ == "__main__":
    key = jax.random.PRNGKey(0)
    kz, kp = jax.random.split(key)
    z = jax.random.normal(kz, (BATCH, LATENT_DIM), jnp.float32)
    params, ref_params = init_params(kp)

    fwd = jax.jit(dec_txt_forward)
    (x_hat,) = fwd(z, params)
    x_hat = jax.block_until_ready(x_hat)

    assert x_hat.shape == (BATCH * TXT_LEN, VOCAB_SIZE), x_hat.shape
    assert bool(jnp.all(jnp.isfinite(x_hat)))
    assert bool(jnp.all((x_hat >= 0.0) & (x_hat <= 1.0)))   # sigmoid range

    # correctness vs an independent pure-XLA f32 implementation
    x_ref = jax.jit(dec_txt_reference)(z, ref_params)
    err = float(jnp.max(jnp.abs(x_hat - x_ref.astype(jnp.float32))))
    assert err < 3e-2, f"max abs diff vs reference: {err}"

    print("KERNEL_OK")
</pallas_src>

<mosaic_0001>
module attributes {stable_mosaic.version = 11 : i64} {
  func.func @_gemm_kernel(%arg0: i32, %arg1: memref<32x512xbf16, #tpu.memory_space<vmem>>, %arg2: memref<512x1024xbf16, #tpu.memory_space<vmem>>, %arg3: memref<1x512xf32, #tpu.memory_space<vmem>>, %arg4: memref<32x1024xbf16, #tpu.memory_space<vmem>>) attributes {dimension_semantics = [#tpu.dimension_semantics<parallel>], iteration_bounds = array<i64: 1>, scalar_prefetch = 0 : i64, scratch_operands = 0 : i64, tpu.core_type = #tpu.core_type<tc>, window_params = [{transform_indices = @transform_0, window_bounds = array<i64: 32, 512>}, {pipeline_mode = #tpu.pipeline_mode<synchronous>, transform_indices = @transform_1, window_bounds = array<i64: 512, 1024>}, {pipeline_mode = #tpu.pipeline_mode<synchronous>, transform_indices = @transform_2, window_bounds = array<i64: 1, 512>}, {transform_indices = @transform_3, window_bounds = array<i64: 32, 1024>}]} {
    %c0 = arith.constant 0 : index
    %c0_0 = arith.constant 0 : index
    %0 = vector.load %arg1[%c0, %c0_0] : memref<32x512xbf16, #tpu.memory_space<vmem>>, vector<32x512xbf16>
    %1 = arith.extf %0 : vector<32x512xbf16> to vector<32x512xf32>
    %c0_1 = arith.constant 0 : index
    %c0_2 = arith.constant 0 : index
    %2 = vector.load %arg3[%c0_1, %c0_2] : memref<1x512xf32, #tpu.memory_space<vmem>>, vector<1x512xf32>
    %3 = vector.broadcast %2 : vector<1x512xf32> to vector<32x512xf32>
    %4 = arith.addf %1, %3 : vector<32x512xf32>
    %cst = arith.constant 0.000000e+00 : f32
    %5 = vector.broadcast %cst : f32 to vector<32x512xf32>
    %6 = arith.maximumf %4, %5 : vector<32x512xf32>
    %7 = arith.truncf %6 : vector<32x512xf32> to vector<32x512xbf16>
    %c0_3 = arith.constant 0 : index
    %c0_4 = arith.constant 0 : index
    %8 = vector.load %arg2[%c0_3, %c0_4] : memref<512x1024xbf16, #tpu.memory_space<vmem>>, vector<512x1024xbf16>
    %cst_5 = arith.constant dense<0.000000e+00> : vector<32x1024xf32>
    %9 = tpu.matmul %7, %8, %cst_5 {dimension_numbers = #tpu.dot_dimension_numbers<[1], [0], [0], [1], [0, 0, 1, 1], [], []>} : vector<32x512xbf16>, vector<512x1024xbf16>, vector<32x1024xf32> -> vector<32x1024xf32>
    %10 = arith.truncf %9 : vector<32x1024xf32> to vector<32x1024xbf16>
    %c0_6 = arith.constant 0 : index
    %c0_7 = arith.constant 0 : index
    %11 = vector.load %arg4[%c0_6, %c0_7] : memref<32x1024xbf16, #tpu.memory_space<vmem>>, vector<32x1024xbf16>
    tpu.vector_store %arg4[%c0_6, %c0_7], %10 {strides = array<i32>} : memref<32x1024xbf16, #tpu.memory_space<vmem>>, vector<32x1024xbf16>,
    return
  }
  func.func @transform_0(%arg0: i32) -> (i32, i32) {
    %c0_i32 = arith.constant 0 : i32
    %c0_i32_0 = arith.constant 0 : i32
    return %arg0, %c0_i32 : i32, i32
  }
  func.func @transform_1(%arg0: i32) -> (i32, i32) {
    %c0_i32 = arith.constant 0 : i32
    %c0_i32_0 = arith.constant 0 : i32
    %c0_i32_1 = arith.constant 0 : i32
    return %c0_i32, %c0_i32_0 : i32, i32
  }
  func.func @transform_2(%arg0: i32) -> (i32, i32) {
    %c0_i32 = arith.constant 0 : i32
    %c0_i32_0 = arith.constant 0 : i32
    %c0_i32_1 = arith.constant 0 : i32
    return %c0_i32, %c0_i32_0 : i32, i32
  }
  func.func @transform_3(%arg0: i32) -> (i32, i32) {
    %c0_i32 = arith.constant 0 : i32
    %c0_i32_0 = arith.constant 0 : i32
    return %arg0, %c0_i32 : i32, i32
  }
}

module attributes {stable_mosaic.version = 11 : i64} {
  func.func @_gemm_kernel(%arg0: i32, %arg1: memref<2x32xbf16, #tpu.memory_space<vmem>>, %arg2: memref<32x8192xbf16, #tpu.memory_space<vmem>>, %arg3: memref<2x8192xbf16, #tpu.memory_space<vmem>>) attributes {dimension_semantics = [#tpu.dimension_semantics<parallel>], iteration_bounds = array<i64: 1>, scalar_prefetch = 0 : i64, scratch_operands = 0 : i64, tpu.core_type = #tpu.core_type<tc>, window_params = [{transform_indices = @transform_0, window_bounds = array<i64: 2, 32>}, {pipeline_mode = #tpu.pipeline_mode<synchronous>, transform_indices = @transform_1, window_bounds = array<i64: 32, 8192>}, {transform_indices = @transform_2, window_bounds = array<i64: 2, 8192>}]} {
    %c0 = arith.constant 0 : index
    %c0_0 = arith.constant 0 : index
    %0 = vector.load %arg1[%c0, %c0_0] : memref<2x32xbf16, #tpu.memory_space<vmem>>, vector<2x32xbf16>
    %c0_1 = arith.constant 0 : index
    %c0_2 = arith.constant 0 : index
    %1 = vector.load %arg2[%c0_1, %c0_2] : memref<32x8192xbf16, #tpu.memory_space<vmem>>, vector<32x8192xbf16>
    %cst = arith.constant dense<0.000000e+00> : vector<2x8192xf32>
    %2 = tpu.matmul %0, %1, %cst {dimension_numbers = #tpu.dot_dimension_numbers<[1], [0], [0], [1], [0, 0, 1, 1], [], []>} : vector<2x32xbf16>, vector<32x8192xbf16>, vector<2x8192xf32> -> vector<2x8192xf32>
    %3 = arith.truncf %2 : vector<2x8192xf32> to vector<2x8192xbf16>
    %c0_3 = arith.constant 0 : index
    %c0_4 = arith.constant 0 : index
    %4 = vector.load %arg3[%c0_3, %c0_4] : memref<2x8192xbf16, #tpu.memory_space<vmem>>, vector<2x8192xbf16>
    tpu.vector_store %arg3[%c0_3, %c0_4], %3 {strides = array<i32>} : memref<2x8192xbf16, #tpu.memory_space<vmem>>, vector<2x8192xbf16>,
    return
  }
  func.func @transform_0(%arg0: i32) -> (i32, i32) {
    %c0_i32 = arith.constant 0 : i32
    %c0_i32_0 = arith.constant 0 : i32
    return %arg0, %c0_i32 : i32, i32
  }
  func.func @transform_1(%arg0: i32) -> (i32, i32) {
    %c0_i32 = arith.constant 0 : i32
    %c0_i32_0 = arith.constant 0 : i32
    %c0_i32_1 = arith.constant 0 : i32
    return %c0_i32, %c0_i32_0 : i32, i32
  }
  func.func @transform_2(%arg0: i32) -> (i32, i32) {
    %c0_i32 = arith.constant 0 : i32
    %c0_i32_0 = arith.constant 0 : i32
    return %arg0, %c0_i32 : i32, i32
  }
}

module attributes {stable_mosaic.version = 11 : i64} {
  func.func @_gemm_kernel(%arg0: i32, %arg1: memref<64x256xbf16, #tpu.memory_space<vmem>>, %arg2: memref<256x512xbf16, #tpu.memory_space<vmem>>, %arg3: memref<1x256xf32, #tpu.memory_space<vmem>>, %arg4: memref<64x512xbf16, #tpu.memory_space<vmem>>) attributes {dimension_semantics = [#tpu.dimension_semantics<parallel>], iteration_bounds = array<i64: 1>, scalar_prefetch = 0 : i64, scratch_operands = 0 : i64, tpu.core_type = #tpu.core_type<tc>, window_params = [{transform_indices = @transform_0, window_bounds = array<i64: 64, 256>}, {pipeline_mode = #tpu.pipeline_mode<synchronous>, transform_indices = @transform_1, window_bounds = array<i64: 256, 512>}, {pipeline_mode = #tpu.pipeline_mode<synchronous>, transform_indices = @transform_2, window_bounds = array<i64: 1, 256>}, {transform_indices = @transform_3, window_bounds = array<i64: 64, 512>}]} {
    %c0 = arith.constant 0 : index
    %c0_0 = arith.constant 0 : index
    %0 = vector.load %arg1[%c0, %c0_0] : memref<64x256xbf16, #tpu.memory_space<vmem>>, vector<64x256xbf16>
    %1 = arith.extf %0 : vector<64x256xbf16> to vector<64x256xf32>
    %c0_1 = arith.constant 0 : index
    %c0_2 = arith.constant 0 : index
    %2 = vector.load %arg3[%c0_1, %c0_2] : memref<1x256xf32, #tpu.memory_space<vmem>>, vector<1x256xf32>
    %3 = vector.broadcast %2 : vector<1x256xf32> to vector<64x256xf32>
    %4 = arith.addf %1, %3 : vector<64x256xf32>
    %cst = arith.constant 0.000000e+00 : f32
    %5 = vector.broadcast %cst : f32 to vector<64x256xf32>
    %6 = arith.maximumf %4, %5 : vector<64x256xf32>
    %7 = arith.truncf %6 : vector<64x256xf32> to vector<64x256xbf16>
    %c0_3 = arith.constant 0 : index
    %c0_4 = arith.constant 0 : index
    %8 = vector.load %arg2[%c0_3, %c0_4] : memref<256x512xbf16, #tpu.memory_space<vmem>>, vector<256x512xbf16>
    %cst_5 = arith.constant dense<0.000000e+00> : vector<64x512xf32>
    %9 = tpu.matmul %7, %8, %cst_5 {dimension_numbers = #tpu.dot_dimension_numbers<[1], [0], [0], [1], [0, 0, 1, 1], [], []>} : vector<64x256xbf16>, vector<256x512xbf16>, vector<64x512xf32> -> vector<64x512xf32>
    %10 = arith.truncf %9 : vector<64x512xf32> to vector<64x512xbf16>
    %c0_6 = arith.constant 0 : index
    %c0_7 = arith.constant 0 : index
    %11 = vector.load %arg4[%c0_6, %c0_7] : memref<64x512xbf16, #tpu.memory_space<vmem>>, vector<64x512xbf16>
    tpu.vector_store %arg4[%c0_6, %c0_7], %10 {strides = array<i32>} : memref<64x512xbf16, #tpu.memory_space<vmem>>, vector<64x512xbf16>,
    return
  }
  func.func @transform_0(%arg0: i32) -> (i32, i32) {
    %c0_i32 = arith.constant 0 : i32
    %c0_i32_0 = arith.constant 0 : i32
    return %arg0, %c0_i32 : i32, i32
  }
  func.func @transform_1(%arg0: i32) -> (i32, i32) {
    %c0_i32 = arith.constant 0 : i32
    %c0_i32_0 = arith.constant 0 : i32
    %c0_i32_1 = arith.constant 0 : i32
    return %c0_i32, %c0_i32_0 : i32, i32
  }
  func.func @transform_2(%arg0: i32) -> (i32, i32) {
    %c0_i32 = arith.constant 0 : i32
    %c0_i32_0 = arith.constant 0 : i32
    %c0_i32_1 = arith.constant 0 : i32
    return %c0_i32, %c0_i32_0 : i32, i32
  }
  func.func @transform_3(%arg0: i32) -> (i32, i32) {
    %c0_i32 = arith.constant 0 : i32
    %c0_i32_0 = arith.constant 0 : i32
    return %arg0, %c0_i32 : i32, i32
  }
}

module attributes {stable_mosaic.version = 11 : i64} {
  func.func @_gemm_kernel(%arg0: i32, %arg1: memref<128x128xbf16, #tpu.memory_space<vmem>>, %arg2: memref<128x1024xbf16, #tpu.memory_space<vmem>>, %arg3: memref<1x128xf32, #tpu.memory_space<vmem>>, %arg4: memref<128x1024xbf16, #tpu.memory_space<vmem>>) attributes {dimension_semantics = [#tpu.dimension_semantics<parallel>], iteration_bounds = array<i64: 1>, scalar_prefetch = 0 : i64, scratch_operands = 0 : i64, tpu.core_type = #tpu.core_type<tc>, window_params = [{transform_indices = @transform_0, window_bounds = array<i64: 128, 128>}, {pipeline_mode = #tpu.pipeline_mode<synchronous>, transform_indices = @transform_1, window_bounds = array<i64: 128, 1024>}, {pipeline_mode = #tpu.pipeline_mode<synchronous>, transform_indices = @transform_2, window_bounds = array<i64: 1, 128>}, {transform_indices = @transform_3, window_bounds = array<i64: 128, 1024>}]} {
    %c0 = arith.constant 0 : index
    %c0_0 = arith.constant 0 : index
    %0 = vector.load %arg1[%c0, %c0_0] : memref<128x128xbf16, #tpu.memory_space<vmem>>, vector<128x128xbf16>
    %1 = arith.extf %0 : vector<128x128xbf16> to vector<128x128xf32>
    %c0_1 = arith.constant 0 : index
    %c0_2 = arith.constant 0 : index
    %2 = vector.load %arg3[%c0_1, %c0_2] : memref<1x128xf32, #tpu.memory_space<vmem>>, vector<1x128xf32>
    %3 = vector.broadcast %2 : vector<1x128xf32> to vector<128x128xf32>
    %4 = arith.addf %1, %3 : vector<128x128xf32>
    %cst = arith.constant 0.000000e+00 : f32
    %5 = vector.broadcast %cst : f32 to vector<128x128xf32>
    %6 = arith.maximumf %4, %5 : vector<128x128xf32>
    %7 = arith.truncf %6 : vector<128x128xf32> to vector<128x128xbf16>
    %c0_3 = arith.constant 0 : index
    %c0_4 = arith.constant 0 : index
    %8 = vector.load %arg2[%c0_3, %c0_4] : memref<128x1024xbf16, #tpu.memory_space<vmem>>, vector<128x1024xbf16>
    %cst_5 = arith.constant dense<0.000000e+00> : vector<128x1024xf32>
    %9 = tpu.matmul %7, %8, %cst_5 {dimension_numbers = #tpu.dot_dimension_numbers<[1], [0], [0], [1], [0, 0, 1, 1], [], []>} : vector<128x128xbf16>, vector<128x1024xbf16>, vector<128x1024xf32> -> vector<128x1024xf32>
    %10 = arith.truncf %9 : vector<128x1024xf32> to vector<128x1024xbf16>
    %c0_6 = arith.constant 0 : index
    %c0_7 = arith.constant 0 : index
    %11 = vector.load %arg4[%c0_6, %c0_7] : memref<128x1024xbf16, #tpu.memory_space<vmem>>, vector<128x1024xbf16>
    tpu.vector_store %arg4[%c0_6, %c0_7], %10 {strides = array<i32>} : memref<128x1024xbf16, #tpu.memory_space<vmem>>, vector<128x1024xbf16>,
    return
  }
  func.func @transform_0(%arg0: i32) -> (i32, i32) {
    %c0_i32 = arith.constant 0 : i32
    %c0_i32_0 = arith.constant 0 : i32
    return %arg0, %c0_i32 : i32, i32
  }
  func.func @transform_1(%arg0: i32) -> (i32, i32) {
    %c0_i32 = arith.constant 0 : i32
    %c0_i32_0 = arith.constant 0 : i32
    %c0_i32_1 = arith.constant 0 : i32
    return %c0_i32, %c0_i32_0 : i32, i32
  }
  func.func @transform_2(%arg0: i32) -> (i32, i32) {
    %c0_i32 = arith.constant 0 : i32
    %c0_i32_0 = arith.constant 0 : i32
    %c0_i32_1 = arith.constant 0 : i32
    return %c0_i32, %c0_i32_0 : i32, i32
  }
  func.func @transform_3(%arg0: i32) -> (i32, i32) {
    %c0_i32 = arith.constant 0 : i32
    %c0_i32_0 = arith.constant 0 : i32
    return %arg0, %c0_i32 : i32, i32
  }
}

module attributes {stable_mosaic.version = 11 : i64} {
  func.func @_gemm_kernel(%arg0: i32, %arg1: memref<512x64xbf16, #tpu.memory_space<vmem>>, %arg2: memref<64x512xbf16, #tpu.memory_space<vmem>>, %arg3: memref<1x64xf32, #tpu.memory_space<vmem>>, %arg4: memref<512x512xbf16, #tpu.memory_space<vmem>>) attributes {dimension_semantics = [#tpu.dimension_semantics<parallel>], iteration_bounds = array<i64: 1>, scalar_prefetch = 0 : i64, scratch_operands = 0 : i64, tpu.core_type = #tpu.core_type<tc>, window_params = [{transform_indices = @transform_0, window_bounds = array<i64: 512, 64>}, {pipeline_mode = #tpu.pipeline_mode<synchronous>, transform_indices = @transform_1, window_bounds = array<i64: 64, 512>}, {pipeline_mode = #tpu.pipeline_mode<synchronous>, transform_indices = @transform_2, window_bounds = array<i64: 1, 64>}, {transform_indices = @transform_3, window_bounds = array<i64: 512, 512>}]} {
    %c0 = arith.constant 0 : index
    %c0_0 = arith.constant 0 : index
    %0 = vector.load %arg1[%c0, %c0_0] : memref<512x64xbf16, #tpu.memory_space<vmem>>, vector<512x64xbf16>
    %1 = arith.extf %0 : vector<512x64xbf16> to vector<512x64xf32>
    %c0_1 = arith.constant 0 : index
    %c0_2 = arith.constant 0 : index
    %2 = vector.load %arg3[%c0_1, %c0_2] : memref<1x64xf32, #tpu.memory_space<vmem>>, vector<1x64xf32>
    %3 = vector.broadcast %2 : vector<1x64xf32> to vector<512x64xf32>
    %4 = arith.addf %1, %3 : vector<512x64xf32>
    %cst = arith.constant 0.000000e+00 : f32
    %5 = vector.broadcast %cst : f32 to vector<512x64xf32>
    %6 = arith.maximumf %4, %5 : vector<512x64xf32>
    %7 = arith.truncf %6 : vector<512x64xf32> to vector<512x64xbf16>
    %c0_3 = arith.constant 0 : index
    %c0_4 = arith.constant 0 : index
    %8 = vector.load %arg2[%c0_3, %c0_4] : memref<64x512xbf16, #tpu.memory_space<vmem>>, vector<64x512xbf16>
    %cst_5 = arith.constant dense<0.000000e+00> : vector<512x512xf32>
    %9 = tpu.matmul %7, %8, %cst_5 {dimension_numbers = #tpu.dot_dimension_numbers<[1], [0], [0], [1], [0, 0, 1, 1], [], []>} : vector<512x64xbf16>, vector<64x512xbf16>, vector<512x512xf32> -> vector<512x512xf32>
    %10 = arith.truncf %9 : vector<512x512xf32> to vector<512x512xbf16>
    %c0_6 = arith.constant 0 : index
    %c0_7 = arith.constant 0 : index
    %11 = vector.load %arg4[%c0_6, %c0_7] : memref<512x512xbf16, #tpu.memory_space<vmem>>, vector<512x512xbf16>
    tpu.vector_store %arg4[%c0_6, %c0_7], %10 {strides = array<i32>} : memref<512x512xbf16, #tpu.memory_space<vmem>>, vector<512x512xbf16>,
    return
  }
  func.func @transform_0(%arg0: i32) -> (i32, i32) {
    %c0_i32 = arith.constant 0 : i32
    %c0_i32_0 = arith.constant 0 : i32
    return %arg0, %c0_i32 : i32, i32
  }
  func.func @transform_1(%arg0: i32) -> (i32, i32) {
    %c0_i32 = arith.constant 0 : i32
    %c0_i32_0 = arith.constant 0 : i32
    %c0_i32_1 = arith.constant 0 : i32
    return %c0_i32, %c0_i32_0 : i32, i32
  }
  func.func @transform_2(%arg0: i32) -> (i32, i32) {
    %c0_i32 = arith.constant 0 : i32
    %c0_i32_0 = arith.constant 0 : i32
    %c0_i32_1 = arith.constant 0 : i32
    return %c0_i32, %c0_i32_0 : i32, i32
  }
  func.func @transform_3(%arg0: i32) -> (i32, i32) {
    %c0_i32 = arith.constant 0 : i32
    %c0_i32_0 = arith.constant 0 : i32
    return %arg0, %c0_i32 : i32, i32
  }
}

module attributes {stable_mosaic.version = 11 : i64} {
  func.func @_gemm_kernel(%arg0: i32, %arg1: memref<1024x32xbf16, #tpu.memory_space<vmem>>, %arg2: memref<32x16xbf16, #tpu.memory_space<vmem>>, %arg3: memref<1x32xf32, #tpu.memory_space<vmem>>, %arg4: memref<1024x16xbf16, #tpu.memory_space<vmem>>) attributes {dimension_semantics = [#tpu.dimension_semantics<parallel>], iteration_bounds = array<i64: 2>, scalar_prefetch = 0 : i64, scratch_operands = 0 : i64, tpu.core_type = #tpu.core_type<tc>, window_params = [{transform_indices = @transform_0, window_bounds = array<i64: 1024, 32>}, {pipeline_mode = #tpu.pipeline_mode<synchronous>, transform_indices = @transform_1, window_bounds = array<i64: 32, 16>}, {pipeline_mode = #tpu.pipeline_mode<synchronous>, transform_indices = @transform_2, window_bounds = array<i64: 1, 32>}, {transform_indices = @transform_3, window_bounds = array<i64: 1024, 16>}]} {
    %c0 = arith.constant 0 : index
    %c0_0 = arith.constant 0 : index
    %0 = vector.load %arg1[%c0, %c0_0] : memref<1024x32xbf16, #tpu.memory_space<vmem>>, vector<1024x32xbf16>
    %1 = arith.extf %0 : vector<1024x32xbf16> to vector<1024x32xf32>
    %c0_1 = arith.constant 0 : index
    %c0_2 = arith.constant 0 : index
    %2 = vector.load %arg3[%c0_1, %c0_2] : memref<1x32xf32, #tpu.memory_space<vmem>>, vector<1x32xf32>
    %3 = vector.broadcast %2 : vector<1x32xf32> to vector<1024x32xf32>
    %4 = arith.addf %1, %3 : vector<1024x32xf32>
    %cst = arith.constant 0.000000e+00 : f32
    %5 = vector.broadcast %cst : f32 to vector<1024x32xf32>
    %6 = arith.maximumf %4, %5 : vector<1024x32xf32>
    %7 = arith.truncf %6 : vector<1024x32xf32> to vector<1024x32xbf16>
    %c0_3 = arith.constant 0 : index
    %c0_4 = arith.constant 0 : index
    %8 = vector.load %arg2[%c0_3, %c0_4] : memref<32x16xbf16, #tpu.memory_space<vmem>>, vector<32x16xbf16>
    %cst_5 = arith.constant dense<0.000000e+00> : vector<1024x16xf32>
    %9 = tpu.matmul %7, %8, %cst_5 {dimension_numbers = #tpu.dot_dimension_numbers<[1], [0], [0], [1], [0, 0, 1, 1], [], []>} : vector<1024x32xbf16>, vector<32x16xbf16>, vector<1024x16xf32> -> vector<1024x16xf32>
    %10 = arith.truncf %9 : vector<1024x16xf32> to vector<1024x16xbf16>
    %c0_6 = arith.constant 0 : index
    %c0_7 = arith.constant 0 : index
    %11 = vector.load %arg4[%c0_6, %c0_7] : memref<1024x16xbf16, #tpu.memory_space<vmem>>, vector<1024x16xbf16>
    tpu.vector_store %arg4[%c0_6, %c0_7], %10 {strides = array<i32>} : memref<1024x16xbf16, #tpu.memory_space<vmem>>, vector<1024x16xbf16>,
    return
  }
  func.func @transform_0(%arg0: i32) -> (i32, i32) {
    %c0_i32 = arith.constant 0 : i32
    %c0_i32_0 = arith.constant 0 : i32
    return %arg0, %c0_i32 : i32, i32
  }
  func.func @transform_1(%arg0: i32) -> (i32, i32) {
    %c0_i32 = arith.constant 0 : i32
    %c0_i32_0 = arith.constant 0 : i32
    %c0_i32_1 = arith.constant 0 : i32
    return %c0_i32, %c0_i32_0 : i32, i32
  }
  func.func @transform_2(%arg0: i32) -> (i32, i32) {
    %c0_i32 = arith.constant 0 : i32
    %c0_i32_0 = arith.constant 0 : i32
    %c0_i32_1 = arith.constant 0 : i32
    return %c0_i32, %c0_i32_0 : i32, i32
  }
  func.func @transform_3(%arg0: i32) -> (i32, i32) {
    %c0_i32 = arith.constant 0 : i32
    %c0_i32_0 = arith.constant 0 : i32
    return %arg0, %c0_i32 : i32, i32
  }
}

module attributes {stable_mosaic.version = 11 : i64} {
  func.func @_gemm_kernel(%arg0: i32, %arg1: memref<64x128xbf16, #tpu.memory_space<vmem>>, %arg2: memref<128x128xbf16, #tpu.memory_space<vmem>>, %arg3: memref<1x128xf32, #tpu.memory_space<vmem>>, %arg4: memref<1x128xf32, #tpu.memory_space<vmem>>, %arg5: memref<64x128xf32, #tpu.memory_space<vmem>>) attributes {dimension_semantics = [#tpu.dimension_semantics<parallel>], iteration_bounds = array<i64: 1>, scalar_prefetch = 0 : i64, scratch_operands = 0 : i64, tpu.core_type = #tpu.core_type<tc>, window_params = [{transform_indices = @transform_0, window_bounds = array<i64: 64, 128>}, {pipeline_mode = #tpu.pipeline_mode<synchronous>, transform_indices = @transform_1, window_bounds = array<i64: 128, 128>}, {pipeline_mode = #tpu.pipeline_mode<synchronous>, transform_indices = @transform_2, window_bounds = array<i64: 1, 128>}, {pipeline_mode = #tpu.pipeline_mode<synchronous>, transform_indices = @transform_3, window_bounds = array<i64: 1, 128>}, {transform_indices = @transform_4, window_bounds = array<i64: 64, 128>}]} {
    %c0 = arith.constant 0 : index
    %c0_0 = arith.constant 0 : index
    %0 = vector.load %arg1[%c0, %c0_0] : memref<64x128xbf16, #tpu.memory_space<vmem>>, vector<64x128xbf16>
    %1 = arith.extf %0 : vector<64x128xbf16> to vector<64x128xf32>
    %c0_1 = arith.constant 0 : index
    %c0_2 = arith.constant 0 : index
    %2 = vector.load %arg3[%c0_1, %c0_2] : memref<1x128xf32, #tpu.memory_space<vmem>>, vector<1x128xf32>
    %3 = vector.broadcast %2 : vector<1x128xf32> to vector<64x128xf32>
    %4 = arith.addf %1, %3 : vector<64x128xf32>
    %cst = arith.constant 0.000000e+00 : f32
    %5 = vector.broadcast %cst : f32 to vector<64x128xf32>
    %6 = arith.maximumf %4, %5 : vector<64x128xf32>
    %7 = arith.truncf %6 : vector<64x128xf32> to vector<64x128xbf16>
    %c0_3 = arith.constant 0 : index
    %c0_4 = arith.constant 0 : index
    %8 = vector.load %arg2[%c0_3, %c0_4] : memref<128x128xbf16, #tpu.memory_space<vmem>>, vector<128x128xbf16>
    %cst_5 = arith.constant dense<0.000000e+00> : vector<64x128xf32>
    %9 = tpu.matmul %7, %8, %cst_5 {dimension_numbers = #tpu.dot_dimension_numbers<[1], [0], [0], [1], [0, 0, 1, 1], [], []>} : vector<64x128xbf16>, vector<128x128xbf16>, vector<64x128xf32> -> vector<64x128xf32>
    %c0_6 = arith.constant 0 : index
    %c0_7 = arith.constant 0 : index
    %10 = vector.load %arg4[%c0_6, %c0_7] : memref<1x128xf32, #tpu.memory_space<vmem>>, vector<1x128xf32>
    %11 = vector.broadcast %10 : vector<1x128xf32> to vector<64x128xf32>
    %12 = arith.addf %9, %11 : vector<64x128xf32>
    %13 = math.absf %12 : vector<64x128xf32>
    %cst_8 = arith.constant 0.000000e+00 : f32
    %14 = vector.broadcast %cst_8 : f32 to vector<64x128xf32>
    %15 = arith.subf %14, %13 : vector<64x128xf32>
    %16 = math.exp %15 : vector<64x128xf32>
    %cst_9 = arith.constant 0.000000e+00 : f32
    %17 = vector.broadcast %cst_9 : f32 to vector<64x128xf32>
    %18 = arith.cmpf oge, %12, %17 : vector<64x128xf32>
    %cst_10 = arith.constant 1.000000e+00 : f32
    %19 = vector.broadcast %cst_10 : f32 to vector<64x128xf32>
    %20 = arith.select %18, %19, %16 : vector<64x128xi1>, vector<64x128xf32>
    %cst_11 = arith.constant 1.000000e+00 : f32
    %21 = vector.broadcast %cst_11 : f32 to vector<64x128xf32>
    %22 = arith.addf %21, %16 : vector<64x128xf32>
    %23 = tpu.reciprocal %22 {approx = true} : vector<64x128xf32> -> vector<64x128xf32>
    %24 = arith.mulf %20, %23 : vector<64x128xf32>
    %cst_12 = arith.constant 1.000000e+00 : f32
    %25 = vector.broadcast %cst_12 : f32 to vector<64x128xf32>
    %26 = arith.minimumf %24, %25 : vector<64x128xf32>
    %c0_13 = arith.constant 0 : index
    %c0_14 = arith.constant 0 : index
    %27 = vector.load %arg5[%c0_13, %c0_14] : memref<64x128xf32, #tpu.memory_space<vmem>>, vector<64x128xf32>
    tpu.vector_store %arg5[%c0_13, %c0_14], %26 {strides = array<i32>} : memref<64x128xf32, #tpu.memory_space<vmem>>, vector<64x128xf32>,
    return
  }
  func.func @transform_0(%arg0: i32) -> (i32, i32) {
    %c0_i32 = arith.constant 0 : i32
    %c0_i32_0 = arith.constant 0 : i32
    return %arg0, %c0_i32 : i32, i32
  }
  func.func @transform_1(%arg0: i32) -> (i32, i32) {
    %c0_i32 = arith.constant 0 : i32
    %c0_i32_0 = arith.constant 0 : i32
    %c0_i32_1 = arith.constant 0 : i32
    return %c0_i32, %c0_i32_0 : i32, i32
  }
  func.func @transform_2(%arg0: i32) -> (i32, i32) {
    %c0_i32 = arith.constant 0 : i32
    %c0_i32_0 = arith.constant 0 : i32
    %c0_i32_1 = arith.constant 0 : i32
    return %c0_i32, %c0_i32_0 : i32, i32
  }
  func.func @transform_3(%arg0: i32) -> (i32, i32) {
    %c0_i32 = arith.constant 0 : i32
    %c0_i32_0 = arith.constant 0 : i32
    %c0_i32_1 = arith.constant 0 : i32
    return %c0_i32, %c0_i32_0 : i32, i32
  }
  func.func @transform_4(%arg0: i32) -> (i32, i32) {
    %c0_i32 = arith.constant 0 : i32
    %c0_i32_0 = arith.constant 0 : i32
    return %arg0, %c0_i32 : i32, i32
  }
}

</mosaic_0001>

<llo_original>
// kernel: dec_txt_forward.7
$region0: #{dec_txt_forward.7}
  #allocation0 [shape = 'u32[]', space=smem, size = 0x4, offset = 0x4, fixed_abs, tag = 'smem constant byte address 0x4 - core index']
  #allocation1 [shape = 'u32[72,128]{1,0:T(1,128)}', space=vmem, size = 0x9000, scoped, tag = 'internal scratch']
  %s0 = inlined_call_operand.vmem [shape: bf16[2,32], index: 0, kind: input, shape index: {}]
  %s1 = inlined_call_operand.hbm [shape: bf16[32,8192], index: 1, kind: input, shape index: {}]
  %s2 = inlined_call_operand.vmem [shape: bf16[2,8192], index: 2, kind: output, shape index: {}]
  %s3 = sld [smem:[#allocation0]]
  $region22: #{dec_txt_forward.7} parent=0
    _
  %s5 = ssub.s32 1, %s3
  %s6 = scalar_select 0, %s5, %s3
  $region1: #{dec_txt_forward.7} parent=0
    #allocation2 [shape = 'u8[524288]{0}', space=vmem, size = 0x80000, scoped, tag = 'input window, operand 1, single buffered']
    #allocation3 [shape = 's32[1]{0}', space=sflag, size = 0x4, scoped, tag = 'scoped memory for dec_txt_forward.7']
    %7 = vsyncpa [#allocation3], 0
    // Predicated region
    $region2: #{dec_txt_forward.7} parent=1 // pred_check
      _
    $region3: #{dec_txt_forward.7} parent=1 // pred_check_branch
      %9 = sbr.rel (0) target = $region5
    $region4: #{dec_txt_forward.7} parent=1 // pred_region
      _
    $region5: #{dec_txt_forward.7} parent=1 // pred_fallthru
      _
    // Predicated region
    $region6: #{dec_txt_forward.7} parent=1 // pred_check
      _
    $region7: #{dec_txt_forward.7} parent=1 // pred_check_branch
      %11 = sbr.rel (0) target = $region9
    $region8: #{dec_txt_forward.7} parent=1 // pred_region
      %13 = vsyncadd [#allocation3], 0
      %s14 = sshll.u32 %s1, 4
      %s15 = int_to_ptr.hbm [resolvable:$true] %s14
      %s16 = sshll.u32 [#allocation2], 4
      %s17 = int_to_ptr.vmem [resolvable:$true] %s16
      %22 = dma.hbm_to_vmem [thread:$0]  %s15, 16384, %s17, [#allocation3], 4096, 4096, 256
    $region9: #{dec_txt_forward.7} parent=1 // pred_fallthru
      _
    // Predicated region
    $region10: #{dec_txt_forward.7} parent=1 // pred_check
      _
    $region11: #{dec_txt_forward.7} parent=1 // pred_check_branch
      %24 = sbr.rel (0) target = $region13
    $region12: #{dec_txt_forward.7} parent=1 // pred_region
      %26 = dma.done [#allocation3], 16384
    $region13: #{dec_txt_forward.7} parent=1 // pred_fallthru
      _
    %v28 = vld [vmem:[%s0] sm:$0x1]
    %v29 = vld [vmem:[#allocation2] sm:$0xff]
    %v30 = vld [vmem:[#allocation2 + $0x8] sm:$0xff]
    %v31 = vld [vmem:[#allocation2 + $0x10] sm:$0xff]
    %v32 = vld [vmem:[#allocation2 + $0x18] sm:$0xff]
    %v33 = vld [vmem:[#allocation2 + $0x20] sm:$0xff]
    %v34 = vld [vmem:[#allocation2 + $0x28] sm:$0xff]
    %v35 = vld [vmem:[#allocation2 + $0x30] sm:$0xff]
    %v36 = vld [vmem:[#allocation2 + $0x38] sm:$0xff]
    %v37 = vld [vmem:[#allocation2 + $0x40] sm:$0xff]
    %v38 = vld [vmem:[#allocation2 + $0x48] sm:$0xff]
    %v39 = vld [vmem:[#allocation2 + $0x50] sm:$0xff]
    %v40 = vld [vmem:[#allocation2 + $0x58] sm:$0xff]
    %v41 = vld [vmem:[#allocation2 + $0x60] sm:$0xff]
    %v42 = vld [vmem:[#allocation2 + $0x68] sm:$0xff]
    %v43 = vld [vmem:[#allocation2 + $0x70] sm:$0xff]
    %v44 = vld [vmem:[#allocation2 + $0x78] sm:$0xff]
    %v45 = vld [vmem:[#allocation2 + $0x80] sm:$0xff]
    %v46 = vld [vmem:[#allocation2 + $0x88] sm:$0xff]
    %v47 = vld [vmem:[#allocation2 + $0x90] sm:$0xff]
    %v48 = vld [vmem:[#allocation2 + $0x98] sm:$0xff]
    %v49 = vld [vmem:[#allocation2 + $0xa0] sm:$0xff]
    %v50 = vld [vmem:[#allocation2 + $0xa8] sm:$0xff]
    %v51 = vld [vmem:[#allocation2 + $0xb0] sm:$0xff]
    %v52 = vld [vmem:[#allocation2 + $0xb8] sm:$0xff]
    %v53 = vld [vmem:[#allocation2 + $0xc0] sm:$0xff]
    %v54 = vld [vmem:[#allocation2 + $0xc8] sm:$0xff]
    %v55 = vld [vmem:[#allocation2 + $0xd0] sm:$0xff]
    %v56 = vld [vmem:[#allocation2 + $0xd8] sm:$0xff]
    %v57 = vld [vmem:[#allocation2 + $0xe0] sm:$0xff]
    %v58 = vld [vmem:[#allocation2 + $0xe8] sm:$0xff]
    %v59 = vld [vmem:[#allocation2 + $0xf0] sm:$0xff]
    %v60 = vld [vmem:[#allocation2 + $0xf8] sm:$0xff]
    %v61 = vld [vmem:[#allocation2 + $0x100] sm:$0xff]
    %v62 = vld [vmem:[#allocation2 + $0x108] sm:$0xff]
    %v63 = vld [vmem:[#allocation2 + $0x110] sm:$0xff]
    %v64 = vld [vmem:[#allocation2 + $0x118] sm:$0xff]
    %v65 = vld [vmem:[#allocation2 + $0x120] sm:$0xff]
    %v66 = vld [vmem:[#allocation2 + $0x128] sm:$0xff]
    %v67 = vld [vmem:[#allocation2 + $0x130] sm:$0xff]
    %v68 = vld [vmem:[#allocation2 + $0x138] sm:$0xff]
    %v69 = vld [vmem:[#allocation2 + $0x140] sm:$0xff]
    %v70 = vld [vmem:[#allocation2 + $0x148] sm:$0xff]
    %v71 = vld [vmem:[#allocation2 + $0x150] sm:$0xff]
    %v72 = vld [vmem:[#allocation2 + $0x158] sm:$0xff]
    %v73 = vld [vmem:[#allocation2 + $0x160] sm:$0xff]
    %v74 = vld [vmem:[#allocation2 + $0x168] sm:$0xff]
    %v75 = vld [vmem:[#allocation2 + $0x170] sm:$0xff]
    %v76 = vld [vmem:[#allocation2 + $0x178] sm:$0xff]
    %v77 = vld [vmem:[#allocation2 + $0x180] sm:$0xff]
    %v78 = vld [vmem:[#allocation2 + $0x188] sm:$0xff]
    %v79 = vld [vmem:[#allocation2 + $0x190] sm:$0xff]
    %v80 = vld [vmem:[#allocation2 + $0x198] sm:$0xff]
    %v81 = vld [vmem:[#allocation2 + $0x1a0] sm:$0xff]
    %v82 = vld [vmem:[#allocation2 + $0x1a8] sm:$0xff]
    %v83 = vld [vmem:[#allocation2 + $0x1b0] sm:$0xff]
    %v84 = vld [vmem:[#allocation2 + $0x1b8] sm:$0xff]
    %v85 = vld [vmem:[#allocation2 + $0x1c0] sm:$0xff]
    %v86 = vld [vmem:[#allocation2 + $0x1c8] sm:$0xff]
    %v87 = vld [vmem:[#allocation2 + $0x1d0] sm:$0xff]
    %v88 = vld [vmem:[#allocation2 + $0x1d8] sm:$0xff]
    %v89 = vld [vmem:[#allocation2 + $0x1e0] sm:$0xff]
    %v90 = vld [vmem:[#allocation2 + $0x1e8] sm:$0xff]
    %v91 = vld [vmem:[#allocation2 + $0x1f0] sm:$0xff]
    %v92 = vld [vmem:[#allocation2 + $0x1f8] sm:$0xff]
    %v93 = vld [vmem:[#allocation2 + $0x200] sm:$0xff]
    %v94 = vld [vmem:[#allocation2 + $0x208] sm:$0xff]
    %v95 = vld [vmem:[#allocation2 + $0x210] sm:$0xff]
    %v96 = vld [vmem:[#allocation2 + $0x218] sm:$0xff]
    %v97 = vld [vmem:[#allocation2 + $0x220] sm:$0xff]
    %v98 = vld [vmem:[#allocation2 + $0x228] sm:$0xff]
    %v99 = vld [vmem:[#allocation2 + $0x230] sm:$0xff]
    %v100 = vld [vmem:[#allocation2 + $0x238] sm:$0xff]
    %v101 = vld [vmem:[#allocation2 + $0x240] sm:$0xff]
    %v102 = vld [vmem:[#allocation2 + $0x248] sm:$0xff]
    %v103 = vld [vmem:[#allocation2 + $0x250] sm:$0xff]
    %v104 = vld [vmem:[#allocation2 + $0x258] sm:$0xff]
    %v105 = vld [vmem:[#allocation2 + $0x260] sm:$0xff]
    %v106 = vld [vmem:[#allocation2 + $0x268] sm:$0xff]
    %v107 = vld [vmem:[#allocation2 + $0x270] sm:$0xff]
    %v108 = vld [vmem:[#allocation2 + $0x278] sm:$0xff]
    %v109 = vld [vmem:[#allocation2 + $0x280] sm:$0xff]
    %v110 = vld [vmem:[#allocation2 + $0x288] sm:$0xff]
    %v111 = vld [vmem:[#allocation2 + $0x290] sm:$0xff]
    %v112 = vld [vmem:[#allocation2 + $0x298] sm:$0xff]
    %v113 = vld [vmem:[#allocation2 + $0x2a0] sm:$0xff]
    %v114 = vld [vmem:[#allocation2 + $0x2a8] sm:$0xff]
    %v115 = vld [vmem:[#allocation2 + $0x2b0] sm:$0xff]
    %v116 = vld [vmem:[#allocation2 + $0x2b8] sm:$0xff]
    %v117 = vld [vmem:[#allocation2 + $0x2c0] sm:$0xff]
    %v118 = vld [vmem:[#allocation2 + $0x2c8] sm:$0xff]
    %v119 = vld [vmem:[#allocation2 + $0x2d0] sm:$0xff]
    %v120 = vld [vmem:[#allocation2 + $0x2d8] sm:$0xff]
    %v121 = vld [vmem:[#allocation2 + $0x2e0] sm:$0xff]
    %v122 = vld [vmem:[#allocation2 + $0x2e8] sm:$0xff]
    %v123 = vld [vmem:[#allocation2 + $0x2f0] sm:$0xff]
    %v124 = vld [vmem:[#allocation2 + $0x2f8] sm:$0xff]
    %v125 = vld [vmem:[#allocation2 + $0x300] sm:$0xff]
    %v126 = vld [vmem:[#allocation2 + $0x308] sm:$0xff]
    %v127 = vld [vmem:[#allocation2 + $0x310] sm:$0xff]
    %v128 = vld [vmem:[#allocation2 + $0x318] sm:$0xff]
    %v129 = vld [vmem:[#allocation2 + $0x320] sm:$0xff]
    %v130 = vld [vmem:[#allocation2 + $0x328] sm:$0xff]
    %v131 = vld [vmem:[#allocation2 + $0x330] sm:$0xff]
    %v132 = vld [vmem:[#allocation2 + $0x338] sm:$0xff]
    %v133 = vld [vmem:[#allocation2 + $0x340] sm:$0xff]
    %v134 = vld [vmem:[#allocation2 + $0x348] sm:$0xff]
    %v135 = vld [vmem:[#allocation2 + $0x350] sm:$0xff]
    %v136 = vld [vmem:[#allocation2 + $0x358] sm:$0xff]
    %v137 = vld [vmem:[#allocation2 + $0x360] sm:$0xff]
    %v138 = vld [vmem:[#allocation2 + $0x368] sm:$0xff]
    %v139 = vld [vmem:[#allocation2 + $0x370] sm:$0xff]
    %v140 = vld [vmem:[#allocation2 + $0x378] sm:$0xff]
    %v141 = vld [vmem:[#allocation2 + $0x380] sm:$0xff]
    %v142 = vld [vmem:[#allocation2 + $0x388] sm:$0xff]
    %v143 = vld [vmem:[#allocation2 + $0x390] sm:$0xff]
    %v144 = vld [vmem:[#allocation2 + $0x398] sm:$0xff]
    %v145 = vld [vmem:[#allocation2 + $0x3a0] sm:$0xff]
    %v146 = vld [vmem:[#allocation2 + $0x3a8] sm:$0xff]
    %v147 = vld [vmem:[#allocation2 + $0x3b0] sm:$0xff]
    %v148 = vld [vmem:[#allocation2 + $0x3b8] sm:$0xff]
    %v149 = vld [vmem:[#allocation2 + $0x3c0] sm:$0xff]
    %v150 = vld [vmem:[#allocation2 + $0x3c8] sm:$0xff]
    %v151 = vld [vmem:[#allocation2 + $0x3d0] sm:$0xff]
    %v152 = vld [vmem:[#allocation2 + $0x3d8] sm:$0xff]
    %v153 = vld [vmem:[#allocation2 + $0x3e0] sm:$0xff]
    %v154 = vld [vmem:[#allocation2 + $0x3e8] sm:$0xff]
    %v155 = vld [vmem:[#allocation2 + $0x3f0] sm:$0xff]
    %v156 = vld [vmem:[#allocation2 + $0x3f8] sm:$0xff]
    %v285 = vunpack.c.l.b16 %v29
    %v286 = vunpack.c.h.b16 %v29
    %v287 = vunpack.c.l.b16 %v30
    %v288 = vunpack.c.h.b16 %v30
    %v289 = vunpack.c.l.b16 %v31
    %v290 = vunpack.c.h.b16 %v31
    %v291 = vunpack.c.l.b16 %v32
    %v292 = vunpack.c.h.b16 %v32
    %v293 = vunpack.c.l.b16 %v33
    %v294 = vunpack.c.h.b16 %v33
    %v295 = vunpack.c.l.b16 %v34
    %v296 = vunpack.c.h.b16 %v34
    %v297 = vunpack.c.l.b16 %v35
    %v298 = vunpack.c.h.b16 %v35
    %v299 = vunpack.c.l.b16 %v36
    %v300 = vunpack.c.h.b16 %v36
    %v301 = vunpack.c.l.b16 %v37
    %v302 = vunpack.c.h.b16 %v37
    %v303 = vunpack.c.l.b16 %v38
    %v304 = vunpack.c.h.b16 %v38
    %v305 = vunpack.c.l.b16 %v39
    %v306 = vunpack.c.h.b16 %v39
    %v307 = vunpack.c.l.b16 %v40
    %v308 = vunpack.c.h.b16 %v40
    %v309 = vunpack.c.l.b16 %v41
    %v310 = vunpack.c.h.b16 %v41
    %v311 = vunpack.c.l.b16 %v42
    %v312 = vunpack.c.h.b16 %v42
    %v313 = vunpack.c.l.b16 %v43
    %v314 = vunpack.c.h.b16 %v43
    %v315 = vunpack.c.l.b16 %v44
    %v316 = vunpack.c.h.b16 %v44
    %v317 = vunpack.c.l.b16 %v45
    %v318 = vunpack.c.h.b16 %v45
    %v319 = vunpack.c.l.b16 %v46
    %v320 = vunpack.c.h.b16 %v46
    %v321 = vunpack.c.l.b16 %v47
    %v322 = vunpack.c.h.b16 %v47
    %v323 = vunpack.c.l.b16 %v48
    %v324 = vunpack.c.h.b16 %v48
    %v325 = vunpack.c.l.b16 %v49
    %v326 = vunpack.c.h.b16 %v49
    %v327 = vunpack.c.l.b16 %v50
    %v328 = vunpack.c.h.b16 %v50
    %v329 = vunpack.c.l.b16 %v51
    %v330 = vunpack.c.h.b16 %v51
    %v331 = vunpack.c.l.b16 %v52
    %v332 = vunpack.c.h.b16 %v52
    %v333 = vunpack.c.l.b16 %v53
    %v334 = vunpack.c.h.b16 %v53
    %v335 = vunpack.c.l.b16 %v54
    %v336 = vunpack.c.h.b16 %v54
    %v337 = vunpack.c.l.b16 %v55
    %v338 = vunpack.c.h.b16 %v55
    %v339 = vunpack.c.l.b16 %v56
    %v340 = vunpack.c.h.b16 %v56
    %v341 = vunpack.c.l.b16 %v57
    %v342 = vunpack.c.h.b16 %v57
    %v343 = vunpack.c.l.b16 %v58
    %v344 = vunpack.c.h.b16 %v58
    %v345 = vunpack.c.l.b16 %v59
    %v346 = vunpack.c.h.b16 %v59
    %v347 = vunpack.c.l.b16 %v60
    %v348 = vunpack.c.h.b16 %v60
    %v349 = vunpack.c.l.b16 %v61
    %v350 = vunpack.c.h.b16 %v61
    %v351 = vunpack.c.l.b16 %v62
    %v352 = vunpack.c.h.b16 %v62
    %v353 = vunpack.c.l.b16 %v63
    %v354 = vunpack.c.h.b16 %v63
    %v355 = vunpack.c.l.b16 %v64
    %v356 = vunpack.c.h.b16 %v64
    %v357 = vunpack.c.l.b16 %v65
    %v358 = vunpack.c.h.b16 %v65
    %v359 = vunpack.c.l.b16 %v66
    %v360 = vunpack.c.h.b16 %v66
    %v361 = vunpack.c.l.b16 %v67
    %v362 = vunpack.c.h.b16 %v67
    %v363 = vunpack.c.l.b16 %v68
    %v364 = vunpack.c.h.b16 %v68
    %v365 = vunpack.c.l.b16 %v69
    %v366 = vunpack.c.h.b16 %v69
    %v367 = vunpack.c.l.b16 %v70
    %v368 = vunpack.c.h.b16 %v70
    %v369 = vunpack.c.l.b16 %v71
    %v370 = vunpack.c.h.b16 %v71
    %v371 = vunpack.c.l.b16 %v72
    %v372 = vunpack.c.h.b16 %v72
    %v373 = vunpack.c.l.b16 %v73
    %v374 = vunpack.c.h.b16 %v73
    %v375 = vunpack.c.l.b16 %v74
    %v376 = vunpack.c.h.b16 %v74
    %v377 = vunpack.c.l.b16 %v75
    %v378 = vunpack.c.h.b16 %v75
    %v379 = vunpack.c.l.b16 %v76
    %v380 = vunpack.c.h.b16 %v76
    %v381 = vunpack.c.l.b16 %v77
    %v382 = vunpack.c.h.b16 %v77
    %v383 = vunpack.c.l.b16 %v78
    %v384 = vunpack.c.h.b16 %v78
    %v385 = vunpack.c.l.b16 %v79
    %v386 = vunpack.c.h.b16 %v79
    %v387 = vunpack.c.l.b16 %v80
    %v388 = vunpack.c.h.b16 %v80
    %v389 = vunpack.c.l.b16 %v81
    %v390 = vunpack.c.h.b16 %v81
    %v391 = vunpack.c.l.b16 %v82
    %v392 = vunpack.c.h.b16 %v82
    %v393 = vunpack.c.l.b16 %v83
    %v394 = vunpack.c.h.b16 %v83
    %v395 = vunpack.c.l.b16 %v84
    %v396 = vunpack.c.h.b16 %v84
    %v397 = vunpack.c.l.b16 %v85
    %v398 = vunpack.c.h.b16 %v85
    %v399 = vunpack.c.l.b16 %v86
    %v400 = vunpack.c.h.b16 %v86
    %v401 = vunpack.c.l.b16 %v87
    %v402 = vunpack.c.h.b16 %v87
    %v403 = vunpack.c.l.b16 %v88
    %v404 = vunpack.c.h.b16 %v88
    %v405 = vunpack.c.l.b16 %v89
    %v406 = vunpack.c.h.b16 %v89
    %v407 = vunpack.c.l.b16 %v90
    %v408 = vunpack.c.h.b16 %v90
    %v409 = vunpack.c.l.b16 %v91
    %v410 = vunpack.c.h.b16 %v91
    %v411 = vunpack.c.l.b16 %v92
    %v412 = vunpack.c.h.b16 %v92
    %v413 = vunpack.c.l.b16 %v93
    %v414 = vunpack.c.h.b16 %v93
    %v415 = vunpack.c.l.b16 %v94
    %v416 = vunpack.c.h.b16 %v94
    %v417 = vunpack.c.l.b16 %v95
    %v418 = vunpack.c.h.b16 %v95
    %v419 = vunpack.c.l.b16 %v96
    %v420 = vunpack.c.h.b16 %v96
    %v421 = vunpack.c.l.b16 %v97
    %v422 = vunpack.c.h.b16 %v97
    %v423 = vunpack.c.l.b16 %v98
    %v424 = vunpack.c.h.b16 %v98
    %v425 = vunpack.c.l.b16 %v99
    %v426 = vunpack.c.h.b16 %v99
    %v427 = vunpack.c.l.b16 %v100
    %v428 = vunpack.c.h.b16 %v100
    %v429 = vunpack.c.l.b16 %v101
    %v430 = vunpack.c.h.b16 %v101
    %v431 = vunpack.c.l.b16 %v102
    %v432 = vunpack.c.h.b16 %v102
    %v433 = vunpack.c.l.b16 %v103
    %v434 = vunpack.c.h.b16 %v103
    %v435 = vunpack.c.l.b16 %v104
    %v436 = vunpack.c.h.b16 %v104
    %v437 = vunpack.c.l.b16 %v105
    %v438 = vunpack.c.h.b16 %v105
    %v439 = vunpack.c.l.b16 %v106
    %v440 = vunpack.c.h.b16 %v106
    %v441 = vunpack.c.l.b16 %v107
    %v442 = vunpack.c.h.b16 %v107
    %v443 = vunpack.c.l.b16 %v108
    %v444 = vunpack.c.h.b16 %v108
    %v445 = vunpack.c.l.b16 %v109
    %v446 = vunpack.c.h.b16 %v109
    %v447 = vunpack.c.l.b16 %v110
    %v448 = vunpack.c.h.b16 %v110
    %v449 = vunpack.c.l.b16 %v111
    %v450 = vunpack.c.h.b16 %v111
    %v451 = vunpack.c.l.b16 %v112
    %v452 = vunpack.c.h.b16 %v112
    %v453 = vunpack.c.l.b16 %v113
    %v454 = vunpack.c.h.b16 %v113
    %v455 = vunpack.c.l.b16 %v114
    %v456 = vunpack.c.h.b16 %v114
    %v457 = vunpack.c.l.b16 %v115
    %v458 = vunpack.c.h.b16 %v115
    %v459 = vunpack.c.l.b16 %v116
    %v460 = vunpack.c.h.b16 %v116
    %v461 = vunpack.c.l.b16 %v117
    %v462 = vunpack.c.h.b16 %v117
    %v463 = vunpack.c.l.b16 %v118
    %v464 = vunpack.c.h.b16 %v118
    %v465 = vunpack.c.l.b16 %v119
    %v466 = vunpack.c.h.b16 %v119
    %v467 = vunpack.c.l.b16 %v120
    %v468 = vunpack.c.h.b16 %v120
    %v469 = vunpack.c.l.b16 %v121
    %v470 = vunpack.c.h.b16 %v121
    %v471 = vunpack.c.l.b16 %v122
    %v472 = vunpack.c.h.b16 %v122
    %v473 = vunpack.c.l.b16 %v123
    %v474 = vunpack.c.h.b16 %v123
    %v475 = vunpack.c.l.b16 %v124
    %v476 = vunpack.c.h.b16 %v124
    %v477 = vunpack.c.l.b16 %v125
    %v478 = vunpack.c.h.b16 %v125
    %v479 = vunpack.c.l.b16 %v126
    %v480 = vunpack.c.h.b16 %v126
    %v481 = vunpack.c.l.b16 %v127
    %v482 = vunpack.c.h.b16 %v127
    %v483 = vunpack.c.l.b16 %v128
    %v484 = vunpack.c.h.b16 %v128
    %v485 = vunpack.c.l.b16 %v129
    %v486 = vunpack.c.h.b16 %v129
    %v487 = vunpack.c.l.b16 %v130
    %v488 = vunpack.c.h.b16 %v130
    %v489 = vunpack.c.l.b16 %v131
    %v490 = vunpack.c.h.b16 %v131
    %v491 = vunpack.c.l.b16 %v132
    %v492 = vunpack.c.h.b16 %v132
    %v493 = vunpack.c.l.b16 %v133
    %v494 = vunpack.c.h.b16 %v133
    %v495 = vunpack.c.l.b16 %v134
    %v496 = vunpack.c.h.b16 %v134
    %v497 = vunpack.c.l.b16 %v135
    %v498 = vunpack.c.h.b16 %v135
    %v499 = vunpack.c.l.b16 %v136
    %v500 = vunpack.c.h.b16 %v136
    %v501 = vunpack.c.l.b16 %v137
    %v502 = vunpack.c.h.b16 %v137
    %v503 = vunpack.c.l.b16 %v138
    %v504 = vunpack.c.h.b16 %v138
    %v505 = vunpack.c.l.b16 %v139
    %v506 = vunpack.c.h.b16 %v139
    %v507 = vunpack.c.l.b16 %v140
    %v508 = vunpack.c.h.b16 %v140
    %v509 = vunpack.c.l.b16 %v141
    %v510 = vunpack.c.h.b16 %v141
    %v511 = vunpack.c.l.b16 %v142
    %v512 = vunpack.c.h.b16 %v142
    %v513 = vunpack.c.l.b16 %v143
    %v514 = vunpack.c.h.b16 %v143
    %v515 = vunpack.c.l.b16 %v144
    %v516 = vunpack.c.h.b16 %v144
    %v517 = vunpack.c.l.b16 %v145
    %v518 = vunpack.c.h.b16 %v145
    %v519 = vunpack.c.l.b16 %v146
    %v520 = vunpack.c.h.b16 %v146
    %v521 = vunpack.c.l.b16 %v147
    %v522 = vunpack.c.h.b16 %v147
    %v523 = vunpack.c.l.b16 %v148
    %v524 = vunpack.c.h.b16 %v148
    %v525 = vunpack.c.l.b16 %v149
    %v526 = vunpack.c.h.b16 %v149
    %v527 = vunpack.c.l.b16 %v150
    %v528 = vunpack.c.h.b16 %v150
    %v529 = vunpack.c.l.b16 %v151
    %v530 = vunpack.c.h.b16 %v151
    %v531 = vunpack.c.l.b16 %v152
    %v532 = vunpack.c.h.b16 %v152
    %v533 = vunpack.c.l.b16 %v153
    %v534 = vunpack.c.h.b16 %v153
    %v535 = vunpack.c.l.b16 %v154
    %v536 = vunpack.c.h.b16 %v154
    %v537 = vunpack.c.l.b16 %v155
    %v538 = vunpack.c.h.b16 %v155
    %v539 = vunpack.c.l.b16 %v156
    %v540 = vunpack.c.h.b16 %v156
    %v541 = vpack.c.b16 %v349, %v285
    %v542 = vpack.c.b16 %v350, %v286
    %v543 = vpack.c.b16 %v351, %v287
    %v544 = vpack.c.b16 %v352, %v288
    %v545 = vpack.c.b16 %v353, %v289
    %v546 = vpack.c.b16 %v354, %v290
    %v547 = vpack.c.b16 %v355, %v291
    %v548 = vpack.c.b16 %v356, %v292
    %v549 = vpack.c.b16 %v357, %v293
    %v550 = vpack.c.b16 %v358, %v294
    %v551 = vpack.c.b16 %v359, %v295
    %v552 = vpack.c.b16 %v360, %v296
    %v553 = vpack.c.b16 %v361, %v297
    %v554 = vpack.c.b16 %v362, %v298
    %v555 = vpack.c.b16 %v363, %v299
    %v556 = vpack.c.b16 %v364, %v300
    %v557 = vpack.c.b16 %v365, %v301
    %v558 = vpack.c.b16 %v366, %v302
    %v559 = vpack.c.b16 %v367, %v303
    %v560 = vpack.c.b16 %v368, %v304
    %v561 = vpack.c.b16 %v369, %v305
    %v562 = vpack.c.b16 %v370, %v306
    %v563 = vpack.c.b16 %v371, %v307
    %v564 = vpack.c.b16 %v372, %v308
    %v565 = vpack.c.b16 %v373, %v309
    %v566 = vpack.c.b16 %v374, %v310
    %v567 = vpack.c.b16 %v375, %v311
    %v568 = vpack.c.b16 %v376, %v312
    %v569 = vpack.c.b16 %v377, %v313
    %v570 = vpack.c.b16 %v378, %v314
    %v571 = vpack.c.b16 %v379, %v315
    %v572 = vpack.c.b16 %v380, %v316
    %v573 = vpack.c.b16 %v381, %v317
    %v574 = vpack.c.b16 %v382, %v318
    %v575 = vpack.c.b16 %v383, %v319
    %v576 = vpack.c.b16 %v384, %v320
    %v577 = vpack.c.b16 %v385, %v321
    %v578 = vpack.c.b16 %v386, %v322
    %v579 = vpack.c.b16 %v387, %v323
    %v580 = vpack.c.b16 %v388, %v324
    %v581 = vpack.c.b16 %v389, %v325
    %v582 = vpack.c.b16 %v390, %v326
    %v583 = vpack.c.b16 %v391, %v327
    %v584 = vpack.c.b16 %v392, %v328
    %v585 = vpack.c.b16 %v393, %v329
    %v586 = vpack.c.b16 %v394, %v330
    %v587 = vpack.c.b16 %v395, %v331
    %v588 = vpack.c.b16 %v396, %v332
    %v589 = vpack.c.b16 %v397, %v333
    %v590 = vpack.c.b16 %v398, %v334
    %v591 = vpack.c.b16 %v399, %v335
    %v592 = vpack.c.b16 %v400, %v336
    %v593 = vpack.c.b16 %v401, %v337
    %v594 = vpack.c.b16 %v402, %v338
    %v595 = vpack.c.b16 %v403, %v339
    %v596 = vpack.c.b16 %v404, %v340
    %v597 = vpack.c.b16 %v405, %v341
    %v598 = vpack.c.b16 %v406, %v342
    %v599 = vpack.c.b16 %v407, %v343
    %v600 = vpack.c.b16 %v408, %v344
    %v601 = vpack.c.b16 %v409, %v345
    %v602 = vpack.c.b16 %v410, %v346
    %v603 = vpack.c.b16 %v411, %v347
    %v604 = vpack.c.b16 %v412, %v348
    %v605 = vpack.c.b16 %v477, %v413
    %v606 = vpack.c.b16 %v478, %v414
    %v607 = vpack.c.b16 %v479, %v415
    %v608 = vpack.c.b16 %v480, %v416
    %v609 = vpack.c.b16 %v481, %v417
    %v610 = vpack.c.b16 %v482, %v418
    %v611 = vpack.c.b16 %v483, %v419
    %v612 = vpack.c.b16 %v484, %v420
    %v613 = vpack.c.b16 %v485, %v421
    %v614 = vpack.c.b16 %v486, %v422
    %v615 = vpack.c.b16 %v487, %v423
    %v616 = vpack.c.b16 %v488, %v424
    %v617 = vpack.c.b16 %v489, %v425
    %v618 = vpack.c.b16 %v490, %v426
    %v619 = vpack.c.b16 %v491, %v427
    %v620 = vpack.c.b16 %v492, %v428
    %v621 = vpack.c.b16 %v493, %v429
    %v622 = vpack.c.b16 %v494, %v430
    %v623 = vpack.c.b16 %v495, %v431
    %v624 = vpack.c.b16 %v496, %v432
    %v625 = vpack.c.b16 %v497, %v433
    %v626 = vpack.c.b16 %v498, %v434
    %v627 = vpack.c.b16 %v499, %v435
    %v628 = vpack.c.b16 %v500, %v436
    %v629 = vpack.c.b16 %v501, %v437
    %v630 = vpack.c.b16 %v502, %v438
    %v631 = vpack.c.b16 %v503, %v439
    %v632 = vpack.c.b16 %v504, %v440
    %v633 = vpack.c.b16 %v505, %v441
    %v634 = vpack.c.b16 %v506, %v442
    %v635 = vpack.c.b16 %v507, %v443
    %v636 = vpack.c.b16 %v508, %v444
    %v637 = vpack.c.b16 %v509, %v445
    %v638 = vpack.c.b16 %v510, %v446
    %v639 = vpack.c.b16 %v511, %v447
    %v640 = vpack.c.b16 %v512, %v448
    %v641 = vpack.c.b16 %v513, %v449
    %v642 = vpack.c.b16 %v514, %v450
    %v643 = vpack.c.b16 %v515, %v451
    %v644 = vpack.c.b16 %v516, %v452
    %v645 = vpack.c.b16 %v517, %v453
    %v646 = vpack.c.b16 %v518, %v454
    %v647 = vpack.c.b16 %v519, %v455
    %v648 = vpack.c.b16 %v520, %v456
    %v649 = vpack.c.b16 %v521, %v457
    %v650 = vpack.c.b16 %v522, %v458
    %v651 = vpack.c.b16 %v523, %v459
    %v652 = vpack.c.b16 %v524, %v460
    %v653 = vpack.c.b16 %v525, %v461
    %v654 = vpack.c.b16 %v526, %v462
    %v655 = vpack.c.b16 %v527, %v463
    %v656 = vpack.c.b16 %v528, %v464
    %v657 = vpack.c.b16 %v529, %v465
    %v658 = vpack.c.b16 %v530, %v466
    %v659 = vpack.c.b16 %v531, %v467
    %v660 = vpack.c.b16 %v532, %v468
    %v661 = vpack.c.b16 %v533, %v469
    %v662 = vpack.c.b16 %v534, %v470
    %v663 = vpack.c.b16 %v535, %v471
    %v664 = vpack.c.b16 %v536, %v472
    %v665 = vpack.c.b16 %v537, %v473
    %v666 = vpack.c.b16 %v538, %v474
    %v667 = vpack.c.b16 %v539, %v475
    %v668 = vpack.c.b16 %v540, %v476
    %vm797 = vcmask 261120
    %v799 = vsel %vm797, %v28, 0
    %801 = vmatpush.bf16.msra.mxu0 0
    %802 = vmatpush.bf16.msra.mxu0 0
    %803 = vmatpush.bf16.msra.mxu0 0
    %804 = vmatpush.bf16.msra.mxu0 0
    %805 = vmatpush.bf16.msra.mxu0 0
    %806 = vmatpush.bf16.msra.mxu0 0
    %807 = vmatpush.bf16.msra.mxu0 %v605
    %808 = vmatpush.bf16.msra.mxu0 %v541
    %809 = vmatmul.bf16.gmra.mxu0 %v799
    %v810 = vpop.f32.mrf.mxu0
    %v811 = vadd.f32 0.0, %v810
    %v812 = vpop.f32.mrf.mxu0
    %813 = vdwg.mxu0
    %814 = vmatpush.bf16.msra.mxu0 0
    %815 = vmatpush.bf16.msra.mxu0 0
    %816 = vmatpush.bf16.msra.mxu0 0
    %817 = vmatpush.bf16.msra.mxu0 0
    %818 = vmatpush.bf16.msra.mxu0 0
    %819 = vmatpush.bf16.msra.mxu0 0
    %820 = vmatpush.bf16.msra.mxu0 %v606
    %821 = vmatpush.bf16.msra.mxu0 %v542
    %822 = vmatmul.bf16.gmra.mxu0 %v799
    %v823 = vpop.f32.mrf.mxu0
    %v824 = vadd.f32 0.0, %v823
    %v825 = vpop.f32.mrf.mxu0
    %826 = vdwg.mxu0
    %827 = vmatpush.bf16.msra.mxu0 0
    %828 = vmatpush.bf16.msra.mxu0 0
    %829 = vmatpush.bf16.msra.mxu0 0
    %830 = vmatpush.bf16.msra.mxu0 0
    %831 = vmatpush.bf16.msra.mxu0 0
    %832 = vmatpush.bf16.msra.mxu0 0
    %833 = vmatpush.bf16.msra.mxu0 %v607
    %834 = vmatpush.bf16.msra.mxu0 %v543
    %835 = vmatmul.bf16.gmra.mxu0 %v799
    %v836 = vpop.f32.mrf.mxu0
    %v837 = vadd.f32 0.0, %v836
    %v838 = vpop.f32.mrf.mxu0
    %839 = vdwg.mxu0
    %840 = vmatpush.bf16.msra.mxu0 0
    %841 = vmatpush.bf16.msra.mxu0 0
    %842 = vmatpush.bf16.msra.mxu0 0
    %843 = vmatpush.bf16.msra.mxu0 0
    %844 = vmatpush.bf16.msra.mxu0 0
    %845 = vmatpush.bf16.msra.mxu0 0
    %846 = vmatpush.bf16.msra.mxu0 %v608
    %847 = vmatpush.bf16.msra.mxu0 %v544
    %848 = vmatmul.bf16.gmra.mxu0 %v799
    %v849 = vpop.f32.mrf.mxu0
    %v850 = vadd.f32 0.0, %v849
    %v851 = vpop.f32.mrf.mxu0
    %852 = vdwg.mxu0
    %853 = vmatpush.bf16.msra.mxu0 0
    %854 = vmatpush.bf16.msra.mxu0 0
    %855 = vmatpush.bf16.msra.mxu0 0
    %856 = vmatpush.bf16.msra.mxu0 0
    %857 = vmatpush.bf16.msra.mxu0 0
    %858 = vmatpush.bf16.msra.mxu0 0
    %859 = vmatpush.bf16.msra.mxu0 %v609
    %860 = vmatpush.bf16.msra.mxu0 %v545
    %861 = vmatmul.bf16.gmra.mxu0 %v799
    %v862 = vpop.f32.mrf.mxu0
    %v863 = vadd.f32 0.0, %v862
    %v864 = vpop.f32.mrf.mxu0
    %865 = vdwg.mxu0
    %866 = vmatpush.bf16.msra.mxu0 0
    %867 = vmatpush.bf16.msra.mxu0 0
    %868 = vmatpush.bf16.msra.mxu0 0
    %869 = vmatpush.bf16.msra.mxu0 0
    %870 = vmatpush.bf16.msra.mxu0 0
    %871 = vmatpush.bf16.msra.mxu0 0
    %872 = vmatpush.bf16.msra.mxu0 %v610
    %873 = vmatpush.bf16.msra.mxu0 %v546
    %874 = vmatmul.bf16.gmra.mxu0 %v799
    %v875 = vpop.f32.mrf.mxu0
    %v876 = vadd.f32 0.0, %v875
    %v877 = vpop.f32.mrf.mxu0
    %878 = vdwg.mxu0
    %879 = vmatpush.bf16.msra.mxu0 0
    %880 = vmatpush.bf16.msra.mxu0 0
    %881 = vmatpush.bf16.msra.mxu0 0
    %882 = vmatpush.bf16.msra.mxu0 0
    %883 = vmatpush.bf16.msra.mxu0 0
    %884 = vmatpush.bf16.msra.mxu0 0
    %885 = vmatpush.bf16.msra.mxu0 %v611
    %886 = vmatpush.bf16.msra.mxu0 %v547
    %887 = vmatmul.bf16.gmra.mxu0 %v799
    %v888 = vpop.f32.mrf.mxu0
    %v889 = vadd.f32 0.0, %v888
    %v890 = vpop.f32.mrf.mxu0
    %891 = vdwg.mxu0
    %892 = vmatpush.bf16.msra.mxu0 0
    %893 = vmatpush.bf16.msra.mxu0 0
    %894 = vmatpush.bf16.msra.mxu0 0
    %895 = vmatpush.bf16.msra.mxu0 0
    %896 = vmatpush.bf16.msra.mxu0 0
    %897 = vmatpush.bf16.msra.mxu0 0
    %898 = vmatpush.bf16.msra.mxu0 %v612
    %899 = vmatpush.bf16.msra.mxu0 %v548
    %900 = vmatmul.bf16.gmra.mxu0 %v799
    %v901 = vpop.f32.mrf.mxu0
    %v902 = vadd.f32 0.0, %v901
    %v903 = vpop.f32.mrf.mxu0
    %904 = vdwg.mxu0
    %905 = vmatpush.bf16.msra.mxu0 0
    %906 = vmatpush.bf16.msra.mxu0 0
    %907 = vmatpush.bf16.msra.mxu0 0
    %908 = vmatpush.bf16.msra.mxu0 0
    %909 = vmatpush.bf16.msra.mxu0 0
    %910 = vmatpush.bf16.msra.mxu0 0
    %911 = vmatpush.bf16.msra.mxu0 %v613
    %912 = vmatpush.bf16.msra.mxu0 %v549
    %913 = vmatmul.bf16.gmra.mxu0 %v799
    %v914 = vpop.f32.mrf.mxu0
    %v915 = vadd.f32 0.0, %v914
    %v916 = vpop.f32.mrf.mxu0
    %917 = vdwg.mxu0
    %918 = vmatpush.bf16.msra.mxu0 0
    %919 = vmatpush.bf16.msra.mxu0 0
    %920 = vmatpush.bf16.msra.mxu0 0
    %921 = vmatpush.bf16.msra.mxu0 0
    %922 = vmatpush.bf16.msra.mxu0 0
    %923 = vmatpush.bf16.msra.mxu0 0
    %924 = vmatpush.bf16.msra.mxu0 %v614
    %925 = vmatpush.bf16.msra.mxu0 %v550
    %926 = vmatmul.bf16.gmra.mxu0 %v799
    %v927 = vpop.f32.mrf.mxu0
    %v928 = vadd.f32 0.0, %v927
    %v929 = vpop.f32.mrf.mxu0
    %930 = vdwg.mxu0
    %931 = vmatpush.bf16.msra.mxu0 0
    %932 = vmatpush.bf16.msra.mxu0 0
    %933 = vmatpush.bf16.msra.mxu0 0
    %934 = vmatpush.bf16.msra.mxu0 0
    %935 = vmatpush.bf16.msra.mxu0 0
    %936 = vmatpush.bf16.msra.mxu0 0
    %937 = vmatpush.bf16.msra.mxu0 %v615
    %938 = vmatpush.bf16.msra.mxu0 %v551
    %939 = vmatmul.bf16.gmra.mxu0 %v799
    %v940 = vpop.f32.mrf.mxu0
    %v941 = vadd.f32 0.0, %v940
    %v942 = vpop.f32.mrf.mxu0
    %943 = vdwg.mxu0
    %944 = vmatpush.bf16.msra.mxu0 0
    %945 = vmatpush.bf16.msra.mxu0 0
    %946 = vmatpush.bf16.msra.mxu0 0
    %947 = vmatpush.bf16.msra.mxu0 0
    %948 = vmatpush.bf16.msra.mxu0 0
    %949 = vmatpush.bf16.msra.mxu0 0
    %950 = vmatpush.bf16.msra.mxu0 %v616
    %951 = vmatpush.bf16.msra.mxu0 %v552
    %952 = vmatmul.bf16.gmra.mxu0 %v799
    %v953 = vpop.f32.mrf.mxu0
    %v954 = vadd.f32 0.0, %v953
    %v955 = vpop.f32.mrf.mxu0
    %956 = vdwg.mxu0
    %957 = vmatpush.bf16.msra.mxu0 0
    %958 = vmatpush.bf16.msra.mxu0 0
    %959 = vmatpush.bf16.msra.mxu0 0
    %960 = vmatpush.bf16.msra.mxu0 0
    %961 = vmatpush.bf16.msra.mxu0 0
    %962 = vmatpush.bf16.msra.mxu0 0
    %963 = vmatpush.bf16.msra.mxu0 %v617
    %964 = vmatpush.bf16.msra.mxu0 %v553
    %965 = vmatmul.bf16.gmra.mxu0 %v799
    %v966 = vpop.f32.mrf.mxu0
    %v967 = vadd.f32 0.0, %v966
    %v968 = vpop.f32.mrf.mxu0
    %969 = vdwg.mxu0
    %970 = vmatpush.bf16.msra.mxu0 0
    %971 = vmatpush.bf16.msra.mxu0 0
    %972 = vmatpush.bf16.msra.mxu0 0
    %973 = vmatpush.bf16.msra.mxu0 0
    %974 = vmatpush.bf16.msra.mxu0 0
    %975 = vmatpush.bf16.msra.mxu0 0
    %976 = vmatpush.bf16.msra.mxu0 %v618
    %977 = vmatpush.bf16.msra.mxu0 %v554
    %978 = vmatmul.bf16.gmra.mxu0 %v799
    %v979 = vpop.f32.mrf.mxu0
    %v980 = vadd.f32 0.0, %v979
    %v981 = vpop.f32.mrf.mxu0
    %982 = vdwg.mxu0
    %983 = vmatpush.bf16.msra.mxu0 0
    %984 = vmatpush.bf16.msra.mxu0 0
    %985 = vmatpush.bf16.msra.mxu0 0
    %986 = vmatpush.bf16.msra.mxu0 0
    %987 = vmatpush.bf16.msra.mxu0 0
    %988 = vmatpush.bf16.msra.mxu0 0
    %989 = vmatpush.bf16.msra.mxu0 %v619
    %990 = vmatpush.bf16.msra.mxu0 %v555
    %991 = vmatmul.bf16.gmra.mxu0 %v799
    %v992 = vpop.f32.mrf.mxu0
    %v993 = vadd.f32 0.0, %v992
    %v994 = vpop.f32.mrf.mxu0
    %995 = vdwg.mxu0
    %996 = vmatpush.bf16.msra.mxu0 0
    %997 = vmatpush.bf16.msra.mxu0 0
    %998 = vmatpush.bf16.msra.mxu0 0
    %999 = vmatpush.bf16.msra.mxu0 0
    %1000 = vmatpush.bf16.msra.mxu0 0
    %1001 = vmatpush.bf16.msra.mxu0 0
    %1002 = vmatpush.bf16.msra.mxu0 %v620
    %1003 = vmatpush.bf16.msra.mxu0 %v556
    %1004 = vmatmul.bf16.gmra.mxu0 %v799
    %v1005 = vpop.f32.mrf.mxu0
    %v1006 = vadd.f32 0.0, %v1005
    %v1007 = vpop.f32.mrf.mxu0
    %1008 = vdwg.mxu0
    %1009 = vmatpush.bf16.msra.mxu0 0
    %1010 = vmatpush.bf16.msra.mxu0 0
    %1011 = vmatpush.bf16.msra.mxu0 0
    %1012 = vmatpush.bf16.msra.mxu0 0
    %1013 = vmatpush.bf16.msra.mxu0 0
    %1014 = vmatpush.bf16.msra.mxu0 0
    %1015 = vmatpush.bf16.msra.mxu0 %v621
    %1016 = vmatpush.bf16.msra.mxu0 %v557
    %1017 = vmatmul.bf16.gmra.mxu0 %v799
    %v1018 = vpop.f32.mrf.mxu0
    %v1019 = vadd.f32 0.0, %v1018
    %v1020 = vpop.f32.mrf.mxu0
    %1021 = vdwg.mxu0
    %1022 = vmatpush.bf16.msra.mxu0 0
    %1023 = vmatpush.bf16.msra.mxu0 0
    %1024 = vmatpush.bf16.msra.mxu0 0
    %1025 = vmatpush.bf16.msra.mxu0 0
    %1026 = vmatpush.bf16.msra.mxu0 0
    %1027 = vmatpush.bf16.msra.mxu0 0
    %1028 = vmatpush.bf16.msra.mxu0 %v622
    %1029 = vmatpush.bf16.msra.mxu0 %v558
    %1030 = vmatmul.bf16.gmra.mxu0 %v799
    %v1031 = vpop.f32.mrf.mxu0
    %v1032 = vadd.f32 0.0, %v1031
    %v1033 = vpop.f32.mrf.mxu0
    %1034 = vdwg.mxu0
    %1035 = vmatpush.bf16.msra.mxu0 0
    %1036 = vmatpush.bf16.msra.mxu0 0
    %1037 = vmatpush.bf16.msra.mxu0 0
    %1038 = vmatpush.bf16.msra.mxu0 0
    %1039 = vmatpush.bf16.msra.mxu0 0
    %1040 = vmatpush.bf16.msra.mxu0 0
    %1041 = vmatpush.bf16.msra.mxu0 %v623
    %1042 = vmatpush.bf16.msra.mxu0 %v559
    %1043 = vmatmul.bf16.gmra.mxu0 %v799
    %v1044 = vpop.f32.mrf.mxu0
    %v1045 = vadd.f32 0.0, %v1044
    %v1046 = vpop.f32.mrf.mxu0
    %1047 = vdwg.mxu0
    %1048 = vmatpush.bf16.msra.mxu0 0
    %1049 = vmatpush.bf16.msra.mxu0 0
    %1050 = vmatpush.bf16.msra.mxu0 0
    %1051 = vmatpush.bf16.msra.mxu0 0
    %1052 = vmatpush.bf16.msra.mxu0 0
    %1053 = vmatpush.bf16.msra.mxu0 0
    %1054 = vmatpush.bf16.msra.mxu0 %v624
    %1055 = vmatpush.bf16.msra.mxu0 %v560
    %1056 = vmatmul.bf16.gmra.mxu0 %v799
    %v1057 = vpop.f32.mrf.mxu0
    %v1058 = vadd.f32 0.0, %v1057
    %v1059 = vpop.f32.mrf.mxu0
    %1060 = vdwg.mxu0
    %1061 = vmatpush.bf16.msra.mxu0 0
    %1062 = vmatpush.bf16.msra.mxu0 0
    %1063 = vmatpush.bf16.msra.mxu0 0
    %1064 = vmatpush.bf16.msra.mxu0 0
    %1065 = vmatpush.bf16.msra.mxu0 0
    %1066 = vmatpush.bf16.msra.mxu0 0
    %1067 = vmatpush.bf16.msra.mxu0 %v625
    %1068 = vmatpush.bf16.msra.mxu0 %v561
    %1069 = vmatmul.bf16.gmra.mxu0 %v799
    %v1070 = vpop.f32.mrf.mxu0
    %v1071 = vadd.f32 0.0, %v1070
    %v1072 = vpop.f32.mrf.mxu0
    %1073 = vdwg.mxu0
    %1074 = vmatpush.bf16.msra.mxu0 0
    %1075 = vmatpush.bf16.msra.mxu0 0
    %1076 = vmatpush.bf16.msra.mxu0 0
    %1077 = vmatpush.bf16.msra.mxu0 0
    %1078 = vmatpush.bf16.msra.mxu0 0
    %1079 = vmatpush.bf16.msra.mxu0 0
    %1080 = vmatpush.bf16.msra.mxu0 %v626
    %1081 = vmatpush.bf16.msra.mxu0 %v562
    %1082 = vmatmul.bf16.gmra.mxu0 %v799
    %v1083 = vpop.f32.mrf.mxu0
    %v1084 = vadd.f32 0.0, %v1083
    %v1085 = vpop.f32.mrf.mxu0
    %1086 = vdwg.mxu0
    %1087 = vmatpush.bf16.msra.mxu0 0
    %1088 = vmatpush.bf16.msra.mxu0 0
    %1089 = vmatpush.bf16.msra.mxu0 0
    %1090 = vmatpush.bf16.msra.mxu0 0
    %1091 = vmatpush.bf16.msra.mxu0 0
    %1092 = vmatpush.bf16.msra.mxu0 0
    %1093 = vmatpush.bf16.msra.mxu0 %v627
    %1094 = vmatpush.bf16.msra.mxu0 %v563
    %1095 = vmatmul.bf16.gmra.mxu0 %v799
    %v1096 = vpop.f32.mrf.mxu0
    %v1097 = vadd.f32 0.0, %v1096
    %v1098 = vpop.f32.mrf.mxu0
    %1099 = vdwg.mxu0
    %1100 = vmatpush.bf16.msra.mxu0 0
    %1101 = vmatpush.bf16.msra.mxu0 0
    %1102 = vmatpush.bf16.msra.mxu0 0
    %1103 = vmatpush.bf16.msra.mxu0 0
    %1104 = vmatpush.bf16.msra.mxu0 0
    %1105 = vmatpush.bf16.msra.mxu0 0
    %1106 = vmatpush.bf16.msra.mxu0 %v628
    %1107 = vmatpush.bf16.msra.mxu0 %v564
    %1108 = vmatmul.bf16.gmra.mxu0 %v799
    %v1109 = vpop.f32.mrf.mxu0
    %v1110 = vadd.f32 0.0, %v1109
    %v1111 = vpop.f32.mrf.mxu0
    %1112 = vdwg.mxu0
    %1113 = vmatpush.bf16.msra.mxu0 0
    %1114 = vmatpush.bf16.msra.mxu0 0
    %1115 = vmatpush.bf16.msra.mxu0 0
    %1116 = vmatpush.bf16.msra.mxu0 0
    %1117 = vmatpush.bf16.msra.mxu0 0
    %1118 = vmatpush.bf16.msra.mxu0 0
    %1119 = vmatpush.bf16.msra.mxu0 %v629
    %1120 = vmatpush.bf16.msra.mxu0 %v565
    %1121 = vmatmul.bf16.gmra.mxu0 %v799
    %v1122 = vpop.f32.mrf.mxu0
    %v1123 = vadd.f32 0.0, %v1122
    %v1124 = vpop.f32.mrf.mxu0
    %1125 = vdwg.mxu0
    %1126 = vmatpush.bf16.msra.mxu0 0
    %1127 = vmatpush.bf16.msra.mxu0 0
    %1128 = vmatpush.bf16.msra.mxu0 0
    %1129 = vmatpush.bf16.msra.mxu0 0
    %1130 = vmatpush.bf16.msra.mxu0 0
    %1131 = vmatpush.bf16.msra.mxu0 0
    %1132 = vmatpush.bf16.msra.mxu0 %v630
    %1133 = vmatpush.bf16.msra.mxu0 %v566
    %1134 = vmatmul.bf16.gmra.mxu0 %v799
    %v1135 = vpop.f32.mrf.mxu0
    %v1136 = vadd.f32 0.0, %v1135
    %v1137 = vpop.f32.mrf.mxu0
    %1138 = vdwg.mxu0
    %1139 = vmatpush.bf16.msra.mxu0 0
    %1140 = vmatpush.bf16.msra.mxu0 0
    %1141 = vmatpush.bf16.msra.mxu0 0
    %1142 = vmatpush.bf16.msra.mxu0 0
    %1143 = vmatpush.bf16.msra.mxu0 0
    %1144 = vmatpush.bf16.msra.mxu0 0
    %1145 = vmatpush.bf16.msra.mxu0 %v631
    %1146 = vmatpush.bf16.msra.mxu0 %v567
    %1147 = vmatmul.bf16.gmra.mxu0 %v799
    %v1148 = vpop.f32.mrf.mxu0
    %v1149 = vadd.f32 0.0, %v1148
    %v1150 = vpop.f32.mrf.mxu0
    %1151 = vdwg.mxu0
    %1152 = vmatpush.bf16.msra.mxu0 0
    %1153 = vmatpush.bf16.msra.mxu0 0
    %1154 = vmatpush.bf16.msra.mxu0 0
    %1155 = vmatpush.bf16.msra.mxu0 0
    %1156 = vmatpush.bf16.msra.mxu0 0
    %1157 = vmatpush.bf16.msra.mxu0 0
    %1158 = vmatpush.bf16.msra.mxu0 %v632
    %1159 = vmatpush.bf16.msra.mxu0 %v568
    %1160 = vmatmul.bf16.gmra.mxu0 %v799
    %v1161 = vpop.f32.mrf.mxu0
    %v1162 = vadd.f32 0.0, %v1161
    %v1163 = vpop.f32.mrf.mxu0
    %1164 = vdwg.mxu0
    %1165 = vmatpush.bf16.msra.mxu0 0
    %1166 = vmatpush.bf16.msra.mxu0 0
    %1167 = vmatpush.bf16.msra.mxu0 0
    %1168 = vmatpush.bf16.msra.mxu0 0
    %1169 = vmatpush.bf16.msra.mxu0 0
    %1170 = vmatpush.bf16.msra.mxu0 0
    %1171 = vmatpush.bf16.msra.mxu0 %v633
    %1172 = vmatpush.bf16.msra.mxu0 %v569
    %1173 = vmatmul.bf16.gmra.mxu0 %v799
    %v1174 = vpop.f32.mrf.mxu0
    %v1175 = vadd.f32 0.0, %v1174
    %v1176 = vpop.f32.mrf.mxu0
    %1177 = vdwg.mxu0
    %1178 = vmatpush.bf16.msra.mxu0 0
    %1179 = vmatpush.bf16.msra.mxu0 0
    %1180 = vmatpush.bf16.msra.mxu0 0
    %1181 = vmatpush.bf16.msra.mxu0 0
    %1182 = vmatpush.bf16.msra.mxu0 0
    %1183 = vmatpush.bf16.msra.mxu0 0
    %1184 = vmatpush.bf16.msra.mxu0 %v634
    %1185 = vmatpush.bf16.msra.mxu0 %v570
    %1186 = vmatmul.bf16.gmra.mxu0 %v799
    %v1187 = vpop.f32.mrf.mxu0
    %v1188 = vadd.f32 0.0, %v1187
    %v1189 = vpop.f32.mrf.mxu0
    %1190 = vdwg.mxu0
    %1191 = vmatpush.bf16.msra.mxu0 0
    %1192 = vmatpush.bf16.msra.mxu0 0
    %1193 = vmatpush.bf16.msra.mxu0 0
    %1194 = vmatpush.bf16.msra.mxu0 0
    %1195 = vmatpush.bf16.msra.mxu0 0
    %1196 = vmatpush.bf16.msra.mxu0 0
    %1197 = vmatpush.bf16.msra.mxu0 %v635
    %1198 = vmatpush.bf16.msra.mxu0 %v571
    %1199 = vmatmul.bf16.gmra.mxu0 %v799
    %v1200 = vpop.f32.mrf.mxu0
    %v1201 = vadd.f32 0.0, %v1200
    %v1202 = vpop.f32.mrf.mxu0
    %1203 = vdwg.mxu0
    %1204 = vmatpush.bf16.msra.mxu0 0
    %1205 = vmatpush.bf16.msra.mxu0 0
    %1206 = vmatpush.bf16.msra.mxu0 0
    %1207 = vmatpush.bf16.msra.mxu0 0
    %1208 = vmatpush.bf16.msra.mxu0 0
    %1209 = vmatpush.bf16.msra.mxu0 0
    %1210 = vmatpush.bf16.msra.mxu0 %v636
    %1211 = vmatpush.bf16.msra.mxu0 %v572
    %1212 = vmatmul.bf16.gmra.mxu0 %v799
    %v1213 = vpop.f32.mrf.mxu0
    %v1214 = vadd.f32 0.0, %v1213
    %v1215 = vpop.f32.mrf.mxu0
    %1216 = vdwg.mxu0
    %1217 = vmatpush.bf16.msra.mxu0 0
    %1218 = vmatpush.bf16.msra.mxu0 0
    %1219 = vmatpush.bf16.msra.mxu0 0
    %1220 = vmatpush.bf16.msra.mxu0 0
    %1221 = vmatpush.bf16.msra.mxu0 0
    %1222 = vmatpush.bf16.msra.mxu0 0
    %1223 = vmatpush.bf16.msra.mxu0 %v637
    %1224 = vmatpush.bf16.msra.mxu0 %v573
    %1225 = vmatmul.bf16.gmra.mxu0 %v799
    %v1226 = vpop.f32.mrf.mxu0
    %v1227 = vadd.f32 0.0, %v1226
    %v1228 = vpop.f32.mrf.mxu0
    %1229 = vdwg.mxu0
    %1230 = vmatpush.bf16.msra.mxu0 0
    %1231 = vmatpush.bf16.msra.mxu0 0
    %1232 = vmatpush.bf16.msra.mxu0 0
    %1233 = vmatpush.bf16.msra.mxu0 0
    %1234 = vmatpush.bf16.msra.mxu0 0
    %1235 = vmatpush.bf16.msra.mxu0 0
    %1236 = vmatpush.bf16.msra.mxu0 %v638
    %1237 = vmatpush.bf16.msra.mxu0 %v574
    %1238 = vmatmul.bf16.gmra.mxu0 %v799
    %v1239 = vpop.f32.mrf.mxu0
    %v1240 = vadd.f32 0.0, %v1239
    %v1241 = vpop.f32.mrf.mxu0
    %1242 = vdwg.mxu0
    %1243 = vmatpush.bf16.msra.mxu0 0
    %1244 = vmatpush.bf16.msra.mxu0 0
    %1245 = vmatpush.bf16.msra.mxu0 0
    %1246 = vmatpush.bf16.msra.mxu0 0
    %1247 = vmatpush.bf16.msra.mxu0 0
    %1248 = vmatpush.bf16.msra.mxu0 0
    %1249 = vmatpush.bf16.msra.mxu0 %v639
    %1250 = vmatpush.bf16.msra.mxu0 %v575
    %1251 = vmatmul.bf16.gmra.mxu0 %v799
    %v1252 = vpop.f32.mrf.mxu0
    %v1253 = vadd.f32 0.0, %v1252
    %v1254 = vpop.f32.mrf.mxu0
    %1255 = vdwg.mxu0
    %1256 = vmatpush.bf16.msra.mxu0 0
    %1257 = vmatpush.bf16.msra.mxu0 0
    %1258 = vmatpush.bf16.msra.mxu0 0
    %1259 = vmatpush.bf16.msra.mxu0 0
    %1260 = vmatpush.bf16.msra.mxu0 0
    %1261 = vmatpush.bf16.msra.mxu0 0
    %1262 = vmatpush.bf16.msra.mxu0 %v640
    %1263 = vmatpush.bf16.msra.mxu0 %v576
    %1264 = vmatmul.bf16.gmra.mxu0 %v799
    %v1265 = vpop.f32.mrf.mxu0
    %v1266 = vadd.f32 0.0, %v1265
    %v1267 = vpop.f32.mrf.mxu0
    %1268 = vdwg.mxu0
    %1269 = vmatpush.bf16.msra.mxu0 0
    %1270 = vmatpush.bf16.msra.mxu0 0
    %1271 = vmatpush.bf16.msra.mxu0 0
    %1272 = vmatpush.bf16.msra.mxu0 0
    %1273 = vmatpush.bf16.msra.mxu0 0
    %1274 = vmatpush.bf16.msra.mxu0 0
    %1275 = vmatpush.bf16.msra.mxu0 %v641
    %1276 = vmatpush.bf16.msra.mxu0 %v577
    %1277 = vmatmul.bf16.gmra.mxu0 %v799
    %v1278 = vpop.f32.mrf.mxu0
    %v1279 = vadd.f32 0.0, %v1278
    %v1280 = vpop.f32.mrf.mxu0
    %1281 = vdwg.mxu0
    %1282 = vmatpush.bf16.msra.mxu0 0
    %1283 = vmatpush.bf16.msra.mxu0 0
    %1284 = vmatpush.bf16.msra.mxu0 0
    %1285 = vmatpush.bf16.msra.mxu0 0
    %1286 = vmatpush.bf16.msra.mxu0 0
    %1287 = vmatpush.bf16.msra.mxu0 0
    %1288 = vmatpush.bf16.msra.mxu0 %v642
    %1289 = vmatpush.bf16.msra.mxu0 %v578
    %1290 = vmatmul.bf16.gmra.mxu0 %v799
    %v1291 = vpop.f32.mrf.mxu0
    %v1292 = vadd.f32 0.0, %v1291
    %v1293 = vpop.f32.mrf.mxu0
    %1294 = vdwg.mxu0
    %1295 = vmatpush.bf16.msra.mxu0 0
    %1296 = vmatpush.bf16.msra.mxu0 0
    %1297 = vmatpush.bf16.msra.mxu0 0
    %1298 = vmatpush.bf16.msra.mxu0 0
    %1299 = vmatpush.bf16.msra.mxu0 0
    %1300 = vmatpush.bf16.msra.mxu0 0
    %1301 = vmatpush.bf16.msra.mxu0 %v643
    %1302 = vmatpush.bf16.msra.mxu0 %v579
    %1303 = vmatmul.bf16.gmra.mxu0 %v799
    %v1304 = vpop.f32.mrf.mxu0
    %v1305 = vadd.f32 0.0, %v1304
    %v1306 = vpop.f32.mrf.mxu0
    %1307 = vdwg.mxu0
    %1308 = vmatpush.bf16.msra.mxu0 0
    %1309 = vmatpush.bf16.msra.mxu0 0
    %1310 = vmatpush.bf16.msra.mxu0 0
    %1311 = vmatpush.bf16.msra.mxu0 0
    %1312 = vmatpush.bf16.msra.mxu0 0
    %1313 = vmatpush.bf16.msra.mxu0 0
    %1314 = vmatpush.bf16.msra.mxu0 %v644
    %1315 = vmatpush.bf16.msra.mxu0 %v580
    %1316 = vmatmul.bf16.gmra.mxu0 %v799
    %v1317 = vpop.f32.mrf.mxu0
    %v1318 = vadd.f32 0.0, %v1317
    %v1319 = vpop.f32.mrf.mxu0
    %1320 = vdwg.mxu0
    %1321 = vmatpush.bf16.msra.mxu0 0
    %1322 = vmatpush.bf16.msra.mxu0 0
    %1323 = vmatpush.bf16.msra.mxu0 0
    %1324 = vmatpush.bf16.msra.mxu0 0
    %1325 = vmatpush.bf16.msra.mxu0 0
    %1326 = vmatpush.bf16.msra.mxu0 0
    %1327 = vmatpush.bf16.msra.mxu0 %v645
    %1328 = vmatpush.bf16.msra.mxu0 %v581
    %1329 = vmatmul.bf16.gmra.mxu0 %v799
    %v1330 = vpop.f32.mrf.mxu0
    %v1331 = vadd.f32 0.0, %v1330
    %v1332 = vpop.f32.mrf.mxu0
    %1333 = vdwg.mxu0
    %1334 = vmatpush.bf16.msra.mxu0 0
    %1335 = vmatpush.bf16.msra.mxu0 0
    %1336 = vmatpush.bf16.msra.mxu0 0
    %1337 = vmatpush.bf16.msra.mxu0 0
    %1338 = vmatpush.bf16.msra.mxu0 0
    %1339 = vmatpush.bf16.msra.mxu0 0
    %1340 = vmatpush.bf16.msra.mxu0 %v646
    %1341 = vmatpush.bf16.msra.mxu0 %v582
    %1342 = vmatmul.bf16.gmra.mxu0 %v799
    %v1343 = vpop.f32.mrf.mxu0
    %v1344 = vadd.f32 0.0, %v1343
    %v1345 = vpop.f32.mrf.mxu0
    %1346 = vdwg.mxu0
    %1347 = vmatpush.bf16.msra.mxu0 0
    %1348 = vmatpush.bf16.msra.mxu0 0
    %1349 = vmatpush.bf16.msra.mxu0 0
    %1350 = vmatpush.bf16.msra.mxu0 0
    %1351 = vmatpush.bf16.msra.mxu0 0
    %1352 = vmatpush.bf16.msra.mxu0 0
    %1353 = vmatpush.bf16.msra.mxu0 %v647
    %1354 = vmatpush.bf16.msra.mxu0 %v583
    %1355 = vmatmul.bf16.gmra.mxu0 %v799
    %v1356 = vpop.f32.mrf.mxu0
    %v1357 = vadd.f32 0.0, %v1356
    %v1358 = vpop.f32.mrf.mxu0
    %1359 = vdwg.mxu0
    %1360 = vmatpush.bf16.msra.mxu0 0
    %1361 = vmatpush.bf16.msra.mxu0 0
    %1362 = vmatpush.bf16.msra.mxu0 0
    %1363 = vmatpush.bf16.msra.mxu0 0
    %1364 = vmatpush.bf16.msra.mxu0 0
    %1365 = vmatpush.bf16.msra.mxu0 0
    %1366 = vmatpush.bf16.msra.mxu0 %v648
    %1367 = vmatpush.bf16.msra.mxu0 %v584
    %1368 = vmatmul.bf16.gmra.mxu0 %v799
    %v1369 = vpop.f32.mrf.mxu0
    %v1370 = vadd.f32 0.0, %v1369
    %v1371 = vpop.f32.mrf.mxu0
    %1372 = vdwg.mxu0
    %1373 = vmatpush.bf16.msra.mxu0 0
    %1374 = vmatpush.bf16.msra.mxu0 0
    %1375 = vmatpush.bf16.msra.mxu0 0
    %1376 = vmatpush.bf16.msra.mxu0 0
    %1377 = vmatpush.bf16.msra.mxu0 0
    %1378 = vmatpush.bf16.msra.mxu0 0
    %1379 = vmatpush.bf16.msra.mxu0 %v649
    %1380 = vmatpush.bf16.msra.mxu0 %v585
    %1381 = vmatmul.bf16.gmra.mxu0 %v799
    %v1382 = vpop.f32.mrf.mxu0
    %v1383 = vadd.f32 0.0, %v1382
    %v1384 = vpop.f32.mrf.mxu0
    %1385 = vdwg.mxu0
    %1386 = vmatpush.bf16.msra.mxu0 0
    %1387 = vmatpush.bf16.msra.mxu0 0
    %1388 = vmatpush.bf16.msra.mxu0 0
    %1389 = vmatpush.bf16.msra.mxu0 0
    %1390 = vmatpush.bf16.msra.mxu0 0
    %1391 = vmatpush.bf16.msra.mxu0 0
    %1392 = vmatpush.bf16.msra.mxu0 %v650
    %1393 = vmatpush.bf16.msra.mxu0 %v586
    %1394 = vmatmul.bf16.gmra.mxu0 %v799
    %v1395 = vpop.f32.mrf.mxu0
    %v1396 = vadd.f32 0.0, %v1395
    %v1397 = vpop.f32.mrf.mxu0
    %1398 = vdwg.mxu0
    %1399 = vmatpush.bf16.msra.mxu0 0
    %1400 = vmatpush.bf16.msra.mxu0 0
    %1401 = vmatpush.bf16.msra.mxu0 0
    %1402 = vmatpush.bf16.msra.mxu0 0
    %1403 = vmatpush.bf16.msra.mxu0 0
    %1404 = vmatpush.bf16.msra.mxu0 0
    %1405 = vmatpush.bf16.msra.mxu0 %v651
    %1406 = vmatpush.bf16.msra.mxu0 %v587
    %1407 = vmatmul.bf16.gmra.mxu0 %v799
    %v1408 = vpop.f32.mrf.mxu0
    %v1409 = vadd.f32 0.0, %v1408
    %v1410 = vpop.f32.mrf.mxu0
    %1411 = vdwg.mxu0
    %1412 = vmatpush.bf16.msra.mxu0 0
    %1413 = vmatpush.bf16.msra.mxu0 0
    %1414 = vmatpush.bf16.msra.mxu0 0
    %1415 = vmatpush.bf16.msra.mxu0 0
    %1416 = vmatpush.bf16.msra.mxu0 0
    %1417 = vmatpush.bf16.msra.mxu0 0
    %1418 = vmatpush.bf16.msra.mxu0 %v652
    %1419 = vmatpush.bf16.msra.mxu0 %v588
    %1420 = vmatmul.bf16.gmra.mxu0 %v799
    %v1421 = vpop.f32.mrf.mxu0
    %v1422 = vadd.f32 0.0, %v1421
    %v1423 = vpop.f32.mrf.mxu0
    %1424 = vdwg.mxu0
    %1425 = vmatpush.bf16.msra.mxu0 0
    %1426 = vmatpush.bf16.msra.mxu0 0
    %1427 = vmatpush.bf16.msra.mxu0 0
    %1428 = vmatpush.bf16.msra.mxu0 0
    %1429 = vmatpush.bf16.msra.mxu0 0
    %1430 = vmatpush.bf16.msra.mxu0 0
    %1431 = vmatpush.bf16.msra.mxu0 %v653
    %1432 = vmatpush.bf16.msra.mxu0 %v589
    %1433 = vmatmul.bf16.gmra.mxu0 %v799
    %v1434 = vpop.f32.mrf.mxu0
    %v1435 = vadd.f32 0.0, %v1434
    %v1436 = vpop.f32.mrf.mxu0
    %1437 = vdwg.mxu0
    %1438 = vmatpush.bf16.msra.mxu0 0
    %1439 = vmatpush.bf16.msra.mxu0 0
    %1440 = vmatpush.bf16.msra.mxu0 0
    %1441 = vmatpush.bf16.msra.mxu0 0
    %1442 = vmatpush.bf16.msra.mxu0 0
    %1443 = vmatpush.bf16.msra.mxu0 0
    %1444 = vmatpush.bf16.msra.mxu0 %v654
    %1445 = vmatpush.bf16.msra.mxu0 %v590
    %1446 = vmatmul.bf16.gmra.mxu0 %v799
    %v1447 = vpop.f32.mrf.mxu0
    %v1448 = vadd.f32 0.0, %v1447
    %v1449 = vpop.f32.mrf.mxu0
    %1450 = vdwg.mxu0
    %1451 = vmatpush.bf16.msra.mxu0 0
    %1452 = vmatpush.bf16.msra.mxu0 0
    %1453 = vmatpush.bf16.msra.mxu0 0
    %1454 = vmatpush.bf16.msra.mxu0 0
    %1455 = vmatpush.bf16.msra.mxu0 0
    %1456 = vmatpush.bf16.msra.mxu0 0
    %1457 = vmatpush.bf16.msra.mxu0 %v655
    %1458 = vmatpush.bf16.msra.mxu0 %v591
    %1459 = vmatmul.bf16.gmra.mxu0 %v799
    %v1460 = vpop.f32.mrf.mxu0
    %v1461 = vadd.f32 0.0, %v1460
    %v1462 = vpop.f32.mrf.mxu0
    %1463 = vdwg.mxu0
    %1464 = vmatpush.bf16.msra.mxu0 0
    %1465 = vmatpush.bf16.msra.mxu0 0
    %1466 = vmatpush.bf16.msra.mxu0 0
    %1467 = vmatpush.bf16.msra.mxu0 0
    %1468 = vmatpush.bf16.msra.mxu0 0
    %1469 = vmatpush.bf16.msra.mxu0 0
    %1470 = vmatpush.bf16.msra.mxu0 %v656
    %1471 = vmatpush.bf16.msra.mxu0 %v592
    %1472 = vmatmul.bf16.gmra.mxu0 %v799
    %v1473 = vpop.f32.mrf.mxu0
    %v1474 = vadd.f32 0.0, %v1473
    %v1475 = vpop.f32.mrf.mxu0
    %1476 = vdwg.mxu0
    %1477 = vmatpush.bf16.msra.mxu0 0
    %1478 = vmatpush.bf16.msra.mxu0 0
    %1479 = vmatpush.bf16.msra.mxu0 0
    %1480 = vmatpush.bf16.msra.mxu0 0
    %1481 = vmatpush.bf16.msra.mxu0 0
    %1482 = vmatpush.bf16.msra.mxu0 0
    %1483 = vmatpush.bf16.msra.mxu0 %v657
    %1484 = vmatpush.bf16.msra.mxu0 %v593
    %1485 = vmatmul.bf16.gmra.mxu0 %v799
    %v1486 = vpop.f32.mrf.mxu0
    %v1487 = vadd.f32 0.0, %v1486
    %v1488 = vpop.f32.mrf.mxu0
    %1489 = vdwg.mxu0
    %1490 = vmatpush.bf16.msra.mxu0 0
    %1491 = vmatpush.bf16.msra.mxu0 0
    %1492 = vmatpush.bf16.msra.mxu0 0
    %1493 = vmatpush.bf16.msra.mxu0 0
    %1494 = vmatpush.bf16.msra.mxu0 0
    %1495 = vmatpush.bf16.msra.mxu0 0
    %1496 = vmatpush.bf16.msra.mxu0 %v658
    %1497 = vmatpush.bf16.msra.mxu0 %v594
    %1498 = vmatmul.bf16.gmra.mxu0 %v799
    %v1499 = vpop.f32.mrf.mxu0
    %v1500 = vadd.f32 0.0, %v1499
    %v1501 = vpop.f32.mrf.mxu0
    %1502 = vdwg.mxu0
    %1503 = vmatpush.bf16.msra.mxu0 0
    %1504 = vmatpush.bf16.msra.mxu0 0
    %1505 = vmatpush.bf16.msra.mxu0 0
    %1506 = vmatpush.bf16.msra.mxu0 0
    %1507 = vmatpush.bf16.msra.mxu0 0
    %1508 = vmatpush.bf16.msra.mxu0 0
    %1509 = vmatpush.bf16.msra.mxu0 %v659
    %1510 = vmatpush.bf16.msra.mxu0 %v595
    %1511 = vmatmul.bf16.gmra.mxu0 %v799
    %v1512 = vpop.f32.mrf.mxu0
    %v1513 = vadd.f32 0.0, %v1512
    %v1514 = vpop.f32.mrf.mxu0
    %1515 = vdwg.mxu0
    %1516 = vmatpush.bf16.msra.mxu0 0
    %1517 = vmatpush.bf16.msra.mxu0 0
    %1518 = vmatpush.bf16.msra.mxu0 0
    %1519 = vmatpush.bf16.msra.mxu0 0
    %1520 = vmatpush.bf16.msra.mxu0 0
    %1521 = vmatpush.bf16.msra.mxu0 0
    %1522 = vmatpush.bf16.msra.mxu0 %v660
    %1523 = vmatpush.bf16.msra.mxu0 %v596
    %1524 = vmatmul.bf16.gmra.mxu0 %v799
    %v1525 = vpop.f32.mrf.mxu0
    %v1526 = vadd.f32 0.0, %v1525
    %v1527 = vpop.f32.mrf.mxu0
    %1528 = vdwg.mxu0
    %1529 = vmatpush.bf16.msra.mxu0 0
    %1530 = vmatpush.bf16.msra.mxu0 0
    %1531 = vmatpush.bf16.msra.mxu0 0
    %1532 = vmatpush.bf16.msra.mxu0 0
    %1533 = vmatpush.bf16.msra.mxu0 0
    %1534 = vmatpush.bf16.msra.mxu0 0
    %1535 = vmatpush.bf16.msra.mxu0 %v661
    %1536 = vmatpush.bf16.msra.mxu0 %v597
    %1537 = vmatmul.bf16.gmra.mxu0 %v799
    %v1538 = vpop.f32.mrf.mxu0
    %v1539 = vadd.f32 0.0, %v1538
    %v1540 = vpop.f32.mrf.mxu0
    %1541 = vdwg.mxu0
    %1542 = vmatpush.bf16.msra.mxu0 0
    %1543 = vmatpush.bf16.msra.mxu0 0
    %1544 = vmatpush.bf16.msra.mxu0 0
    %1545 = vmatpush.bf16.msra.mxu0 0
    %1546 = vmatpush.bf16.msra.mxu0 0
    %1547 = vmatpush.bf16.msra.mxu0 0
    %1548 = vmatpush.bf16.msra.mxu0 %v662
    %1549 = vmatpush.bf16.msra.mxu0 %v598
    %1550 = vmatmul.bf16.gmra.mxu0 %v799
    %v1551 = vpop.f32.mrf.mxu0
    %v1552 = vadd.f32 0.0, %v1551
    %v1553 = vpop.f32.mrf.mxu0
    %1554 = vdwg.mxu0
    %1555 = vmatpush.bf16.msra.mxu0 0
    %1556 = vmatpush.bf16.msra.mxu0 0
    %1557 = vmatpush.bf16.msra.mxu0 0
    %1558 = vmatpush.bf16.msra.mxu0 0
    %1559 = vmatpush.bf16.msra.mxu0 0
    %1560 = vmatpush.bf16.msra.mxu0 0
    %1561 = vmatpush.bf16.msra.mxu0 %v663
    %1562 = vmatpush.bf16.msra.mxu0 %v599
    %1563 = vmatmul.bf16.gmra.mxu0 %v799
    %v1564 = vpop.f32.mrf.mxu0
    %v1565 = vadd.f32 0.0, %v1564
    %v1566 = vpop.f32.mrf.mxu0
    %1567 = vdwg.mxu0
    %1568 = vmatpush.bf16.msra.mxu0 0
    %1569 = vmatpush.bf16.msra.mxu0 0
    %1570 = vmatpush.bf16.msra.mxu0 0
    %1571 = vmatpush.bf16.msra.mxu0 0
    %1572 = vmatpush.bf16.msra.mxu0 0
    %1573 = vmatpush.bf16.msra.mxu0 0
    %1574 = vmatpush.bf16.msra.mxu0 %v664
    %1575 = vmatpush.bf16.msra.mxu0 %v600
    %1576 = vmatmul.bf16.gmra.mxu0 %v799
    %v1577 = vpop.f32.mrf.mxu0
    %v1578 = vadd.f32 0.0, %v1577
    %v1579 = vpop.f32.mrf.mxu0
    %1580 = vdwg.mxu0
    %1581 = vmatpush.bf16.msra.mxu0 0
    %1582 = vmatpush.bf16.msra.mxu0 0
    %1583 = vmatpush.bf16.msra.mxu0 0
    %1584 = vmatpush.bf16.msra.mxu0 0
    %1585 = vmatpush.bf16.msra.mxu0 0
    %1586 = vmatpush.bf16.msra.mxu0 0
    %1587 = vmatpush.bf16.msra.mxu0 %v665
    %1588 = vmatpush.bf16.msra.mxu0 %v601
    %1589 = vmatmul.bf16.gmra.mxu0 %v799
    %v1590 = vpop.f32.mrf.mxu0
    %v1591 = vadd.f32 0.0, %v1590
    %v1592 = vpop.f32.mrf.mxu0
    %1593 = vdwg.mxu0
    %1594 = vmatpush.bf16.msra.mxu0 0
    %1595 = vmatpush.bf16.msra.mxu0 0
    %1596 = vmatpush.bf16.msra.mxu0 0
    %1597 = vmatpush.bf16.msra.mxu0 0
    %1598 = vmatpush.bf16.msra.mxu0 0
    %1599 = vmatpush.bf16.msra.mxu0 0
    %1600 = vmatpush.bf16.msra.mxu0 %v666
    %1601 = vmatpush.bf16.msra.mxu0 %v602
    %1602 = vmatmul.bf16.gmra.mxu0 %v799
    %v1603 = vpop.f32.mrf.mxu0
    %v1604 = vadd.f32 0.0, %v1603
    %v1605 = vpop.f32.mrf.mxu0
    %1606 = vdwg.mxu0
    %1607 = vmatpush.bf16.msra.mxu0 0
    %1608 = vmatpush.bf16.msra.mxu0 0
    %1609 = vmatpush.bf16.msra.mxu0 0
    %1610 = vmatpush.bf16.msra.mxu0 0
    %1611 = vmatpush.bf16.msra.mxu0 0
    %1612 = vmatpush.bf16.msra.mxu0 0
    %1613 = vmatpush.bf16.msra.mxu0 %v667
    %1614 = vmatpush.bf16.msra.mxu0 %v603
    %1615 = vmatmul.bf16.gmra.mxu0 %v799
    %v1616 = vpop.f32.mrf.mxu0
    %v1617 = vadd.f32 0.0, %v1616
    %v1618 = vpop.f32.mrf.mxu0
    %1619 = vdwg.mxu0
    %1620 = vmatpush.bf16.msra.mxu0 0
    %1621 = vmatpush.bf16.msra.mxu0 0
    %1622 = vmatpush.bf16.msra.mxu0 0
    %1623 = vmatpush.bf16.msra.mxu0 0
    %1624 = vmatpush.bf16.msra.mxu0 0
    %1625 = vmatpush.bf16.msra.mxu0 0
    %1626 = vmatpush.bf16.msra.mxu0 %v668
    %1627 = vmatpush.bf16.msra.mxu0 %v604
    %1628 = vmatmul.bf16.gmra.mxu0 %v799
    %v1629 = vpop.f32.mrf.mxu0
    %v1630 = vadd.f32 0.0, %v1629
    %v1631 = vpop.f32.mrf.mxu0
    %1632 = vdwg.mxu0
    %v1633 = vpack.c.bf16 %v824, %v811
    %v1634 = vpack.c.bf16 %v850, %v837
    %v1635 = vpack.c.bf16 %v876, %v863
    %v1636 = vpack.c.bf16 %v902, %v889
    %v1637 = vpack.c.bf16 %v928, %v915
    %v1638 = vpack.c.bf16 %v954, %v941
    %v1639 = vpack.c.bf16 %v980, %v967
    %v1640 = vpack.c.bf16 %v1006, %v993
    %v1641 = vpack.c.bf16 %v1032, %v1019
    %v1642 = vpack.c.bf16 %v1058, %v1045
    %v1643 = vpack.c.bf16 %v1084, %v1071
    %v1644 = vpack.c.bf16 %v1110, %v1097
    %v1645 = vpack.c.bf16 %v1136, %v1123
    %v1646 = vpack.c.bf16 %v1162, %v1149
    %v1647 = vpack.c.bf16 %v1188, %v1175
    %v1648 = vpack.c.bf16 %v1214, %v1201
    %v1649 = vpack.c.bf16 %v1240, %v1227
    %v1650 = vpack.c.bf16 %v1266, %v1253
    %v1651 = vpack.c.bf16 %v1292, %v1279
    %v1652 = vpack.c.bf16 %v1318, %v1305
    %v1653 = vpack.c.bf16 %v1344, %v1331
    %v1654 = vpack.c.bf16 %v1370, %v1357
    %v1655 = vpack.c.bf16 %v1396, %v1383
    %v1656 = vpack.c.bf16 %v1422, %v1409
    %v1657 = vpack.c.bf16 %v1448, %v1435
    %v1658 = vpack.c.bf16 %v1474, %v1461
    %v1659 = vpack.c.bf16 %v1500, %v1487
    %v1660 = vpack.c.bf16 %v1526, %v1513
    %v1661 = vpack.c.bf16 %v1552, %v1539
    %v1662 = vpack.c.bf16 %v1578, %v1565
    %v1663 = vpack.c.bf16 %v1604, %v1591
    %v1664 = vpack.c.bf16 %v1630, %v1617
    %v1697 = vrot.slane %v1633, 3
    %v1698 = vrot.slane %v1634, 6
    %v1699 = vrot.slane %v1634, 1
    %v1700 = vrot.slane %v1635, 4
    %v1701 = vrot.slane %v1635, 7
    %v1702 = vrot.slane %v1636, 2
    %v1703 = vrot.slane %v1636, 5
    %v1704 = vrot.slane %v1637, 3
    %v1705 = vrot.slane %v1638, 6
    %v1706 = vrot.slane %v1638, 1
    %v1707 = vrot.slane %v1639, 4
    %v1708 = vrot.slane %v1639, 7
    %v1709 = vrot.slane %v1640, 2
    %v1710 = vrot.slane %v1640, 5
    %v1711 = vrot.slane %v1641, 3
    %v1712 = vrot.slane %v1642, 6
    %v1713 = vrot.slane %v1642, 1
    %v1714 = vrot.slane %v1643, 4
    %v1715 = vrot.slane %v1643, 7
    %v1716 = vrot.slane %v1644, 2
    %v1717 = vrot.slane %v1644, 5
    %v1718 = vrot.slane %v1645, 3
    %v1719 = vrot.slane %v1646, 6
    %v1720 = vrot.slane %v1646, 1
    %v1721 = vrot.slane %v1647, 4
    %v1722 = vrot.slane %v1647, 7
    %v1723 = vrot.slane %v1648, 2
    %v1724 = vrot.slane %v1648, 5
    %v1725 = vrot.slane %v1649, 3
    %v1726 = vrot.slane %v1650, 6
    %v1727 = vrot.slane %v1650, 1
    %v1728 = vrot.slane %v1651, 4
    %v1729 = vrot.slane %v1651, 7
    %v1730 = vrot.slane %v1652, 2
    %v1731 = vrot.slane %v1652, 5
    %v1732 = vrot.slane %v1653, 3
    %v1733 = vrot.slane %v1654, 6
    %v1734 = vrot.slane %v1654, 1
    %v1735 = vrot.slane %v1655, 4
    %v1736 = vrot.slane %v1655, 7
    %v1737 = vrot.slane %v1656, 2
    %v1738 = vrot.slane %v1656, 5
    %v1739 = vrot.slane %v1657, 3
    %v1740 = vrot.slane %v1658, 6
    %v1741 = vrot.slane %v1658, 1
    %v1742 = vrot.slane %v1659, 4
    %v1743 = vrot.slane %v1659, 7
    %v1744 = vrot.slane %v1660, 2
    %v1745 = vrot.slane %v1660, 5
    %v1746 = vrot.slane %v1661, 3
    %v1747 = vrot.slane %v1662, 6
    %v1748 = vrot.slane %v1662, 1
    %v1749 = vrot.slane %v1663, 4
    %v1750 = vrot.slane %v1663, 7
    %v1751 = vrot.slane %v1664, 2
    %v1752 = vrot.slane %v1664, 5
    %vm1753 = vcmask 1040384
    %v1756 = vsel %vm1753, %v1633, %v1697
    %vm1757 = vcmask 1042434
    %v1760 = vsel %vm1757, %v1698, %v1699
    %vm1761 = vcmask 1041408
    %v1762 = vsel %vm1761, %v1756, %v1760
    %vm1763 = vcmask 1044484
    %v1766 = vsel %vm1763, %v1700, %v1701
    %vm1767 = vcmask 1046534
    %v1770 = vsel %vm1767, %v1702, %v1703
    %vm1771 = vcmask 1045508
    %v1772 = vsel %vm1771, %v1766, %v1770
    %vm1773 = vcmask 1043456
    %v1774 = vsel %vm1773, %v1762, %v1772
    %v1777 = vsel %vm1753, %v1637, %v1704
    %v1780 = vsel %vm1757, %v1705, %v1706
    %v1781 = vsel %vm1761, %v1777, %v1780
    %v1784 = vsel %vm1763, %v1707, %v1708
    %v1787 = vsel %vm1767, %v1709, %v1710
    %v1788 = vsel %vm1771, %v1784, %v1787
    %v1789 = vsel %vm1773, %v1781, %v1788
    %v1792 = vsel %vm1753, %v1641, %v1711
    %v1795 = vsel %vm1757, %v1712, %v1713
    %v1796 = vsel %vm1761, %v1792, %v1795
    %v1799 = vsel %vm1763, %v1714, %v1715
    %v1802 = vsel %vm1767, %v1716, %v1717
    %v1803 = vsel %vm1771, %v1799, %v1802
    %v1804 = vsel %vm1773, %v1796, %v1803
    %v1807 = vsel %vm1753, %v1645, %v1718
    %v1810 = vsel %vm1757, %v1719, %v1720
    %v1811 = vsel %vm1761, %v1807, %v1810
    %v1814 = vsel %vm1763, %v1721, %v1722
    %v1817 = vsel %vm1767, %v1723, %v1724
    %v1818 = vsel %vm1771, %v1814, %v1817
    %v1819 = vsel %vm1773, %v1811, %v1818
    %v1822 = vsel %vm1753, %v1649, %v1725
    %v1825 = vsel %vm1757, %v1726, %v1727
    %v1826 = vsel %vm1761, %v1822, %v1825
    %v1829 = vsel %vm1763, %v1728, %v1729
    %v1832 = vsel %vm1767, %v1730, %v1731
    %v1833 = vsel %vm1771, %v1829, %v1832
    %v1834 = vsel %vm1773, %v1826, %v1833
    %v1837 = vsel %vm1753, %v1653, %v1732
    %v1840 = vsel %vm1757, %v1733, %v1734
    %v1841 = vsel %vm1761, %v1837, %v1840
    %v1844 = vsel %vm1763, %v1735, %v1736
    %v1847 = vsel %vm1767, %v1737, %v1738
    %v1848 = vsel %vm1771, %v1844, %v1847
    %v1849 = vsel %vm1773, %v1841, %v1848
    %v1852 = vsel %vm1753, %v1657, %v1739
    %v1855 = vsel %vm1757, %v1740, %v1741
    %v1856 = vsel %vm1761, %v1852, %v1855
    %v1859 = vsel %vm1763, %v1742, %v1743
    %v1862 = vsel %vm1767, %v1744, %v1745
    %v1863 = vsel %vm1771, %v1859, %v1862
    %v1864 = vsel %vm1773, %v1856, %v1863
    %v1867 = vsel %vm1753, %v1661, %v1746
    %v1870 = vsel %vm1757, %v1747, %v1748
    %v1871 = vsel %vm1761, %v1867, %v1870
    %v1874 = vsel %vm1763, %v1749, %v1750
    %v1877 = vsel %vm1767, %v1751, %v1752
    %v1878 = vsel %vm1771, %v1874, %v1877
    %v1879 = vsel %vm1773, %v1871, %v1878
    %1888 = vst [vmem:[%s2] sm:$0xff] %v1774
    %1889 = vst [vmem:[%s2 + $0x8] sm:$0xff] %v1789
    %1890 = vst [vmem:[%s2 + $0x10] sm:$0xff] %v1804
    %1891 = vst [vmem:[%s2 + $0x18] sm:$0xff] %v1819
    %1892 = vst [vmem:[%s2 + $0x20] sm:$0xff] %v1834
    %1893 = vst [vmem:[%s2 + $0x28] sm:$0xff] %v1849
    %1894 = vst [vmem:[%s2 + $0x30] sm:$0xff] %v1864
    %1895 = vst [vmem:[%s2 + $0x38] sm:$0xff] %v1879
    // Predicated region
    $region14: #{dec_txt_forward.7} parent=1 // pred_check
      _
    $region15: #{dec_txt_forward.7} parent=1 // pred_check_branch
      %1897 = sbr.rel (0) target = $region17
    $region16: #{dec_txt_forward.7} parent=1 // pred_region
      _
    $region17: #{dec_txt_forward.7} parent=1 // pred_fallthru
      _
    // Predicated region
    $region18: #{dec_txt_forward.7} parent=1 // pred_check
      _
    $region19: #{dec_txt_forward.7} parent=1 // pred_check_branch
      %1899 = sbr.rel (0) target = $region21
    $region20: #{dec_txt_forward.7} parent=1 // pred_region
      _
    $region21: #{dec_txt_forward.7} parent=1 // pred_fallthru
      _
    %1900 = vsyncpa [#allocation3], 1

// kernel: dec_txt_forward.8
$region0: #{dec_txt_forward.8}
  #allocation0 [shape = 'u32[]', space=smem, size = 0x4, offset = 0x4, fixed_abs, tag = 'smem constant byte address 0x4 - core index']
  #allocation1 [shape = 'u32[72,128]{1,0:T(1,128)}', space=vmem, size = 0x9000, scoped, tag = 'internal scratch']
  %s0 = inlined_call_operand.vmem [shape: bf16[32,512], index: 0, kind: input, shape index: {}]
  %s1 = inlined_call_operand.hbm [shape: bf16[512,1024], index: 1, kind: input, shape index: {}]
  %s2 = inlined_call_operand.hbm [shape: f32[1,512], index: 2, kind: input, shape index: {}]
  %s3 = inlined_call_operand.vmem [shape: bf16[32,1024], index: 3, kind: output, shape index: {}]
  %s4 = sld [smem:[#allocation0]]
  $region30: #{dec_txt_forward.8} parent=0
    _
  %s6 = ssub.s32 1, %s4
  %s7 = scalar_select 0, %s6, %s4
  $region1: #{dec_txt_forward.8} parent=0
    #allocation2 [shape = 'u8[1048576]{0}', space=vmem, size = 0x100000, scoped, tag = 'input window, operand 1, single buffered']
    #allocation3 [shape = 's32[1]{0}', space=sflag, size = 0x4, scoped, tag = 'scoped memory for dec_txt_forward.8']
    #allocation4 [shape = 'u8[2048]{0}', space=vmem, size = 0x800, scoped, tag = 'input window, operand 2, single buffered']
    #allocation5 [shape = 's32[1]{0}', space=sflag, size = 0x4, scoped, tag = 'scoped memory for dec_txt_forward.8']
    %8 = vsyncpa [#allocation3], 0
    %9 = vsyncpa [#allocation5], 0
    // Predicated region
    $region2: #{dec_txt_forward.8} parent=1 // pred_check
      _
    $region3: #{dec_txt_forward.8} parent=1 // pred_check_branch
      %11 = sbr.rel (0) target = $region5
    $region4: #{dec_txt_forward.8} parent=1 // pred_region
      _
    $region5: #{dec_txt_forward.8} parent=1 // pred_fallthru
      _
    // Predicated region
    $region6: #{dec_txt_forward.8} parent=1 // pred_check
      _
    $region7: #{dec_txt_forward.8} parent=1 // pred_check_branch
      %13 = sbr.rel (0) target = $region9
    $region8: #{dec_txt_forward.8} parent=1 // pred_region
      %15 = vsyncadd [#allocation3], 0
      %s16 = sshll.u32 %s1, 4
      %s17 = int_to_ptr.hbm [resolvable:$true] %s16
      %s18 = sshll.u32 [#allocation2], 4
      %s19 = int_to_ptr.vmem [resolvable:$true] %s18
      %24 = dma.hbm_to_vmem [thread:$0]  %s17, 32768, %s19, [#allocation3], 512, 512, 32
    $region9: #{dec_txt_forward.8} parent=1 // pred_fallthru
      _
    // Predicated region
    $region10: #{dec_txt_forward.8} parent=1 // pred_check
      _
    $region11: #{dec_txt_forward.8} parent=1 // pred_check_branch
      %26 = sbr.rel (0) target = $region13
    $region12: #{dec_txt_forward.8} parent=1 // pred_region
      %28 = vsyncadd [#allocation5], 0
      %s30 = sshll.u32 %s2, 4
      %s31 = int_to_ptr.hbm [resolvable:$true] %s30
      %s32 = sshll.u32 [#allocation4], 4
      %s33 = int_to_ptr.vmem [resolvable:$true] %s32
      %35 = dma.hbm_to_vmem [thread:$0]  %s31, 64, %s33, [#allocation5]
    $region13: #{dec_txt_forward.8} parent=1 // pred_fallthru
      _
    // Predicated region
    $region14: #{dec_txt_forward.8} parent=1 // pred_check
      _
    $region15: #{dec_txt_forward.8} parent=1 // pred_check_branch
      %37 = sbr.rel (0) target = $region17
    $region16: #{dec_txt_forward.8} parent=1 // pred_region
      %39 = dma.done [#allocation3], 32768
    $region17: #{dec_txt_forward.8} parent=1 // pred_fallthru
      _
    // Predicated region
    $region18: #{dec_txt_forward.8} parent=1 // pred_check
      _
    $region19: #{dec_txt_forward.8} parent=1 // pred_check_branch
      %41 = sbr.rel (0) target = $region21
    $region20: #{dec_txt_forward.8} parent=1 // pred_region
      %43 = dma.done [#allocation5], 64
    $region21: #{dec_txt_forward.8} parent=1 // pred_fallthru
      _
    %v44 = vld [vmem:[%s0] sm:$0xff]
    %v45 = vld [vmem:[%s0 + $0x8] sm:$0xff]
    %v46 = vld [vmem:[%s0 + $0x10] sm:$0xff]
    %v47 = vld [vmem:[%s0 + $0x18] sm:$0xff]
    %v48 = vld [vmem:[%s0 + $0x20] sm:$0xff]
    %v49 = vld [vmem:[%s0 + $0x28] sm:$0xff]
    %v50 = vld [vmem:[%s0 + $0x30] sm:$0xff]
    %v51 = vld [vmem:[%s0 + $0x38] sm:$0xff]
    %v52 = vunpack.c.l.bf16 %v44
    %v53 = vunpack.c.h.bf16 %v44
    %v54 = vunpack.c.l.bf16 %v45
    %v55 = vunpack.c.h.bf16 %v45
    %v56 = vunpack.c.l.bf16 %v46
    %v57 = vunpack.c.h.bf16 %v46
    %v58 = vunpack.c.l.bf16 %v47
    %v59 = vunpack.c.h.bf16 %v47
    %v60 = vunpack.c.l.bf16 %v48
    %v61 = vunpack.c.h.bf16 %v48
    %v62 = vunpack.c.l.bf16 %v49
    %v63 = vunpack.c.h.bf16 %v49
    %v64 = vunpack.c.l.bf16 %v50
    %v65 = vunpack.c.h.bf16 %v50
    %v66 = vunpack.c.l.bf16 %v51
    %v67 = vunpack.c.h.bf16 %v51
    %v68 = vld [vmem:[#allocation4] sm:$0xf]
    %v70 = vperm.slane %v68, 0
    %v71 = vperm.slane %v68, 1
    %v72 = vperm.slane %v68, 2
    %v73 = vperm.slane %v68, 3
    %v78 = vadd.f32 %v52, %v70
    %v79 = vadd.f32 %v53, %v71
    %v80 = vadd.f32 %v54, %v72
    %v81 = vadd.f32 %v55, %v73
    %v82 = vadd.f32 %v56, %v70
    %v83 = vadd.f32 %v57, %v71
    %v84 = vadd.f32 %v58, %v72
    %v85 = vadd.f32 %v59, %v73
    %v86 = vadd.f32 %v60, %v70
    %v87 = vadd.f32 %v61, %v71
    %v88 = vadd.f32 %v62, %v72
    %v89 = vadd.f32 %v63, %v73
    %v90 = vadd.f32 %v64, %v70
    %v91 = vadd.f32 %v65, %v71
    %v92 = vadd.f32 %v66, %v72
    %v93 = vadd.f32 %v67, %v73
    %v94 = vmax.f32 %v78, 0.0
    %v95 = vmax.f32 %v79, 0.0
    %v96 = vmax.f32 %v80, 0.0
    %v97 = vmax.f32 %v81, 0.0
    %v98 = vmax.f32 %v82, 0.0
    %v99 = vmax.f32 %v83, 0.0
    %v100 = vmax.f32 %v84, 0.0
    %v101 = vmax.f32 %v85, 0.0
    %v102 = vmax.f32 %v86, 0.0
    %v103 = vmax.f32 %v87, 0.0
    %v104 = vmax.f32 %v88, 0.0
    %v105 = vmax.f32 %v89, 0.0
    %v106 = vmax.f32 %v90, 0.0
    %v107 = vmax.f32 %v91, 0.0
    %v108 = vmax.f32 %v92, 0.0
    %v109 = vmax.f32 %v93, 0.0
    %v110 = vpack.c.bf16 %v98, %v94
    %v111 = vpack.c.bf16 %v99, %v95
    %v112 = vpack.c.bf16 %v100, %v96
    %v113 = vpack.c.bf16 %v101, %v97
    %v114 = vpack.c.bf16 %v106, %v102
    %v115 = vpack.c.bf16 %v107, %v103
    %v116 = vpack.c.bf16 %v108, %v104
    %v117 = vpack.c.bf16 %v109, %v105
    %v118 = vld [vmem:[#allocation2] sm:$0xff]
    %v119 = vld [vmem:[#allocation2 + $0x8] sm:$0xff]
    %v120 = vld [vmem:[#allocation2 + $0x10] sm:$0xff]
    %v121 = vld [vmem:[#allocation2 + $0x18] sm:$0xff]
    %v122 = vld [vmem:[#allocation2 + $0x20] sm:$0xff]
    %v123 = vld [vmem:[#allocation2 + $0x28] sm:$0xff]
    %v124 = vld [vmem:[#allocation2 + $0x30] sm:$0xff]
    %v125 = vld [vmem:[#allocation2 + $0x38] sm:$0xff]
    %v126 = vld [vmem:[#allocation2 + $0x40] sm:$0xff]
    %v127 = vld [vmem:[#allocation2 + $0x48] sm:$0xff]
    %v128 = vld [vmem:[#allocation2 + $0x50] sm:$0xff]
    %v129 = vld [vmem:[#allocation2 + $0x58] sm:$0xff]
    %v130 = vld [vmem:[#allocation2 + $0x60] sm:$0xff]
    %v131 = vld [vmem:[#allocation2 + $0x68] sm:$0xff]
    %v132 = vld [vmem:[#allocation2 + $0x70] sm:$0xff]
    %v133 = vld [vmem:[#allocation2 + $0x78] sm:$0xff]
    %v134 = vld [vmem:[#allocation2 + $0x80] sm:$0xff]
    %v135 = vld [vmem:[#allocation2 + $0x88] sm:$0xff]
    %v136 = vld [vmem:[#allocation2 + $0x90] sm:$0xff]
    %v137 = vld [vmem:[#allocation2 + $0x98] sm:$0xff]
    %v138 = vld [vmem:[#allocation2 + $0xa0] sm:$0xff]
    %v139 = vld [vmem:[#allocation2 + $0xa8] sm:$0xff]
    %v140 = vld [vmem:[#allocation2 + $0xb0] sm:$0xff]
    %v141 = vld [vmem:[#allocation2 + $0xb8] sm:$0xff]
    %v142 = vld [vmem:[#allocation2 + $0xc0] sm:$0xff]
    %v143 = vld [vmem:[#allocation2 + $0xc8] sm:$0xff]
    %v144 = vld [vmem:[#allocation2 + $0xd0] sm:$0xff]
    %v145 = vld [vmem:[#allocation2 + $0xd8] sm:$0xff]
    %v146 = vld [vmem:[#allocation2 + $0xe0] sm:$0xff]
    %v147 = vld [vmem:[#allocation2 + $0xe8] sm:$0xff]
    %v148 = vld [vmem:[#allocation2 + $0xf0] sm:$0xff]
    %v149 = vld [vmem:[#allocation2 + $0xf8] sm:$0xff]
    %v150 = vld [vmem:[#allocation2 + $0x100] sm:$0xff]
    %v151 = vld [vmem:[#allocation2 + $0x108] sm:$0xff]
    %v152 = vld [vmem:[#allocation2 + $0x110] sm:$0xff]
    %v153 = vld [vmem:[#allocation2 + $0x118] sm:$0xff]
    %v154 = vld [vmem:[#allocation2 + $0x120] sm:$0xff]
    %v155 = vld [vmem:[#allocation2 + $0x128] sm:$0xff]
    %v156 = vld [vmem:[#allocation2 + $0x130] sm:$0xff]
    %v157 = vld [vmem:[#allocation2 + $0x138] sm:$0xff]
    %v158 = vld [vmem:[#allocation2 + $0x140] sm:$0xff]
    %v159 = vld [vmem:[#allocation2 + $0x148] sm:$0xff]
    %v160 = vld [vmem:[#allocation2 + $0x150] sm:$0xff]
    %v161 = vld [vmem:[#allocation2 + $0x158] sm:$0xff]
    %v162 = vld [vmem:[#allocation2 + $0x160] sm:$0xff]
    %v163 = vld [vmem:[#allocation2 + $0x168] sm:$0xff]
    %v164 = vld [vmem:[#allocation2 + $0x170] sm:$0xff]
    %v165 = vld [vmem:[#allocation2 + $0x178] sm:$0xff]
    %v166 = vld [vmem:[#allocation2 + $0x180] sm:$0xff]
    %v167 = vld [vmem:[#allocation2 + $0x188] sm:$0xff]
    %v168 = vld [vmem:[#allocation2 + $0x190] sm:$0xff]
    %v169 = vld [vmem:[#allocation2 + $0x198] sm:$0xff]
    %v170 = vld [vmem:[#allocation2 + $0x1a0] sm:$0xff]
    %v171 = vld [vmem:[#allocation2 + $0x1a8] sm:$0xff]
    %v172 = vld [vmem:[#allocation2 + $0x1b0] sm:$0xff]
    %v173 = vld [vmem:[#allocation2 + $0x1b8] sm:$0xff]
    %v174 = vld [vmem:[#allocation2 + $0x1c0] sm:$0xff]
    %v175 = vld [vmem:[#allocation2 + $0x1c8] sm:$0xff]
    %v176 = vld [vmem:[#allocation2 + $0x1d0] sm:$0xff]
    %v177 = vld [vmem:[#allocation2 + $0x1d8] sm:$0xff]
    %v178 = vld [vmem:[#allocation2 + $0x1e0] sm:$0xff]
    %v179 = vld [vmem:[#allocation2 + $0x1e8] sm:$0xff]
    %v180 = vld [vmem:[#allocation2 + $0x1f0] sm:$0xff]
    %v181 = vld [vmem:[#allocation2 + $0x1f8] sm:$0xff]
    %v182 = vld [vmem:[#allocation2 + $0x200] sm:$0xff]
    %v183 = vld [vmem:[#allocation2 + $0x208] sm:$0xff]
    %v184 = vld [vmem:[#allocation2 + $0x210] sm:$0xff]
    %v185 = vld [vmem:[#allocation2 + $0x218] sm:$0xff]
    %v186 = vld [vmem:[#allocation2 + $0x220] sm:$0xff]
    %v187 = vld [vmem:[#allocation2 + $0x228] sm:$0xff]
    %v188 = vld [vmem:[#allocation2 + $0x230] sm:$0xff]
    %v189 = vld [vmem:[#allocation2 + $0x238] sm:$0xff]
    %v190 = vld [vmem:[#allocation2 + $0x240] sm:$0xff]
    %v191 = vld [vmem:[#allocation2 + $0x248] sm:$0xff]
    %v192 = vld [vmem:[#allocation2 + $0x250] sm:$0xff]
    %v193 = vld [vmem:[#allocation2 + $0x258] sm:$0xff]
    %v194 = vld [vmem:[#allocation2 + $0x260] sm:$0xff]
    %v195 = vld [vmem:[#allocation2 + $0x268] sm:$0xff]
    %v196 = vld [vmem:[#allocation2 + $0x270] sm:$0xff]
    %v197 = vld [vmem:[#allocation2 + $0x278] sm:$0xff]
    %v198 = vld [vmem:[#allocation2 + $0x280] sm:$0xff]
    %v199 = vld [vmem:[#allocation2 + $0x288] sm:$0xff]
    %v200 = vld [vmem:[#allocation2 + $0x290] sm:$0xff]
    %v201 = vld [vmem:[#allocation2 + $0x298] sm:$0xff]
    %v202 = vld [vmem:[#allocation2 + $0x2a0] sm:$0xff]
    %v203 = vld [vmem:[#allocation2 + $0x2a8] sm:$0xff]
    %v204 = vld [vmem:[#allocation2 + $0x2b0] sm:$0xff]
    %v205 = vld [vmem:[#allocation2 + $0x2b8] sm:$0xff]
    %v206 = vld [vmem:[#allocation2 + $0x2c0] sm:$0xff]
    %v207 = vld [vmem:[#allocation2 + $0x2c8] sm:$0xff]
    %v208 = vld [vmem:[#allocation2 + $0x2d0] sm:$0xff]
    %v209 = vld [vmem:[#allocation2 + $0x2d8] sm:$0xff]
    %v210 = vld [vmem:[#allocation2 + $0x2e0] sm:$0xff]
    %v211 = vld [vmem:[#allocation2 + $0x2e8] sm:$0xff]
    %v212 = vld [vmem:[#allocation2 + $0x2f0] sm:$0xff]
    %v213 = vld [vmem:[#allocation2 + $0x2f8] sm:$0xff]
    %v214 = vld [vmem:[#allocation2 + $0x300] sm:$0xff]
    %v215 = vld [vmem:[#allocation2 + $0x308] sm:$0xff]
    %v216 = vld [vmem:[#allocation2 + $0x310] sm:$0xff]
    %v217 = vld [vmem:[#allocation2 + $0x318] sm:$0xff]
    %v218 = vld [vmem:[#allocation2 + $0x320] sm:$0xff]
    %v219 = vld [vmem:[#allocation2 + $0x328] sm:$0xff]
    %v220 = vld [vmem:[#allocation2 + $0x330] sm:$0xff]
    %v221 = vld [vmem:[#allocation2 + $0x338] sm:$0xff]
    %v222 = vld [vmem:[#allocation2 + $0x340] sm:$0xff]
    %v223 = vld [vmem:[#allocation2 + $0x348] sm:$0xff]
    %v224 = vld [vmem:[#allocation2 + $0x350] sm:$0xff]
    %v225 = vld [vmem:[#allocation2 + $0x358] sm:$0xff]
    %v226 = vld [vmem:[#allocation2 + $0x360] sm:$0xff]
    %v227 = vld [vmem:[#allocation2 + $0x368] sm:$0xff]
    %v228 = vld [vmem:[#allocation2 + $0x370] sm:$0xff]
    %v229 = vld [vmem:[#allocation2 + $0x378] sm:$0xff]
    %v230 = vld [vmem:[#allocation2 + $0x380] sm:$0xff]
    %v231 = vld [vmem:[#allocation2 + $0x388] sm:$0xff]
    %v232 = vld [vmem:[#allocation2 + $0x390] sm:$0xff]
    %v233 = vld [vmem:[#allocation2 + $0x398] sm:$0xff]
    %v234 = vld [vmem:[#allocation2 + $0x3a0] sm:$0xff]
    %v235 = vld [vmem:[#allocation2 + $0x3a8] sm:$0xff]
    %v236 = vld [vmem:[#allocation2 + $0x3b0] sm:$0xff]
    %v237 = vld [vmem:[#allocation2 + $0x3b8] sm:$0xff]
    %v238 = vld [vmem:[#allocation2 + $0x3c0] sm:$0xff]
    %v239 = vld [vmem:[#allocation2 + $0x3c8] sm:$0xff]
    %v240 = vld [vmem:[#allocation2 + $0x3d0] sm:$0xff]
    %v241 = vld [vmem:[#allocation2 + $0x3d8] sm:$0xff]
    %v242 = vld [vmem:[#allocation2 + $0x3e0] sm:$0xff]
    %v243 = vld [vmem:[#allocation2 + $0x3e8] sm:$0xff]
    %v244 = vld [vmem:[#allocation2 + $0x3f0] sm:$0xff]
    %v245 = vld [vmem:[#allocation2 + $0x3f8] sm:$0xff]
    %v246 = vld [vmem:[#allocation2 + $0x400] sm:$0xff]
    %v247 = vld [vmem:[#allocation2 + $0x408] sm:$0xff]
    %v248 = vld [vmem:[#allocation2 + $0x410] sm:$0xff]
    %v249 = vld [vmem:[#allocation2 + $0x418] sm:$0xff]
    %v250 = vld [vmem:[#allocation2 + $0x420] sm:$0xff]
    %v251 = vld [vmem:[#allocation2 + $0x428] sm:$0xff]
    %v252 = vld [vmem:[#allocation2 + $0x430] sm:$0xff]
    %v253 = vld [vmem:[#allocation2 + $0x438] sm:$0xff]
    %v254 = vld [vmem:[#allocation2 + $0x440] sm:$0xff]
    %v255 = vld [vmem:[#allocation2 + $0x448] sm:$0xff]
    %v256 = vld [vmem:[#allocation2 + $0x450] sm:$0xff]
    %v257 = vld [vmem:[#allocation2 + $0x458] sm:$0xff]
    %v258 = vld [vmem:[#allocation2 + $0x460] sm:$0xff]
    %v259 = vld [vmem:[#allocation2 + $0x468] sm:$0xff]
    %v260 = vld [vmem:[#allocation2 + $0x470] sm:$0xff]
    %v261 = vld [vmem:[#allocation2 + $0x478] sm:$0xff]
    %v262 = vld [vmem:[#allocation2 + $0x480] sm:$0xff]
    %v263 = vld [vmem:[#allocation2 + $0x488] sm:$0xff]
    %v264 = vld [vmem:[#allocation2 + $0x490] sm:$0xff]
    %v265 = vld [vmem:[#allocation2 + $0x498] sm:$0xff]
    %v266 = vld [vmem:[#allocation2 + $0x4a0] sm:$0xff]
    %v267 = vld [vmem:[#allocation2 + $0x4a8] sm:$0xff]
    %v268 = vld [vmem:[#allocation2 + $0x4b0] sm:$0xff]
    %v269 = vld [vmem:[#allocation2 + $0x4b8] sm:$0xff]
    %v270 = vld [vmem:[#allocation2 + $0x4c0] sm:$0xff]
    %v271 = vld [vmem:[#allocation2 + $0x4c8] sm:$0xff]
    %v272 = vld [vmem:[#allocation2 + $0x4d0] sm:$0xff]
    %v273 = vld [vmem:[#allocation2 + $0x4d8] sm:$0xff]
    %v274 = vld [vmem:[#allocation2 + $0x4e0] sm:$0xff]
    %v275 = vld [vmem:[#allocation2 + $0x4e8] sm:$0xff]
    %v276 = vld [vmem:[#allocation2 + $0x4f0] sm:$0xff]
    %v277 = vld [vmem:[#allocation2 + $0x4f8] sm:$0xff]
    %v278 = vld [vmem:[#allocation2 + $0x500] sm:$0xff]
    %v279 = vld [vmem:[#allocation2 + $0x508] sm:$0xff]
    %v280 = vld [vmem:[#allocation2 + $0x510] sm:$0xff]
    %v281 = vld [vmem:[#allocation2 + $0x518] sm:$0xff]
    %v282 = vld [vmem:[#allocation2 + $0x520] sm:$0xff]
    %v283 = vld [vmem:[#allocation2 + $0x528] sm:$0xff]
    %v284 = vld [vmem:[#allocation2 + $0x530] sm:$0xff]
    %v285 = vld [vmem:[#allocation2 + $0x538] sm:$0xff]
    %v286 = vld [vmem:[#allocation2 + $0x540] sm:$0xff]
    %v287 = vld [vmem:[#allocation2 + $0x548] sm:$0xff]
    %v288 = vld [vmem:[#allocation2 + $0x550] sm:$0xff]
    %v289 = vld [vmem:[#allocation2 + $0x558] sm:$0xff]
    %v290 = vld [vmem:[#allocation2 + $0x560] sm:$0xff]
    %v291 = vld [vmem:[#allocation2 + $0x568] sm:$0xff]
    %v292 = vld [vmem:[#allocation2 + $0x570] sm:$0xff]
    %v293 = vld [vmem:[#allocation2 + $0x578] sm:$0xff]
    %v294 = vld [vmem:[#allocation2 + $0x580] sm:$0xff]
    %v295 = vld [vmem:[#allocation2 + $0x588] sm:$0xff]
    %v296 = vld [vmem:[#allocation2 + $0x590] sm:$0xff]
    %v297 = vld [vmem:[#allocation2 + $0x598] sm:$0xff]
    %v298 = vld [vmem:[#allocation2 + $0x5a0] sm:$0xff]
    %v299 = vld [vmem:[#allocation2 + $0x5a8] sm:$0xff]
    %v300 = vld [vmem:[#allocation2 + $0x5b0] sm:$0xff]
    %v301 = vld [vmem:[#allocation2 + $0x5b8] sm:$0xff]
    %v302 = vld [vmem:[#allocation2 + $0x5c0] sm:$0xff]
    %v303 = vld [vmem:[#allocation2 + $0x5c8] sm:$0xff]
    %v304 = vld [vmem:[#allocation2 + $0x5d0] sm:$0xff]
    %v305 = vld [vmem:[#allocation2 + $0x5d8] sm:$0xff]
    %v306 = vld [vmem:[#allocation2 + $0x5e0] sm:$0xff]
    %v307 = vld [vmem:[#allocation2 + $0x5e8] sm:$0xff]
    %v308 = vld [vmem:[#allocation2 + $0x5f0] sm:$0xff]
    %v309 = vld [vmem:[#allocation2 + $0x5f8] sm:$0xff]
    %v310 = vld [vmem:[#allocation2 + $0x600] sm:$0xff]
    %v311 = vld [vmem:[#allocation2 + $0x608] sm:$0xff]
    %v312 = vld [vmem:[#allocation2 + $0x610] sm:$0xff]
    %v313 = vld [vmem:[#allocation2 + $0x618] sm:$0xff]
    %v314 = vld [vmem:[#allocation2 + $0x620] sm:$0xff]
    %v315 = vld [vmem:[#allocation2 + $0x628] sm:$0xff]
    %v316 = vld [vmem:[#allocation2 + $0x630] sm:$0xff]
    %v317 = vld [vmem:[#allocation2 + $0x638] sm:$0xff]
    %v318 = vld [vmem:[#allocation2 + $0x640] sm:$0xff]
    %v319 = vld [vmem:[#allocation2 + $0x648] sm:$0xff]
    %v320 = vld [vmem:[#allocation2 + $0x650] sm:$0xff]
    %v321 = vld [vmem:[#allocation2 + $0x658] sm:$0xff]
    %v322 = vld [vmem:[#allocation2 + $0x660] sm:$0xff]
    %v323 = vld [vmem:[#allocation2 + $0x668] sm:$0xff]
    %v324 = vld [vmem:[#allocation2 + $0x670] sm:$0xff]
    %v325 = vld [vmem:[#allocation2 + $0x678] sm:$0xff]
    %v326 = vld [vmem:[#allocation2 + $0x680] sm:$0xff]
    %v327 = vld [vmem:[#allocation2 + $0x688] sm:$0xff]
    %v328 = vld [vmem:[#allocation2 + $0x690] sm:$0xff]
    %v329 = vld [vmem:[#allocation2 + $0x698] sm:$0xff]
    %v330 = vld [vmem:[#allocation2 + $0x6a0] sm:$0xff]
    %v331 = vld [vmem:[#allocation2 + $0x6a8] sm:$0xff]
    %v332 = vld [vmem:[#allocation2 + $0x6b0] sm:$0xff]
    %v333 = vld [vmem:[#allocation2 + $0x6b8] sm:$0xff]
    %v334 = vld [vmem:[#allocation2 + $0x6c0] sm:$0xff]
    %v335 = vld [vmem:[#allocation2 + $0x6c8] sm:$0xff]
    %v336 = vld [vmem:[#allocation2 + $0x6d0] sm:$0xff]
    %v337 = vld [vmem:[#allocation2 + $0x6d8] sm:$0xff]
    %v338 = vld [vmem:[#allocation2 + $0x6e0] sm:$0xff]
    %v339 = vld [vmem:[#allocation2 + $0x6e8] sm:$0xff]
    %v340 = vld [vmem:[#allocation2 + $0x6f0] sm:$0xff]
    %v341 = vld [vmem:[#allocation2 + $0x6f8] sm:$0xff]
    %v342 = vld [vmem:[#allocation2 + $0x700] sm:$0xff]
    %v343 = vld [vmem:[#allocation2 + $0x708] sm:$0xff]
    %v344 = vld [vmem:[#allocation2 + $0x710] sm:$0xff]
    %v345 = vld [vmem:[#allocation2 + $0x718] sm:$0xff]
    %v346 = vld [vmem:[#allocation2 + $0x720] sm:$0xff]
    %v347 = vld [vmem:[#allocation2 + $0x728] sm:$0xff]
    %v348 = vld [vmem:[#allocation2 + $0x730] sm:$0xff]
    %v349 = vld [vmem:[#allocation2 + $0x738] sm:$0xff]
    %v350 = vld [vmem:[#allocation2 + $0x740] sm:$0xff]
    %v351 = vld [vmem:[#allocation2 + $0x748] sm:$0xff]
    %v352 = vld [vmem:[#allocation2 + $0x750] sm:$0xff]
    %v353 = vld [vmem:[#allocation2 + $0x758] sm:$0xff]
    %v354 = vld [vmem:[#allocation2 + $0x760] sm:$0xff]
    %v355 = vld [vmem:[#allocation2 + $0x768] sm:$0xff]
    %v356 = vld [vmem:[#allocation2 + $0x770] sm:$0xff]
    %v357 = vld [vmem:[#allocation2 + $0x778] sm:$0xff]
    %v358 = vld [vmem:[#allocation2 + $0x780] sm:$0xff]
    %v359 = vld [vmem:[#allocation2 + $0x788] sm:$0xff]
    %v360 = vld [vmem:[#allocation2 + $0x790] sm:$0xff]
    %v361 = vld [vmem:[#allocation2 + $0x798] sm:$0xff]
    %v362 = vld [vmem:[#allocation2 + $0x7a0] sm:$0xff]
    %v363 = vld [vmem:[#allocation2 + $0x7a8] sm:$0xff]
    %v364 = vld [vmem:[#allocation2 + $0x7b0] sm:$0xff]
    %v365 = vld [vmem:[#allocation2 + $0x7b8] sm:$0xff]
    %v366 = vld [vmem:[#allocation2 + $0x7c0] sm:$0xff]
    %v367 = vld [vmem:[#allocation2 + $0x7c8] sm:$0xff]
    %v368 = vld [vmem:[#allocation2 + $0x7d0] sm:$0xff]
    %v369 = vld [vmem:[#allocation2 + $0x7d8] sm:$0xff]
    %v370 = vld [vmem:[#allocation2 + $0x7e0] sm:$0xff]
    %v371 = vld [vmem:[#allocation2 + $0x7e8] sm:$0xff]
    %v372 = vld [vmem:[#allocation2 + $0x7f0] sm:$0xff]
    %v373 = vld [vmem:[#allocation2 + $0x7f8] sm:$0xff]
    %v630 = vunpack.c.l.b16 %v118
    %v631 = vunpack.c.h.b16 %v118
    %v632 = vunpack.c.l.b16 %v119
    %v633 = vunpack.c.h.b16 %v119
    %v634 = vunpack.c.l.b16 %v120
    %v635 = vunpack.c.h.b16 %v120
    %v636 = vunpack.c.l.b16 %v121
    %v637 = vunpack.c.h.b16 %v121
    %v638 = vunpack.c.l.b16 %v122
    %v639 = vunpack.c.h.b16 %v122
    %v640 = vunpack.c.l.b16 %v123
    %v641 = vunpack.c.h.b16 %v123
    %v642 = vunpack.c.l.b16 %v124
    %v643 = vunpack.c.h.b16 %v124
    %v644 = vunpack.c.l.b16 %v125
    %v645 = vunpack.c.h.b16 %v125
    %v646 = vunpack.c.l.b16 %v126
    %v647 = vunpack.c.h.b16 %v126
    %v648 = vunpack.c.l.b16 %v127
    %v649 = vunpack.c.h.b16 %v127
    %v650 = vunpack.c.l.b16 %v128
    %v651 = vunpack.c.h.b16 %v128
    %v652 = vunpack.c.l.b16 %v129
    %v653 = vunpack.c.h.b16 %v129
    %v654 = vunpack.c.l.b16 %v130
    %v655 = vunpack.c.h.b16 %v130
    %v656 = vunpack.c.l.b16 %v131
    %v657 = vunpack.c.h.b16 %v131
    %v658 = vunpack.c.l.b16 %v132
    %v659 = vunpack.c.h.b16 %v132
    %v660 = vunpack.c.l.b16 %v133
    %v661 = vunpack.c.h.b16 %v133
    %v662 = vunpack.c.l.b16 %v134
    %v663 = vunpack.c.h.b16 %v134
    %v664 = vunpack.c.l.b16 %v135
    %v665 = vunpack.c.h.b16 %v135
    %v666 = vunpack.c.l.b16 %v136
    %v667 = vunpack.c.h.b16 %v136
    %v668 = vunpack.c.l.b16 %v137
    %v669 = vunpack.c.h.b16 %v137
    %v670 = vunpack.c.l.b16 %v138
    %v671 = vunpack.c.h.b16 %v138
    %v672 = vunpack.c.l.b16 %v139
    %v673 = vunpack.c.h.b16 %v139
    %v674 = vunpack.c.l.b16 %v140
    %v675 = vunpack.c.h.b16 %v140
    %v676 = vunpack.c.l.b16 %v141
    %v677 = vunpack.c.h.b16 %v141
    %v678 = vunpack.c.l.b16 %v142
    %v679 = vunpack.c.h.b16 %v142
    %v680 = vunpack.c.l.b16 %v143
    %v681 = vunpack.c.h.b16 %v143
    %v682 = vunpack.c.l.b16 %v144
    %v683 = vunpack.c.h.b16 %v144
    %v684 = vunpack.c.l.b16 %v145
    %v685 = vunpack.c.h.b16 %v145
    %v686 = vunpack.c.l.b16 %v146
    %v687 = vunpack.c.h.b16 %v146
    %v688 = vunpack.c.l.b16 %v147
    %v689 = vunpack.c.h.b16 %v147
    %v690 = vunpack.c.l.b16 %v148
    %v691 = vunpack.c.h.b16 %v148
    %v692 = vunpack.c.l.b16 %v149
    %v693 = vunpack.c.h.b16 %v149
    %v694 = vunpack.c.l.b16 %v150
    %v695 = vunpack.c.h.b16 %v150
    %v696 = vunpack.c.l.b16 %v151
    %v697 = vunpack.c.h.b16 %v151
    %v698 = vunpack.c.l.b16 %v152
    %v699 = vunpack.c.h.b16 %v152
    %v700 = vunpack.c.l.b16 %v153
    %v701 = vunpack.c.h.b16 %v153
    %v702 = vunpack.c.l.b16 %v154
    %v703 = vunpack.c.h.b16 %v154
    %v704 = vunpack.c.l.b16 %v155
    %v705 = vunpack.c.h.b16 %v155
    %v706 = vunpack.c.l.b16 %v156
    %v707 = vunpack.c.h.b16 %v156
    %v708 = vunpack.c.l.b16 %v157
    %v709 = vunpack.c.h.b16 %v157
    %v710 = vunpack.c.l.b16 %v158
    %v711 = vunpack.c.h.b16 %v158
    %v712 = vunpack.c.l.b16 %v159
    %v713 = vunpack.c.h.b16 %v159
    %v714 = vunpack.c.l.b16 %v160
    %v715 = vunpack.c.h.b16 %v160
    %v716 = vunpack.c.l.b16 %v161
    %v717 = vunpack.c.h.b16 %v161
    %v718 = vunpack.c.l.b16 %v162
    %v719 = vunpack.c.h.b16 %v162
    %v720 = vunpack.c.l.b16 %v163
    %v721 = vunpack.c.h.b16 %v163
    %v722 = vunpack.c.l.b16 %v164
    %v723 = vunpack.c.h.b16 %v164
    %v724 = vunpack.c.l.b16 %v165
    %v725 = vunpack.c.h.b16 %v165
    %v726 = vunpack.c.l.b16 %v166
    %v727 = vunpack.c.h.b16 %v166
    %v728 = vunpack.c.l.b16 %v167
    %v729 = vunpack.c.h.b16 %v167
    %v730 = vunpack.c.l.b16 %v168
    %v731 = vunpack.c.h.b16 %v168
    %v732 = vunpack.c.l.b16 %v169
    %v733 = vunpack.c.h.b16 %v169
    %v734 = vunpack.c.l.b16 %v170
    %v735 = vunpack.c.h.b16 %v170
    %v736 = vunpack.c.l.b16 %v171
    %v737 = vunpack.c.h.b16 %v171
    %v738 = vunpack.c.l.b16 %v172
    %v739 = vunpack.c.h.b16 %v172
    %v740 = vunpack.c.l.b16 %v173
    %v741 = vunpack.c.h.b16 %v173
    %v742 = vunpack.c.l.b16 %v174
    %v743 = vunpack.c.h.b16 %v174
    %v744 = vunpack.c.l.b16 %v175
    %v745 = vunpack.c.h.b16 %v175
    %v746 = vunpack.c.l.b16 %v176
    %v747 = vunpack.c.h.b16 %v176
    %v748 = vunpack.c.l.b16 %v177
    %v749 = vunpack.c.h.b16 %v177
    %v750 = vunpack.c.l.b16 %v178
    %v751 = vunpack.c.h.b16 %v178
    %v752 = vunpack.c.l.b16 %v179
    %v753 = vunpack.c.h.b16 %v179
    %v754 = vunpack.c.l.b16 %v180
    %v755 = vunpack.c.h.b16 %v180
    %v756 = vunpack.c.l.b16 %v181
    %v757 = vunpack.c.h.b16 %v181
    %v758 = vunpack.c.l.b16 %v182
    %v759 = vunpack.c.h.b16 %v182
    %v760 = vunpack.c.l.b16 %v183
    %v761 = vunpack.c.h.b16 %v183
    %v762 = vunpack.c.l.b16 %v184
    %v763 = vunpack.c.h.b16 %v184
    %v764 = vunpack.c.l.b16 %v185
    %v765 = vunpack.c.h.b16 %v185
    %v766 = vunpack.c.l.b16 %v186
    %v767 = vunpack.c.h.b16 %v186
    %v768 = vunpack.c.l.b16 %v187
    %v769 = vunpack.c.h.b16 %v187
    %v770 = vunpack.c.l.b16 %v188
    %v771 = vunpack.c.h.b16 %v188
    %v772 = vunpack.c.l.b16 %v189
    %v773 = vunpack.c.h.b16 %v189
    %v774 = vunpack.c.l.b16 %v190
    %v775 = vunpack.c.h.b16 %v190
    %v776 = vunpack.c.l.b16 %v191
    %v777 = vunpack.c.h.b16 %v191
    %v778 = vunpack.c.l.b16 %v192
    %v779 = vunpack.c.h.b16 %v192
    %v780 = vunpack.c.l.b16 %v193
    %v781 = vunpack.c.h.b16 %v193
    %v782 = vunpack.c.l.b16 %v194
    %v783 = vunpack.c.h.b16 %v194
    %v784 = vunpack.c.l.b16 %v195
    %v785 = vunpack.c.h.b16 %v195
    %v786 = vunpack.c.l.b16 %v196
    %v787 = vunpack.c.h.b16 %v196
    %v788 = vunpack.c.l.b16 %v197
    %v789 = vunpack.c.h.b16 %v197
    %v790 = vunpack.c.l.b16 %v198
    %v791 = vunpack.c.h.b16 %v198
    %v792 = vunpack.c.l.b16 %v199
    %v793 = vunpack.c.h.b16 %v199
    %v794 = vunpack.c.l.b16 %v200
    %v795 = vunpack.c.h.b16 %v200
    %v796 = vunpack.c.l.b16 %v201
    %v797 = vunpack.c.h.b16 %v201
    %v798 = vunpack.c.l.b16 %v202
    %v799 = vunpack.c.h.b16 %v202
    %v800 = vunpack.c.l.b16 %v203
    %v801 = vunpack.c.h.b16 %v203
    %v802 = vunpack.c.l.b16 %v204
    %v803 = vunpack.c.h.b16 %v204
    %v804 = vunpack.c.l.b16 %v205
    %v805 = vunpack.c.h.b16 %v205
    %v806 = vunpack.c.l.b16 %v206
    %v807 = vunpack.c.h.b16 %v206
    %v808 = vunpack.c.l.b16 %v207
    %v809 = vunpack.c.h.b16 %v207
    %v810 = vunpack.c.l.b16 %v208
    %v811 = vunpack.c.h.b16 %v208
    %v812 = vunpack.c.l.b16 %v209
    %v813 = vunpack.c.h.b16 %v209
    %v814 = vunpack.c.l.b16 %v210
    %v815 = vunpack.c.h.b16 %v210
    %v816 = vunpack.c.l.b16 %v211
    %v817 = vunpack.c.h.b16 %v211
    %v818 = vunpack.c.l.b16 %v212
    %v819 = vunpack.c.h.b16 %v212
    %v820 = vunpack.c.l.b16 %v213
    %v821 = vunpack.c.h.b16 %v213
    %v822 = vunpack.c.l.b16 %v214
    %v823 = vunpack.c.h.b16 %v214
    %v824 = vunpack.c.l.b16 %v215
    %v825 = vunpack.c.h.b16 %v215
    %v826 = vunpack.c.l.b16 %v216
    %v827 = vunpack.c.h.b16 %v216
    %v828 = vunpack.c.l.b16 %v217
    %v829 = vunpack.c.h.b16 %v217
    %v830 = vunpack.c.l.b16 %v218
    %v831 = vunpack.c.h.b16 %v218
    %v832 = vunpack.c.l.b16 %v219
    %v833 = vunpack.c.h.b16 %v219
    %v834 = vunpack.c.l.b16 %v220
    %v835 = vunpack.c.h.b16 %v220
    %v836 = vunpack.c.l.b16 %v221
    %v837 = vunpack.c.h.b16 %v221
    %v838 = vunpack.c.l.b16 %v222
    %v839 = vunpack.c.h.b16 %v222
    %v840 = vunpack.c.l.b16 %v223
    %v841 = vunpack.c.h.b16 %v223
    %v842 = vunpack.c.l.b16 %v224
    %v843 = vunpack.c.h.b16 %v224
    %v844 = vunpack.c.l.b16 %v225
    %v845 = vunpack.c.h.b16 %v225
    %v846 = vunpack.c.l.b16 %v226
    %v847 = vunpack.c.h.b16 %v226
    %v848 = vunpack.c.l.b16 %v227
    %v849 = vunpack.c.h.b16 %v227
    %v850 = vunpack.c.l.b16 %v228
    %v851 = vunpack.c.h.b16 %v228
    %v852 = vunpack.c.l.b16 %v229
    %v853 = vunpack.c.h.b16 %v229
    %v854 = vunpack.c.l.b16 %v230
    %v855 = vunpack.c.h.b16 %v230
    %v856 = vunpack.c.l.b16 %v231
    %v857 = vunpack.c.h.b16 %v231
    %v858 = vunpack.c.l.b16 %v232
    %v859 = vunpack.c.h.b16 %v232
    %v860 = vunpack.c.l.b16 %v233
    %v861 = vunpack.c.h.b16 %v233
    %v862 = vunpack.c.l.b16 %v234
    %v863 = vunpack.c.h.b16 %v234
    %v864 = vunpack.c.l.b16 %v235
    %v865 = vunpack.c.h.b16 %v235
    %v866 = vunpack.c.l.b16 %v236
    %v867 = vunpack.c.h.b16 %v236
    %v868 = vunpack.c.l.b16 %v237
    %v869 = vunpack.c.h.b16 %v237
    %v870 = vunpack.c.l.b16 %v238
    %v871 = vunpack.c.h.b16 %v238
    %v872 = vunpack.c.l.b16 %v239
    %v873 = vunpack.c.h.b16 %v239
    %v874 = vunpack.c.l.b16 %v240
    %v875 = vunpack.c.h.b16 %v240
    %v876 = vunpack.c.l.b16 %v241
    %v877 = vunpack.c.h.b16 %v241
    %v878 = vunpack.c.l.b16 %v242
    %v879 = vunpack.c.h.b16 %v242
    %v880 = vunpack.c.l.b16 %v243
    %v881 = vunpack.c.h.b16 %v243
    %v882 = vunpack.c.l.b16 %v244
    %v883 = vunpack.c.h.b16 %v244
    %v884 = vunpack.c.l.b16 %v245
    %v885 = vunpack.c.h.b16 %v245
    %v886 = vunpack.c.l.b16 %v246
    %v887 = vunpack.c.h.b16 %v246
    %v888 = vunpack.c.l.b16 %v247
    %v889 = vunpack.c.h.b16 %v247
    %v890 = vunpack.c.l.b16 %v248
    %v891 = vunpack.c.h.b16 %v248
    %v892 = vunpack.c.l.b16 %v249
    %v893 = vunpack.c.h.b16 %v249
    %v894 = vunpack.c.l.b16 %v250
    %v895 = vunpack.c.h.b16 %v250
    %v896 = vunpack.c.l.b16 %v251
    %v897 = vunpack.c.h.b16 %v251
    %v898 = vunpack.c.l.b16 %v252
    %v899 = vunpack.c.h.b16 %v252
    %v900 = vunpack.c.l.b16 %v253
    %v901 = vunpack.c.h.b16 %v253
    %v902 = vunpack.c.l.b16 %v254
    %v903 = vunpack.c.h.b16 %v254
    %v904 = vunpack.c.l.b16 %v255
    %v905 = vunpack.c.h.b16 %v255
    %v906 = vunpack.c.l.b16 %v256
    %v907 = vunpack.c.h.b16 %v256
    %v908 = vunpack.c.l.b16 %v257
    %v909 = vunpack.c.h.b16 %v257
    %v910 = vunpack.c.l.b16 %v258
    %v911 = vunpack.c.h.b16 %v258
    %v912 = vunpack.c.l.b16 %v259
    %v913 = vunpack.c.h.b16 %v259
    %v914 = vunpack.c.l.b16 %v260
    %v915 = vunpack.c.h.b16 %v260
    %v916 = vunpack.c.l.b16 %v261
    %v917 = vunpack.c.h.b16 %v261
    %v918 = vunpack.c.l.b16 %v262
    %v919 = vunpack.c.h.b16 %v262
    %v920 = vunpack.c.l.b16 %v263
    %v921 = vunpack.c.h.b16 %v263
    %v922 = vunpack.c.l.b16 %v264
    %v923 = vunpack.c.h.b16 %v264
    %v924 = vunpack.c.l.b16 %v265
    %v925 = vunpack.c.h.b16 %v265
    %v926 = vunpack.c.l.b16 %v266
    %v927 = vunpack.c.h.b16 %v266
    %v928 = vunpack.c.l.b16 %v267
    %v929 = vunpack.c.h.b16 %v267
    %v930 = vunpack.c.l.b16 %v268
    %v931 = vunpack.c.h.b16 %v268
    %v932 = vunpack.c.l.b16 %v269
    %v933 = vunpack.c.h.b16 %v269
    %v934 = vunpack.c.l.b16 %v270
    %v935 = vunpack.c.h.b16 %v270
    %v936 = vunpack.c.l.b16 %v271
    %v937 = vunpack.c.h.b16 %v271
    %v938 = vunpack.c.l.b16 %v272
    %v939 = vunpack.c.h.b16 %v272
    %v940 = vunpack.c.l.b16 %v273
    %v941 = vunpack.c.h.b16 %v273
    %v942 = vunpack.c.l.b16 %v274
    %v943 = vunpack.c.h.b16 %v274
    %v944 = vunpack.c.l.b16 %v275
    %v945 = vunpack.c.h.b16 %v275
    %v946 = vunpack.c.l.b16 %v276
    %v947 = vunpack.c.h.b16 %v276
    %v948 = vunpack.c.l.b16 %v277
    %v949 = vunpack.c.h.b16 %v277
    %v950 = vunpack.c.l.b16 %v278
    %v951 = vunpack.c.h.b16 %v278
    %v952 = vunpack.c.l.b16 %v279
    %v953 = vunpack.c.h.b16 %v279
    %v954 = vunpack.c.l.b16 %v280
    %v955 = vunpack.c.h.b16 %v280
    %v956 = vunpack.c.l.b16 %v281
    %v957 = vunpack.c.h.b16 %v281
    %v958 = vunpack.c.l.b16 %v282
    %v959 = vunpack.c.h.b16 %v282
    %v960 = vunpack.c.l.b16 %v283
    %v961 = vunpack.c.h.b16 %v283
    %v962 = vunpack.c.l.b16 %v284
    %v963 = vunpack.c.h.b16 %v284
    %v964 = vunpack.c.l.b16 %v285
    %v965 = vunpack.c.h.b16 %v285
    %v966 = vunpack.c.l.b16 %v286
    %v967 = vunpack.c.h.b16 %v286
    %v968 = vunpack.c.l.b16 %v287
    %v969 = vunpack.c.h.b16 %v287
    %v970 = vunpack.c.l.b16 %v288
    %v971 = vunpack.c.h.b16 %v288
    %v972 = vunpack.c.l.b16 %v289
    %v973 = vunpack.c.h.b16 %v289
    %v974 = vunpack.c.l.b16 %v290
    %v975 = vunpack.c.h.b16 %v290
    %v976 = vunpack.c.l.b16 %v291
    %v977 = vunpack.c.h.b16 %v291
    %v978 = vunpack.c.l.b16 %v292
    %v979 = vunpack.c.h.b16 %v292
    %v980 = vunpack.c.l.b16 %v293
    %v981 = vunpack.c.h.b16 %v293
    %v982 = vunpack.c.l.b16 %v294
    %v983 = vunpack.c.h.b16 %v294
    %v984 = vunpack.c.l.b16 %v295
    %v985 = vunpack.c.h.b16 %v295
    %v986 = vunpack.c.l.b16 %v296
    %v987 = vunpack.c.h.b16 %v296
    %v988 = vunpack.c.l.b16 %v297
    %v989 = vunpack.c.h.b16 %v297
    %v990 = vunpack.c.l.b16 %v298
    %v991 = vunpack.c.h.b16 %v298
    %v992 = vunpack.c.l.b16 %v299
    %v993 = vunpack.c.h.b16 %v299
    %v994 = vunpack.c.l.b16 %v300
    %v995 = vunpack.c.h.b16 %v300
    %v996 = vunpack.c.l.b16 %v301
    %v997 = vunpack.c.h.b16 %v301
    %v998 = vunpack.c.l.b16 %v302
    %v999 = vunpack.c.h.b16 %v302
    %v1000 = vunpack.c.l.b16 %v303
    %v1001 = vunpack.c.h.b16 %v303
    %v1002 = vunpack.c.l.b16 %v304
    %v1003 = vunpack.c.h.b16 %v304
    %v1004 = vunpack.c.l.b16 %v305
    %v1005 = vunpack.c.h.b16 %v305
    %v1006 = vunpack.c.l.b16 %v306
    %v1007 = vunpack.c.h.b16 %v306
    %v1008 = vunpack.c.l.b16 %v307
    %v1009 = vunpack.c.h.b16 %v307
    %v1010 = vunpack.c.l.b16 %v308
    %v1011 = vunpack.c.h.b16 %v308
    %v1012 = vunpack.c.l.b16 %v309
    %v1013 = vunpack.c.h.b16 %v309
    %v1014 = vunpack.c.l.b16 %v310
    %v1015 = vunpack.c.h.b16 %v310
    %v1016 = vunpack.c.l.b16 %v311
    %v1017 = vunpack.c.h.b16 %v311
    %v1018 = vunpack.c.l.b16 %v312
    %v1019 = vunpack.c.h.b16 %v312
    %v1020 = vunpack.c.l.b16 %v313
    %v1021 = vunpack.c.h.b16 %v313
    %v1022 = vunpack.c.l.b16 %v314
    %v1023 = vunpack.c.h.b16 %v314
    %v1024 = vunpack.c.l.b16 %v315
    %v1025 = vunpack.c.h.b16 %v315
    %v1026 = vunpack.c.l.b16 %v316
    %v1027 = vunpack.c.h.b16 %v316
    %v1028 = vunpack.c.l.b16 %v317
    %v1029 = vunpack.c.h.b16 %v317
    %v1030 = vunpack.c.l.b16 %v318
    %v1031 = vunpack.c.h.b16 %v318
    %v1032 = vunpack.c.l.b16 %v319
    %v1033 = vunpack.c.h.b16 %v319
    %v1034 = vunpack.c.l.b16 %v320
    %v1035 = vunpack.c.h.b16 %v320
    %v1036 = vunpack.c.l.b16 %v321
    %v1037 = vunpack.c.h.b16 %v321
    %v1038 = vunpack.c.l.b16 %v322
    %v1039 = vunpack.c.h.b16 %v322
    %v1040 = vunpack.c.l.b16 %v323
    %v1041 = vunpack.c.h.b16 %v323
    %v1042 = vunpack.c.l.b16 %v324
    %v1043 = vunpack.c.h.b16 %v324
    %v1044 = vunpack.c.l.b16 %v325
    %v1045 = vunpack.c.h.b16 %v325
    %v1046 = vunpack.c.l.b16 %v326
    %v1047 = vunpack.c.h.b16 %v326
    %v1048 = vunpack.c.l.b16 %v327
    %v1049 = vunpack.c.h.b16 %v327
    %v1050 = vunpack.c.l.b16 %v328
    %v1051 = vunpack.c.h.b16 %v328
    %v1052 = vunpack.c.l.b16 %v329
    %v1053 = vunpack.c.h.b16 %v329
    %v1054 = vunpack.c.l.b16 %v330
    %v1055 = vunpack.c.h.b16 %v330
    %v1056 = vunpack.c.l.b16 %v331
    %v1057 = vunpack.c.h.b16 %v331
    %v1058 = vunpack.c.l.b16 %v332
    %v1059 = vunpack.c.h.b16 %v332
    %v1060 = vunpack.c.l.b16 %v333
    %v1061 = vunpack.c.h.b16 %v333
    %v1062 = vunpack.c.l.b16 %v334
    %v1063 = vunpack.c.h.b16 %v334
    %v1064 = vunpack.c.l.b16 %v335
    %v1065 = vunpack.c.h.b16 %v335
    %v1066 = vunpack.c.l.b16 %v336
    %v1067 = vunpack.c.h.b16 %v336
    %v1068 = vunpack.c.l.b16 %v337
    %v1069 = vunpack.c.h.b16 %v337
    %v1070 = vunpack.c.l.b16 %v338
    %v1071 = vunpack.c.h.b16 %v338
    %v1072 = vunpack.c.l.b16 %v339
    %v1073 = vunpack.c.h.b16 %v339
    %v1074 = vunpack.c.l.b16 %v340
    %v1075 = vunpack.c.h.b16 %v340
    %v1076 = vunpack.c.l.b16 %v341
    %v1077 = vunpack.c.h.b16 %v341
    %v1078 = vunpack.c.l.b16 %v342
    %v1079 = vunpack.c.h.b16 %v342
    %v1080 = vunpack.c.l.b16 %v343
    %v1081 = vunpack.c.h.b16 %v343
    %v1082 = vunpack.c.l.b16 %v344
    %v1083 = vunpack.c.h.b16 %v344
    %v1084 = vunpack.c.l.b16 %v345
    %v1085 = vunpack.c.h.b16 %v345
    %v1086 = vunpack.c.l.b16 %v346
    %v1087 = vunpack.c.h.b16 %v346
    %v1088 = vunpack.c.l.b16 %v347
    %v1089 = vunpack.c.h.b16 %v347
    %v1090 = vunpack.c.l.b16 %v348
    %v1091 = vunpack.c.h.b16 %v348
    %v1092 = vunpack.c.l.b16 %v349
    %v1093 = vunpack.c.h.b16 %v349
    %v1094 = vunpack.c.l.b16 %v350
    %v1095 = vunpack.c.h.b16 %v350
    %v1096 = vunpack.c.l.b16 %v351
    %v1097 = vunpack.c.h.b16 %v351
    %v1098 = vunpack.c.l.b16 %v352
    %v1099 = vunpack.c.h.b16 %v352
    %v1100 = vunpack.c.l.b16 %v353
    %v1101 = vunpack.c.h.b16 %v353
    %v1102 = vunpack.c.l.b16 %v354
    %v1103 = vunpack.c.h.b16 %v354
    %v1104 = vunpack.c.l.b16 %v355
    %v1105 = vunpack.c.h.b16 %v355
    %v1106 = vunpack.c.l.b16 %v356
    %v1107 = vunpack.c.h.b16 %v356
    %v1108 = vunpack.c.l.b16 %v357
    %v1109 = vunpack.c.h.b16 %v357
    %v1110 = vunpack.c.l.b16 %v358
    %v1111 = vunpack.c.h.b16 %v358
    %v1112 = vunpack.c.l.b16 %v359
    %v1113 = vunpack.c.h.b16 %v359
    %v1114 = vunpack.c.l.b16 %v360
    %v1115 = vunpack.c.h.b16 %v360
    %v1116 = vunpack.c.l.b16 %v361
    %v1117 = vunpack.c.h.b16 %v361
    %v1118 = vunpack.c.l.b16 %v362
    %v1119 = vunpack.c.h.b16 %v362
    %v1120 = vunpack.c.l.b16 %v363
    %v1121 = vunpack.c.h.b16 %v363
    %v1122 = vunpack.c.l.b16 %v364
    %v1123 = vunpack.c.h.b16 %v364
    %v1124 = vunpack.c.l.b16 %v365
    %v1125 = vunpack.c.h.b16 %v365
    %v1126 = vunpack.c.l.b16 %v366
    %v1127 = vunpack.c.h.b16 %v366
    %v1128 = vunpack.c.l.b16 %v367
    %v1129 = vunpack.c.h.b16 %v367
    %v1130 = vunpack.c.l.b16 %v368
    %v1131 = vunpack.c.h.b16 %v368
    %v1132 = vunpack.c.l.b16 %v369
    %v1133 = vunpack.c.h.b16 %v369
    %v1134 = vunpack.c.l.b16 %v370
    %v1135 = vunpack.c.h.b16 %v370
    %v1136 = vunpack.c.l.b16 %v371
    %v1137 = vunpack.c.h.b16 %v371
    %v1138 = vunpack.c.l.b16 %v372
    %v1139 = vunpack.c.h.b16 %v372
    %v1140 = vunpack.c.l.b16 %v373
    %v1141 = vunpack.c.h.b16 %v373
    %v1142 = vpack.c.b16 %v638, %v630
    %v1143 = vpack.c.b16 %v639, %v631
    %v1144 = vpack.c.b16 %v640, %v632
    %v1145 = vpack.c.b16 %v641, %v633
    %v1146 = vpack.c.b16 %v642, %v634
    %v1147 = vpack.c.b16 %v643, %v635
    %v1148 = vpack.c.b16 %v644, %v636
    %v1149 = vpack.c.b16 %v645, %v637
    %v1150 = vpack.c.b16 %v654, %v646
    %v1151 = vpack.c.b16 %v655, %v647
    %v1152 = vpack.c.b16 %v656, %v648
    %v1153 = vpack.c.b16 %v657, %v649
    %v1154 = vpack.c.b16 %v658, %v650
    %v1155 = vpack.c.b16 %v659, %v651
    %v1156 = vpack.c.b16 %v660, %v652
    %v1157 = vpack.c.b16 %v661, %v653
    %v1158 = vpack.c.b16 %v670, %v662
    %v1159 = vpack.c.b16 %v671, %v663
    %v1160 = vpack.c.b16 %v672, %v664
    %v1161 = vpack.c.b16 %v673, %v665
    %v1162 = vpack.c.b16 %v674, %v666
    %v1163 = vpack.c.b16 %v675, %v667
    %v1164 = vpack.c.b16 %v676, %v668
    %v1165 = vpack.c.b16 %v677, %v669
    %v1166 = vpack.c.b16 %v686, %v678
    %v1167 = vpack.c.b16 %v687, %v679
    %v1168 = vpack.c.b16 %v688, %v680
    %v1169 = vpack.c.b16 %v689, %v681
    %v1170 = vpack.c.b16 %v690, %v682
    %v1171 = vpack.c.b16 %v691, %v683
    %v1172 = vpack.c.b16 %v692, %v684
    %v1173 = vpack.c.b16 %v693, %v685
    %v1174 = vpack.c.b16 %v702, %v694
    %v1175 = vpack.c.b16 %v703, %v695
    %v1176 = vpack.c.b16 %v704, %v696
    %v1177 = vpack.c.b16 %v705, %v697
    %v1178 = vpack.c.b16 %v706, %v698
    %v1179 = vpack.c.b16 %v707, %v699
    %v1180 = vpack.c.b16 %v708, %v700
    %v1181 = vpack.c.b16 %v709, %v701
    %v1182 = vpack.c.b16 %v718, %v710
    %v1183 = vpack.c.b16 %v719, %v711
    %v1184 = vpack.c.b16 %v720, %v712
    %v1185 = vpack.c.b16 %v721, %v713
    %v1186 = vpack.c.b16 %v722, %v714
    %v1187 = vpack.c.b16 %v723, %v715
    %v1188 = vpack.c.b16 %v724, %v716
    %v1189 = vpack.c.b16 %v725, %v717
    %v1190 = vpack.c.b16 %v734, %v726
    %v1191 = vpack.c.b16 %v735, %v727
    %v1192 = vpack.c.b16 %v736, %v728
    %v1193 = vpack.c.b16 %v737, %v729
    %v1194 = vpack.c.b16 %v738, %v730
    %v1195 = vpack.c.b16 %v739, %v731
    %v1196 = vpack.c.b16 %v740, %v732
    %v1197 = vpack.c.b16 %v741, %v733
    %v1198 = vpack.c.b16 %v750, %v742
    %v1199 = vpack.c.b16 %v751, %v743
    %v1200 = vpack.c.b16 %v752, %v744
    %v1201 = vpack.c.b16 %v753, %v745
    %v1202 = vpack.c.b16 %v754, %v746
    %v1203 = vpack.c.b16 %v755, %v747
    %v1204 = vpack.c.b16 %v756, %v748
    %v1205 = vpack.c.b16 %v757, %v749
    %v1206 = vpack.c.b16 %v766, %v758
    %v1207 = vpack.c.b16 %v767, %v759
    %v1208 = vpack.c.b16 %v768, %v760
    %v1209 = vpack.c.b16 %v769, %v761
    %v1210 = vpack.c.b16 %v770, %v762
    %v1211 = vpack.c.b16 %v771, %v763
    %v1212 = vpack.c.b16 %v772, %v764
    %v1213 = vpack.c.b16 %v773, %v765
    %v1214 = vpack.c.b16 %v782, %v774
    %v1215 = vpack.c.b16 %v783, %v775
    %v1216 = vpack.c.b16 %v784, %v776
    %v1217 = vpack.c.b16 %v785, %v777
    %v1218 = vpack.c.b16 %v786, %v778
    %v1219 = vpack.c.b16 %v787, %v779
    %v1220 = vpack.c.b16 %v788, %v780
    %v1221 = vpack.c.b16 %v789, %v781
    %v1222 = vpack.c.b16 %v798, %v790
    %v1223 = vpack.c.b16 %v799, %v791
    %v1224 = vpack.c.b16 %v800, %v792
    %v1225 = vpack.c.b16 %v801, %v793
    %v1226 = vpack.c.b16 %v802, %v794
    %v1227 = vpack.c.b16 %v803, %v795
    %v1228 = vpack.c.b16 %v804, %v796
    %v1229 = vpack.c.b16 %v805, %v797
    %v1230 = vpack.c.b16 %v814, %v806
    %v1231 = vpack.c.b16 %v815, %v807
    %v1232 = vpack.c.b16 %v816, %v808
    %v1233 = vpack.c.b16 %v817, %v809
    %v1234 = vpack.c.b16 %v818, %v810
    %v1235 = vpack.c.b16 %v819, %v811
    %v1236 = vpack.c.b16 %v820, %v812
    %v1237 = vpack.c.b16 %v821, %v813
    %v1238 = vpack.c.b16 %v830, %v822
    %v1239 = vpack.c.b16 %v831, %v823
    %v1240 = vpack.c.b16 %v832, %v824
    %v1241 = vpack.c.b16 %v833, %v825
    %v1242 = vpack.c.b16 %v834, %v826
    %v1243 = vpack.c.b16 %v835, %v827
    %v1244 = vpack.c.b16 %v836, %v828
    %v1245 = vpack.c.b16 %v837, %v829
    %v1246 = vpack.c.b16 %v846, %v838
    %v1247 = vpack.c.b16 %v847, %v839
    %v1248 = vpack.c.b16 %v848, %v840
    %v1249 = vpack.c.b16 %v849, %v841
    %v1250 = vpack.c.b16 %v850, %v842
    %v1251 = vpack.c.b16 %v851, %v843
    %v1252 = vpack.c.b16 %v852, %v844
    %v1253 = vpack.c.b16 %v853, %v845
    %v1254 = vpack.c.b16 %v862, %v854
    %v1255 = vpack.c.b16 %v863, %v855
    %v1256 = vpack.c.b16 %v864, %v856
    %v1257 = vpack.c.b16 %v865, %v857
    %v1258 = vpack.c.b16 %v866, %v858
    %v1259 = vpack.c.b16 %v867, %v859
    %v1260 = vpack.c.b16 %v868, %v860
    %v1261 = vpack.c.b16 %v869, %v861
    %v1262 = vpack.c.b16 %v878, %v870
    %v1263 = vpack.c.b16 %v879, %v871
    %v1264 = vpack.c.b16 %v880, %v872
    %v1265 = vpack.c.b16 %v881, %v873
    %v1266 = vpack.c.b16 %v882, %v874
    %v1267 = vpack.c.b16 %v883, %v875
    %v1268 = vpack.c.b16 %v884, %v876
    %v1269 = vpack.c.b16 %v885, %v877
    %v1270 = vpack.c.b16 %v894, %v886
    %v1271 = vpack.c.b16 %v895, %v887
    %v1272 = vpack.c.b16 %v896, %v888
    %v1273 = vpack.c.b16 %v897, %v889
    %v1274 = vpack.c.b16 %v898, %v890
    %v1275 = vpack.c.b16 %v899, %v891
    %v1276 = vpack.c.b16 %v900, %v892
    %v1277 = vpack.c.b16 %v901, %v893
    %v1278 = vpack.c.b16 %v910, %v902
    %v1279 = vpack.c.b16 %v911, %v903
    %v1280 = vpack.c.b16 %v912, %v904
    %v1281 = vpack.c.b16 %v913, %v905
    %v1282 = vpack.c.b16 %v914, %v906
    %v1283 = vpack.c.b16 %v915, %v907
    %v1284 = vpack.c.b16 %v916, %v908
    %v1285 = vpack.c.b16 %v917, %v909
    %v1286 = vpack.c.b16 %v926, %v918
    %v1287 = vpack.c.b16 %v927, %v919
    %v1288 = vpack.c.b16 %v928, %v920
    %v1289 = vpack.c.b16 %v929, %v921
    %v1290 = vpack.c.b16 %v930, %v922
    %v1291 = vpack.c.b16 %v931, %v923
    %v1292 = vpack.c.b16 %v932, %v924
    %v1293 = vpack.c.b16 %v933, %v925
    %v1294 = vpack.c.b16 %v942, %v934
    %v1295 = vpack.c.b16 %v943, %v935
    %v1296 = vpack.c.b16 %v944, %v936
    %v1297 = vpack.c.b16 %v945, %v937
    %v1298 = vpack.c.b16 %v946, %v938
    %v1299 = vpack.c.b16 %v947, %v939
    %v1300 = vpack.c.b16 %v948, %v940
    %v1301 = vpack.c.b16 %v949, %v941
    %v1302 = vpack.c.b16 %v958, %v950
    %v1303 = vpack.c.b16 %v959, %v951
    %v1304 = vpack.c.b16 %v960, %v952
    %v1305 = vpack.c.b16 %v961, %v953
    %v1306 = vpack.c.b16 %v962, %v954
    %v1307 = vpack.c.b16 %v963, %v955
    %v1308 = vpack.c.b16 %v964, %v956
    %v1309 = vpack.c.b16 %v965, %v957
    %v1310 = vpack.c.b16 %v974, %v966
    %v1311 = vpack.c.b16 %v975, %v967
    %v1312 = vpack.c.b16 %v976, %v968
    %v1313 = vpack.c.b16 %v977, %v969
    %v1314 = vpack.c.b16 %v978, %v970
    %v1315 = vpack.c.b16 %v979, %v971
    %v1316 = vpack.c.b16 %v980, %v972
    %v1317 = vpack.c.b16 %v981, %v973
    %v1318 = vpack.c.b16 %v990, %v982
    %v1319 = vpack.c.b16 %v991, %v983
    %v1320 = vpack.c.b16 %v992, %v984
    %v1321 = vpack.c.b16 %v993, %v985
    %v1322 = vpack.c.b16 %v994, %v986
    %v1323 = vpack.c.b16 %v995, %v987
    %v1324 = vpack.c.b16 %v996, %v988
    %v1325 = vpack.c.b16 %v997, %v989
    %v1326 = vpack.c.b16 %v1006, %v998
    %v1327 = vpack.c.b16 %v1007, %v999
    %v1328 = vpack.c.b16 %v1008, %v1000
    %v1329 = vpack.c.b16 %v1009, %v1001
    %v1330 = vpack.c.b16 %v1010, %v1002
    %v1331 = vpack.c.b16 %v1011, %v1003
    %v1332 = vpack.c.b16 %v1012, %v1004
    %v1333 = vpack.c.b16 %v1013, %v1005
    %v1334 = vpack.c.b16 %v1022, %v1014
    %v1335 = vpack.c.b16 %v1023, %v1015
    %v1336 = vpack.c.b16 %v1024, %v1016
    %v1337 = vpack.c.b16 %v1025, %v1017
    %v1338 = vpack.c.b16 %v1026, %v1018
    %v1339 = vpack.c.b16 %v1027, %v1019
    %v1340 = vpack.c.b16 %v1028, %v1020
    %v1341 = vpack.c.b16 %v1029, %v1021
    %v1342 = vpack.c.b16 %v1038, %v1030
    %v1343 = vpack.c.b16 %v1039, %v1031
    %v1344 = vpack.c.b16 %v1040, %v1032
    %v1345 = vpack.c.b16 %v1041, %v1033
    %v1346 = vpack.c.b16 %v1042, %v1034
    %v1347 = vpack.c.b16 %v1043, %v1035
    %v1348 = vpack.c.b16 %v1044, %v1036
    %v1349 = vpack.c.b16 %v1045, %v1037
    %v1350 = vpack.c.b16 %v1054, %v1046
    %v1351 = vpack.c.b16 %v1055, %v1047
    %v1352 = vpack.c.b16 %v1056, %v1048
    %v1353 = vpack.c.b16 %v1057, %v1049
    %v1354 = vpack.c.b16 %v1058, %v1050
    %v1355 = vpack.c.b16 %v1059, %v1051
    %v1356 = vpack.c.b16 %v1060, %v1052
    %v1357 = vpack.c.b16 %v1061, %v1053
    %v1358 = vpack.c.b16 %v1070, %v1062
    %v1359 = vpack.c.b16 %v1071, %v1063
    %v1360 = vpack.c.b16 %v1072, %v1064
    %v1361 = vpack.c.b16 %v1073, %v1065
    %v1362 = vpack.c.b16 %v1074, %v1066
    %v1363 = vpack.c.b16 %v1075, %v1067
    %v1364 = vpack.c.b16 %v1076, %v1068
    %v1365 = vpack.c.b16 %v1077, %v1069
    %v1366 = vpack.c.b16 %v1086, %v1078
    %v1367 = vpack.c.b16 %v1087, %v1079
    %v1368 = vpack.c.b16 %v1088, %v1080
    %v1369 = vpack.c.b16 %v1089, %v1081
    %v1370 = vpack.c.b16 %v1090, %v1082
    %v1371 = vpack.c.b16 %v1091, %v1083
    %v1372 = vpack.c.b16 %v1092, %v1084
    %v1373 = vpack.c.b16 %v1093, %v1085
    %v1374 = vpack.c.b16 %v1102, %v1094
    %v1375 = vpack.c.b16 %v1103, %v1095
    %v1376 = vpack.c.b16 %v1104, %v1096
    %v1377 = vpack.c.b16 %v1105, %v1097
    %v1378 = vpack.c.b16 %v1106, %v1098
    %v1379 = vpack.c.b16 %v1107, %v1099
    %v1380 = vpack.c.b16 %v1108, %v1100
    %v1381 = vpack.c.b16 %v1109, %v1101
    %v1382 = vpack.c.b16 %v1118, %v1110
    %v1383 = vpack.c.b16 %v1119, %v1111
    %v1384 = vpack.c.b16 %v1120, %v1112
    %v1385 = vpack.c.b16 %v1121, %v1113
    %v1386 = vpack.c.b16 %v1122, %v1114
    %v1387 = vpack.c.b16 %v1123, %v1115
    %v1388 = vpack.c.b16 %v1124, %v1116
    %v1389 = vpack.c.b16 %v1125, %v1117
    %v1390 = vpack.c.b16 %v1134, %v1126
    %v1391 = vpack.c.b16 %v1135, %v1127
    %v1392 = vpack.c.b16 %v1136, %v1128
    %v1393 = vpack.c.b16 %v1137, %v1129
    %v1394 = vpack.c.b16 %v1138, %v1130
    %v1395 = vpack.c.b16 %v1139, %v1131
    %v1396 = vpack.c.b16 %v1140, %v1132
    %v1397 = vpack.c.b16 %v1141, %v1133
    %1654 = vmatpush.bf16.msra.mxu0 %v1198
    %1655 = vmatpush.bf16.msra.mxu0 %v1190
    %1656 = vmatpush.bf16.msra.mxu0 %v1182
    %1657 = vmatpush.bf16.msra.mxu0 %v1174
    %1658 = vmatpush.bf16.msra.mxu0 %v1166
    %1659 = vmatpush.bf16.msra.mxu0 %v1158
    %1660 = vmatpush.bf16.msra.mxu0 %v1150
    %1661 = vmatpush.bf16.msra.mxu0 %v1142
    %1662 = vmatmul.bf16.gmra.mxu0 %v110
    %v1663 = vpop.f32.mrf.mxu0
    %v1664 = vadd.f32 0.0, %v1663
    %v1665 = vpop.f32.mrf.mxu0
    %v1666 = vadd.f32 0.0, %v1665
    %1667 = vmatmul.bf16.gmra.mxu0 %v114
    %v1668 = vpop.f32.mrf.mxu0
    %v1669 = vadd.f32 0.0, %v1668
    %v1670 = vpop.f32.mrf.mxu0
    %v1671 = vadd.f32 0.0, %v1670
    %1672 = vdwg.mxu0
    %1673 = vmatpush.bf16.msra.mxu0 %v1262
    %1674 = vmatpush.bf16.msra.mxu0 %v1254
    %1675 = vmatpush.bf16.msra.mxu0 %v1246
    %1676 = vmatpush.bf16.msra.mxu0 %v1238
    %1677 = vmatpush.bf16.msra.mxu0 %v1230
    %1678 = vmatpush.bf16.msra.mxu0 %v1222
    %1679 = vmatpush.bf16.msra.mxu0 %v1214
    %1680 = vmatpush.bf16.msra.mxu0 %v1206
    %1681 = vmatmul.bf16.gmra.mxu0 %v111
    %v1682 = vpop.f32.mrf.mxu0
    %v1683 = vadd.f32 %v1664, %v1682
    %v1684 = vpop.f32.mrf.mxu0
    %v1685 = vadd.f32 %v1666, %v1684
    %1686 = vmatmul.bf16.gmra.mxu0 %v115
    %v1687 = vpop.f32.mrf.mxu0
    %v1688 = vadd.f32 %v1669, %v1687
    %v1689 = vpop.f32.mrf.mxu0
    %v1690 = vadd.f32 %v1671, %v1689
    %1691 = vdwg.mxu0
    %1692 = vmatpush.bf16.msra.mxu0 %v1326
    %1693 = vmatpush.bf16.msra.mxu0 %v1318
    %1694 = vmatpush.bf16.msra.mxu0 %v1310
    %1695 = vmatpush.bf16.msra.mxu0 %v1302
    %1696 = vmatpush.bf16.msra.mxu0 %v1294
    %1697 = vmatpush.bf16.msra.mxu0 %v1286
    %1698 = vmatpush.bf16.msra.mxu0 %v1278
    %1699 = vmatpush.bf16.msra.mxu0 %v1270
    %1700 = vmatmul.bf16.gmra.mxu0 %v112
    %v1701 = vpop.f32.mrf.mxu0
    %v1702 = vadd.f32 %v1683, %v1701
    %v1703 = vpop.f32.mrf.mxu0
    %v1704 = vadd.f32 %v1685, %v1703
    %1705 = vmatmul.bf16.gmra.mxu0 %v116
    %v1706 = vpop.f32.mrf.mxu0
    %v1707 = vadd.f32 %v1688, %v1706
    %v1708 = vpop.f32.mrf.mxu0
    %v1709 = vadd.f32 %v1690, %v1708
    %1710 = vdwg.mxu0
    %1711 = vmatpush.bf16.msra.mxu0 %v1390
    %1712 = vmatpush.bf16.msra.mxu0 %v1382
    %1713 = vmatpush.bf16.msra.mxu0 %v1374
    %1714 = vmatpush.bf16.msra.mxu0 %v1366
    %1715 = vmatpush.bf16.msra.mxu0 %v1358
    %1716 = vmatpush.bf16.msra.mxu0 %v1350
    %1717 = vmatpush.bf16.msra.mxu0 %v1342
    %1718 = vmatpush.bf16.msra.mxu0 %v1334
    %1719 = vmatmul.bf16.gmra.mxu0 %v113
    %v1720 = vpop.f32.mrf.mxu0
    %v1721 = vadd.f32 %v1702, %v1720
    %v1722 = vpop.f32.mrf.mxu0
    %v1723 = vadd.f32 %v1704, %v1722
    %1724 = vmatmul.bf16.gmra.mxu0 %v117
    %v1725 = vpop.f32.mrf.mxu0
    %v1726 = vadd.f32 %v1707, %v1725
    %v1727 = vpop.f32.mrf.mxu0
    %v1728 = vadd.f32 %v1709, %v1727
    %1729 = vdwg.mxu0
    %1730 = vmatpush.bf16.msra.mxu0 %v1199
    %1731 = vmatpush.bf16.msra.mxu0 %v1191
    %1732 = vmatpush.bf16.msra.mxu0 %v1183
    %1733 = vmatpush.bf16.msra.mxu0 %v1175
    %1734 = vmatpush.bf16.msra.mxu0 %v1167
    %1735 = vmatpush.bf16.msra.mxu0 %v1159
    %1736 = vmatpush.bf16.msra.mxu0 %v1151
    %1737 = vmatpush.bf16.msra.mxu0 %v1143
    %1738 = vmatmul.bf16.gmra.mxu0 %v110
    %v1739 = vpop.f32.mrf.mxu0
    %v1740 = vadd.f32 0.0, %v1739
    %v1741 = vpop.f32.mrf.mxu0
    %v1742 = vadd.f32 0.0, %v1741
    %1743 = vmatmul.bf16.gmra.mxu0 %v114
    %v1744 = vpop.f32.mrf.mxu0
    %v1745 = vadd.f32 0.0, %v1744
    %v1746 = vpop.f32.mrf.mxu0
    %v1747 = vadd.f32 0.0, %v1746
    %1748 = vdwg.mxu0
    %1749 = vmatpush.bf16.msra.mxu0 %v1263
    %1750 = vmatpush.bf16.msra.mxu0 %v1255
    %1751 = vmatpush.bf16.msra.mxu0 %v1247
    %1752 = vmatpush.bf16.msra.mxu0 %v1239
    %1753 = vmatpush.bf16.msra.mxu0 %v1231
    %1754 = vmatpush.bf16.msra.mxu0 %v1223
    %1755 = vmatpush.bf16.msra.mxu0 %v1215
    %1756 = vmatpush.bf16.msra.mxu0 %v1207
    %1757 = vmatmul.bf16.gmra.mxu0 %v111
    %v1758 = vpop.f32.mrf.mxu0
    %v1759 = vadd.f32 %v1740, %v1758
    %v1760 = vpop.f32.mrf.mxu0
    %v1761 = vadd.f32 %v1742, %v1760
    %1762 = vmatmul.bf16.gmra.mxu0 %v115
    %v1763 = vpop.f32.mrf.mxu0
    %v1764 = vadd.f32 %v1745, %v1763
    %v1765 = vpop.f32.mrf.mxu0
    %v1766 = vadd.f32 %v1747, %v1765
    %1767 = vdwg.mxu0
    %1768 = vmatpush.bf16.msra.mxu0 %v1327
    %1769 = vmatpush.bf16.msra.mxu0 %v1319
    %1770 = vmatpush.bf16.msra.mxu0 %v1311
    %1771 = vmatpush.bf16.msra.mxu0 %v1303
    %1772 = vmatpush.bf16.msra.mxu0 %v1295
    %1773 = vmatpush.bf16.msra.mxu0 %v1287
    %1774 = vmatpush.bf16.msra.mxu0 %v1279
    %1775 = vmatpush.bf16.msra.mxu0 %v1271
    %1776 = vmatmul.bf16.gmra.mxu0 %v112
    %v1777 = vpop.f32.mrf.mxu0
    %v1778 = vadd.f32 %v1759, %v1777
    %v1779 = vpop.f32.mrf.mxu0
    %v1780 = vadd.f32 %v1761, %v1779
    %1781 = vmatmul.bf16.gmra.mxu0 %v116
    %v1782 = vpop.f32.mrf.mxu0
    %v1783 = vadd.f32 %v1764, %v1782
    %v1784 = vpop.f32.mrf.mxu0
    %v1785 = vadd.f32 %v1766, %v1784
    %1786 = vdwg.mxu0
    %1787 = vmatpush.bf16.msra.mxu0 %v1391
    %1788 = vmatpush.bf16.msra.mxu0 %v1383
    %1789 = vmatpush.bf16.msra.mxu0 %v1375
    %1790 = vmatpush.bf16.msra.mxu0 %v1367
    %1791 = vmatpush.bf16.msra.mxu0 %v1359
    %1792 = vmatpush.bf16.msra.mxu0 %v1351
    %1793 = vmatpush.bf16.msra.mxu0 %v1343
    %1794 = vmatpush.bf16.msra.mxu0 %v1335
    %1795 = vmatmul.bf16.gmra.mxu0 %v113
    %v1796 = vpop.f32.mrf.mxu0
    %v1797 = vadd.f32 %v1778, %v1796
    %v1798 = vpop.f32.mrf.mxu0
    %v1799 = vadd.f32 %v1780, %v1798
    %1800 = vmatmul.bf16.gmra.mxu0 %v117
    %v1801 = vpop.f32.mrf.mxu0
    %v1802 = vadd.f32 %v1783, %v1801
    %v1803 = vpop.f32.mrf.mxu0
    %v1804 = vadd.f32 %v1785, %v1803
    %1805 = vdwg.mxu0
    %1806 = vmatpush.bf16.msra.mxu0 %v1200
    %1807 = vmatpush.bf16.msra.mxu0 %v1192
    %1808 = vmatpush.bf16.msra.mxu0 %v1184
    %1809 = vmatpush.bf16.msra.mxu0 %v1176
    %1810 = vmatpush.bf16.msra.mxu0 %v1168
    %1811 = vmatpush.bf16.msra.mxu0 %v1160
    %1812 = vmatpush.bf16.msra.mxu0 %v1152
    %1813 = vmatpush.bf16.msra.mxu0 %v1144
    %1814 = vmatmul.bf16.gmra.mxu0 %v110
    %v1815 = vpop.f32.mrf.mxu0
    %v1816 = vadd.f32 0.0, %v1815
    %v1817 = vpop.f32.mrf.mxu0
    %v1818 = vadd.f32 0.0, %v1817
    %1819 = vmatmul.bf16.gmra.mxu0 %v114
    %v1820 = vpop.f32.mrf.mxu0
    %v1821 = vadd.f32 0.0, %v1820
    %v1822 = vpop.f32.mrf.mxu0
    %v1823 = vadd.f32 0.0, %v1822
    %1824 = vdwg.mxu0
    %1825 = vmatpush.bf16.msra.mxu0 %v1264
    %1826 = vmatpush.bf16.msra.mxu0 %v1256
    %1827 = vmatpush.bf16.msra.mxu0 %v1248
    %1828 = vmatpush.bf16.msra.mxu0 %v1240
    %1829 = vmatpush.bf16.msra.mxu0 %v1232
    %1830 = vmatpush.bf16.msra.mxu0 %v1224
    %1831 = vmatpush.bf16.msra.mxu0 %v1216
    %1832 = vmatpush.bf16.msra.mxu0 %v1208
    %1833 = vmatmul.bf16.gmra.mxu0 %v111
    %v1834 = vpop.f32.mrf.mxu0
    %v1835 = vadd.f32 %v1816, %v1834
    %v1836 = vpop.f32.mrf.mxu0
    %v1837 = vadd.f32 %v1818, %v1836
    %1838 = vmatmul.bf16.gmra.mxu0 %v115
    %v1839 = vpop.f32.mrf.mxu0
    %v1840 = vadd.f32 %v1821, %v1839
    %v1841 = vpop.f32.mrf.mxu0
    %v1842 = vadd.f32 %v1823, %v1841
    %1843 = vdwg.mxu0
    %1844 = vmatpush.bf16.msra.mxu0 %v1328
    %1845 = vmatpush.bf16.msra.mxu0 %v1320
    %1846 = vmatpush.bf16.msra.mxu0 %v1312
    %1847 = vmatpush.bf16.msra.mxu0 %v1304
    %1848 = vmatpush.bf16.msra.mxu0 %v1296
    %1849 = vmatpush.bf16.msra.mxu0 %v1288
    %1850 = vmatpush.bf16.msra.mxu0 %v1280
    %1851 = vmatpush.bf16.msra.mxu0 %v1272
    %1852 = vmatmul.bf16.gmra.mxu0 %v112
    %v1853 = vpop.f32.mrf.mxu0
    %v1854 = vadd.f32 %v1835, %v1853
    %v1855 = vpop.f32.mrf.mxu0
    %v1856 = vadd.f32 %v1837, %v1855
    %1857 = vmatmul.bf16.gmra.mxu0 %v116
    %v1858 = vpop.f32.mrf.mxu0
    %v1859 = vadd.f32 %v1840, %v1858
    %v1860 = vpop.f32.mrf.mxu0
    %v1861 = vadd.f32 %v1842, %v1860
    %1862 = vdwg.mxu0
    %1863 = vmatpush.bf16.msra.mxu0 %v1392
    %1864 = vmatpush.bf16.msra.mxu0 %v1384
    %1865 = vmatpush.bf16.msra.mxu0 %v1376
    %1866 = vmatpush.bf16.msra.mxu0 %v1368
    %1867 = vmatpush.bf16.msra.mxu0 %v1360
    %1868 = vmatpush.bf16.msra.mxu0 %v1352
    %1869 = vmatpush.bf16.msra.mxu0 %v1344
    %1870 = vmatpush.bf16.msra.mxu0 %v1336
    %1871 = vmatmul.bf16.gmra.mxu0 %v113
    %v1872 = vpop.f32.mrf.mxu0
    %v1873 = vadd.f32 %v1854, %v1872
    %v1874 = vpop.f32.mrf.mxu0
    %v1875 = vadd.f32 %v1856, %v1874
    %1876 = vmatmul.bf16.gmra.mxu0 %v117
    %v1877 = vpop.f32.mrf.mxu0
    %v1878 = vadd.f32 %v1859, %v1877
    %v1879 = vpop.f32.mrf.mxu0
    %v1880 = vadd.f32 %v1861, %v1879
    %1881 = vdwg.mxu0
    %1882 = vmatpush.bf16.msra.mxu0 %v1201
    %1883 = vmatpush.bf16.msra.mxu0 %v1193
    %1884 = vmatpush.bf16.msra.mxu0 %v1185
    %1885 = vmatpush.bf16.msra.mxu0 %v1177
    %1886 = vmatpush.bf16.msra.mxu0 %v1169
    %1887 = vmatpush.bf16.msra.mxu0 %v1161
    %1888 = vmatpush.bf16.msra.mxu0 %v1153
    %1889 = vmatpush.bf16.msra.mxu0 %v1145
    %1890 = vmatmul.bf16.gmra.mxu0 %v110
    %v1891 = vpop.f32.mrf.mxu0
    %v1892 = vadd.f32 0.0, %v1891
    %v1893 = vpop.f32.mrf.mxu0
    %v1894 = vadd.f32 0.0, %v1893
    %1895 = vmatmul.bf16.gmra.mxu0 %v114
    %v1896 = vpop.f32.mrf.mxu0
    %v1897 = vadd.f32 0.0, %v1896
    %v1898 = vpop.f32.mrf.mxu0
    %v1899 = vadd.f32 0.0, %v1898
    %1900 = vdwg.mxu0
    %1901 = vmatpush.bf16.msra.mxu0 %v1265
    %1902 = vmatpush.bf16.msra.mxu0 %v1257
    %1903 = vmatpush.bf16.msra.mxu0 %v1249
    %1904 = vmatpush.bf16.msra.mxu0 %v1241
    %1905 = vmatpush.bf16.msra.mxu0 %v1233
    %1906 = vmatpush.bf16.msra.mxu0 %v1225
    %1907 = vmatpush.bf16.msra.mxu0 %v1217
    %1908 = vmatpush.bf16.msra.mxu0 %v1209
    %1909 = vmatmul.bf16.gmra.mxu0 %v111
    %v1910 = vpop.f32.mrf.mxu0
    %v1911 = vadd.f32 %v1892, %v1910
    %v1912 = vpop.f32.mrf.mxu0
    %v1913 = vadd.f32 %v1894, %v1912
    %1914 = vmatmul.bf16.gmra.mxu0 %v115
    %v1915 = vpop.f32.mrf.mxu0
    %v1916 = vadd.f32 %v1897, %v1915
    %v1917 = vpop.f32.mrf.mxu0
    %v1918 = vadd.f32 %v1899, %v1917
    %1919 = vdwg.mxu0
    %1920 = vmatpush.bf16.msra.mxu0 %v1329
    %1921 = vmatpush.bf16.msra.mxu0 %v1321
    %1922 = vmatpush.bf16.msra.mxu0 %v1313
    %1923 = vmatpush.bf16.msra.mxu0 %v1305
    %1924 = vmatpush.bf16.msra.mxu0 %v1297
    %1925 = vmatpush.bf16.msra.mxu0 %v1289
    %1926 = vmatpush.bf16.msra.mxu0 %v1281
    %1927 = vmatpush.bf16.msra.mxu0 %v1273
    %1928 = vmatmul.bf16.gmra.mxu0 %v112
    %v1929 = vpop.f32.mrf.mxu0
    %v1930 = vadd.f32 %v1911, %v1929
    %v1931 = vpop.f32.mrf.mxu0
    %v1932 = vadd.f32 %v1913, %v1931
    %1933 = vmatmul.bf16.gmra.mxu0 %v116
    %v1934 = vpop.f32.mrf.mxu0
    %v1935 = vadd.f32 %v1916, %v1934
    %v1936 = vpop.f32.mrf.mxu0
    %v1937 = vadd.f32 %v1918, %v1936
    %1938 = vdwg.mxu0
    %1939 = vmatpush.bf16.msra.mxu0 %v1393
    %1940 = vmatpush.bf16.msra.mxu0 %v1385
    %1941 = vmatpush.bf16.msra.mxu0 %v1377
    %1942 = vmatpush.bf16.msra.mxu0 %v1369
    %1943 = vmatpush.bf16.msra.mxu0 %v1361
    %1944 = vmatpush.bf16.msra.mxu0 %v1353
    %1945 = vmatpush.bf16.msra.mxu0 %v1345
    %1946 = vmatpush.bf16.msra.mxu0 %v1337
    %1947 = vmatmul.bf16.gmra.mxu0 %v113
    %v1948 = vpop.f32.mrf.mxu0
    %v1949 = vadd.f32 %v1930, %v1948
    %v1950 = vpop.f32.mrf.mxu0
    %v1951 = vadd.f32 %v1932, %v1950
    %1952 = vmatmul.bf16.gmra.mxu0 %v117
    %v1953 = vpop.f32.mrf.mxu0
    %v1954 = vadd.f32 %v1935, %v1953
    %v1955 = vpop.f32.mrf.mxu0
    %v1956 = vadd.f32 %v1937, %v1955
    %1957 = vdwg.mxu0
    %1958 = vmatpush.bf16.msra.mxu0 %v1202
    %1959 = vmatpush.bf16.msra.mxu0 %v1194
    %1960 = vmatpush.bf16.msra.mxu0 %v1186
    %1961 = vmatpush.bf16.msra.mxu0 %v1178
    %1962 = vmatpush.bf16.msra.mxu0 %v1170
    %1963 = vmatpush.bf16.msra.mxu0 %v1162
    %1964 = vmatpush.bf16.msra.mxu0 %v1154
    %1965 = vmatpush.bf16.msra.mxu0 %v1146
    %1966 = vmatmul.bf16.gmra.mxu0 %v110
    %v1967 = vpop.f32.mrf.mxu0
    %v1968 = vadd.f32 0.0, %v1967
    %v1969 = vpop.f32.mrf.mxu0
    %v1970 = vadd.f32 0.0, %v1969
    %1971 = vmatmul.bf16.gmra.mxu0 %v114
    %v1972 = vpop.f32.mrf.mxu0
    %v1973 = vadd.f32 0.0, %v1972
    %v1974 = vpop.f32.mrf.mxu0
    %v1975 = vadd.f32 0.0, %v1974
    %1976 = vdwg.mxu0
    %1977 = vmatpush.bf16.msra.mxu0 %v1266
    %1978 = vmatpush.bf16.msra.mxu0 %v1258
    %1979 = vmatpush.bf16.msra.mxu0 %v1250
    %1980 = vmatpush.bf16.msra.mxu0 %v1242
    %1981 = vmatpush.bf16.msra.mxu0 %v1234
    %1982 = vmatpush.bf16.msra.mxu0 %v1226
    %1983 = vmatpush.bf16.msra.mxu0 %v1218
    %1984 = vmatpush.bf16.msra.mxu0 %v1210
    %1985 = vmatmul.bf16.gmra.mxu0 %v111
    %v1986 = vpop.f32.mrf.mxu0
    %v1987 = vadd.f32 %v1968, %v1986
    %v1988 = vpop.f32.mrf.mxu0
    %v1989 = vadd.f32 %v1970, %v1988
    %1990 = vmatmul.bf16.gmra.mxu0 %v115
    %v1991 = vpop.f32.mrf.mxu0
    %v1992 = vadd.f32 %v1973, %v1991
    %v1993 = vpop.f32.mrf.mxu0
    %v1994 = vadd.f32 %v1975, %v1993
    %1995 = vdwg.mxu0
    %1996 = vmatpush.bf16.msra.mxu0 %v1330
    %1997 = vmatpush.bf16.msra.mxu0 %v1322
    %1998 = vmatpush.bf16.msra.mxu0 %v1314
    %1999 = vmatpush.bf16.msra.mxu0 %v1306
    %2000 = vmatpush.bf16.msra.mxu0 %v1298
    %2001 = vmatpush.bf16.msra.mxu0 %v1290
    %2002 = vmatpush.bf16.msra.mxu0 %v1282
    %2003 = vmatpush.bf16.msra.mxu0 %v1274
    %2004 = vmatmul.bf16.gmra.mxu0 %v112
    %v2005 = vpop.f32.mrf.mxu0
    %v2006 = vadd.f32 %v1987, %v2005
    %v2007 = vpop.f32.mrf.mxu0
    %v2008 = vadd.f32 %v1989, %v2007
    %2009 = vmatmul.bf16.gmra.mxu0 %v116
    %v2010 = vpop.f32.mrf.mxu0
    %v2011 = vadd.f32 %v1992, %v2010
    %v2012 = vpop.f32.mrf.mxu0
    %v2013 = vadd.f32 %v1994, %v2012
    %2014 = vdwg.mxu0
    %2015 = vmatpush.bf16.msra.mxu0 %v1394
    %2016 = vmatpush.bf16.msra.mxu0 %v1386
    %2017 = vmatpush.bf16.msra.mxu0 %v1378
    %2018 = vmatpush.bf16.msra.mxu0 %v1370
    %2019 = vmatpush.bf16.msra.mxu0 %v1362
    %2020 = vmatpush.bf16.msra.mxu0 %v1354
    %2021 = vmatpush.bf16.msra.mxu0 %v1346
    %2022 = vmatpush.bf16.msra.mxu0 %v1338
    %2023 = vmatmul.bf16.gmra.mxu0 %v113
    %v2024 = vpop.f32.mrf.mxu0
    %v2025 = vadd.f32 %v2006, %v2024
    %v2026 = vpop.f32.mrf.mxu0
    %v2027 = vadd.f32 %v2008, %v2026
    %2028 = vmatmul.bf16.gmra.mxu0 %v117
    %v2029 = vpop.f32.mrf.mxu0
    %v2030 = vadd.f32 %v2011, %v2029
    %v2031 = vpop.f32.mrf.mxu0
    %v2032 = vadd.f32 %v2013, %v2031
    %2033 = vdwg.mxu0
    %2034 = vmatpush.bf16.msra.mxu0 %v1203
    %2035 = vmatpush.bf16.msra.mxu0 %v1195
    %2036 = vmatpush.bf16.msra.mxu0 %v1187
    %2037 = vmatpush.bf16.msra.mxu0 %v1179
    %2038 = vmatpush.bf16.msra.mxu0 %v1171
    %2039 = vmatpush.bf16.msra.mxu0 %v1163
    %2040 = vmatpush.bf16.msra.mxu0 %v1155
    %2041 = vmatpush.bf16.msra.mxu0 %v1147
    %2042 = vmatmul.bf16.gmra.mxu0 %v110
    %v2043 = vpop.f32.mrf.mxu0
    %v2044 = vadd.f32 0.0, %v2043
    %v2045 = vpop.f32.mrf.mxu0
    %v2046 = vadd.f32 0.0, %v2045
    %2047 = vmatmul.bf16.gmra.mxu0 %v114
    %v2048 = vpop.f32.mrf.mxu0
    %v2049 = vadd.f32 0.0, %v2048
    %v2050 = vpop.f32.mrf.mxu0
    %v2051 = vadd.f32 0.0, %v2050
    %2052 = vdwg.mxu0
    %2053 = vmatpush.bf16.msra.mxu0 %v1267
    %2054 = vmatpush.bf16.msra.mxu0 %v1259
    %2055 = vmatpush.bf16.msra.mxu0 %v1251
    %2056 = vmatpush.bf16.msra.mxu0 %v1243
    %2057 = vmatpush.bf16.msra.mxu0 %v1235
    %2058 = vmatpush.bf16.msra.mxu0 %v1227
    %2059 = vmatpush.bf16.msra.mxu0 %v1219
    %2060 = vmatpush.bf16.msra.mxu0 %v1211
    %2061 = vmatmul.bf16.gmra.mxu0 %v111
    %v2062 = vpop.f32.mrf.mxu0
    %v2063 = vadd.f32 %v2044, %v2062
    %v2064 = vpop.f32.mrf.mxu0
    %v2065 = vadd.f32 %v2046, %v2064
    %2066 = vmatmul.bf16.gmra.mxu0 %v115
    %v2067 = vpop.f32.mrf.mxu0
    %v2068 = vadd.f32 %v2049, %v2067
    %v2069 = vpop.f32.mrf.mxu0
    %v2070 = vadd.f32 %v2051, %v2069
    %2071 = vdwg.mxu0
    %2072 = vmatpush.bf16.msra.mxu0 %v1331
    %2073 = vmatpush.bf16.msra.mxu0 %v1323
    %2074 = vmatpush.bf16.msra.mxu0 %v1315
    %2075 = vmatpush.bf16.msra.mxu0 %v1307
    %2076 = vmatpush.bf16.msra.mxu0 %v1299
    %2077 = vmatpush.bf16.msra.mxu0 %v1291
    %2078 = vmatpush.bf16.msra.mxu0 %v1283
    %2079 = vmatpush.bf16.msra.mxu0 %v1275
    %2080 = vmatmul.bf16.gmra.mxu0 %v112
    %v2081 = vpop.f32.mrf.mxu0
    %v2082 = vadd.f32 %v2063, %v2081
    %v2083 = vpop.f32.mrf.mxu0
    %v2084 = vadd.f32 %v2065, %v2083
    %2085 = vmatmul.bf16.gmra.mxu0 %v116
    %v2086 = vpop.f32.mrf.mxu0
    %v2087 = vadd.f32 %v2068, %v2086
    %v2088 = vpop.f32.mrf.mxu0
    %v2089 = vadd.f32 %v2070, %v2088
    %2090 = vdwg.mxu0
    %2091 = vmatpush.bf16.msra.mxu0 %v1395
    %2092 = vmatpush.bf16.msra.mxu0 %v1387
    %2093 = vmatpush.bf16.msra.mxu0 %v1379
    %2094 = vmatpush.bf16.msra.mxu0 %v1371
    %2095 = vmatpush.bf16.msra.mxu0 %v1363
    %2096 = vmatpush.bf16.msra.mxu0 %v1355
    %2097 = vmatpush.bf16.msra.mxu0 %v1347
    %2098 = vmatpush.bf16.msra.mxu0 %v1339
    %2099 = vmatmul.bf16.gmra.mxu0 %v113
    %v2100 = vpop.f32.mrf.mxu0
    %v2101 = vadd.f32 %v2082, %v2100
    %v2102 = vpop.f32.mrf.mxu0
    %v2103 = vadd.f32 %v2084, %v2102
    %2104 = vmatmul.bf16.gmra.mxu0 %v117
    %v2105 = vpop.f32.mrf.mxu0
    %v2106 = vadd.f32 %v2087, %v2105
    %v2107 = vpop.f32.mrf.mxu0
    %v2108 = vadd.f32 %v2089, %v2107
    %2109 = vdwg.mxu0
    %2110 = vmatpush.bf16.msra.mxu0 %v1204
    %2111 = vmatpush.bf16.msra.mxu0 %v1196
    %2112 = vmatpush.bf16.msra.mxu0 %v1188
    %2113 = vmatpush.bf16.msra.mxu0 %v1180
    %2114 = vmatpush.bf16.msra.mxu0 %v1172
    %2115 = vmatpush.bf16.msra.mxu0 %v1164
    %2116 = vmatpush.bf16.msra.mxu0 %v1156
    %2117 = vmatpush.bf16.msra.mxu0 %v1148
    %2118 = vmatmul.bf16.gmra.mxu0 %v110
    %v2119 = vpop.f32.mrf.mxu0
    %v2120 = vadd.f32 0.0, %v2119
    %v2121 = vpop.f32.mrf.mxu0
    %v2122 = vadd.f32 0.0, %v2121
    %2123 = vmatmul.bf16.gmra.mxu0 %v114
    %v2124 = vpop.f32.mrf.mxu0
    %v2125 = vadd.f32 0.0, %v2124
    %v2126 = vpop.f32.mrf.mxu0
    %v2127 = vadd.f32 0.0, %v2126
    %2128 = vdwg.mxu0
    %2129 = vmatpush.bf16.msra.mxu0 %v1268
    %2130 = vmatpush.bf16.msra.mxu0 %v1260
    %2131 = vmatpush.bf16.msra.mxu0 %v1252
    %2132 = vmatpush.bf16.msra.mxu0 %v1244
    %2133 = vmatpush.bf16.msra.mxu0 %v1236
    %2134 = vmatpush.bf16.msra.mxu0 %v1228
    %2135 = vmatpush.bf16.msra.mxu0 %v1220
    %2136 = vmatpush.bf16.msra.mxu0 %v1212
    %2137 = vmatmul.bf16.gmra.mxu0 %v111
    %v2138 = vpop.f32.mrf.mxu0
    %v2139 = vadd.f32 %v2120, %v2138
    %v2140 = vpop.f32.mrf.mxu0
    %v2141 = vadd.f32 %v2122, %v2140
    %2142 = vmatmul.bf16.gmra.mxu0 %v115
    %v2143 = vpop.f32.mrf.mxu0
    %v2144 = vadd.f32 %v2125, %v2143
    %v2145 = vpop.f32.mrf.mxu0
    %v2146 = vadd.f32 %v2127, %v2145
    %2147 = vdwg.mxu0
    %2148 = vmatpush.bf16.msra.mxu0 %v1332
    %2149 = vmatpush.bf16.msra.mxu0 %v1324
    %2150 = vmatpush.bf16.msra.mxu0 %v1316
    %2151 = vmatpush.bf16.msra.mxu0 %v1308
    %2152 = vmatpush.bf16.msra.mxu0 %v1300
    %2153 = vmatpush.bf16.msra.mxu0 %v1292
    %2154 = vmatpush.bf16.msra.mxu0 %v1284
    %2155 = vmatpush.bf16.msra.mxu0 %v1276
    %2156 = vmatmul.bf16.gmra.mxu0 %v112
    %v2157 = vpop.f32.mrf.mxu0
    %v2158 = vadd.f32 %v2139, %v2157
    %v2159 = vpop.f32.mrf.mxu0
    %v2160 = vadd.f32 %v2141, %v2159
    %2161 = vmatmul.bf16.gmra.mxu0 %v116
    %v2162 = vpop.f32.mrf.mxu0
    %v2163 = vadd.f32 %v2144, %v2162
    %v2164 = vpop.f32.mrf.mxu0
    %v2165 = vadd.f32 %v2146, %v2164
    %2166 = vdwg.mxu0
    %2167 = vmatpush.bf16.msra.mxu0 %v1396
    %2168 = vmatpush.bf16.msra.mxu0 %v1388
    %2169 = vmatpush.bf16.msra.mxu0 %v1380
    %2170 = vmatpush.bf16.msra.mxu0 %v1372
    %2171 = vmatpush.bf16.msra.mxu0 %v1364
    %2172 = vmatpush.bf16.msra.mxu0 %v1356
    %2173 = vmatpush.bf16.msra.mxu0 %v1348
    %2174 = vmatpush.bf16.msra.mxu0 %v1340
    %2175 = vmatmul.bf16.gmra.mxu0 %v113
    %v2176 = vpop.f32.mrf.mxu0
    %v2177 = vadd.f32 %v2158, %v2176
    %v2178 = vpop.f32.mrf.mxu0
    %v2179 = vadd.f32 %v2160, %v2178
    %2180 = vmatmul.bf16.gmra.mxu0 %v117
    %v2181 = vpop.f32.mrf.mxu0
    %v2182 = vadd.f32 %v2163, %v2181
    %v2183 = vpop.f32.mrf.mxu0
    %v2184 = vadd.f32 %v2165, %v2183
    %2185 = vdwg.mxu0
    %2186 = vmatpush.bf16.msra.mxu0 %v1205
    %2187 = vmatpush.bf16.msra.mxu0 %v1197
    %2188 = vmatpush.bf16.msra.mxu0 %v1189
    %2189 = vmatpush.bf16.msra.mxu0 %v1181
    %2190 = vmatpush.bf16.msra.mxu0 %v1173
    %2191 = vmatpush.bf16.msra.mxu0 %v1165
    %2192 = vmatpush.bf16.msra.mxu0 %v1157
    %2193 = vmatpush.bf16.msra.mxu0 %v1149
    %2194 = vmatmul.bf16.gmra.mxu0 %v110
    %v2195 = vpop.f32.mrf.mxu0
    %v2196 = vadd.f32 0.0, %v2195
    %v2197 = vpop.f32.mrf.mxu0
    %v2198 = vadd.f32 0.0, %v2197
    %2199 = vmatmul.bf16.gmra.mxu0 %v114
    %v2200 = vpop.f32.mrf.mxu0
    %v2201 = vadd.f32 0.0, %v2200
    %v2202 = vpop.f32.mrf.mxu0
    %v2203 = vadd.f32 0.0, %v2202
    %2204 = vdwg.mxu0
    %2205 = vmatpush.bf16.msra.mxu0 %v1269
    %2206 = vmatpush.bf16.msra.mxu0 %v1261
    %2207 = vmatpush.bf16.msra.mxu0 %v1253
    %2208 = vmatpush.bf16.msra.mxu0 %v1245
    %2209 = vmatpush.bf16.msra.mxu0 %v1237
    %2210 = vmatpush.bf16.msra.mxu0 %v1229
    %2211 = vmatpush.bf16.msra.mxu0 %v1221
    %2212 = vmatpush.bf16.msra.mxu0 %v1213
    %2213 = vmatmul.bf16.gmra.mxu0 %v111
    %v2214 = vpop.f32.mrf.mxu0
    %v2215 = vadd.f32 %v2196, %v2214
    %v2216 = vpop.f32.mrf.mxu0
    %v2217 = vadd.f32 %v2198, %v2216
    %2218 = vmatmul.bf16.gmra.mxu0 %v115
    %v2219 = vpop.f32.mrf.mxu0
    %v2220 = vadd.f32 %v2201, %v2219
    %v2221 = vpop.f32.mrf.mxu0
    %v2222 = vadd.f32 %v2203, %v2221
    %2223 = vdwg.mxu0
    %2224 = vmatpush.bf16.msra.mxu0 %v1333
    %2225 = vmatpush.bf16.msra.mxu0 %v1325
    %2226 = vmatpush.bf16.msra.mxu0 %v1317
    %2227 = vmatpush.bf16.msra.mxu0 %v1309
    %2228 = vmatpush.bf16.msra.mxu0 %v1301
    %2229 = vmatpush.bf16.msra.mxu0 %v1293
    %2230 = vmatpush.bf16.msra.mxu0 %v1285
    %2231 = vmatpush.bf16.msra.mxu0 %v1277
    %2232 = vmatmul.bf16.gmra.mxu0 %v112
    %v2233 = vpop.f32.mrf.mxu0
    %v2234 = vadd.f32 %v2215, %v2233
    %v2235 = vpop.f32.mrf.mxu0
    %v2236 = vadd.f32 %v2217, %v2235
    %2237 = vmatmul.bf16.gmra.mxu0 %v116
    %v2238 = vpop.f32.mrf.mxu0
    %v2239 = vadd.f32 %v2220, %v2238
    %v2240 = vpop.f32.mrf.mxu0
    %v2241 = vadd.f32 %v2222, %v2240
    %2242 = vdwg.mxu0
    %2243 = vmatpush.bf16.msra.mxu0 %v1397
    %2244 = vmatpush.bf16.msra.mxu0 %v1389
    %2245 = vmatpush.bf16.msra.mxu0 %v1381
    %2246 = vmatpush.bf16.msra.mxu0 %v1373
    %2247 = vmatpush.bf16.msra.mxu0 %v1365
    %2248 = vmatpush.bf16.msra.mxu0 %v1357
    %2249 = vmatpush.bf16.msra.mxu0 %v1349
    %2250 = vmatpush.bf16.msra.mxu0 %v1341
    %2251 = vmatmul.bf16.gmra.mxu0 %v113
    %v2252 = vpop.f32.mrf.mxu0
    %v2253 = vadd.f32 %v2234, %v2252
    %v2254 = vpop.f32.mrf.mxu0
    %v2255 = vadd.f32 %v2236, %v2254
    %2256 = vmatmul.bf16.gmra.mxu0 %v117
    %v2257 = vpop.f32.mrf.mxu0
    %v2258 = vadd.f32 %v2239, %v2257
    %v2259 = vpop.f32.mrf.mxu0
    %v2260 = vadd.f32 %v2241, %v2259
    %2261 = vdwg.mxu0
    %v2262 = vpack.c.bf16 %v1797, %v1721
    %v2263 = vpack.c.bf16 %v1949, %v1873
    %v2264 = vpack.c.bf16 %v2101, %v2025
    %v2265 = vpack.c.bf16 %v2253, %v2177
    %v2266 = vpack.c.bf16 %v1799, %v1723
    %v2267 = vpack.c.bf16 %v1951, %v1875
    %v2268 = vpack.c.bf16 %v2103, %v2027
    %v2269 = vpack.c.bf16 %v2255, %v2179
    %v2270 = vpack.c.bf16 %v1802, %v1726
    %v2271 = vpack.c.bf16 %v1954, %v1878
    %v2272 = vpack.c.bf16 %v2106, %v2030
    %v2273 = vpack.c.bf16 %v2258, %v2182
    %v2274 = vpack.c.bf16 %v1804, %v1728
    %v2275 = vpack.c.bf16 %v1956, %v1880
    %v2276 = vpack.c.bf16 %v2108, %v2032
    %v2277 = vpack.c.bf16 %v2260, %v2184
    %2278 = vst [vmem:[%s3] sm:$0xff] %v2262
    %2279 = vst [vmem:[%s3 + $0x8] sm:$0xff] %v2263
    %2280 = vst [vmem:[%s3 + $0x10] sm:$0xff] %v2264
    %2281 = vst [vmem:[%s3 + $0x18] sm:$0xff] %v2265
    %2282 = vst [vmem:[%s3 + $0x20] sm:$0xff] %v2266
    %2283 = vst [vmem:[%s3 + $0x28] sm:$0xff] %v2267
    %2284 = vst [vmem:[%s3 + $0x30] sm:$0xff] %v2268
    %2285 = vst [vmem:[%s3 + $0x38] sm:$0xff] %v2269
    %2286 = vst [vmem:[%s3 + $0x40] sm:$0xff] %v2270
    %2287 = vst [vmem:[%s3 + $0x48] sm:$0xff] %v2271
    %2288 = vst [vmem:[%s3 + $0x50] sm:$0xff] %v2272
    %2289 = vst [vmem:[%s3 + $0x58] sm:$0xff] %v2273
    %2290 = vst [vmem:[%s3 + $0x60] sm:$0xff] %v2274
    %2291 = vst [vmem:[%s3 + $0x68] sm:$0xff] %v2275
    %2292 = vst [vmem:[%s3 + $0x70] sm:$0xff] %v2276
    %2293 = vst [vmem:[%s3 + $0x78] sm:$0xff] %v2277
    // Predicated region
    $region22: #{dec_txt_forward.8} parent=1 // pred_check
      _
    $region23: #{dec_txt_forward.8} parent=1 // pred_check_branch
      %2295 = sbr.rel (0) target = $region25
    $region24: #{dec_txt_forward.8} parent=1 // pred_region
      _
    $region25: #{dec_txt_forward.8} parent=1 // pred_fallthru
      _
    // Predicated region
    $region26: #{dec_txt_forward.8} parent=1 // pred_check
      _
    $region27: #{dec_txt_forward.8} parent=1 // pred_check_branch
      %2297 = sbr.rel (0) target = $region29
    $region28: #{dec_txt_forward.8} parent=1 // pred_region
      _
    $region29: #{dec_txt_forward.8} parent=1 // pred_fallthru
      _
    %2298 = vsyncpa [#allocation3], 1
    %2299 = vsyncpa [#allocation5], 1

// kernel: dec_txt_forward.9
$region0: #{dec_txt_forward.9}
  #allocation0 [shape = 'u32[]', space=smem, size = 0x4, offset = 0x4, fixed_abs, tag = 'smem constant byte address 0x4 - core index']
  #allocation1 [shape = 'u32[72,128]{1,0:T(1,128)}', space=vmem, size = 0x9000, scoped, tag = 'internal scratch']
  %s0 = inlined_call_operand.vmem [shape: bf16[64,256], index: 0, kind: input, shape index: {}]
  %s1 = inlined_call_operand.hbm [shape: bf16[256,512], index: 1, kind: input, shape index: {}]
  %s2 = inlined_call_operand.hbm [shape: f32[1,256], index: 2, kind: input, shape index: {}]
  %s3 = inlined_call_operand.vmem [shape: bf16[64,512], index: 3, kind: output, shape index: {}]
  %s4 = sld [smem:[#allocation0]]
  $region30: #{dec_txt_forward.9} parent=0
    _
  %s6 = ssub.s32 1, %s4
  %s7 = scalar_select 0, %s6, %s4
  $region1: #{dec_txt_forward.9} parent=0
    #allocation2 [shape = 'u8[262144]{0}', space=vmem, size = 0x40000, scoped, tag = 'input window, operand 1, single buffered']
    #allocation3 [shape = 's32[1]{0}', space=sflag, size = 0x4, scoped, tag = 'scoped memory for dec_txt_forward.9']
    #allocation4 [shape = 'u8[1024]{0}', space=vmem, size = 0x400, scoped, tag = 'input window, operand 2, single buffered']
    #allocation5 [shape = 's32[1]{0}', space=sflag, size = 0x4, scoped, tag = 'scoped memory for dec_txt_forward.9']
    %8 = vsyncpa [#allocation3], 0
    %9 = vsyncpa [#allocation5], 0
    // Predicated region
    $region2: #{dec_txt_forward.9} parent=1 // pred_check
      _
    $region3: #{dec_txt_forward.9} parent=1 // pred_check_branch
      %11 = sbr.rel (0) target = $region5
    $region4: #{dec_txt_forward.9} parent=1 // pred_region
      _
    $region5: #{dec_txt_forward.9} parent=1 // pred_fallthru
      _
    // Predicated region
    $region6: #{dec_txt_forward.9} parent=1 // pred_check
      _
    $region7: #{dec_txt_forward.9} parent=1 // pred_check_branch
      %13 = sbr.rel (0) target = $region9
    $region8: #{dec_txt_forward.9} parent=1 // pred_region
      %15 = vsyncadd [#allocation3], 0
      %s16 = sshll.u32 %s1, 4
      %s17 = int_to_ptr.hbm [resolvable:$true] %s16
      %s18 = sshll.u32 [#allocation2], 4
      %s19 = int_to_ptr.vmem [resolvable:$true] %s18
      %24 = dma.hbm_to_vmem [thread:$0]  %s17, 8192, %s19, [#allocation3], 256, 256, 16
    $region9: #{dec_txt_forward.9} parent=1 // pred_fallthru
      _
    // Predicated region
    $region10: #{dec_txt_forward.9} parent=1 // pred_check
      _
    $region11: #{dec_txt_forward.9} parent=1 // pred_check_branch
      %26 = sbr.rel (0) target = $region13
    $region12: #{dec_txt_forward.9} parent=1 // pred_region
      %28 = vsyncadd [#allocation5], 0
      %s30 = sshll.u32 %s2, 4
      %s31 = int_to_ptr.hbm [resolvable:$true] %s30
      %s32 = sshll.u32 [#allocation4], 4
      %s33 = int_to_ptr.vmem [resolvable:$true] %s32
      %35 = dma.hbm_to_vmem [thread:$0]  %s31, 32, %s33, [#allocation5]
    $region13: #{dec_txt_forward.9} parent=1 // pred_fallthru
      _
    // Predicated region
    $region14: #{dec_txt_forward.9} parent=1 // pred_check
      _
    $region15: #{dec_txt_forward.9} parent=1 // pred_check_branch
      %37 = sbr.rel (0) target = $region17
    $region16: #{dec_txt_forward.9} parent=1 // pred_region
      %39 = dma.done [#allocation3], 8192
    $region17: #{dec_txt_forward.9} parent=1 // pred_fallthru
      _
    // Predicated region
    $region18: #{dec_txt_forward.9} parent=1 // pred_check
      _
    $region19: #{dec_txt_forward.9} parent=1 // pred_check_branch
      %41 = sbr.rel (0) target = $region21
    $region20: #{dec_txt_forward.9} parent=1 // pred_region
      %43 = dma.done [#allocation5], 32
    $region21: #{dec_txt_forward.9} parent=1 // pred_fallthru
      _
    %v44 = vld [vmem:[%s0] sm:$0xff]
    %v45 = vld [vmem:[%s0 + $0x8] sm:$0xff]
    %v46 = vld [vmem:[%s0 + $0x10] sm:$0xff]
    %v47 = vld [vmem:[%s0 + $0x18] sm:$0xff]
    %v48 = vld [vmem:[%s0 + $0x20] sm:$0xff]
    %v49 = vld [vmem:[%s0 + $0x28] sm:$0xff]
    %v50 = vld [vmem:[%s0 + $0x30] sm:$0xff]
    %v51 = vld [vmem:[%s0 + $0x38] sm:$0xff]
    %v52 = vunpack.c.l.bf16 %v44
    %v53 = vunpack.c.h.bf16 %v44
    %v54 = vunpack.c.l.bf16 %v45
    %v55 = vunpack.c.h.bf16 %v45
    %v56 = vunpack.c.l.bf16 %v46
    %v57 = vunpack.c.h.bf16 %v46
    %v58 = vunpack.c.l.bf16 %v47
    %v59 = vunpack.c.h.bf16 %v47
    %v60 = vunpack.c.l.bf16 %v48
    %v61 = vunpack.c.h.bf16 %v48
    %v62 = vunpack.c.l.bf16 %v49
    %v63 = vunpack.c.h.bf16 %v49
    %v64 = vunpack.c.l.bf16 %v50
    %v65 = vunpack.c.h.bf16 %v50
    %v66 = vunpack.c.l.bf16 %v51
    %v67 = vunpack.c.h.bf16 %v51
    %v68 = vld [vmem:[#allocation4] sm:$0x3]
    %v70 = vperm.slane %v68, 0
    %v71 = vperm.slane %v68, 1
    %v74 = vadd.f32 %v52, %v70
    %v75 = vadd.f32 %v53, %v71
    %v76 = vadd.f32 %v54, %v70
    %v77 = vadd.f32 %v55, %v71
    %v78 = vadd.f32 %v56, %v70
    %v79 = vadd.f32 %v57, %v71
    %v80 = vadd.f32 %v58, %v70
    %v81 = vadd.f32 %v59, %v71
    %v82 = vadd.f32 %v60, %v70
    %v83 = vadd.f32 %v61, %v71
    %v84 = vadd.f32 %v62, %v70
    %v85 = vadd.f32 %v63, %v71
    %v86 = vadd.f32 %v64, %v70
    %v87 = vadd.f32 %v65, %v71
    %v88 = vadd.f32 %v66, %v70
    %v89 = vadd.f32 %v67, %v71
    %v90 = vmax.f32 %v74, 0.0
    %v91 = vmax.f32 %v75, 0.0
    %v92 = vmax.f32 %v76, 0.0
    %v93 = vmax.f32 %v77, 0.0
    %v94 = vmax.f32 %v78, 0.0
    %v95 = vmax.f32 %v79, 0.0
    %v96 = vmax.f32 %v80, 0.0
    %v97 = vmax.f32 %v81, 0.0
    %v98 = vmax.f32 %v82, 0.0
    %v99 = vmax.f32 %v83, 0.0
    %v100 = vmax.f32 %v84, 0.0
    %v101 = vmax.f32 %v85, 0.0
    %v102 = vmax.f32 %v86, 0.0
    %v103 = vmax.f32 %v87, 0.0
    %v104 = vmax.f32 %v88, 0.0
    %v105 = vmax.f32 %v89, 0.0
    %v106 = vpack.c.bf16 %v92, %v90
    %v107 = vpack.c.bf16 %v93, %v91
    %v108 = vpack.c.bf16 %v96, %v94
    %v109 = vpack.c.bf16 %v97, %v95
    %v110 = vpack.c.bf16 %v100, %v98
    %v111 = vpack.c.bf16 %v101, %v99
    %v112 = vpack.c.bf16 %v104, %v102
    %v113 = vpack.c.bf16 %v105, %v103
    %v114 = vld [vmem:[#allocation2] sm:$0xff]
    %v115 = vld [vmem:[#allocation2 + $0x8] sm:$0xff]
    %v116 = vld [vmem:[#allocation2 + $0x10] sm:$0xff]
    %v117 = vld [vmem:[#allocation2 + $0x18] sm:$0xff]
    %v118 = vld [vmem:[#allocation2 + $0x20] sm:$0xff]
    %v119 = vld [vmem:[#allocation2 + $0x28] sm:$0xff]
    %v120 = vld [vmem:[#allocation2 + $0x30] sm:$0xff]
    %v121 = vld [vmem:[#allocation2 + $0x38] sm:$0xff]
    %v122 = vld [vmem:[#allocation2 + $0x40] sm:$0xff]
    %v123 = vld [vmem:[#allocation2 + $0x48] sm:$0xff]
    %v124 = vld [vmem:[#allocation2 + $0x50] sm:$0xff]
    %v125 = vld [vmem:[#allocation2 + $0x58] sm:$0xff]
    %v126 = vld [vmem:[#allocation2 + $0x60] sm:$0xff]
    %v127 = vld [vmem:[#allocation2 + $0x68] sm:$0xff]
    %v128 = vld [vmem:[#allocation2 + $0x70] sm:$0xff]
    %v129 = vld [vmem:[#allocation2 + $0x78] sm:$0xff]
    %v130 = vld [vmem:[#allocation2 + $0x80] sm:$0xff]
    %v131 = vld [vmem:[#allocation2 + $0x88] sm:$0xff]
    %v132 = vld [vmem:[#allocation2 + $0x90] sm:$0xff]
    %v133 = vld [vmem:[#allocation2 + $0x98] sm:$0xff]
    %v134 = vld [vmem:[#allocation2 + $0xa0] sm:$0xff]
    %v135 = vld [vmem:[#allocation2 + $0xa8] sm:$0xff]
    %v136 = vld [vmem:[#allocation2 + $0xb0] sm:$0xff]
    %v137 = vld [vmem:[#allocation2 + $0xb8] sm:$0xff]
    %v138 = vld [vmem:[#allocation2 + $0xc0] sm:$0xff]
    %v139 = vld [vmem:[#allocation2 + $0xc8] sm:$0xff]
    %v140 = vld [vmem:[#allocation2 + $0xd0] sm:$0xff]
    %v141 = vld [vmem:[#allocation2 + $0xd8] sm:$0xff]
    %v142 = vld [vmem:[#allocation2 + $0xe0] sm:$0xff]
    %v143 = vld [vmem:[#allocation2 + $0xe8] sm:$0xff]
    %v144 = vld [vmem:[#allocation2 + $0xf0] sm:$0xff]
    %v145 = vld [vmem:[#allocation2 + $0xf8] sm:$0xff]
    %v146 = vld [vmem:[#allocation2 + $0x100] sm:$0xff]
    %v147 = vld [vmem:[#allocation2 + $0x108] sm:$0xff]
    %v148 = vld [vmem:[#allocation2 + $0x110] sm:$0xff]
    %v149 = vld [vmem:[#allocation2 + $0x118] sm:$0xff]
    %v150 = vld [vmem:[#allocation2 + $0x120] sm:$0xff]
    %v151 = vld [vmem:[#allocation2 + $0x128] sm:$0xff]
    %v152 = vld [vmem:[#allocation2 + $0x130] sm:$0xff]
    %v153 = vld [vmem:[#allocation2 + $0x138] sm:$0xff]
    %v154 = vld [vmem:[#allocation2 + $0x140] sm:$0xff]
    %v155 = vld [vmem:[#allocation2 + $0x148] sm:$0xff]
    %v156 = vld [vmem:[#allocation2 + $0x150] sm:$0xff]
    %v157 = vld [vmem:[#allocation2 + $0x158] sm:$0xff]
    %v158 = vld [vmem:[#allocation2 + $0x160] sm:$0xff]
    %v159 = vld [vmem:[#allocation2 + $0x168] sm:$0xff]
    %v160 = vld [vmem:[#allocation2 + $0x170] sm:$0xff]
    %v161 = vld [vmem:[#allocation2 + $0x178] sm:$0xff]
    %v162 = vld [vmem:[#allocation2 + $0x180] sm:$0xff]
    %v163 = vld [vmem:[#allocation2 + $0x188] sm:$0xff]
    %v164 = vld [vmem:[#allocation2 + $0x190] sm:$0xff]
    %v165 = vld [vmem:[#allocation2 + $0x198] sm:$0xff]
    %v166 = vld [vmem:[#allocation2 + $0x1a0] sm:$0xff]
    %v167 = vld [vmem:[#allocation2 + $0x1a8] sm:$0xff]
    %v168 = vld [vmem:[#allocation2 + $0x1b0] sm:$0xff]
    %v169 = vld [vmem:[#allocation2 + $0x1b8] sm:$0xff]
    %v170 = vld [vmem:[#allocation2 + $0x1c0] sm:$0xff]
    %v171 = vld [vmem:[#allocation2 + $0x1c8] sm:$0xff]
    %v172 = vld [vmem:[#allocation2 + $0x1d0] sm:$0xff]
    %v173 = vld [vmem:[#allocation2 + $0x1d8] sm:$0xff]
    %v174 = vld [vmem:[#allocation2 + $0x1e0] sm:$0xff]
    %v175 = vld [vmem:[#allocation2 + $0x1e8] sm:$0xff]
    %v176 = vld [vmem:[#allocation2 + $0x1f0] sm:$0xff]
    %v177 = vld [vmem:[#allocation2 + $0x1f8] sm:$0xff]
    %v242 = vunpack.c.l.b16 %v114
    %v243 = vunpack.c.h.b16 %v114
    %v244 = vunpack.c.l.b16 %v115
    %v245 = vunpack.c.h.b16 %v115
    %v246 = vunpack.c.l.b16 %v116
    %v247 = vunpack.c.h.b16 %v116
    %v248 = vunpack.c.l.b16 %v117
    %v249 = vunpack.c.h.b16 %v117
    %v250 = vunpack.c.l.b16 %v118
    %v251 = vunpack.c.h.b16 %v118
    %v252 = vunpack.c.l.b16 %v119
    %v253 = vunpack.c.h.b16 %v119
    %v254 = vunpack.c.l.b16 %v120
    %v255 = vunpack.c.h.b16 %v120
    %v256 = vunpack.c.l.b16 %v121
    %v257 = vunpack.c.h.b16 %v121
    %v258 = vunpack.c.l.b16 %v122
    %v259 = vunpack.c.h.b16 %v122
    %v260 = vunpack.c.l.b16 %v123
    %v261 = vunpack.c.h.b16 %v123
    %v262 = vunpack.c.l.b16 %v124
    %v263 = vunpack.c.h.b16 %v124
    %v264 = vunpack.c.l.b16 %v125
    %v265 = vunpack.c.h.b16 %v125
    %v266 = vunpack.c.l.b16 %v126
    %v267 = vunpack.c.h.b16 %v126
    %v268 = vunpack.c.l.b16 %v127
    %v269 = vunpack.c.h.b16 %v127
    %v270 = vunpack.c.l.b16 %v128
    %v271 = vunpack.c.h.b16 %v128
    %v272 = vunpack.c.l.b16 %v129
    %v273 = vunpack.c.h.b16 %v129
    %v274 = vunpack.c.l.b16 %v130
    %v275 = vunpack.c.h.b16 %v130
    %v276 = vunpack.c.l.b16 %v131
    %v277 = vunpack.c.h.b16 %v131
    %v278 = vunpack.c.l.b16 %v132
    %v279 = vunpack.c.h.b16 %v132
    %v280 = vunpack.c.l.b16 %v133
    %v281 = vunpack.c.h.b16 %v133
    %v282 = vunpack.c.l.b16 %v134
    %v283 = vunpack.c.h.b16 %v134
    %v284 = vunpack.c.l.b16 %v135
    %v285 = vunpack.c.h.b16 %v135
    %v286 = vunpack.c.l.b16 %v136
    %v287 = vunpack.c.h.b16 %v136
    %v288 = vunpack.c.l.b16 %v137
    %v289 = vunpack.c.h.b16 %v137
    %v290 = vunpack.c.l.b16 %v138
    %v291 = vunpack.c.h.b16 %v138
    %v292 = vunpack.c.l.b16 %v139
    %v293 = vunpack.c.h.b16 %v139
    %v294 = vunpack.c.l.b16 %v140
    %v295 = vunpack.c.h.b16 %v140
    %v296 = vunpack.c.l.b16 %v141
    %v297 = vunpack.c.h.b16 %v141
    %v298 = vunpack.c.l.b16 %v142
    %v299 = vunpack.c.h.b16 %v142
    %v300 = vunpack.c.l.b16 %v143
    %v301 = vunpack.c.h.b16 %v143
    %v302 = vunpack.c.l.b16 %v144
    %v303 = vunpack.c.h.b16 %v144
    %v304 = vunpack.c.l.b16 %v145
    %v305 = vunpack.c.h.b16 %v145
    %v306 = vunpack.c.l.b16 %v146
    %v307 = vunpack.c.h.b16 %v146
    %v308 = vunpack.c.l.b16 %v147
    %v309 = vunpack.c.h.b16 %v147
    %v310 = vunpack.c.l.b16 %v148
    %v311 = vunpack.c.h.b16 %v148
    %v312 = vunpack.c.l.b16 %v149
    %v313 = vunpack.c.h.b16 %v149
    %v314 = vunpack.c.l.b16 %v150
    %v315 = vunpack.c.h.b16 %v150
    %v316 = vunpack.c.l.b16 %v151
    %v317 = vunpack.c.h.b16 %v151
    %v318 = vunpack.c.l.b16 %v152
    %v319 = vunpack.c.h.b16 %v152
    %v320 = vunpack.c.l.b16 %v153
    %v321 = vunpack.c.h.b16 %v153
    %v322 = vunpack.c.l.b16 %v154
    %v323 = vunpack.c.h.b16 %v154
    %v324 = vunpack.c.l.b16 %v155
    %v325 = vunpack.c.h.b16 %v155
    %v326 = vunpack.c.l.b16 %v156
    %v327 = vunpack.c.h.b16 %v156
    %v328 = vunpack.c.l.b16 %v157
    %v329 = vunpack.c.h.b16 %v157
    %v330 = vunpack.c.l.b16 %v158
    %v331 = vunpack.c.h.b16 %v158
    %v332 = vunpack.c.l.b16 %v159
    %v333 = vunpack.c.h.b16 %v159
    %v334 = vunpack.c.l.b16 %v160
    %v335 = vunpack.c.h.b16 %v160
    %v336 = vunpack.c.l.b16 %v161
    %v337 = vunpack.c.h.b16 %v161
    %v338 = vunpack.c.l.b16 %v162
    %v339 = vunpack.c.h.b16 %v162
    %v340 = vunpack.c.l.b16 %v163
    %v341 = vunpack.c.h.b16 %v163
    %v342 = vunpack.c.l.b16 %v164
    %v343 = vunpack.c.h.b16 %v164
    %v344 = vunpack.c.l.b16 %v165
    %v345 = vunpack.c.h.b16 %v165
    %v346 = vunpack.c.l.b16 %v166
    %v347 = vunpack.c.h.b16 %v166
    %v348 = vunpack.c.l.b16 %v167
    %v349 = vunpack.c.h.b16 %v167
    %v350 = vunpack.c.l.b16 %v168
    %v351 = vunpack.c.h.b16 %v168
    %v352 = vunpack.c.l.b16 %v169
    %v353 = vunpack.c.h.b16 %v169
    %v354 = vunpack.c.l.b16 %v170
    %v355 = vunpack.c.h.b16 %v170
    %v356 = vunpack.c.l.b16 %v171
    %v357 = vunpack.c.h.b16 %v171
    %v358 = vunpack.c.l.b16 %v172
    %v359 = vunpack.c.h.b16 %v172
    %v360 = vunpack.c.l.b16 %v173
    %v361 = vunpack.c.h.b16 %v173
    %v362 = vunpack.c.l.b16 %v174
    %v363 = vunpack.c.h.b16 %v174
    %v364 = vunpack.c.l.b16 %v175
    %v365 = vunpack.c.h.b16 %v175
    %v366 = vunpack.c.l.b16 %v176
    %v367 = vunpack.c.h.b16 %v176
    %v368 = vunpack.c.l.b16 %v177
    %v369 = vunpack.c.h.b16 %v177
    %v370 = vpack.c.b16 %v246, %v242
    %v371 = vpack.c.b16 %v247, %v243
    %v372 = vpack.c.b16 %v248, %v244
    %v373 = vpack.c.b16 %v249, %v245
    %v374 = vpack.c.b16 %v254, %v250
    %v375 = vpack.c.b16 %v255, %v251
    %v376 = vpack.c.b16 %v256, %v252
    %v377 = vpack.c.b16 %v257, %v253
    %v378 = vpack.c.b16 %v262, %v258
    %v379 = vpack.c.b16 %v263, %v259
    %v380 = vpack.c.b16 %v264, %v260
    %v381 = vpack.c.b16 %v265, %v261
    %v382 = vpack.c.b16 %v270, %v266
    %v383 = vpack.c.b16 %v271, %v267
    %v384 = vpack.c.b16 %v272, %v268
    %v385 = vpack.c.b16 %v273, %v269
    %v386 = vpack.c.b16 %v278, %v274
    %v387 = vpack.c.b16 %v279, %v275
    %v388 = vpack.c.b16 %v280, %v276
    %v389 = vpack.c.b16 %v281, %v277
    %v390 = vpack.c.b16 %v286, %v282
    %v391 = vpack.c.b16 %v287, %v283
    %v392 = vpack.c.b16 %v288, %v284
    %v393 = vpack.c.b16 %v289, %v285
    %v394 = vpack.c.b16 %v294, %v290
    %v395 = vpack.c.b16 %v295, %v291
    %v396 = vpack.c.b16 %v296, %v292
    %v397 = vpack.c.b16 %v297, %v293
    %v398 = vpack.c.b16 %v302, %v298
    %v399 = vpack.c.b16 %v303, %v299
    %v400 = vpack.c.b16 %v304, %v300
    %v401 = vpack.c.b16 %v305, %v301
    %v402 = vpack.c.b16 %v310, %v306
    %v403 = vpack.c.b16 %v311, %v307
    %v404 = vpack.c.b16 %v312, %v308
    %v405 = vpack.c.b16 %v313, %v309
    %v406 = vpack.c.b16 %v318, %v314
    %v407 = vpack.c.b16 %v319, %v315
    %v408 = vpack.c.b16 %v320, %v316
    %v409 = vpack.c.b16 %v321, %v317
    %v410 = vpack.c.b16 %v326, %v322
    %v411 = vpack.c.b16 %v327, %v323
    %v412 = vpack.c.b16 %v328, %v324
    %v413 = vpack.c.b16 %v329, %v325
    %v414 = vpack.c.b16 %v334, %v330
    %v415 = vpack.c.b16 %v335, %v331
    %v416 = vpack.c.b16 %v336, %v332
    %v417 = vpack.c.b16 %v337, %v333
    %v418 = vpack.c.b16 %v342, %v338
    %v419 = vpack.c.b16 %v343, %v339
    %v420 = vpack.c.b16 %v344, %v340
    %v421 = vpack.c.b16 %v345, %v341
    %v422 = vpack.c.b16 %v350, %v346
    %v423 = vpack.c.b16 %v351, %v347
    %v424 = vpack.c.b16 %v352, %v348
    %v425 = vpack.c.b16 %v353, %v349
    %v426 = vpack.c.b16 %v358, %v354
    %v427 = vpack.c.b16 %v359, %v355
    %v428 = vpack.c.b16 %v360, %v356
    %v429 = vpack.c.b16 %v361, %v357
    %v430 = vpack.c.b16 %v366, %v362
    %v431 = vpack.c.b16 %v367, %v363
    %v432 = vpack.c.b16 %v368, %v364
    %v433 = vpack.c.b16 %v369, %v365
    %498 = vmatpush.bf16.msra.mxu0 %v398
    %499 = vmatpush.bf16.msra.mxu0 %v394
    %500 = vmatpush.bf16.msra.mxu0 %v390
    %501 = vmatpush.bf16.msra.mxu0 %v386
    %502 = vmatpush.bf16.msra.mxu0 %v382
    %503 = vmatpush.bf16.msra.mxu0 %v378
    %504 = vmatpush.bf16.msra.mxu0 %v374
    %505 = vmatpush.bf16.msra.mxu0 %v370
    %506 = vmatmul.bf16.gmra.mxu0 %v106
    %v507 = vpop.f32.mrf.mxu0
    %v508 = vadd.f32 0.0, %v507
    %v509 = vpop.f32.mrf.mxu0
    %v510 = vadd.f32 0.0, %v509
    %511 = vmatmul.bf16.gmra.mxu0 %v108
    %v512 = vpop.f32.mrf.mxu0
    %v513 = vadd.f32 0.0, %v512
    %v514 = vpop.f32.mrf.mxu0
    %v515 = vadd.f32 0.0, %v514
    %516 = vmatmul.bf16.gmra.mxu0 %v110
    %v517 = vpop.f32.mrf.mxu0
    %v518 = vadd.f32 0.0, %v517
    %v519 = vpop.f32.mrf.mxu0
    %v520 = vadd.f32 0.0, %v519
    %521 = vmatmul.bf16.gmra.mxu0 %v112
    %v522 = vpop.f32.mrf.mxu0
    %v523 = vadd.f32 0.0, %v522
    %v524 = vpop.f32.mrf.mxu0
    %v525 = vadd.f32 0.0, %v524
    %526 = vdwg.mxu0
    %527 = vmatpush.bf16.msra.mxu0 %v430
    %528 = vmatpush.bf16.msra.mxu0 %v426
    %529 = vmatpush.bf16.msra.mxu0 %v422
    %530 = vmatpush.bf16.msra.mxu0 %v418
    %531 = vmatpush.bf16.msra.mxu0 %v414
    %532 = vmatpush.bf16.msra.mxu0 %v410
    %533 = vmatpush.bf16.msra.mxu0 %v406
    %534 = vmatpush.bf16.msra.mxu0 %v402
    %535 = vmatmul.bf16.gmra.mxu0 %v107
    %v536 = vpop.f32.mrf.mxu0
    %v537 = vadd.f32 %v508, %v536
    %v538 = vpop.f32.mrf.mxu0
    %v539 = vadd.f32 %v510, %v538
    %540 = vmatmul.bf16.gmra.mxu0 %v109
    %v541 = vpop.f32.mrf.mxu0
    %v542 = vadd.f32 %v513, %v541
    %v543 = vpop.f32.mrf.mxu0
    %v544 = vadd.f32 %v515, %v543
    %545 = vmatmul.bf16.gmra.mxu0 %v111
    %v546 = vpop.f32.mrf.mxu0
    %v547 = vadd.f32 %v518, %v546
    %v548 = vpop.f32.mrf.mxu0
    %v549 = vadd.f32 %v520, %v548
    %550 = vmatmul.bf16.gmra.mxu0 %v113
    %v551 = vpop.f32.mrf.mxu0
    %v552 = vadd.f32 %v523, %v551
    %v553 = vpop.f32.mrf.mxu0
    %v554 = vadd.f32 %v525, %v553
    %555 = vdwg.mxu0
    %556 = vmatpush.bf16.msra.mxu0 %v399
    %557 = vmatpush.bf16.msra.mxu0 %v395
    %558 = vmatpush.bf16.msra.mxu0 %v391
    %559 = vmatpush.bf16.msra.mxu0 %v387
    %560 = vmatpush.bf16.msra.mxu0 %v383
    %561 = vmatpush.bf16.msra.mxu0 %v379
    %562 = vmatpush.bf16.msra.mxu0 %v375
    %563 = vmatpush.bf16.msra.mxu0 %v371
    %564 = vmatmul.bf16.gmra.mxu0 %v106
    %v565 = vpop.f32.mrf.mxu0
    %v566 = vadd.f32 0.0, %v565
    %v567 = vpop.f32.mrf.mxu0
    %v568 = vadd.f32 0.0, %v567
    %569 = vmatmul.bf16.gmra.mxu0 %v108
    %v570 = vpop.f32.mrf.mxu0
    %v571 = vadd.f32 0.0, %v570
    %v572 = vpop.f32.mrf.mxu0
    %v573 = vadd.f32 0.0, %v572
    %574 = vmatmul.bf16.gmra.mxu0 %v110
    %v575 = vpop.f32.mrf.mxu0
    %v576 = vadd.f32 0.0, %v575
    %v577 = vpop.f32.mrf.mxu0
    %v578 = vadd.f32 0.0, %v577
    %579 = vmatmul.bf16.gmra.mxu0 %v112
    %v580 = vpop.f32.mrf.mxu0
    %v581 = vadd.f32 0.0, %v580
    %v582 = vpop.f32.mrf.mxu0
    %v583 = vadd.f32 0.0, %v582
    %584 = vdwg.mxu0
    %585 = vmatpush.bf16.msra.mxu0 %v431
    %586 = vmatpush.bf16.msra.mxu0 %v427
    %587 = vmatpush.bf16.msra.mxu0 %v423
    %588 = vmatpush.bf16.msra.mxu0 %v419
    %589 = vmatpush.bf16.msra.mxu0 %v415
    %590 = vmatpush.bf16.msra.mxu0 %v411
    %591 = vmatpush.bf16.msra.mxu0 %v407
    %592 = vmatpush.bf16.msra.mxu0 %v403
    %593 = vmatmul.bf16.gmra.mxu0 %v107
    %v594 = vpop.f32.mrf.mxu0
    %v595 = vadd.f32 %v566, %v594
    %v596 = vpop.f32.mrf.mxu0
    %v597 = vadd.f32 %v568, %v596
    %598 = vmatmul.bf16.gmra.mxu0 %v109
    %v599 = vpop.f32.mrf.mxu0
    %v600 = vadd.f32 %v571, %v599
    %v601 = vpop.f32.mrf.mxu0
    %v602 = vadd.f32 %v573, %v601
    %603 = vmatmul.bf16.gmra.mxu0 %v111
    %v604 = vpop.f32.mrf.mxu0
    %v605 = vadd.f32 %v576, %v604
    %v606 = vpop.f32.mrf.mxu0
    %v607 = vadd.f32 %v578, %v606
    %608 = vmatmul.bf16.gmra.mxu0 %v113
    %v609 = vpop.f32.mrf.mxu0
    %v610 = vadd.f32 %v581, %v609
    %v611 = vpop.f32.mrf.mxu0
    %v612 = vadd.f32 %v583, %v611
    %613 = vdwg.mxu0
    %614 = vmatpush.bf16.msra.mxu0 %v400
    %615 = vmatpush.bf16.msra.mxu0 %v396
    %616 = vmatpush.bf16.msra.mxu0 %v392
    %617 = vmatpush.bf16.msra.mxu0 %v388
    %618 = vmatpush.bf16.msra.mxu0 %v384
    %619 = vmatpush.bf16.msra.mxu0 %v380
    %620 = vmatpush.bf16.msra.mxu0 %v376
    %621 = vmatpush.bf16.msra.mxu0 %v372
    %622 = vmatmul.bf16.gmra.mxu0 %v106
    %v623 = vpop.f32.mrf.mxu0
    %v624 = vadd.f32 0.0, %v623
    %v625 = vpop.f32.mrf.mxu0
    %v626 = vadd.f32 0.0, %v625
    %627 = vmatmul.bf16.gmra.mxu0 %v108
    %v628 = vpop.f32.mrf.mxu0
    %v629 = vadd.f32 0.0, %v628
    %v630 = vpop.f32.mrf.mxu0
    %v631 = vadd.f32 0.0, %v630
    %632 = vmatmul.bf16.gmra.mxu0 %v110
    %v633 = vpop.f32.mrf.mxu0
    %v634 = vadd.f32 0.0, %v633
    %v635 = vpop.f32.mrf.mxu0
    %v636 = vadd.f32 0.0, %v635
    %637 = vmatmul.bf16.gmra.mxu0 %v112
    %v638 = vpop.f32.mrf.mxu0
    %v639 = vadd.f32 0.0, %v638
    %v640 = vpop.f32.mrf.mxu0
    %v641 = vadd.f32 0.0, %v640
    %642 = vdwg.mxu0
    %643 = vmatpush.bf16.msra.mxu0 %v432
    %644 = vmatpush.bf16.msra.mxu0 %v428
    %645 = vmatpush.bf16.msra.mxu0 %v424
    %646 = vmatpush.bf16.msra.mxu0 %v420
    %647 = vmatpush.bf16.msra.mxu0 %v416
    %648 = vmatpush.bf16.msra.mxu0 %v412
    %649 = vmatpush.bf16.msra.mxu0 %v408
    %650 = vmatpush.bf16.msra.mxu0 %v404
    %651 = vmatmul.bf16.gmra.mxu0 %v107
    %v652 = vpop.f32.mrf.mxu0
    %v653 = vadd.f32 %v624, %v652
    %v654 = vpop.f32.mrf.mxu0
    %v655 = vadd.f32 %v626, %v654
    %656 = vmatmul.bf16.gmra.mxu0 %v109
    %v657 = vpop.f32.mrf.mxu0
    %v658 = vadd.f32 %v629, %v657
    %v659 = vpop.f32.mrf.mxu0
    %v660 = vadd.f32 %v631, %v659
    %661 = vmatmul.bf16.gmra.mxu0 %v111
    %v662 = vpop.f32.mrf.mxu0
    %v663 = vadd.f32 %v634, %v662
    %v664 = vpop.f32.mrf.mxu0
    %v665 = vadd.f32 %v636, %v664
    %666 = vmatmul.bf16.gmra.mxu0 %v113
    %v667 = vpop.f32.mrf.mxu0
    %v668 = vadd.f32 %v639, %v667
    %v669 = vpop.f32.mrf.mxu0
    %v670 = vadd.f32 %v641, %v669
    %671 = vdwg.mxu0
    %672 = vmatpush.bf16.msra.mxu0 %v401
    %673 = vmatpush.bf16.msra.mxu0 %v397
    %674 = vmatpush.bf16.msra.mxu0 %v393
    %675 = vmatpush.bf16.msra.mxu0 %v389
    %676 = vmatpush.bf16.msra.mxu0 %v385
    %677 = vmatpush.bf16.msra.mxu0 %v381
    %678 = vmatpush.bf16.msra.mxu0 %v377
    %679 = vmatpush.bf16.msra.mxu0 %v373
    %680 = vmatmul.bf16.gmra.mxu0 %v106
    %v681 = vpop.f32.mrf.mxu0
    %v682 = vadd.f32 0.0, %v681
    %v683 = vpop.f32.mrf.mxu0
    %v684 = vadd.f32 0.0, %v683
    %685 = vmatmul.bf16.gmra.mxu0 %v108
    %v686 = vpop.f32.mrf.mxu0
    %v687 = vadd.f32 0.0, %v686
    %v688 = vpop.f32.mrf.mxu0
    %v689 = vadd.f32 0.0, %v688
    %690 = vmatmul.bf16.gmra.mxu0 %v110
    %v691 = vpop.f32.mrf.mxu0
    %v692 = vadd.f32 0.0, %v691
    %v693 = vpop.f32.mrf.mxu0
    %v694 = vadd.f32 0.0, %v693
    %695 = vmatmul.bf16.gmra.mxu0 %v112
    %v696 = vpop.f32.mrf.mxu0
    %v697 = vadd.f32 0.0, %v696
    %v698 = vpop.f32.mrf.mxu0
    %v699 = vadd.f32 0.0, %v698
    %700 = vdwg.mxu0
    %701 = vmatpush.bf16.msra.mxu0 %v433
    %702 = vmatpush.bf16.msra.mxu0 %v429
    %703 = vmatpush.bf16.msra.mxu0 %v425
    %704 = vmatpush.bf16.msra.mxu0 %v421
    %705 = vmatpush.bf16.msra.mxu0 %v417
    %706 = vmatpush.bf16.msra.mxu0 %v413
    %707 = vmatpush.bf16.msra.mxu0 %v409
    %708 = vmatpush.bf16.msra.mxu0 %v405
    %709 = vmatmul.bf16.gmra.mxu0 %v107
    %v710 = vpop.f32.mrf.mxu0
    %v711 = vadd.f32 %v682, %v710
    %v712 = vpop.f32.mrf.mxu0
    %v713 = vadd.f32 %v684, %v712
    %714 = vmatmul.bf16.gmra.mxu0 %v109
    %v715 = vpop.f32.mrf.mxu0
    %v716 = vadd.f32 %v687, %v715
    %v717 = vpop.f32.mrf.mxu0
    %v718 = vadd.f32 %v689, %v717
    %719 = vmatmul.bf16.gmra.mxu0 %v111
    %v720 = vpop.f32.mrf.mxu0
    %v721 = vadd.f32 %v692, %v720
    %v722 = vpop.f32.mrf.mxu0
    %v723 = vadd.f32 %v694, %v722
    %724 = vmatmul.bf16.gmra.mxu0 %v113
    %v725 = vpop.f32.mrf.mxu0
    %v726 = vadd.f32 %v697, %v725
    %v727 = vpop.f32.mrf.mxu0
    %v728 = vadd.f32 %v699, %v727
    %729 = vdwg.mxu0
    %v730 = vpack.c.bf16 %v595, %v537
    %v731 = vpack.c.bf16 %v711, %v653
    %v732 = vpack.c.bf16 %v597, %v539
    %v733 = vpack.c.bf16 %v713, %v655
    %v734 = vpack.c.bf16 %v600, %v542
    %v735 = vpack.c.bf16 %v716, %v658
    %v736 = vpack.c.bf16 %v602, %v544
    %v737 = vpack.c.bf16 %v718, %v660
    %v738 = vpack.c.bf16 %v605, %v547
    %v739 = vpack.c.bf16 %v721, %v663
    %v740 = vpack.c.bf16 %v607, %v549
    %v741 = vpack.c.bf16 %v723, %v665
    %v742 = vpack.c.bf16 %v610, %v552
    %v743 = vpack.c.bf16 %v726, %v668
    %v744 = vpack.c.bf16 %v612, %v554
    %v745 = vpack.c.bf16 %v728, %v670
    %746 = vst [vmem:[%s3] sm:$0xff] %v730
    %747 = vst [vmem:[%s3 + $0x8] sm:$0xff] %v731
    %748 = vst [vmem:[%s3 + $0x10] sm:$0xff] %v732
    %749 = vst [vmem:[%s3 + $0x18] sm:$0xff] %v733
    %750 = vst [vmem:[%s3 + $0x20] sm:$0xff] %v734
    %751 = vst [vmem:[%s3 + $0x28] sm:$0xff] %v735
    %752 = vst [vmem:[%s3 + $0x30] sm:$0xff] %v736
    %753 = vst [vmem:[%s3 + $0x38] sm:$0xff] %v737
    %754 = vst [vmem:[%s3 + $0x40] sm:$0xff] %v738
    %755 = vst [vmem:[%s3 + $0x48] sm:$0xff] %v739
    %756 = vst [vmem:[%s3 + $0x50] sm:$0xff] %v740
    %757 = vst [vmem:[%s3 + $0x58] sm:$0xff] %v741
    %758 = vst [vmem:[%s3 + $0x60] sm:$0xff] %v742
    %759 = vst [vmem:[%s3 + $0x68] sm:$0xff] %v743
    %760 = vst [vmem:[%s3 + $0x70] sm:$0xff] %v744
    %761 = vst [vmem:[%s3 + $0x78] sm:$0xff] %v745
    // Predicated region
    $region22: #{dec_txt_forward.9} parent=1 // pred_check
      _
    $region23: #{dec_txt_forward.9} parent=1 // pred_check_branch
      %763 = sbr.rel (0) target = $region25
    $region24: #{dec_txt_forward.9} parent=1 // pred_region
      _
    $region25: #{dec_txt_forward.9} parent=1 // pred_fallthru
      _
    // Predicated region
    $region26: #{dec_txt_forward.9} parent=1 // pred_check
      _
    $region27: #{dec_txt_forward.9} parent=1 // pred_check_branch
      %765 = sbr.rel (0) target = $region29
    $region28: #{dec_txt_forward.9} parent=1 // pred_region
      _
    $region29: #{dec_txt_forward.9} parent=1 // pred_fallthru
      _
    %766 = vsyncpa [#allocation3], 1
    %767 = vsyncpa [#allocation5], 1

// kernel: dec_txt_forward.10
$region0: #{dec_txt_forward.10}
  #allocation0 [shape = 'u32[]', space=smem, size = 0x4, offset = 0x4, fixed_abs, tag = 'smem constant byte address 0x4 - core index']
  #allocation1 [shape = 'u32[72,128]{1,0:T(1,128)}', space=vmem, size = 0x9000, scoped, tag = 'internal scratch']
  %s0 = inlined_call_operand.vmem [shape: bf16[128,128], index: 0, kind: input, shape index: {}]
  %s1 = inlined_call_operand.vmem [shape: bf16[128,1024], index: 1, kind: input, shape index: {}]
  %s2 = inlined_call_operand.vmem [shape: f32[1,128], index: 2, kind: input, shape index: {}]
  %s3 = inlined_call_operand.vmem [shape: bf16[128,1024], index: 3, kind: output, shape index: {}]
  %s4 = sld [smem:[#allocation0]]
  $region22: #{dec_txt_forward.10} parent=0
    _
  %s6 = ssub.s32 1, %s4
  %s7 = scalar_select 0, %s6, %s4
  // Predicated region
  $region2: #{dec_txt_forward.10} parent=0 // pred_check
    _
  $region3: #{dec_txt_forward.10} parent=0 // pred_check_branch
    %9 = sbr.rel (0) target = $region5
  $region4: #{dec_txt_forward.10} parent=0 // pred_region
    _
  $region5: #{dec_txt_forward.10} parent=0 // pred_fallthru
    _
  // Predicated region
  $region6: #{dec_txt_forward.10} parent=0 // pred_check
    _
  $region7: #{dec_txt_forward.10} parent=0 // pred_check_branch
    %11 = sbr.rel (0) target = $region9
  $region8: #{dec_txt_forward.10} parent=0 // pred_region
    _
  $region9: #{dec_txt_forward.10} parent=0 // pred_fallthru
    _
  // Predicated region
  $region10: #{dec_txt_forward.10} parent=0 // pred_check
    _
  $region11: #{dec_txt_forward.10} parent=0 // pred_check_branch
    %13 = sbr.rel (0) target = $region13
  $region12: #{dec_txt_forward.10} parent=0 // pred_region
    _
  $region13: #{dec_txt_forward.10} parent=0 // pred_fallthru
    _
  %v14 = vld [vmem:[%s0] sm:$0xf]
  %v15 = vld [vmem:[%s0 + $0x4] sm:$0xf]
  %v16 = vld [vmem:[%s0 + $0x8] sm:$0xf]
  %v17 = vld [vmem:[%s0 + $0xc] sm:$0xf]
  %v18 = vld [vmem:[%s0 + $0x10] sm:$0xf]
  %v19 = vld [vmem:[%s0 + $0x14] sm:$0xf]
  %v20 = vld [vmem:[%s0 + $0x18] sm:$0xf]
  %v21 = vld [vmem:[%s0 + $0x1c] sm:$0xf]
  %v22 = vld [vmem:[%s0 + $0x20] sm:$0xf]
  %v23 = vld [vmem:[%s0 + $0x24] sm:$0xf]
  %v24 = vld [vmem:[%s0 + $0x28] sm:$0xf]
  %v25 = vld [vmem:[%s0 + $0x2c] sm:$0xf]
  %v26 = vld [vmem:[%s0 + $0x30] sm:$0xf]
  %v27 = vld [vmem:[%s0 + $0x34] sm:$0xf]
  %v28 = vld [vmem:[%s0 + $0x38] sm:$0xf]
  %v29 = vld [vmem:[%s0 + $0x3c] sm:$0xf]
  %v30 = vunpack.c.l.bf16 %v14
  %v31 = vunpack.c.l.bf16 %v15
  %v32 = vunpack.c.l.bf16 %v16
  %v33 = vunpack.c.l.bf16 %v17
  %v34 = vunpack.c.l.bf16 %v18
  %v35 = vunpack.c.l.bf16 %v19
  %v36 = vunpack.c.l.bf16 %v20
  %v37 = vunpack.c.l.bf16 %v21
  %v38 = vunpack.c.l.bf16 %v22
  %v39 = vunpack.c.l.bf16 %v23
  %v40 = vunpack.c.l.bf16 %v24
  %v41 = vunpack.c.l.bf16 %v25
  %v42 = vunpack.c.l.bf16 %v26
  %v43 = vunpack.c.l.bf16 %v27
  %v44 = vunpack.c.l.bf16 %v28
  %v45 = vunpack.c.l.bf16 %v29
  %v46 = vld [vmem:[%s2] sm:$0x1]
  %v48 = vperm.slane %v46, 0
  %v50 = vadd.f32 %v30, %v48
  %v51 = vadd.f32 %v31, %v48
  %v52 = vadd.f32 %v32, %v48
  %v53 = vadd.f32 %v33, %v48
  %v54 = vadd.f32 %v34, %v48
  %v55 = vadd.f32 %v35, %v48
  %v56 = vadd.f32 %v36, %v48
  %v57 = vadd.f32 %v37, %v48
  %v58 = vadd.f32 %v38, %v48
  %v59 = vadd.f32 %v39, %v48
  %v60 = vadd.f32 %v40, %v48
  %v61 = vadd.f32 %v41, %v48
  %v62 = vadd.f32 %v42, %v48
  %v63 = vadd.f32 %v43, %v48
  %v64 = vadd.f32 %v44, %v48
  %v65 = vadd.f32 %v45, %v48
  %v66 = vmax.f32 %v50, 0.0
  %v67 = vmax.f32 %v51, 0.0
  %v68 = vmax.f32 %v52, 0.0
  %v69 = vmax.f32 %v53, 0.0
  %v70 = vmax.f32 %v54, 0.0
  %v71 = vmax.f32 %v55, 0.0
  %v72 = vmax.f32 %v56, 0.0
  %v73 = vmax.f32 %v57, 0.0
  %v74 = vmax.f32 %v58, 0.0
  %v75 = vmax.f32 %v59, 0.0
  %v76 = vmax.f32 %v60, 0.0
  %v77 = vmax.f32 %v61, 0.0
  %v78 = vmax.f32 %v62, 0.0
  %v79 = vmax.f32 %v63, 0.0
  %v80 = vmax.f32 %v64, 0.0
  %v81 = vmax.f32 %v65, 0.0
  %v82 = vpack.c.bf16 %v67, %v66
  %v83 = vpack.c.bf16 %v69, %v68
  %v84 = vpack.c.bf16 %v71, %v70
  %v85 = vpack.c.bf16 %v73, %v72
  %v86 = vpack.c.bf16 %v75, %v74
  %v87 = vpack.c.bf16 %v77, %v76
  %v88 = vpack.c.bf16 %v79, %v78
  %v89 = vpack.c.bf16 %v81, %v80
  %v90 = vld [vmem:[%s1] sm:$0xff]
  %v91 = vld [vmem:[%s1 + $0x8] sm:$0xff]
  %v92 = vld [vmem:[%s1 + $0x10] sm:$0xff]
  %v93 = vld [vmem:[%s1 + $0x18] sm:$0xff]
  %v94 = vld [vmem:[%s1 + $0x20] sm:$0xff]
  %v95 = vld [vmem:[%s1 + $0x28] sm:$0xff]
  %v96 = vld [vmem:[%s1 + $0x30] sm:$0xff]
  %v97 = vld [vmem:[%s1 + $0x38] sm:$0xff]
  %v98 = vld [vmem:[%s1 + $0x40] sm:$0xff]
  %v99 = vld [vmem:[%s1 + $0x48] sm:$0xff]
  %v100 = vld [vmem:[%s1 + $0x50] sm:$0xff]
  %v101 = vld [vmem:[%s1 + $0x58] sm:$0xff]
  %v102 = vld [vmem:[%s1 + $0x60] sm:$0xff]
  %v103 = vld [vmem:[%s1 + $0x68] sm:$0xff]
  %v104 = vld [vmem:[%s1 + $0x70] sm:$0xff]
  %v105 = vld [vmem:[%s1 + $0x78] sm:$0xff]
  %v106 = vld [vmem:[%s1 + $0x80] sm:$0xff]
  %v107 = vld [vmem:[%s1 + $0x88] sm:$0xff]
  %v108 = vld [vmem:[%s1 + $0x90] sm:$0xff]
  %v109 = vld [vmem:[%s1 + $0x98] sm:$0xff]
  %v110 = vld [vmem:[%s1 + $0xa0] sm:$0xff]
  %v111 = vld [vmem:[%s1 + $0xa8] sm:$0xff]
  %v112 = vld [vmem:[%s1 + $0xb0] sm:$0xff]
  %v113 = vld [vmem:[%s1 + $0xb8] sm:$0xff]
  %v114 = vld [vmem:[%s1 + $0xc0] sm:$0xff]
  %v115 = vld [vmem:[%s1 + $0xc8] sm:$0xff]
  %v116 = vld [vmem:[%s1 + $0xd0] sm:$0xff]
  %v117 = vld [vmem:[%s1 + $0xd8] sm:$0xff]
  %v118 = vld [vmem:[%s1 + $0xe0] sm:$0xff]
  %v119 = vld [vmem:[%s1 + $0xe8] sm:$0xff]
  %v120 = vld [vmem:[%s1 + $0xf0] sm:$0xff]
  %v121 = vld [vmem:[%s1 + $0xf8] sm:$0xff]
  %v122 = vld [vmem:[%s1 + $0x100] sm:$0xff]
  %v123 = vld [vmem:[%s1 + $0x108] sm:$0xff]
  %v124 = vld [vmem:[%s1 + $0x110] sm:$0xff]
  %v125 = vld [vmem:[%s1 + $0x118] sm:$0xff]
  %v126 = vld [vmem:[%s1 + $0x120] sm:$0xff]
  %v127 = vld [vmem:[%s1 + $0x128] sm:$0xff]
  %v128 = vld [vmem:[%s1 + $0x130] sm:$0xff]
  %v129 = vld [vmem:[%s1 + $0x138] sm:$0xff]
  %v130 = vld [vmem:[%s1 + $0x140] sm:$0xff]
  %v131 = vld [vmem:[%s1 + $0x148] sm:$0xff]
  %v132 = vld [vmem:[%s1 + $0x150] sm:$0xff]
  %v133 = vld [vmem:[%s1 + $0x158] sm:$0xff]
  %v134 = vld [vmem:[%s1 + $0x160] sm:$0xff]
  %v135 = vld [vmem:[%s1 + $0x168] sm:$0xff]
  %v136 = vld [vmem:[%s1 + $0x170] sm:$0xff]
  %v137 = vld [vmem:[%s1 + $0x178] sm:$0xff]
  %v138 = vld [vmem:[%s1 + $0x180] sm:$0xff]
  %v139 = vld [vmem:[%s1 + $0x188] sm:$0xff]
  %v140 = vld [vmem:[%s1 + $0x190] sm:$0xff]
  %v141 = vld [vmem:[%s1 + $0x198] sm:$0xff]
  %v142 = vld [vmem:[%s1 + $0x1a0] sm:$0xff]
  %v143 = vld [vmem:[%s1 + $0x1a8] sm:$0xff]
  %v144 = vld [vmem:[%s1 + $0x1b0] sm:$0xff]
  %v145 = vld [vmem:[%s1 + $0x1b8] sm:$0xff]
  %v146 = vld [vmem:[%s1 + $0x1c0] sm:$0xff]
  %v147 = vld [vmem:[%s1 + $0x1c8] sm:$0xff]
  %v148 = vld [vmem:[%s1 + $0x1d0] sm:$0xff]
  %v149 = vld [vmem:[%s1 + $0x1d8] sm:$0xff]
  %v150 = vld [vmem:[%s1 + $0x1e0] sm:$0xff]
  %v151 = vld [vmem:[%s1 + $0x1e8] sm:$0xff]
  %v152 = vld [vmem:[%s1 + $0x1f0] sm:$0xff]
  %v153 = vld [vmem:[%s1 + $0x1f8] sm:$0xff]
  %v218 = vunpack.c.l.b16 %v90
  %v219 = vunpack.c.h.b16 %v90
  %v220 = vunpack.c.l.b16 %v91
  %v221 = vunpack.c.h.b16 %v91
  %v222 = vunpack.c.l.b16 %v92
  %v223 = vunpack.c.h.b16 %v92
  %v224 = vunpack.c.l.b16 %v93
  %v225 = vunpack.c.h.b16 %v93
  %v226 = vunpack.c.l.b16 %v94
  %v227 = vunpack.c.h.b16 %v94
  %v228 = vunpack.c.l.b16 %v95
  %v229 = vunpack.c.h.b16 %v95
  %v230 = vunpack.c.l.b16 %v96
  %v231 = vunpack.c.h.b16 %v96
  %v232 = vunpack.c.l.b16 %v97
  %v233 = vunpack.c.h.b16 %v97
  %v234 = vunpack.c.l.b16 %v98
  %v235 = vunpack.c.h.b16 %v98
  %v236 = vunpack.c.l.b16 %v99
  %v237 = vunpack.c.h.b16 %v99
  %v238 = vunpack.c.l.b16 %v100
  %v239 = vunpack.c.h.b16 %v100
  %v240 = vunpack.c.l.b16 %v101
  %v241 = vunpack.c.h.b16 %v101
  %v242 = vunpack.c.l.b16 %v102
  %v243 = vunpack.c.h.b16 %v102
  %v244 = vunpack.c.l.b16 %v103
  %v245 = vunpack.c.h.b16 %v103
  %v246 = vunpack.c.l.b16 %v104
  %v247 = vunpack.c.h.b16 %v104
  %v248 = vunpack.c.l.b16 %v105
  %v249 = vunpack.c.h.b16 %v105
  %v250 = vunpack.c.l.b16 %v106
  %v251 = vunpack.c.h.b16 %v106
  %v252 = vunpack.c.l.b16 %v107
  %v253 = vunpack.c.h.b16 %v107
  %v254 = vunpack.c.l.b16 %v108
  %v255 = vunpack.c.h.b16 %v108
  %v256 = vunpack.c.l.b16 %v109
  %v257 = vunpack.c.h.b16 %v109
  %v258 = vunpack.c.l.b16 %v110
  %v259 = vunpack.c.h.b16 %v110
  %v260 = vunpack.c.l.b16 %v111
  %v261 = vunpack.c.h.b16 %v111
  %v262 = vunpack.c.l.b16 %v112
  %v263 = vunpack.c.h.b16 %v112
  %v264 = vunpack.c.l.b16 %v113
  %v265 = vunpack.c.h.b16 %v113
  %v266 = vunpack.c.l.b16 %v114
  %v267 = vunpack.c.h.b16 %v114
  %v268 = vunpack.c.l.b16 %v115
  %v269 = vunpack.c.h.b16 %v115
  %v270 = vunpack.c.l.b16 %v116
  %v271 = vunpack.c.h.b16 %v116
  %v272 = vunpack.c.l.b16 %v117
  %v273 = vunpack.c.h.b16 %v117
  %v274 = vunpack.c.l.b16 %v118
  %v275 = vunpack.c.h.b16 %v118
  %v276 = vunpack.c.l.b16 %v119
  %v277 = vunpack.c.h.b16 %v119
  %v278 = vunpack.c.l.b16 %v120
  %v279 = vunpack.c.h.b16 %v120
  %v280 = vunpack.c.l.b16 %v121
  %v281 = vunpack.c.h.b16 %v121
  %v282 = vunpack.c.l.b16 %v122
  %v283 = vunpack.c.h.b16 %v122
  %v284 = vunpack.c.l.b16 %v123
  %v285 = vunpack.c.h.b16 %v123
  %v286 = vunpack.c.l.b16 %v124
  %v287 = vunpack.c.h.b16 %v124
  %v288 = vunpack.c.l.b16 %v125
  %v289 = vunpack.c.h.b16 %v125
  %v290 = vunpack.c.l.b16 %v126
  %v291 = vunpack.c.h.b16 %v126
  %v292 = vunpack.c.l.b16 %v127
  %v293 = vunpack.c.h.b16 %v127
  %v294 = vunpack.c.l.b16 %v128
  %v295 = vunpack.c.h.b16 %v128
  %v296 = vunpack.c.l.b16 %v129
  %v297 = vunpack.c.h.b16 %v129
  %v298 = vunpack.c.l.b16 %v130
  %v299 = vunpack.c.h.b16 %v130
  %v300 = vunpack.c.l.b16 %v131
  %v301 = vunpack.c.h.b16 %v131
  %v302 = vunpack.c.l.b16 %v132
  %v303 = vunpack.c.h.b16 %v132
  %v304 = vunpack.c.l.b16 %v133
  %v305 = vunpack.c.h.b16 %v133
  %v306 = vunpack.c.l.b16 %v134
  %v307 = vunpack.c.h.b16 %v134
  %v308 = vunpack.c.l.b16 %v135
  %v309 = vunpack.c.h.b16 %v135
  %v310 = vunpack.c.l.b16 %v136
  %v311 = vunpack.c.h.b16 %v136
  %v312 = vunpack.c.l.b16 %v137
  %v313 = vunpack.c.h.b16 %v137
  %v314 = vunpack.c.l.b16 %v138
  %v315 = vunpack.c.h.b16 %v138
  %v316 = vunpack.c.l.b16 %v139
  %v317 = vunpack.c.h.b16 %v139
  %v318 = vunpack.c.l.b16 %v140
  %v319 = vunpack.c.h.b16 %v140
  %v320 = vunpack.c.l.b16 %v141
  %v321 = vunpack.c.h.b16 %v141
  %v322 = vunpack.c.l.b16 %v142
  %v323 = vunpack.c.h.b16 %v142
  %v324 = vunpack.c.l.b16 %v143
  %v325 = vunpack.c.h.b16 %v143
  %v326 = vunpack.c.l.b16 %v144
  %v327 = vunpack.c.h.b16 %v144
  %v328 = vunpack.c.l.b16 %v145
  %v329 = vunpack.c.h.b16 %v145
  %v330 = vunpack.c.l.b16 %v146
  %v331 = vunpack.c.h.b16 %v146
  %v332 = vunpack.c.l.b16 %v147
  %v333 = vunpack.c.h.b16 %v147
  %v334 = vunpack.c.l.b16 %v148
  %v335 = vunpack.c.h.b16 %v148
  %v336 = vunpack.c.l.b16 %v149
  %v337 = vunpack.c.h.b16 %v149
  %v338 = vunpack.c.l.b16 %v150
  %v339 = vunpack.c.h.b16 %v150
  %v340 = vunpack.c.l.b16 %v151
  %v341 = vunpack.c.h.b16 %v151
  %v342 = vunpack.c.l.b16 %v152
  %v343 = vunpack.c.h.b16 %v152
  %v344 = vunpack.c.l.b16 %v153
  %v345 = vunpack.c.h.b16 %v153
  %v346 = vpack.c.b16 %v226, %v218
  %v347 = vpack.c.b16 %v227, %v219
  %v348 = vpack.c.b16 %v228, %v220
  %v349 = vpack.c.b16 %v229, %v221
  %v350 = vpack.c.b16 %v230, %v222
  %v351 = vpack.c.b16 %v231, %v223
  %v352 = vpack.c.b16 %v232, %v224
  %v353 = vpack.c.b16 %v233, %v225
  %v354 = vpack.c.b16 %v242, %v234
  %v355 = vpack.c.b16 %v243, %v235
  %v356 = vpack.c.b16 %v244, %v236
  %v357 = vpack.c.b16 %v245, %v237
  %v358 = vpack.c.b16 %v246, %v238
  %v359 = vpack.c.b16 %v247, %v239
  %v360 = vpack.c.b16 %v248, %v240
  %v361 = vpack.c.b16 %v249, %v241
  %v362 = vpack.c.b16 %v258, %v250
  %v363 = vpack.c.b16 %v259, %v251
  %v364 = vpack.c.b16 %v260, %v252
  %v365 = vpack.c.b16 %v261, %v253
  %v366 = vpack.c.b16 %v262, %v254
  %v367 = vpack.c.b16 %v263, %v255
  %v368 = vpack.c.b16 %v264, %v256
  %v369 = vpack.c.b16 %v265, %v257
  %v370 = vpack.c.b16 %v274, %v266
  %v371 = vpack.c.b16 %v275, %v267
  %v372 = vpack.c.b16 %v276, %v268
  %v373 = vpack.c.b16 %v277, %v269
  %v374 = vpack.c.b16 %v278, %v270
  %v375 = vpack.c.b16 %v279, %v271
  %v376 = vpack.c.b16 %v280, %v272
  %v377 = vpack.c.b16 %v281, %v273
  %v378 = vpack.c.b16 %v290, %v282
  %v379 = vpack.c.b16 %v291, %v283
  %v380 = vpack.c.b16 %v292, %v284
  %v381 = vpack.c.b16 %v293, %v285
  %v382 = vpack.c.b16 %v294, %v286
  %v383 = vpack.c.b16 %v295, %v287
  %v384 = vpack.c.b16 %v296, %v288
  %v385 = vpack.c.b16 %v297, %v289
  %v386 = vpack.c.b16 %v306, %v298
  %v387 = vpack.c.b16 %v307, %v299
  %v388 = vpack.c.b16 %v308, %v300
  %v389 = vpack.c.b16 %v309, %v301
  %v390 = vpack.c.b16 %v310, %v302
  %v391 = vpack.c.b16 %v311, %v303
  %v392 = vpack.c.b16 %v312, %v304
  %v393 = vpack.c.b16 %v313, %v305
  %v394 = vpack.c.b16 %v322, %v314
  %v395 = vpack.c.b16 %v323, %v315
  %v396 = vpack.c.b16 %v324, %v316
  %v397 = vpack.c.b16 %v325, %v317
  %v398 = vpack.c.b16 %v326, %v318
  %v399 = vpack.c.b16 %v327, %v319
  %v400 = vpack.c.b16 %v328, %v320
  %v401 = vpack.c.b16 %v329, %v321
  %v402 = vpack.c.b16 %v338, %v330
  %v403 = vpack.c.b16 %v339, %v331
  %v404 = vpack.c.b16 %v340, %v332
  %v405 = vpack.c.b16 %v341, %v333
  %v406 = vpack.c.b16 %v342, %v334
  %v407 = vpack.c.b16 %v343, %v335
  %v408 = vpack.c.b16 %v344, %v336
  %v409 = vpack.c.b16 %v345, %v337
  %474 = vmatpush.bf16.msra.mxu0 %v402
  %475 = vmatpush.bf16.msra.mxu0 %v394
  %476 = vmatpush.bf16.msra.mxu0 %v386
  %477 = vmatpush.bf16.msra.mxu0 %v378
  %478 = vmatpush.bf16.msra.mxu0 %v370
  %479 = vmatpush.bf16.msra.mxu0 %v362
  %480 = vmatpush.bf16.msra.mxu0 %v354
  %481 = vmatpush.bf16.msra.mxu0 %v346
  %482 = vmatmul.bf16.gmra.mxu0 %v82
  %v483 = vpop.f32.mrf.mxu0
  %v484 = vadd.f32 0.0, %v483
  %v485 = vpop.f32.mrf.mxu0
  %v486 = vadd.f32 0.0, %v485
  %487 = vmatmul.bf16.gmra.mxu0 %v83
  %v488 = vpop.f32.mrf.mxu0
  %v489 = vadd.f32 0.0, %v488
  %v490 = vpop.f32.mrf.mxu0
  %v491 = vadd.f32 0.0, %v490
  %492 = vmatmul.bf16.gmra.mxu0 %v84
  %v493 = vpop.f32.mrf.mxu0
  %v494 = vadd.f32 0.0, %v493
  %v495 = vpop.f32.mrf.mxu0
  %v496 = vadd.f32 0.0, %v495
  %497 = vmatmul.bf16.gmra.mxu0 %v85
  %v498 = vpop.f32.mrf.mxu0
  %v499 = vadd.f32 0.0, %v498
  %v500 = vpop.f32.mrf.mxu0
  %v501 = vadd.f32 0.0, %v500
  %502 = vmatmul.bf16.gmra.mxu0 %v86
  %v503 = vpop.f32.mrf.mxu0
  %v504 = vadd.f32 0.0, %v503
  %v505 = vpop.f32.mrf.mxu0
  %v506 = vadd.f32 0.0, %v505
  %507 = vmatmul.bf16.gmra.mxu0 %v87
  %v508 = vpop.f32.mrf.mxu0
  %v509 = vadd.f32 0.0, %v508
  %v510 = vpop.f32.mrf.mxu0
  %v511 = vadd.f32 0.0, %v510
  %512 = vmatmul.bf16.gmra.mxu0 %v88
  %v513 = vpop.f32.mrf.mxu0
  %v514 = vadd.f32 0.0, %v513
  %v515 = vpop.f32.mrf.mxu0
  %v516 = vadd.f32 0.0, %v515
  %517 = vmatmul.bf16.gmra.mxu0 %v89
  %v518 = vpop.f32.mrf.mxu0
  %v519 = vadd.f32 0.0, %v518
  %v520 = vpop.f32.mrf.mxu0
  %v521 = vadd.f32 0.0, %v520
  %522 = vdwg.mxu0
  %523 = vmatpush.bf16.msra.mxu0 %v403
  %524 = vmatpush.bf16.msra.mxu0 %v395
  %525 = vmatpush.bf16.msra.mxu0 %v387
  %526 = vmatpush.bf16.msra.mxu0 %v379
  %527 = vmatpush.bf16.msra.mxu0 %v371
  %528 = vmatpush.bf16.msra.mxu0 %v363
  %529 = vmatpush.bf16.msra.mxu0 %v355
  %530 = vmatpush.bf16.msra.mxu0 %v347
  %531 = vmatmul.bf16.gmra.mxu0 %v82
  %v532 = vpop.f32.mrf.mxu0
  %v533 = vadd.f32 0.0, %v532
  %v534 = vpop.f32.mrf.mxu0
  %v535 = vadd.f32 0.0, %v534
  %536 = vmatmul.bf16.gmra.mxu0 %v83
  %v537 = vpop.f32.mrf.mxu0
  %v538 = vadd.f32 0.0, %v537
  %v539 = vpop.f32.mrf.mxu0
  %v540 = vadd.f32 0.0, %v539
  %541 = vmatmul.bf16.gmra.mxu0 %v84
  %v542 = vpop.f32.mrf.mxu0
  %v543 = vadd.f32 0.0, %v542
  %v544 = vpop.f32.mrf.mxu0
  %v545 = vadd.f32 0.0, %v544
  %546 = vmatmul.bf16.gmra.mxu0 %v85
  %v547 = vpop.f32.mrf.mxu0
  %v548 = vadd.f32 0.0, %v547
  %v549 = vpop.f32.mrf.mxu0
  %v550 = vadd.f32 0.0, %v549
  %551 = vmatmul.bf16.gmra.mxu0 %v86
  %v552 = vpop.f32.mrf.mxu0
  %v553 = vadd.f32 0.0, %v552
  %v554 = vpop.f32.mrf.mxu0
  %v555 = vadd.f32 0.0, %v554
  %556 = vmatmul.bf16.gmra.mxu0 %v87
  %v557 = vpop.f32.mrf.mxu0
  %v558 = vadd.f32 0.0, %v557
  %v559 = vpop.f32.mrf.mxu0
  %v560 = vadd.f32 0.0, %v559
  %561 = vmatmul.bf16.gmra.mxu0 %v88
  %v562 = vpop.f32.mrf.mxu0
  %v563 = vadd.f32 0.0, %v562
  %v564 = vpop.f32.mrf.mxu0
  %v565 = vadd.f32 0.0, %v564
  %566 = vmatmul.bf16.gmra.mxu0 %v89
  %v567 = vpop.f32.mrf.mxu0
  %v568 = vadd.f32 0.0, %v567
  %v569 = vpop.f32.mrf.mxu0
  %v570 = vadd.f32 0.0, %v569
  %571 = vdwg.mxu0
  %572 = vmatpush.bf16.msra.mxu0 %v404
  %573 = vmatpush.bf16.msra.mxu0 %v396
  %574 = vmatpush.bf16.msra.mxu0 %v388
  %575 = vmatpush.bf16.msra.mxu0 %v380
  %576 = vmatpush.bf16.msra.mxu0 %v372
  %577 = vmatpush.bf16.msra.mxu0 %v364
  %578 = vmatpush.bf16.msra.mxu0 %v356
  %579 = vmatpush.bf16.msra.mxu0 %v348
  %580 = vmatmul.bf16.gmra.mxu0 %v82
  %v581 = vpop.f32.mrf.mxu0
  %v582 = vadd.f32 0.0, %v581
  %v583 = vpop.f32.mrf.mxu0
  %v584 = vadd.f32 0.0, %v583
  %585 = vmatmul.bf16.gmra.mxu0 %v83
  %v586 = vpop.f32.mrf.mxu0
  %v587 = vadd.f32 0.0, %v586
  %v588 = vpop.f32.mrf.mxu0
  %v589 = vadd.f32 0.0, %v588
  %590 = vmatmul.bf16.gmra.mxu0 %v84
  %v591 = vpop.f32.mrf.mxu0
  %v592 = vadd.f32 0.0, %v591
  %v593 = vpop.f32.mrf.mxu0
  %v594 = vadd.f32 0.0, %v593
  %595 = vmatmul.bf16.gmra.mxu0 %v85
  %v596 = vpop.f32.mrf.mxu0
  %v597 = vadd.f32 0.0, %v596
  %v598 = vpop.f32.mrf.mxu0
  %v599 = vadd.f32 0.0, %v598
  %600 = vmatmul.bf16.gmra.mxu0 %v86
  %v601 = vpop.f32.mrf.mxu0
  %v602 = vadd.f32 0.0, %v601
  %v603 = vpop.f32.mrf.mxu0
  %v604 = vadd.f32 0.0, %v603
  %605 = vmatmul.bf16.gmra.mxu0 %v87
  %v606 = vpop.f32.mrf.mxu0
  %v607 = vadd.f32 0.0, %v606
  %v608 = vpop.f32.mrf.mxu0
  %v609 = vadd.f32 0.0, %v608
  %610 = vmatmul.bf16.gmra.mxu0 %v88
  %v611 = vpop.f32.mrf.mxu0
  %v612 = vadd.f32 0.0, %v611
  %v613 = vpop.f32.mrf.mxu0
  %v614 = vadd.f32 0.0, %v613
  %615 = vmatmul.bf16.gmra.mxu0 %v89
  %v616 = vpop.f32.mrf.mxu0
  %v617 = vadd.f32 0.0, %v616
  %v618 = vpop.f32.mrf.mxu0
  %v619 = vadd.f32 0.0, %v618
  %620 = vdwg.mxu0
  %621 = vmatpush.bf16.msra.mxu0 %v405
  %622 = vmatpush.bf16.msra.mxu0 %v397
  %623 = vmatpush.bf16.msra.mxu0 %v389
  %624 = vmatpush.bf16.msra.mxu0 %v381
  %625 = vmatpush.bf16.msra.mxu0 %v373
  %626 = vmatpush.bf16.msra.mxu0 %v365
  %627 = vmatpush.bf16.msra.mxu0 %v357
  %628 = vmatpush.bf16.msra.mxu0 %v349
  %629 = vmatmul.bf16.gmra.mxu0 %v82
  %v630 = vpop.f32.mrf.mxu0
  %v631 = vadd.f32 0.0, %v630
  %v632 = vpop.f32.mrf.mxu0
  %v633 = vadd.f32 0.0, %v632
  %634 = vmatmul.bf16.gmra.mxu0 %v83
  %v635 = vpop.f32.mrf.mxu0
  %v636 = vadd.f32 0.0, %v635
  %v637 = vpop.f32.mrf.mxu0
  %v638 = vadd.f32 0.0, %v637
  %639 = vmatmul.bf16.gmra.mxu0 %v84
  %v640 = vpop.f32.mrf.mxu0
  %v641 = vadd.f32 0.0, %v640
  %v642 = vpop.f32.mrf.mxu0
  %v643 = vadd.f32 0.0, %v642
  %644 = vmatmul.bf16.gmra.mxu0 %v85
  %v645 = vpop.f32.mrf.mxu0
  %v646 = vadd.f32 0.0, %v645
  %v647 = vpop.f32.mrf.mxu0
  %v648 = vadd.f32 0.0, %v647
  %649 = vmatmul.bf16.gmra.mxu0 %v86
  %v650 = vpop.f32.mrf.mxu0
  %v651 = vadd.f32 0.0, %v650
  %v652 = vpop.f32.mrf.mxu0
  %v653 = vadd.f32 0.0, %v652
  %654 = vmatmul.bf16.gmra.mxu0 %v87
  %v655 = vpop.f32.mrf.mxu0
  %v656 = vadd.f32 0.0, %v655
  %v657 = vpop.f32.mrf.mxu0
  %v658 = vadd.f32 0.0, %v657
  %659 = vmatmul.bf16.gmra.mxu0 %v88
  %v660 = vpop.f32.mrf.mxu0
  %v661 = vadd.f32 0.0, %v660
  %v662 = vpop.f32.mrf.mxu0
  %v663 = vadd.f32 0.0, %v662
  %664 = vmatmul.bf16.gmra.mxu0 %v89
  %v665 = vpop.f32.mrf.mxu0
  %v666 = vadd.f32 0.0, %v665
  %v667 = vpop.f32.mrf.mxu0
  %v668 = vadd.f32 0.0, %v667
  %669 = vdwg.mxu0
  %670 = vmatpush.bf16.msra.mxu0 %v406
  %671 = vmatpush.bf16.msra.mxu0 %v398
  %672 = vmatpush.bf16.msra.mxu0 %v390
  %673 = vmatpush.bf16.msra.mxu0 %v382
  %674 = vmatpush.bf16.msra.mxu0 %v374
  %675 = vmatpush.bf16.msra.mxu0 %v366
  %676 = vmatpush.bf16.msra.mxu0 %v358
  %677 = vmatpush.bf16.msra.mxu0 %v350
  %678 = vmatmul.bf16.gmra.mxu0 %v82
  %v679 = vpop.f32.mrf.mxu0
  %v680 = vadd.f32 0.0, %v679
  %v681 = vpop.f32.mrf.mxu0
  %v682 = vadd.f32 0.0, %v681
  %683 = vmatmul.bf16.gmra.mxu0 %v83
  %v684 = vpop.f32.mrf.mxu0
  %v685 = vadd.f32 0.0, %v684
  %v686 = vpop.f32.mrf.mxu0
  %v687 = vadd.f32 0.0, %v686
  %688 = vmatmul.bf16.gmra.mxu0 %v84
  %v689 = vpop.f32.mrf.mxu0
  %v690 = vadd.f32 0.0, %v689
  %v691 = vpop.f32.mrf.mxu0
  %v692 = vadd.f32 0.0, %v691
  %693 = vmatmul.bf16.gmra.mxu0 %v85
  %v694 = vpop.f32.mrf.mxu0
  %v695 = vadd.f32 0.0, %v694
  %v696 = vpop.f32.mrf.mxu0
  %v697 = vadd.f32 0.0, %v696
  %698 = vmatmul.bf16.gmra.mxu0 %v86
  %v699 = vpop.f32.mrf.mxu0
  %v700 = vadd.f32 0.0, %v699
  %v701 = vpop.f32.mrf.mxu0
  %v702 = vadd.f32 0.0, %v701
  %703 = vmatmul.bf16.gmra.mxu0 %v87
  %v704 = vpop.f32.mrf.mxu0
  %v705 = vadd.f32 0.0, %v704
  %v706 = vpop.f32.mrf.mxu0
  %v707 = vadd.f32 0.0, %v706
  %708 = vmatmul.bf16.gmra.mxu0 %v88
  %v709 = vpop.f32.mrf.mxu0
  %v710 = vadd.f32 0.0, %v709
  %v711 = vpop.f32.mrf.mxu0
  %v712 = vadd.f32 0.0, %v711
  %713 = vmatmul.bf16.gmra.mxu0 %v89
  %v714 = vpop.f32.mrf.mxu0
  %v715 = vadd.f32 0.0, %v714
  %v716 = vpop.f32.mrf.mxu0
  %v717 = vadd.f32 0.0, %v716
  %718 = vdwg.mxu0
  %719 = vmatpush.bf16.msra.mxu0 %v407
  %720 = vmatpush.bf16.msra.mxu0 %v399
  %721 = vmatpush.bf16.msra.mxu0 %v391
  %722 = vmatpush.bf16.msra.mxu0 %v383
  %723 = vmatpush.bf16.msra.mxu0 %v375
  %724 = vmatpush.bf16.msra.mxu0 %v367
  %725 = vmatpush.bf16.msra.mxu0 %v359
  %726 = vmatpush.bf16.msra.mxu0 %v351
  %727 = vmatmul.bf16.gmra.mxu0 %v82
  %v728 = vpop.f32.mrf.mxu0
  %v729 = vadd.f32 0.0, %v728
  %v730 = vpop.f32.mrf.mxu0
  %v731 = vadd.f32 0.0, %v730
  %732 = vmatmul.bf16.gmra.mxu0 %v83
  %v733 = vpop.f32.mrf.mxu0
  %v734 = vadd.f32 0.0, %v733
  %v735 = vpop.f32.mrf.mxu0
  %v736 = vadd.f32 0.0, %v735
  %737 = vmatmul.bf16.gmra.mxu0 %v84
  %v738 = vpop.f32.mrf.mxu0
  %v739 = vadd.f32 0.0, %v738
  %v740 = vpop.f32.mrf.mxu0
  %v741 = vadd.f32 0.0, %v740
  %742 = vmatmul.bf16.gmra.mxu0 %v85
  %v743 = vpop.f32.mrf.mxu0
  %v744 = vadd.f32 0.0, %v743
  %v745 = vpop.f32.mrf.mxu0
  %v746 = vadd.f32 0.0, %v745
  %747 = vmatmul.bf16.gmra.mxu0 %v86
  %v748 = vpop.f32.mrf.mxu0
  %v749 = vadd.f32 0.0, %v748
  %v750 = vpop.f32.mrf.mxu0
  %v751 = vadd.f32 0.0, %v750
  %752 = vmatmul.bf16.gmra.mxu0 %v87
  %v753 = vpop.f32.mrf.mxu0
  %v754 = vadd.f32 0.0, %v753
  %v755 = vpop.f32.mrf.mxu0
  %v756 = vadd.f32 0.0, %v755
  %757 = vmatmul.bf16.gmra.mxu0 %v88
  %v758 = vpop.f32.mrf.mxu0
  %v759 = vadd.f32 0.0, %v758
  %v760 = vpop.f32.mrf.mxu0
  %v761 = vadd.f32 0.0, %v760
  %762 = vmatmul.bf16.gmra.mxu0 %v89
  %v763 = vpop.f32.mrf.mxu0
  %v764 = vadd.f32 0.0, %v763
  %v765 = vpop.f32.mrf.mxu0
  %v766 = vadd.f32 0.0, %v765
  %767 = vdwg.mxu0
  %768 = vmatpush.bf16.msra.mxu0 %v408
  %769 = vmatpush.bf16.msra.mxu0 %v400
  %770 = vmatpush.bf16.msra.mxu0 %v392
  %771 = vmatpush.bf16.msra.mxu0 %v384
  %772 = vmatpush.bf16.msra.mxu0 %v376
  %773 = vmatpush.bf16.msra.mxu0 %v368
  %774 = vmatpush.bf16.msra.mxu0 %v360
  %775 = vmatpush.bf16.msra.mxu0 %v352
  %776 = vmatmul.bf16.gmra.mxu0 %v82
  %v777 = vpop.f32.mrf.mxu0
  %v778 = vadd.f32 0.0, %v777
  %v779 = vpop.f32.mrf.mxu0
  %v780 = vadd.f32 0.0, %v779
  %781 = vmatmul.bf16.gmra.mxu0 %v83
  %v782 = vpop.f32.mrf.mxu0
  %v783 = vadd.f32 0.0, %v782
  %v784 = vpop.f32.mrf.mxu0
  %v785 = vadd.f32 0.0, %v784
  %786 = vmatmul.bf16.gmra.mxu0 %v84
  %v787 = vpop.f32.mrf.mxu0
  %v788 = vadd.f32 0.0, %v787
  %v789 = vpop.f32.mrf.mxu0
  %v790 = vadd.f32 0.0, %v789
  %791 = vmatmul.bf16.gmra.mxu0 %v85
  %v792 = vpop.f32.mrf.mxu0
  %v793 = vadd.f32 0.0, %v792
  %v794 = vpop.f32.mrf.mxu0
  %v795 = vadd.f32 0.0, %v794
  %796 = vmatmul.bf16.gmra.mxu0 %v86
  %v797 = vpop.f32.mrf.mxu0
  %v798 = vadd.f32 0.0, %v797
  %v799 = vpop.f32.mrf.mxu0
  %v800 = vadd.f32 0.0, %v799
  %801 = vmatmul.bf16.gmra.mxu0 %v87
  %v802 = vpop.f32.mrf.mxu0
  %v803 = vadd.f32 0.0, %v802
  %v804 = vpop.f32.mrf.mxu0
  %v805 = vadd.f32 0.0, %v804
  %806 = vmatmul.bf16.gmra.mxu0 %v88
  %v807 = vpop.f32.mrf.mxu0
  %v808 = vadd.f32 0.0, %v807
  %v809 = vpop.f32.mrf.mxu0
  %v810 = vadd.f32 0.0, %v809
  %811 = vmatmul.bf16.gmra.mxu0 %v89
  %v812 = vpop.f32.mrf.mxu0
  %v813 = vadd.f32 0.0, %v812
  %v814 = vpop.f32.mrf.mxu0
  %v815 = vadd.f32 0.0, %v814
  %816 = vdwg.mxu0
  %817 = vmatpush.bf16.msra.mxu0 %v409
  %818 = vmatpush.bf16.msra.mxu0 %v401
  %819 = vmatpush.bf16.msra.mxu0 %v393
  %820 = vmatpush.bf16.msra.mxu0 %v385
  %821 = vmatpush.bf16.msra.mxu0 %v377
  %822 = vmatpush.bf16.msra.mxu0 %v369
  %823 = vmatpush.bf16.msra.mxu0 %v361
  %824 = vmatpush.bf16.msra.mxu0 %v353
  %825 = vmatmul.bf16.gmra.mxu0 %v82
  %v826 = vpop.f32.mrf.mxu0
  %v827 = vadd.f32 0.0, %v826
  %v828 = vpop.f32.mrf.mxu0
  %v829 = vadd.f32 0.0, %v828
  %830 = vmatmul.bf16.gmra.mxu0 %v83
  %v831 = vpop.f32.mrf.mxu0
  %v832 = vadd.f32 0.0, %v831
  %v833 = vpop.f32.mrf.mxu0
  %v834 = vadd.f32 0.0, %v833
  %835 = vmatmul.bf16.gmra.mxu0 %v84
  %v836 = vpop.f32.mrf.mxu0
  %v837 = vadd.f32 0.0, %v836
  %v838 = vpop.f32.mrf.mxu0
  %v839 = vadd.f32 0.0, %v838
  %840 = vmatmul.bf16.gmra.mxu0 %v85
  %v841 = vpop.f32.mrf.mxu0
  %v842 = vadd.f32 0.0, %v841
  %v843 = vpop.f32.mrf.mxu0
  %v844 = vadd.f32 0.0, %v843
  %845 = vmatmul.bf16.gmra.mxu0 %v86
  %v846 = vpop.f32.mrf.mxu0
  %v847 = vadd.f32 0.0, %v846
  %v848 = vpop.f32.mrf.mxu0
  %v849 = vadd.f32 0.0, %v848
  %850 = vmatmul.bf16.gmra.mxu0 %v87
  %v851 = vpop.f32.mrf.mxu0
  %v852 = vadd.f32 0.0, %v851
  %v853 = vpop.f32.mrf.mxu0
  %v854 = vadd.f32 0.0, %v853
  %855 = vmatmul.bf16.gmra.mxu0 %v88
  %v856 = vpop.f32.mrf.mxu0
  %v857 = vadd.f32 0.0, %v856
  %v858 = vpop.f32.mrf.mxu0
  %v859 = vadd.f32 0.0, %v858
  %860 = vmatmul.bf16.gmra.mxu0 %v89
  %v861 = vpop.f32.mrf.mxu0
  %v862 = vadd.f32 0.0, %v861
  %v863 = vpop.f32.mrf.mxu0
  %v864 = vadd.f32 0.0, %v863
  %865 = vdwg.mxu0
  %v866 = vpack.c.bf16 %v533, %v484
  %v867 = vpack.c.bf16 %v631, %v582
  %v868 = vpack.c.bf16 %v729, %v680
  %v869 = vpack.c.bf16 %v827, %v778
  %v870 = vpack.c.bf16 %v535, %v486
  %v871 = vpack.c.bf16 %v633, %v584
  %v872 = vpack.c.bf16 %v731, %v682
  %v873 = vpack.c.bf16 %v829, %v780
  %v874 = vpack.c.bf16 %v538, %v489
  %v875 = vpack.c.bf16 %v636, %v587
  %v876 = vpack.c.bf16 %v734, %v685
  %v877 = vpack.c.bf16 %v832, %v783
  %v878 = vpack.c.bf16 %v540, %v491
  %v879 = vpack.c.bf16 %v638, %v589
  %v880 = vpack.c.bf16 %v736, %v687
  %v881 = vpack.c.bf16 %v834, %v785
  %v882 = vpack.c.bf16 %v543, %v494
  %v883 = vpack.c.bf16 %v641, %v592
  %v884 = vpack.c.bf16 %v739, %v690
  %v885 = vpack.c.bf16 %v837, %v788
  %v886 = vpack.c.bf16 %v545, %v496
  %v887 = vpack.c.bf16 %v643, %v594
  %v888 = vpack.c.bf16 %v741, %v692
  %v889 = vpack.c.bf16 %v839, %v790
  %v890 = vpack.c.bf16 %v548, %v499
  %v891 = vpack.c.bf16 %v646, %v597
  %v892 = vpack.c.bf16 %v744, %v695
  %v893 = vpack.c.bf16 %v842, %v793
  %v894 = vpack.c.bf16 %v550, %v501
  %v895 = vpack.c.bf16 %v648, %v599
  %v896 = vpack.c.bf16 %v746, %v697
  %v897 = vpack.c.bf16 %v844, %v795
  %v898 = vpack.c.bf16 %v553, %v504
  %v899 = vpack.c.bf16 %v651, %v602
  %v900 = vpack.c.bf16 %v749, %v700
  %v901 = vpack.c.bf16 %v847, %v798
  %v902 = vpack.c.bf16 %v555, %v506
  %v903 = vpack.c.bf16 %v653, %v604
  %v904 = vpack.c.bf16 %v751, %v702
  %v905 = vpack.c.bf16 %v849, %v800
  %v906 = vpack.c.bf16 %v558, %v509
  %v907 = vpack.c.bf16 %v656, %v607
  %v908 = vpack.c.bf16 %v754, %v705
  %v909 = vpack.c.bf16 %v852, %v803
  %v910 = vpack.c.bf16 %v560, %v511
  %v911 = vpack.c.bf16 %v658, %v609
  %v912 = vpack.c.bf16 %v756, %v707
  %v913 = vpack.c.bf16 %v854, %v805
  %v914 = vpack.c.bf16 %v563, %v514
  %v915 = vpack.c.bf16 %v661, %v612
  %v916 = vpack.c.bf16 %v759, %v710
  %v917 = vpack.c.bf16 %v857, %v808
  %v918 = vpack.c.bf16 %v565, %v516
  %v919 = vpack.c.bf16 %v663, %v614
  %v920 = vpack.c.bf16 %v761, %v712
  %v921 = vpack.c.bf16 %v859, %v810
  %v922 = vpack.c.bf16 %v568, %v519
  %v923 = vpack.c.bf16 %v666, %v617
  %v924 = vpack.c.bf16 %v764, %v715
  %v925 = vpack.c.bf16 %v862, %v813
  %v926 = vpack.c.bf16 %v570, %v521
  %v927 = vpack.c.bf16 %v668, %v619
  %v928 = vpack.c.bf16 %v766, %v717
  %v929 = vpack.c.bf16 %v864, %v815
  %930 = vst [vmem:[%s3] sm:$0xff] %v866
  %931 = vst [vmem:[%s3 + $0x8] sm:$0xff] %v867
  %932 = vst [vmem:[%s3 + $0x10] sm:$0xff] %v868
  %933 = vst [vmem:[%s3 + $0x18] sm:$0xff] %v869
  %934 = vst [vmem:[%s3 + $0x20] sm:$0xff] %v870
  %935 = vst [vmem:[%s3 + $0x28] sm:$0xff] %v871
  %936 = vst [vmem:[%s3 + $0x30] sm:$0xff] %v872
  %937 = vst [vmem:[%s3 + $0x38] sm:$0xff] %v873
  %938 = vst [vmem:[%s3 + $0x40] sm:$0xff] %v874
  %939 = vst [vmem:[%s3 + $0x48] sm:$0xff] %v875
  %940 = vst [vmem:[%s3 + $0x50] sm:$0xff] %v876
  %941 = vst [vmem:[%s3 + $0x58] sm:$0xff] %v877
  %942 = vst [vmem:[%s3 + $0x60] sm:$0xff] %v878
  %943 = vst [vmem:[%s3 + $0x68] sm:$0xff] %v879
  %944 = vst [vmem:[%s3 + $0x70] sm:$0xff] %v880
  %945 = vst [vmem:[%s3 + $0x78] sm:$0xff] %v881
  %946 = vst [vmem:[%s3 + $0x80] sm:$0xff] %v882
  %947 = vst [vmem:[%s3 + $0x88] sm:$0xff] %v883
  %948 = vst [vmem:[%s3 + $0x90] sm:$0xff] %v884
  %949 = vst [vmem:[%s3 + $0x98] sm:$0xff] %v885
  %950 = vst [vmem:[%s3 + $0xa0] sm:$0xff] %v886
  %951 = vst [vmem:[%s3 + $0xa8] sm:$0xff] %v887
  %952 = vst [vmem:[%s3 + $0xb0] sm:$0xff] %v888
  %953 = vst [vmem:[%s3 + $0xb8] sm:$0xff] %v889
  %954 = vst [vmem:[%s3 + $0xc0] sm:$0xff] %v890
  %955 = vst [vmem:[%s3 + $0xc8] sm:$0xff] %v891
  %956 = vst [vmem:[%s3 + $0xd0] sm:$0xff] %v892
  %957 = vst [vmem:[%s3 + $0xd8] sm:$0xff] %v893
  %958 = vst [vmem:[%s3 + $0xe0] sm:$0xff] %v894
  %959 = vst [vmem:[%s3 + $0xe8] sm:$0xff] %v895
  %960 = vst [vmem:[%s3 + $0xf0] sm:$0xff] %v896
  %961 = vst [vmem:[%s3 + $0xf8] sm:$0xff] %v897
  %962 = vst [vmem:[%s3 + $0x100] sm:$0xff] %v898
  %963 = vst [vmem:[%s3 + $0x108] sm:$0xff] %v899
  %964 = vst [vmem:[%s3 + $0x110] sm:$0xff] %v900
  %965 = vst [vmem:[%s3 + $0x118] sm:$0xff] %v901
  %966 = vst [vmem:[%s3 + $0x120] sm:$0xff] %v902
  %967 = vst [vmem:[%s3 + $0x128] sm:$0xff] %v903
  %968 = vst [vmem:[%s3 + $0x130] sm:$0xff] %v904
  %969 = vst [vmem:[%s3 + $0x138] sm:$0xff] %v905
  %970 = vst [vmem:[%s3 + $0x140] sm:$0xff] %v906
  %971 = vst [vmem:[%s3 + $0x148] sm:$0xff] %v907
  %972 = vst [vmem:[%s3 + $0x150] sm:$0xff] %v908
  %973 = vst [vmem:[%s3 + $0x158] sm:$0xff] %v909
  %974 = vst [vmem:[%s3 + $0x160] sm:$0xff] %v910
  %975 = vst [vmem:[%s3 + $0x168] sm:$0xff] %v911
  %976 = vst [vmem:[%s3 + $0x170] sm:$0xff] %v912
  %977 = vst [vmem:[%s3 + $0x178] sm:$0xff] %v913
  %978 = vst [vmem:[%s3 + $0x180] sm:$0xff] %v914
  %979 = vst [vmem:[%s3 + $0x188] sm:$0xff] %v915
  %980 = vst [vmem:[%s3 + $0x190] sm:$0xff] %v916
  %981 = vst [vmem:[%s3 + $0x198] sm:$0xff] %v917
  %982 = vst [vmem:[%s3 + $0x1a0] sm:$0xff] %v918
  %983 = vst [vmem:[%s3 + $0x1a8] sm:$0xff] %v919
  %984 = vst [vmem:[%s3 + $0x1b0] sm:$0xff] %v920
  %985 = vst [vmem:[%s3 + $0x1b8] sm:$0xff] %v921
  %986 = vst [vmem:[%s3 + $0x1c0] sm:$0xff] %v922
  %987 = vst [vmem:[%s3 + $0x1c8] sm:$0xff] %v923
  %988 = vst [vmem:[%s3 + $0x1d0] sm:$0xff] %v924
  %989 = vst [vmem:[%s3 + $0x1d8] sm:$0xff] %v925
  %990 = vst [vmem:[%s3 + $0x1e0] sm:$0xff] %v926
  %991 = vst [vmem:[%s3 + $0x1e8] sm:$0xff] %v927
  %992 = vst [vmem:[%s3 + $0x1f0] sm:$0xff] %v928
  %993 = vst [vmem:[%s3 + $0x1f8] sm:$0xff] %v929
  // Predicated region
  $region14: #{dec_txt_forward.10} parent=0 // pred_check
    _
  $region15: #{dec_txt_forward.10} parent=0 // pred_check_branch
    %995 = sbr.rel (0) target = $region17
  $region16: #{dec_txt_forward.10} parent=0 // pred_region
    _
  $region17: #{dec_txt_forward.10} parent=0 // pred_fallthru
    _
  // Predicated region
  $region18: #{dec_txt_forward.10} parent=0 // pred_check
    _
  $region19: #{dec_txt_forward.10} parent=0 // pred_check_branch
    %997 = sbr.rel (0) target = $region21
  $region20: #{dec_txt_forward.10} parent=0 // pred_region
    _
  $region21: #{dec_txt_forward.10} parent=0 // pred_fallthru
    _

// kernel: dec_txt_forward.11
$region0: #{dec_txt_forward.11}
  #allocation0 [shape = 'u32[]', space=smem, size = 0x4, offset = 0x4, fixed_abs, tag = 'smem constant byte address 0x4 - core index']
  #allocation1 [shape = 'u32[72,128]{1,0:T(1,128)}', space=vmem, size = 0x9000, scoped, tag = 'internal scratch']
  %s0 = inlined_call_operand.vmem [shape: bf16[512,64], index: 0, kind: input, shape index: {}]
  %s1 = inlined_call_operand.vmem [shape: bf16[64,512], index: 1, kind: input, shape index: {}]
  %s2 = inlined_call_operand.vmem [shape: f32[1,64], index: 2, kind: input, shape index: {}]
  %s3 = inlined_call_operand.vmem [shape: bf16[512,512], index: 3, kind: output, shape index: {}]
  %s4 = sld [smem:[#allocation0]]
  $region22: #{dec_txt_forward.11} parent=0
    _
  %s6 = ssub.s32 1, %s4
  %s7 = scalar_select 0, %s6, %s4
  // Predicated region
  $region2: #{dec_txt_forward.11} parent=0 // pred_check
    _
  $region3: #{dec_txt_forward.11} parent=0 // pred_check_branch
    %9 = sbr.rel (0) target = $region5
  $region4: #{dec_txt_forward.11} parent=0 // pred_region
    _
  $region5: #{dec_txt_forward.11} parent=0 // pred_fallthru
    _
  // Predicated region
  $region6: #{dec_txt_forward.11} parent=0 // pred_check
    _
  $region7: #{dec_txt_forward.11} parent=0 // pred_check_branch
    %11 = sbr.rel (0) target = $region9
  $region8: #{dec_txt_forward.11} parent=0 // pred_region
    _
  $region9: #{dec_txt_forward.11} parent=0 // pred_fallthru
    _
  // Predicated region
  $region10: #{dec_txt_forward.11} parent=0 // pred_check
    _
  $region11: #{dec_txt_forward.11} parent=0 // pred_check_branch
    %13 = sbr.rel (0) target = $region13
  $region12: #{dec_txt_forward.11} parent=0 // pred_region
    _
  $region13: #{dec_txt_forward.11} parent=0 // pred_fallthru
    _
  %v15 = vld [vmem:[%s0] sm:$0xf]
  %v16 = vld [vmem:[%s0 + $0x4] sm:$0xf]
  %v17 = vld [vmem:[%s0 + $0x8] sm:$0xf]
  %v18 = vld [vmem:[%s0 + $0xc] sm:$0xf]
  %v19 = vld [vmem:[%s0 + $0x10] sm:$0xf]
  %v20 = vld [vmem:[%s0 + $0x14] sm:$0xf]
  %v21 = vld [vmem:[%s0 + $0x18] sm:$0xf]
  %v22 = vld [vmem:[%s0 + $0x1c] sm:$0xf]
  %v23 = vld [vmem:[%s0 + $0x20] sm:$0xf]
  %v24 = vld [vmem:[%s0 + $0x24] sm:$0xf]
  %v25 = vld [vmem:[%s0 + $0x28] sm:$0xf]
  %v26 = vld [vmem:[%s0 + $0x2c] sm:$0xf]
  %v27 = vld [vmem:[%s0 + $0x30] sm:$0xf]
  %v28 = vld [vmem:[%s0 + $0x34] sm:$0xf]
  %v29 = vld [vmem:[%s0 + $0x38] sm:$0xf]
  %v30 = vld [vmem:[%s0 + $0x3c] sm:$0xf]
  %v31 = vld [vmem:[%s0 + $0x40] sm:$0xf]
  %v32 = vld [vmem:[%s0 + $0x44] sm:$0xf]
  %v33 = vld [vmem:[%s0 + $0x48] sm:$0xf]
  %v34 = vld [vmem:[%s0 + $0x4c] sm:$0xf]
  %v35 = vld [vmem:[%s0 + $0x50] sm:$0xf]
  %v36 = vld [vmem:[%s0 + $0x54] sm:$0xf]
  %v37 = vld [vmem:[%s0 + $0x58] sm:$0xf]
  %v38 = vld [vmem:[%s0 + $0x5c] sm:$0xf]
  %v39 = vld [vmem:[%s0 + $0x60] sm:$0xf]
  %v40 = vld [vmem:[%s0 + $0x64] sm:$0xf]
  %v41 = vld [vmem:[%s0 + $0x68] sm:$0xf]
  %v42 = vld [vmem:[%s0 + $0x6c] sm:$0xf]
  %v43 = vld [vmem:[%s0 + $0x70] sm:$0xf]
  %v44 = vld [vmem:[%s0 + $0x74] sm:$0xf]
  %v45 = vld [vmem:[%s0 + $0x78] sm:$0xf]
  %v46 = vld [vmem:[%s0 + $0x7c] sm:$0xf]
  %v47 = vld [vmem:[%s0 + $0x80] sm:$0xf]
  %v48 = vld [vmem:[%s0 + $0x84] sm:$0xf]
  %v49 = vld [vmem:[%s0 + $0x88] sm:$0xf]
  %v50 = vld [vmem:[%s0 + $0x8c] sm:$0xf]
  %v51 = vld [vmem:[%s0 + $0x90] sm:$0xf]
  %v52 = vld [vmem:[%s0 + $0x94] sm:$0xf]
  %v53 = vld [vmem:[%s0 + $0x98] sm:$0xf]
  %v54 = vld [vmem:[%s0 + $0x9c] sm:$0xf]
  %v55 = vld [vmem:[%s0 + $0xa0] sm:$0xf]
  %v56 = vld [vmem:[%s0 + $0xa4] sm:$0xf]
  %v57 = vld [vmem:[%s0 + $0xa8] sm:$0xf]
  %v58 = vld [vmem:[%s0 + $0xac] sm:$0xf]
  %v59 = vld [vmem:[%s0 + $0xb0] sm:$0xf]
  %v60 = vld [vmem:[%s0 + $0xb4] sm:$0xf]
  %v61 = vld [vmem:[%s0 + $0xb8] sm:$0xf]
  %v62 = vld [vmem:[%s0 + $0xbc] sm:$0xf]
  %v63 = vld [vmem:[%s0 + $0xc0] sm:$0xf]
  %v64 = vld [vmem:[%s0 + $0xc4] sm:$0xf]
  %v65 = vld [vmem:[%s0 + $0xc8] sm:$0xf]
  %v66 = vld [vmem:[%s0 + $0xcc] sm:$0xf]
  %v67 = vld [vmem:[%s0 + $0xd0] sm:$0xf]
  %v68 = vld [vmem:[%s0 + $0xd4] sm:$0xf]
  %v69 = vld [vmem:[%s0 + $0xd8] sm:$0xf]
  %v70 = vld [vmem:[%s0 + $0xdc] sm:$0xf]
  %v71 = vld [vmem:[%s0 + $0xe0] sm:$0xf]
  %v72 = vld [vmem:[%s0 + $0xe4] sm:$0xf]
  %v73 = vld [vmem:[%s0 + $0xe8] sm:$0xf]
  %v74 = vld [vmem:[%s0 + $0xec] sm:$0xf]
  %v75 = vld [vmem:[%s0 + $0xf0] sm:$0xf]
  %v76 = vld [vmem:[%s0 + $0xf4] sm:$0xf]
  %v77 = vld [vmem:[%s0 + $0xf8] sm:$0xf]
  %v78 = vld [vmem:[%s0 + $0xfc] sm:$0xf]
  %v79 = vunpack.c.l.bf16 %v15
  %v80 = vunpack.c.l.bf16 %v16
  %v81 = vunpack.c.l.bf16 %v17
  %v82 = vunpack.c.l.bf16 %v18
  %v83 = vunpack.c.l.bf16 %v19
  %v84 = vunpack.c.l.bf16 %v20
  %v85 = vunpack.c.l.bf16 %v21
  %v86 = vunpack.c.l.bf16 %v22
  %v87 = vunpack.c.l.bf16 %v23
  %v88 = vunpack.c.l.bf16 %v24
  %v89 = vunpack.c.l.bf16 %v25
  %v90 = vunpack.c.l.bf16 %v26
  %v91 = vunpack.c.l.bf16 %v27
  %v92 = vunpack.c.l.bf16 %v28
  %v93 = vunpack.c.l.bf16 %v29
  %v94 = vunpack.c.l.bf16 %v30
  %v95 = vunpack.c.l.bf16 %v31
  %v96 = vunpack.c.l.bf16 %v32
  %v97 = vunpack.c.l.bf16 %v33
  %v98 = vunpack.c.l.bf16 %v34
  %v99 = vunpack.c.l.bf16 %v35
  %v100 = vunpack.c.l.bf16 %v36
  %v101 = vunpack.c.l.bf16 %v37
  %v102 = vunpack.c.l.bf16 %v38
  %v103 = vunpack.c.l.bf16 %v39
  %v104 = vunpack.c.l.bf16 %v40
  %v105 = vunpack.c.l.bf16 %v41
  %v106 = vunpack.c.l.bf16 %v42
  %v107 = vunpack.c.l.bf16 %v43
  %v108 = vunpack.c.l.bf16 %v44
  %v109 = vunpack.c.l.bf16 %v45
  %v110 = vunpack.c.l.bf16 %v46
  %v111 = vunpack.c.l.bf16 %v47
  %v112 = vunpack.c.l.bf16 %v48
  %v113 = vunpack.c.l.bf16 %v49
  %v114 = vunpack.c.l.bf16 %v50
  %v115 = vunpack.c.l.bf16 %v51
  %v116 = vunpack.c.l.bf16 %v52
  %v117 = vunpack.c.l.bf16 %v53
  %v118 = vunpack.c.l.bf16 %v54
  %v119 = vunpack.c.l.bf16 %v55
  %v120 = vunpack.c.l.bf16 %v56
  %v121 = vunpack.c.l.bf16 %v57
  %v122 = vunpack.c.l.bf16 %v58
  %v123 = vunpack.c.l.bf16 %v59
  %v124 = vunpack.c.l.bf16 %v60
  %v125 = vunpack.c.l.bf16 %v61
  %v126 = vunpack.c.l.bf16 %v62
  %v127 = vunpack.c.l.bf16 %v63
  %v128 = vunpack.c.l.bf16 %v64
  %v129 = vunpack.c.l.bf16 %v65
  %v130 = vunpack.c.l.bf16 %v66
  %v131 = vunpack.c.l.bf16 %v67
  %v132 = vunpack.c.l.bf16 %v68
  %v133 = vunpack.c.l.bf16 %v69
  %v134 = vunpack.c.l.bf16 %v70
  %v135 = vunpack.c.l.bf16 %v71
  %v136 = vunpack.c.l.bf16 %v72
  %v137 = vunpack.c.l.bf16 %v73
  %v138 = vunpack.c.l.bf16 %v74
  %v139 = vunpack.c.l.bf16 %v75
  %v140 = vunpack.c.l.bf16 %v76
  %v141 = vunpack.c.l.bf16 %v77
  %v142 = vunpack.c.l.bf16 %v78
  %v143 = vld [vmem:[%s2] sm:$0x1]
  %v145 = vperm.slane %v143, 0
  %v147 = vadd.f32 %v79, %v145
  %v148 = vadd.f32 %v80, %v145
  %v149 = vadd.f32 %v81, %v145
  %v150 = vadd.f32 %v82, %v145
  %v151 = vadd.f32 %v83, %v145
  %v152 = vadd.f32 %v84, %v145
  %v153 = vadd.f32 %v85, %v145
  %v154 = vadd.f32 %v86, %v145
  %v155 = vadd.f32 %v87, %v145
  %v156 = vadd.f32 %v88, %v145
  %v157 = vadd.f32 %v89, %v145
  %v158 = vadd.f32 %v90, %v145
  %v159 = vadd.f32 %v91, %v145
  %v160 = vadd.f32 %v92, %v145
  %v161 = vadd.f32 %v93, %v145
  %v162 = vadd.f32 %v94, %v145
  %v163 = vadd.f32 %v95, %v145
  %v164 = vadd.f32 %v96, %v145
  %v165 = vadd.f32 %v97, %v145
  %v166 = vadd.f32 %v98, %v145
  %v167 = vadd.f32 %v99, %v145
  %v168 = vadd.f32 %v100, %v145
  %v169 = vadd.f32 %v101, %v145
  %v170 = vadd.f32 %v102, %v145
  %v171 = vadd.f32 %v103, %v145
  %v172 = vadd.f32 %v104, %v145
  %v173 = vadd.f32 %v105, %v145
  %v174 = vadd.f32 %v106, %v145
  %v175 = vadd.f32 %v107, %v145
  %v176 = vadd.f32 %v108, %v145
  %v177 = vadd.f32 %v109, %v145
  %v178 = vadd.f32 %v110, %v145
  %v179 = vadd.f32 %v111, %v145
  %v180 = vadd.f32 %v112, %v145
  %v181 = vadd.f32 %v113, %v145
  %v182 = vadd.f32 %v114, %v145
  %v183 = vadd.f32 %v115, %v145
  %v184 = vadd.f32 %v116, %v145
  %v185 = vadd.f32 %v117, %v145
  %v186 = vadd.f32 %v118, %v145
  %v187 = vadd.f32 %v119, %v145
  %v188 = vadd.f32 %v120, %v145
  %v189 = vadd.f32 %v121, %v145
  %v190 = vadd.f32 %v122, %v145
  %v191 = vadd.f32 %v123, %v145
  %v192 = vadd.f32 %v124, %v145
  %v193 = vadd.f32 %v125, %v145
  %v194 = vadd.f32 %v126, %v145
  %v195 = vadd.f32 %v127, %v145
  %v196 = vadd.f32 %v128, %v145
  %v197 = vadd.f32 %v129, %v145
  %v198 = vadd.f32 %v130, %v145
  %v199 = vadd.f32 %v131, %v145
  %v200 = vadd.f32 %v132, %v145
  %v201 = vadd.f32 %v133, %v145
  %v202 = vadd.f32 %v134, %v145
  %v203 = vadd.f32 %v135, %v145
  %v204 = vadd.f32 %v136, %v145
  %v205 = vadd.f32 %v137, %v145
  %v206 = vadd.f32 %v138, %v145
  %v207 = vadd.f32 %v139, %v145
  %v208 = vadd.f32 %v140, %v145
  %v209 = vadd.f32 %v141, %v145
  %v210 = vadd.f32 %v142, %v145
  %v211 = vmax.f32 %v147, 0.0
  %v212 = vmax.f32 %v148, 0.0
  %v213 = vmax.f32 %v149, 0.0
  %v214 = vmax.f32 %v150, 0.0
  %v215 = vmax.f32 %v151, 0.0
  %v216 = vmax.f32 %v152, 0.0
  %v217 = vmax.f32 %v153, 0.0
  %v218 = vmax.f32 %v154, 0.0
  %v219 = vmax.f32 %v155, 0.0
  %v220 = vmax.f32 %v156, 0.0
  %v221 = vmax.f32 %v157, 0.0
  %v222 = vmax.f32 %v158, 0.0
  %v223 = vmax.f32 %v159, 0.0
  %v224 = vmax.f32 %v160, 0.0
  %v225 = vmax.f32 %v161, 0.0
  %v226 = vmax.f32 %v162, 0.0
  %v227 = vmax.f32 %v163, 0.0
  %v228 = vmax.f32 %v164, 0.0
  %v229 = vmax.f32 %v165, 0.0
  %v230 = vmax.f32 %v166, 0.0
  %v231 = vmax.f32 %v167, 0.0
  %v232 = vmax.f32 %v168, 0.0
  %v233 = vmax.f32 %v169, 0.0
  %v234 = vmax.f32 %v170, 0.0
  %v235 = vmax.f32 %v171, 0.0
  %v236 = vmax.f32 %v172, 0.0
  %v237 = vmax.f32 %v173, 0.0
  %v238 = vmax.f32 %v174, 0.0
  %v239 = vmax.f32 %v175, 0.0
  %v240 = vmax.f32 %v176, 0.0
  %v241 = vmax.f32 %v177, 0.0
  %v242 = vmax.f32 %v178, 0.0
  %v243 = vmax.f32 %v179, 0.0
  %v244 = vmax.f32 %v180, 0.0
  %v245 = vmax.f32 %v181, 0.0
  %v246 = vmax.f32 %v182, 0.0
  %v247 = vmax.f32 %v183, 0.0
  %v248 = vmax.f32 %v184, 0.0
  %v249 = vmax.f32 %v185, 0.0
  %v250 = vmax.f32 %v186, 0.0
  %v251 = vmax.f32 %v187, 0.0
  %v252 = vmax.f32 %v188, 0.0
  %v253 = vmax.f32 %v189, 0.0
  %v254 = vmax.f32 %v190, 0.0
  %v255 = vmax.f32 %v191, 0.0
  %v256 = vmax.f32 %v192, 0.0
  %v257 = vmax.f32 %v193, 0.0
  %v258 = vmax.f32 %v194, 0.0
  %v259 = vmax.f32 %v195, 0.0
  %v260 = vmax.f32 %v196, 0.0
  %v261 = vmax.f32 %v197, 0.0
  %v262 = vmax.f32 %v198, 0.0
  %v263 = vmax.f32 %v199, 0.0
  %v264 = vmax.f32 %v200, 0.0
  %v265 = vmax.f32 %v201, 0.0
  %v266 = vmax.f32 %v202, 0.0
  %v267 = vmax.f32 %v203, 0.0
  %v268 = vmax.f32 %v204, 0.0
  %v269 = vmax.f32 %v205, 0.0
  %v270 = vmax.f32 %v206, 0.0
  %v271 = vmax.f32 %v207, 0.0
  %v272 = vmax.f32 %v208, 0.0
  %v273 = vmax.f32 %v209, 0.0
  %v274 = vmax.f32 %v210, 0.0
  %v275 = vpack.c.bf16 %v212, %v211
  %v276 = vpack.c.bf16 %v214, %v213
  %v277 = vpack.c.bf16 %v216, %v215
  %v278 = vpack.c.bf16 %v218, %v217
  %v279 = vpack.c.bf16 %v220, %v219
  %v280 = vpack.c.bf16 %v222, %v221
  %v281 = vpack.c.bf16 %v224, %v223
  %v282 = vpack.c.bf16 %v226, %v225
  %v283 = vpack.c.bf16 %v228, %v227
  %v284 = vpack.c.bf16 %v230, %v229
  %v285 = vpack.c.bf16 %v232, %v231
  %v286 = vpack.c.bf16 %v234, %v233
  %v287 = vpack.c.bf16 %v236, %v235
  %v288 = vpack.c.bf16 %v238, %v237
  %v289 = vpack.c.bf16 %v240, %v239
  %v290 = vpack.c.bf16 %v242, %v241
  %v291 = vpack.c.bf16 %v244, %v243
  %v292 = vpack.c.bf16 %v246, %v245
  %v293 = vpack.c.bf16 %v248, %v247
  %v294 = vpack.c.bf16 %v250, %v249
  %v295 = vpack.c.bf16 %v252, %v251
  %v296 = vpack.c.bf16 %v254, %v253
  %v297 = vpack.c.bf16 %v256, %v255
  %v298 = vpack.c.bf16 %v258, %v257
  %v299 = vpack.c.bf16 %v260, %v259
  %v300 = vpack.c.bf16 %v262, %v261
  %v301 = vpack.c.bf16 %v264, %v263
  %v302 = vpack.c.bf16 %v266, %v265
  %v303 = vpack.c.bf16 %v268, %v267
  %v304 = vpack.c.bf16 %v270, %v269
  %v305 = vpack.c.bf16 %v272, %v271
  %v306 = vpack.c.bf16 %v274, %v273
  %v307 = vld [vmem:[%s1] sm:$0xff]
  %v308 = vld [vmem:[%s1 + $0x8] sm:$0xff]
  %v309 = vld [vmem:[%s1 + $0x10] sm:$0xff]
  %v310 = vld [vmem:[%s1 + $0x18] sm:$0xff]
  %v311 = vld [vmem:[%s1 + $0x20] sm:$0xff]
  %v312 = vld [vmem:[%s1 + $0x28] sm:$0xff]
  %v313 = vld [vmem:[%s1 + $0x30] sm:$0xff]
  %v314 = vld [vmem:[%s1 + $0x38] sm:$0xff]
  %v315 = vld [vmem:[%s1 + $0x40] sm:$0xff]
  %v316 = vld [vmem:[%s1 + $0x48] sm:$0xff]
  %v317 = vld [vmem:[%s1 + $0x50] sm:$0xff]
  %v318 = vld [vmem:[%s1 + $0x58] sm:$0xff]
  %v319 = vld [vmem:[%s1 + $0x60] sm:$0xff]
  %v320 = vld [vmem:[%s1 + $0x68] sm:$0xff]
  %v321 = vld [vmem:[%s1 + $0x70] sm:$0xff]
  %v322 = vld [vmem:[%s1 + $0x78] sm:$0xff]
  %v339 = vunpack.c.l.b16 %v307
  %v340 = vunpack.c.h.b16 %v307
  %v341 = vunpack.c.l.b16 %v308
  %v342 = vunpack.c.h.b16 %v308
  %v343 = vunpack.c.l.b16 %v309
  %v344 = vunpack.c.h.b16 %v309
  %v345 = vunpack.c.l.b16 %v310
  %v346 = vunpack.c.h.b16 %v310
  %v347 = vunpack.c.l.b16 %v311
  %v348 = vunpack.c.h.b16 %v311
  %v349 = vunpack.c.l.b16 %v312
  %v350 = vunpack.c.h.b16 %v312
  %v351 = vunpack.c.l.b16 %v313
  %v352 = vunpack.c.h.b16 %v313
  %v353 = vunpack.c.l.b16 %v314
  %v354 = vunpack.c.h.b16 %v314
  %v355 = vunpack.c.l.b16 %v315
  %v356 = vunpack.c.h.b16 %v315
  %v357 = vunpack.c.l.b16 %v316
  %v358 = vunpack.c.h.b16 %v316
  %v359 = vunpack.c.l.b16 %v317
  %v360 = vunpack.c.h.b16 %v317
  %v361 = vunpack.c.l.b16 %v318
  %v362 = vunpack.c.h.b16 %v318
  %v363 = vunpack.c.l.b16 %v319
  %v364 = vunpack.c.h.b16 %v319
  %v365 = vunpack.c.l.b16 %v320
  %v366 = vunpack.c.h.b16 %v320
  %v367 = vunpack.c.l.b16 %v321
  %v368 = vunpack.c.h.b16 %v321
  %v369 = vunpack.c.l.b16 %v322
  %v370 = vunpack.c.h.b16 %v322
  %v371 = vpack.c.b16 %v343, %v339
  %v372 = vpack.c.b16 %v344, %v340
  %v373 = vpack.c.b16 %v345, %v341
  %v374 = vpack.c.b16 %v346, %v342
  %v375 = vpack.c.b16 %v351, %v347
  %v376 = vpack.c.b16 %v352, %v348
  %v377 = vpack.c.b16 %v353, %v349
  %v378 = vpack.c.b16 %v354, %v350
  %v379 = vpack.c.b16 %v359, %v355
  %v380 = vpack.c.b16 %v360, %v356
  %v381 = vpack.c.b16 %v361, %v357
  %v382 = vpack.c.b16 %v362, %v358
  %v383 = vpack.c.b16 %v367, %v363
  %v384 = vpack.c.b16 %v368, %v364
  %v385 = vpack.c.b16 %v369, %v365
  %v386 = vpack.c.b16 %v370, %v366
  %vm403 = vcmask 523264
  %v405 = vsel %vm403, %v275, 0
  %v408 = vsel %vm403, %v276, 0
  %v411 = vsel %vm403, %v277, 0
  %v414 = vsel %vm403, %v278, 0
  %v417 = vsel %vm403, %v279, 0
  %v420 = vsel %vm403, %v280, 0
  %v423 = vsel %vm403, %v281, 0
  %v426 = vsel %vm403, %v282, 0
  %v429 = vsel %vm403, %v283, 0
  %v432 = vsel %vm403, %v284, 0
  %v435 = vsel %vm403, %v285, 0
  %v438 = vsel %vm403, %v286, 0
  %v441 = vsel %vm403, %v287, 0
  %v444 = vsel %vm403, %v288, 0
  %v447 = vsel %vm403, %v289, 0
  %v450 = vsel %vm403, %v290, 0
  %v453 = vsel %vm403, %v291, 0
  %v456 = vsel %vm403, %v292, 0
  %v459 = vsel %vm403, %v293, 0
  %v462 = vsel %vm403, %v294, 0
  %v465 = vsel %vm403, %v295, 0
  %v468 = vsel %vm403, %v296, 0
  %v471 = vsel %vm403, %v297, 0
  %v474 = vsel %vm403, %v298, 0
  %v477 = vsel %vm403, %v299, 0
  %v480 = vsel %vm403, %v300, 0
  %v483 = vsel %vm403, %v301, 0
  %v486 = vsel %vm403, %v302, 0
  %v489 = vsel %vm403, %v303, 0
  %v492 = vsel %vm403, %v304, 0
  %v495 = vsel %vm403, %v305, 0
  %v498 = vsel %vm403, %v306, 0
  %500 = vmatpush.bf16.msra.mxu0 0
  %501 = vmatpush.bf16.msra.mxu0 0
  %502 = vmatpush.bf16.msra.mxu0 0
  %503 = vmatpush.bf16.msra.mxu0 0
  %504 = vmatpush.bf16.msra.mxu0 %v383
  %505 = vmatpush.bf16.msra.mxu0 %v379
  %506 = vmatpush.bf16.msra.mxu0 %v375
  %507 = vmatpush.bf16.msra.mxu0 %v371
  %508 = vmatmul.bf16.gmra.mxu0 %v405
  %v509 = vpop.f32.mrf.mxu0
  %v510 = vadd.f32 0.0, %v509
  %v511 = vpop.f32.mrf.mxu0
  %v512 = vadd.f32 0.0, %v511
  %513 = vmatmul.bf16.gmra.mxu0 %v408
  %v514 = vpop.f32.mrf.mxu0
  %v515 = vadd.f32 0.0, %v514
  %v516 = vpop.f32.mrf.mxu0
  %v517 = vadd.f32 0.0, %v516
  %518 = vmatmul.bf16.gmra.mxu0 %v411
  %v519 = vpop.f32.mrf.mxu0
  %v520 = vadd.f32 0.0, %v519
  %v521 = vpop.f32.mrf.mxu0
  %v522 = vadd.f32 0.0, %v521
  %523 = vmatmul.bf16.gmra.mxu0 %v414
  %v524 = vpop.f32.mrf.mxu0
  %v525 = vadd.f32 0.0, %v524
  %v526 = vpop.f32.mrf.mxu0
  %v527 = vadd.f32 0.0, %v526
  %528 = vmatmul.bf16.gmra.mxu0 %v417
  %v529 = vpop.f32.mrf.mxu0
  %v530 = vadd.f32 0.0, %v529
  %v531 = vpop.f32.mrf.mxu0
  %v532 = vadd.f32 0.0, %v531
  %533 = vmatmul.bf16.gmra.mxu0 %v420
  %v534 = vpop.f32.mrf.mxu0
  %v535 = vadd.f32 0.0, %v534
  %v536 = vpop.f32.mrf.mxu0
  %v537 = vadd.f32 0.0, %v536
  %538 = vmatmul.bf16.gmra.mxu0 %v423
  %v539 = vpop.f32.mrf.mxu0
  %v540 = vadd.f32 0.0, %v539
  %v541 = vpop.f32.mrf.mxu0
  %v542 = vadd.f32 0.0, %v541
  %543 = vmatmul.bf16.gmra.mxu0 %v426
  %v544 = vpop.f32.mrf.mxu0
  %v545 = vadd.f32 0.0, %v544
  %v546 = vpop.f32.mrf.mxu0
  %v547 = vadd.f32 0.0, %v546
  %548 = vmatmul.bf16.gmra.mxu0 %v429
  %v549 = vpop.f32.mrf.mxu0
  %v550 = vadd.f32 0.0, %v549
  %v551 = vpop.f32.mrf.mxu0
  %v552 = vadd.f32 0.0, %v551
  %553 = vmatmul.bf16.gmra.mxu0 %v432
  %v554 = vpop.f32.mrf.mxu0
  %v555 = vadd.f32 0.0, %v554
  %v556 = vpop.f32.mrf.mxu0
  %v557 = vadd.f32 0.0, %v556
  %558 = vmatmul.bf16.gmra.mxu0 %v435
  %v559 = vpop.f32.mrf.mxu0
  %v560 = vadd.f32 0.0, %v559
  %v561 = vpop.f32.mrf.mxu0
  %v562 = vadd.f32 0.0, %v561
  %563 = vmatmul.bf16.gmra.mxu0 %v438
  %v564 = vpop.f32.mrf.mxu0
  %v565 = vadd.f32 0.0, %v564
  %v566 = vpop.f32.mrf.mxu0
  %v567 = vadd.f32 0.0, %v566
  %568 = vmatmul.bf16.gmra.mxu0 %v441
  %v569 = vpop.f32.mrf.mxu0
  %v570 = vadd.f32 0.0, %v569
  %v571 = vpop.f32.mrf.mxu0
  %v572 = vadd.f32 0.0, %v571
  %573 = vmatmul.bf16.gmra.mxu0 %v444
  %v574 = vpop.f32.mrf.mxu0
  %v575 = vadd.f32 0.0, %v574
  %v576 = vpop.f32.mrf.mxu0
  %v577 = vadd.f32 0.0, %v576
  %578 = vmatmul.bf16.gmra.mxu0 %v447
  %v579 = vpop.f32.mrf.mxu0
  %v580 = vadd.f32 0.0, %v579
  %v581 = vpop.f32.mrf.mxu0
  %v582 = vadd.f32 0.0, %v581
  %583 = vmatmul.bf16.gmra.mxu0 %v450
  %v584 = vpop.f32.mrf.mxu0
  %v585 = vadd.f32 0.0, %v584
  %v586 = vpop.f32.mrf.mxu0
  %v587 = vadd.f32 0.0, %v586
  %588 = vmatmul.bf16.gmra.mxu0 %v453
  %v589 = vpop.f32.mrf.mxu0
  %v590 = vadd.f32 0.0, %v589
  %v591 = vpop.f32.mrf.mxu0
  %v592 = vadd.f32 0.0, %v591
  %593 = vmatmul.bf16.gmra.mxu0 %v456
  %v594 = vpop.f32.mrf.mxu0
  %v595 = vadd.f32 0.0, %v594
  %v596 = vpop.f32.mrf.mxu0
  %v597 = vadd.f32 0.0, %v596
  %598 = vmatmul.bf16.gmra.mxu0 %v459
  %v599 = vpop.f32.mrf.mxu0
  %v600 = vadd.f32 0.0, %v599
  %v601 = vpop.f32.mrf.mxu0
  %v602 = vadd.f32 0.0, %v601
  %603 = vmatmul.bf16.gmra.mxu0 %v462
  %v604 = vpop.f32.mrf.mxu0
  %v605 = vadd.f32 0.0, %v604
  %v606 = vpop.f32.mrf.mxu0
  %v607 = vadd.f32 0.0, %v606
  %608 = vmatmul.bf16.gmra.mxu0 %v465
  %v609 = vpop.f32.mrf.mxu0
  %v610 = vadd.f32 0.0, %v609
  %v611 = vpop.f32.mrf.mxu0
  %v612 = vadd.f32 0.0, %v611
  %613 = vmatmul.bf16.gmra.mxu0 %v468
  %v614 = vpop.f32.mrf.mxu0
  %v615 = vadd.f32 0.0, %v614
  %v616 = vpop.f32.mrf.mxu0
  %v617 = vadd.f32 0.0, %v616
  %618 = vmatmul.bf16.gmra.mxu0 %v471
  %v619 = vpop.f32.mrf.mxu0
  %v620 = vadd.f32 0.0, %v619
  %v621 = vpop.f32.mrf.mxu0
  %v622 = vadd.f32 0.0, %v621
  %623 = vmatmul.bf16.gmra.mxu0 %v474
  %v624 = vpop.f32.mrf.mxu0
  %v625 = vadd.f32 0.0, %v624
  %v626 = vpop.f32.mrf.mxu0
  %v627 = vadd.f32 0.0, %v626
  %628 = vmatmul.bf16.gmra.mxu0 %v477
  %v629 = vpop.f32.mrf.mxu0
  %v630 = vadd.f32 0.0, %v629
  %v631 = vpop.f32.mrf.mxu0
  %v632 = vadd.f32 0.0, %v631
  %633 = vmatmul.bf16.gmra.mxu0 %v480
  %v634 = vpop.f32.mrf.mxu0
  %v635 = vadd.f32 0.0, %v634
  %v636 = vpop.f32.mrf.mxu0
  %v637 = vadd.f32 0.0, %v636
  %638 = vmatmul.bf16.gmra.mxu0 %v483
  %v639 = vpop.f32.mrf.mxu0
  %v640 = vadd.f32 0.0, %v639
  %v641 = vpop.f32.mrf.mxu0
  %v642 = vadd.f32 0.0, %v641
  %643 = vmatmul.bf16.gmra.mxu0 %v486
  %v644 = vpop.f32.mrf.mxu0
  %v645 = vadd.f32 0.0, %v644
  %v646 = vpop.f32.mrf.mxu0
  %v647 = vadd.f32 0.0, %v646
  %648 = vmatmul.bf16.gmra.mxu0 %v489
  %v649 = vpop.f32.mrf.mxu0
  %v650 = vadd.f32 0.0, %v649
  %v651 = vpop.f32.mrf.mxu0
  %v652 = vadd.f32 0.0, %v651
  %653 = vmatmul.bf16.gmra.mxu0 %v492
  %v654 = vpop.f32.mrf.mxu0
  %v655 = vadd.f32 0.0, %v654
  %v656 = vpop.f32.mrf.mxu0
  %v657 = vadd.f32 0.0, %v656
  %658 = vmatmul.bf16.gmra.mxu0 %v495
  %v659 = vpop.f32.mrf.mxu0
  %v660 = vadd.f32 0.0, %v659
  %v661 = vpop.f32.mrf.mxu0
  %v662 = vadd.f32 0.0, %v661
  %663 = vmatmul.bf16.gmra.mxu0 %v498
  %v664 = vpop.f32.mrf.mxu0
  %v665 = vadd.f32 0.0, %v664
  %v666 = vpop.f32.mrf.mxu0
  %v667 = vadd.f32 0.0, %v666
  %668 = vdwg.mxu0
  %669 = vmatpush.bf16.msra.mxu0 0
  %670 = vmatpush.bf16.msra.mxu0 0
  %671 = vmatpush.bf16.msra.mxu0 0
  %672 = vmatpush.bf16.msra.mxu0 0
  %673 = vmatpush.bf16.msra.mxu0 %v384
  %674 = vmatpush.bf16.msra.mxu0 %v380
  %675 = vmatpush.bf16.msra.mxu0 %v376
  %676 = vmatpush.bf16.msra.mxu0 %v372
  %677 = vmatmul.bf16.gmra.mxu0 %v405
  %v678 = vpop.f32.mrf.mxu0
  %v679 = vadd.f32 0.0, %v678
  %v680 = vpop.f32.mrf.mxu0
  %v681 = vadd.f32 0.0, %v680
  %682 = vmatmul.bf16.gmra.mxu0 %v408
  %v683 = vpop.f32.mrf.mxu0
  %v684 = vadd.f32 0.0, %v683
  %v685 = vpop.f32.mrf.mxu0
  %v686 = vadd.f32 0.0, %v685
  %687 = vmatmul.bf16.gmra.mxu0 %v411
  %v688 = vpop.f32.mrf.mxu0
  %v689 = vadd.f32 0.0, %v688
  %v690 = vpop.f32.mrf.mxu0
  %v691 = vadd.f32 0.0, %v690
  %692 = vmatmul.bf16.gmra.mxu0 %v414
  %v693 = vpop.f32.mrf.mxu0
  %v694 = vadd.f32 0.0, %v693
  %v695 = vpop.f32.mrf.mxu0
  %v696 = vadd.f32 0.0, %v695
  %697 = vmatmul.bf16.gmra.mxu0 %v417
  %v698 = vpop.f32.mrf.mxu0
  %v699 = vadd.f32 0.0, %v698
  %v700 = vpop.f32.mrf.mxu0
  %v701 = vadd.f32 0.0, %v700
  %702 = vmatmul.bf16.gmra.mxu0 %v420
  %v703 = vpop.f32.mrf.mxu0
  %v704 = vadd.f32 0.0, %v703
  %v705 = vpop.f32.mrf.mxu0
  %v706 = vadd.f32 0.0, %v705
  %707 = vmatmul.bf16.gmra.mxu0 %v423
  %v708 = vpop.f32.mrf.mxu0
  %v709 = vadd.f32 0.0, %v708
  %v710 = vpop.f32.mrf.mxu0
  %v711 = vadd.f32 0.0, %v710
  %712 = vmatmul.bf16.gmra.mxu0 %v426
  %v713 = vpop.f32.mrf.mxu0
  %v714 = vadd.f32 0.0, %v713
  %v715 = vpop.f32.mrf.mxu0
  %v716 = vadd.f32 0.0, %v715
  %717 = vmatmul.bf16.gmra.mxu0 %v429
  %v718 = vpop.f32.mrf.mxu0
  %v719 = vadd.f32 0.0, %v718
  %v720 = vpop.f32.mrf.mxu0
  %v721 = vadd.f32 0.0, %v720
  %722 = vmatmul.bf16.gmra.mxu0 %v432
  %v723 = vpop.f32.mrf.mxu0
  %v724 = vadd.f32 0.0, %v723
  %v725 = vpop.f32.mrf.mxu0
  %v726 = vadd.f32 0.0, %v725
  %727 = vmatmul.bf16.gmra.mxu0 %v435
  %v728 = vpop.f32.mrf.mxu0
  %v729 = vadd.f32 0.0, %v728
  %v730 = vpop.f32.mrf.mxu0
  %v731 = vadd.f32 0.0, %v730
  %732 = vmatmul.bf16.gmra.mxu0 %v438
  %v733 = vpop.f32.mrf.mxu0
  %v734 = vadd.f32 0.0, %v733
  %v735 = vpop.f32.mrf.mxu0
  %v736 = vadd.f32 0.0, %v735
  %737 = vmatmul.bf16.gmra.mxu0 %v441
  %v738 = vpop.f32.mrf.mxu0
  %v739 = vadd.f32 0.0, %v738
  %v740 = vpop.f32.mrf.mxu0
  %v741 = vadd.f32 0.0, %v740
  %742 = vmatmul.bf16.gmra.mxu0 %v444
  %v743 = vpop.f32.mrf.mxu0
  %v744 = vadd.f32 0.0, %v743
  %v745 = vpop.f32.mrf.mxu0
  %v746 = vadd.f32 0.0, %v745
  %747 = vmatmul.bf16.gmra.mxu0 %v447
  %v748 = vpop.f32.mrf.mxu0
  %v749 = vadd.f32 0.0, %v748
  %v750 = vpop.f32.mrf.mxu0
  %v751 = vadd.f32 0.0, %v750
  %752 = vmatmul.bf16.gmra.mxu0 %v450
  %v753 = vpop.f32.mrf.mxu0
  %v754 = vadd.f32 0.0, %v753
  %v755 = vpop.f32.mrf.mxu0
  %v756 = vadd.f32 0.0, %v755
  %757 = vmatmul.bf16.gmra.mxu0 %v453
  %v758 = vpop.f32.mrf.mxu0
  %v759 = vadd.f32 0.0, %v758
  %v760 = vpop.f32.mrf.mxu0
  %v761 = vadd.f32 0.0, %v760
  %762 = vmatmul.bf16.gmra.mxu0 %v456
  %v763 = vpop.f32.mrf.mxu0
  %v764 = vadd.f32 0.0, %v763
  %v765 = vpop.f32.mrf.mxu0
  %v766 = vadd.f32 0.0, %v765
  %767 = vmatmul.bf16.gmra.mxu0 %v459
  %v768 = vpop.f32.mrf.mxu0
  %v769 = vadd.f32 0.0, %v768
  %v770 = vpop.f32.mrf.mxu0
  %v771 = vadd.f32 0.0, %v770
  %772 = vmatmul.bf16.gmra.mxu0 %v462
  %v773 = vpop.f32.mrf.mxu0
  %v774 = vadd.f32 0.0, %v773
  %v775 = vpop.f32.mrf.mxu0
  %v776 = vadd.f32 0.0, %v775
  %777 = vmatmul.bf16.gmra.mxu0 %v465
  %v778 = vpop.f32.mrf.mxu0
  %v779 = vadd.f32 0.0, %v778
  %v780 = vpop.f32.mrf.mxu0
  %v781 = vadd.f32 0.0, %v780
  %782 = vmatmul.bf16.gmra.mxu0 %v468
  %v783 = vpop.f32.mrf.mxu0
  %v784 = vadd.f32 0.0, %v783
  %v785 = vpop.f32.mrf.mxu0
  %v786 = vadd.f32 0.0, %v785
  %787 = vmatmul.bf16.gmra.mxu0 %v471
  %v788 = vpop.f32.mrf.mxu0
  %v789 = vadd.f32 0.0, %v788
  %v790 = vpop.f32.mrf.mxu0
  %v791 = vadd.f32 0.0, %v790
  %792 = vmatmul.bf16.gmra.mxu0 %v474
  %v793 = vpop.f32.mrf.mxu0
  %v794 = vadd.f32 0.0, %v793
  %v795 = vpop.f32.mrf.mxu0
  %v796 = vadd.f32 0.0, %v795
  %797 = vmatmul.bf16.gmra.mxu0 %v477
  %v798 = vpop.f32.mrf.mxu0
  %v799 = vadd.f32 0.0, %v798
  %v800 = vpop.f32.mrf.mxu0
  %v801 = vadd.f32 0.0, %v800
  %802 = vmatmul.bf16.gmra.mxu0 %v480
  %v803 = vpop.f32.mrf.mxu0
  %v804 = vadd.f32 0.0, %v803
  %v805 = vpop.f32.mrf.mxu0
  %v806 = vadd.f32 0.0, %v805
  %807 = vmatmul.bf16.gmra.mxu0 %v483
  %v808 = vpop.f32.mrf.mxu0
  %v809 = vadd.f32 0.0, %v808
  %v810 = vpop.f32.mrf.mxu0
  %v811 = vadd.f32 0.0, %v810
  %812 = vmatmul.bf16.gmra.mxu0 %v486
  %v813 = vpop.f32.mrf.mxu0
  %v814 = vadd.f32 0.0, %v813
  %v815 = vpop.f32.mrf.mxu0
  %v816 = vadd.f32 0.0, %v815
  %817 = vmatmul.bf16.gmra.mxu0 %v489
  %v818 = vpop.f32.mrf.mxu0
  %v819 = vadd.f32 0.0, %v818
  %v820 = vpop.f32.mrf.mxu0
  %v821 = vadd.f32 0.0, %v820
  %822 = vmatmul.bf16.gmra.mxu0 %v492
  %v823 = vpop.f32.mrf.mxu0
  %v824 = vadd.f32 0.0, %v823
  %v825 = vpop.f32.mrf.mxu0
  %v826 = vadd.f32 0.0, %v825
  %827 = vmatmul.bf16.gmra.mxu0 %v495
  %v828 = vpop.f32.mrf.mxu0
  %v829 = vadd.f32 0.0, %v828
  %v830 = vpop.f32.mrf.mxu0
  %v831 = vadd.f32 0.0, %v830
  %832 = vmatmul.bf16.gmra.mxu0 %v498
  %v833 = vpop.f32.mrf.mxu0
  %v834 = vadd.f32 0.0, %v833
  %v835 = vpop.f32.mrf.mxu0
  %v836 = vadd.f32 0.0, %v835
  %837 = vdwg.mxu0
  %838 = vmatpush.bf16.msra.mxu0 0
  %839 = vmatpush.bf16.msra.mxu0 0
  %840 = vmatpush.bf16.msra.mxu0 0
  %841 = vmatpush.bf16.msra.mxu0 0
  %842 = vmatpush.bf16.msra.mxu0 %v385
  %843 = vmatpush.bf16.msra.mxu0 %v381
  %844 = vmatpush.bf16.msra.mxu0 %v377
  %845 = vmatpush.bf16.msra.mxu0 %v373
  %846 = vmatmul.bf16.gmra.mxu0 %v405
  %v847 = vpop.f32.mrf.mxu0
  %v848 = vadd.f32 0.0, %v847
  %v849 = vpop.f32.mrf.mxu0
  %v850 = vadd.f32 0.0, %v849
  %851 = vmatmul.bf16.gmra.mxu0 %v408
  %v852 = vpop.f32.mrf.mxu0
  %v853 = vadd.f32 0.0, %v852
  %v854 = vpop.f32.mrf.mxu0
  %v855 = vadd.f32 0.0, %v854
  %856 = vmatmul.bf16.gmra.mxu0 %v411
  %v857 = vpop.f32.mrf.mxu0
  %v858 = vadd.f32 0.0, %v857
  %v859 = vpop.f32.mrf.mxu0
  %v860 = vadd.f32 0.0, %v859
  %861 = vmatmul.bf16.gmra.mxu0 %v414
  %v862 = vpop.f32.mrf.mxu0
  %v863 = vadd.f32 0.0, %v862
  %v864 = vpop.f32.mrf.mxu0
  %v865 = vadd.f32 0.0, %v864
  %866 = vmatmul.bf16.gmra.mxu0 %v417
  %v867 = vpop.f32.mrf.mxu0
  %v868 = vadd.f32 0.0, %v867
  %v869 = vpop.f32.mrf.mxu0
  %v870 = vadd.f32 0.0, %v869
  %871 = vmatmul.bf16.gmra.mxu0 %v420
  %v872 = vpop.f32.mrf.mxu0
  %v873 = vadd.f32 0.0, %v872
  %v874 = vpop.f32.mrf.mxu0
  %v875 = vadd.f32 0.0, %v874
  %876 = vmatmul.bf16.gmra.mxu0 %v423
  %v877 = vpop.f32.mrf.mxu0
  %v878 = vadd.f32 0.0, %v877
  %v879 = vpop.f32.mrf.mxu0
  %v880 = vadd.f32 0.0, %v879
  %881 = vmatmul.bf16.gmra.mxu0 %v426
  %v882 = vpop.f32.mrf.mxu0
  %v883 = vadd.f32 0.0, %v882
  %v884 = vpop.f32.mrf.mxu0
  %v885 = vadd.f32 0.0, %v884
  %886 = vmatmul.bf16.gmra.mxu0 %v429
  %v887 = vpop.f32.mrf.mxu0
  %v888 = vadd.f32 0.0, %v887
  %v889 = vpop.f32.mrf.mxu0
  %v890 = vadd.f32 0.0, %v889
  %891 = vmatmul.bf16.gmra.mxu0 %v432
  %v892 = vpop.f32.mrf.mxu0
  %v893 = vadd.f32 0.0, %v892
  %v894 = vpop.f32.mrf.mxu0
  %v895 = vadd.f32 0.0, %v894
  %896 = vmatmul.bf16.gmra.mxu0 %v435
  %v897 = vpop.f32.mrf.mxu0
  %v898 = vadd.f32 0.0, %v897
  %v899 = vpop.f32.mrf.mxu0
  %v900 = vadd.f32 0.0, %v899
  %901 = vmatmul.bf16.gmra.mxu0 %v438
  %v902 = vpop.f32.mrf.mxu0
  %v903 = vadd.f32 0.0, %v902
  %v904 = vpop.f32.mrf.mxu0
  %v905 = vadd.f32 0.0, %v904
  %906 = vmatmul.bf16.gmra.mxu0 %v441
  %v907 = vpop.f32.mrf.mxu0
  %v908 = vadd.f32 0.0, %v907
  %v909 = vpop.f32.mrf.mxu0
  %v910 = vadd.f32 0.0, %v909
  %911 = vmatmul.bf16.gmra.mxu0 %v444
  %v912 = vpop.f32.mrf.mxu0
  %v913 = vadd.f32 0.0, %v912
  %v914 = vpop.f32.mrf.mxu0
  %v915 = vadd.f32 0.0, %v914
  %916 = vmatmul.bf16.gmra.mxu0 %v447
  %v917 = vpop.f32.mrf.mxu0
  %v918 = vadd.f32 0.0, %v917
  %v919 = vpop.f32.mrf.mxu0
  %v920 = vadd.f32 0.0, %v919
  %921 = vmatmul.bf16.gmra.mxu0 %v450
  %v922 = vpop.f32.mrf.mxu0
  %v923 = vadd.f32 0.0, %v922
  %v924 = vpop.f32.mrf.mxu0
  %v925 = vadd.f32 0.0, %v924
  %926 = vmatmul.bf16.gmra.mxu0 %v453
  %v927 = vpop.f32.mrf.mxu0
  %v928 = vadd.f32 0.0, %v927
  %v929 = vpop.f32.mrf.mxu0
  %v930 = vadd.f32 0.0, %v929
  %931 = vmatmul.bf16.gmra.mxu0 %v456
  %v932 = vpop.f32.mrf.mxu0
  %v933 = vadd.f32 0.0, %v932
  %v934 = vpop.f32.mrf.mxu0
  %v935 = vadd.f32 0.0, %v934
  %936 = vmatmul.bf16.gmra.mxu0 %v459
  %v937 = vpop.f32.mrf.mxu0
  %v938 = vadd.f32 0.0, %v937
  %v939 = vpop.f32.mrf.mxu0
  %v940 = vadd.f32 0.0, %v939
  %941 = vmatmul.bf16.gmra.mxu0 %v462
  %v942 = vpop.f32.mrf.mxu0
  %v943 = vadd.f32 0.0, %v942
  %v944 = vpop.f32.mrf.mxu0
  %v945 = vadd.f32 0.0, %v944
  %946 = vmatmul.bf16.gmra.mxu0 %v465
  %v947 = vpop.f32.mrf.mxu0
  %v948 = vadd.f32 0.0, %v947
  %v949 = vpop.f32.mrf.mxu0
  %v950 = vadd.f32 0.0, %v949
  %951 = vmatmul.bf16.gmra.mxu0 %v468
  %v952 = vpop.f32.mrf.mxu0
  %v953 = vadd.f32 0.0, %v952
  %v954 = vpop.f32.mrf.mxu0
  %v955 = vadd.f32 0.0, %v954
  %956 = vmatmul.bf16.gmra.mxu0 %v471
  %v957 = vpop.f32.mrf.mxu0
  %v958 = vadd.f32 0.0, %v957
  %v959 = vpop.f32.mrf.mxu0
  %v960 = vadd.f32 0.0, %v959
  %961 = vmatmul.bf16.gmra.mxu0 %v474
  %v962 = vpop.f32.mrf.mxu0
  %v963 = vadd.f32 0.0, %v962
  %v964 = vpop.f32.mrf.mxu0
  %v965 = vadd.f32 0.0, %v964
  %966 = vmatmul.bf16.gmra.mxu0 %v477
  %v967 = vpop.f32.mrf.mxu0
  %v968 = vadd.f32 0.0, %v967
  %v969 = vpop.f32.mrf.mxu0
  %v970 = vadd.f32 0.0, %v969
  %971 = vmatmul.bf16.gmra.mxu0 %v480
  %v972 = vpop.f32.mrf.mxu0
  %v973 = vadd.f32 0.0, %v972
  %v974 = vpop.f32.mrf.mxu0
  %v975 = vadd.f32 0.0, %v974
  %976 = vmatmul.bf16.gmra.mxu0 %v483
  %v977 = vpop.f32.mrf.mxu0
  %v978 = vadd.f32 0.0, %v977
  %v979 = vpop.f32.mrf.mxu0
  %v980 = vadd.f32 0.0, %v979
  %981 = vmatmul.bf16.gmra.mxu0 %v486
  %v982 = vpop.f32.mrf.mxu0
  %v983 = vadd.f32 0.0, %v982
  %v984 = vpop.f32.mrf.mxu0
  %v985 = vadd.f32 0.0, %v984
  %986 = vmatmul.bf16.gmra.mxu0 %v489
  %v987 = vpop.f32.mrf.mxu0
  %v988 = vadd.f32 0.0, %v987
  %v989 = vpop.f32.mrf.mxu0
  %v990 = vadd.f32 0.0, %v989
  %991 = vmatmul.bf16.gmra.mxu0 %v492
  %v992 = vpop.f32.mrf.mxu0
  %v993 = vadd.f32 0.0, %v992
  %v994 = vpop.f32.mrf.mxu0
  %v995 = vadd.f32 0.0, %v994
  %996 = vmatmul.bf16.gmra.mxu0 %v495
  %v997 = vpop.f32.mrf.mxu0
  %v998 = vadd.f32 0.0, %v997
  %v999 = vpop.f32.mrf.mxu0
  %v1000 = vadd.f32 0.0, %v999
  %1001 = vmatmul.bf16.gmra.mxu0 %v498
  %v1002 = vpop.f32.mrf.mxu0
  %v1003 = vadd.f32 0.0, %v1002
  %v1004 = vpop.f32.mrf.mxu0
  %v1005 = vadd.f32 0.0, %v1004
  %1006 = vdwg.mxu0
  %1007 = vmatpush.bf16.msra.mxu0 0
  %1008 = vmatpush.bf16.msra.mxu0 0
  %1009 = vmatpush.bf16.msra.mxu0 0
  %1010 = vmatpush.bf16.msra.mxu0 0
  %1011 = vmatpush.bf16.msra.mxu0 %v386
  %1012 = vmatpush.bf16.msra.mxu0 %v382
  %1013 = vmatpush.bf16.msra.mxu0 %v378
  %1014 = vmatpush.bf16.msra.mxu0 %v374
  %1015 = vmatmul.bf16.gmra.mxu0 %v405
  %v1016 = vpop.f32.mrf.mxu0
  %v1017 = vadd.f32 0.0, %v1016
  %v1018 = vpop.f32.mrf.mxu0
  %v1019 = vadd.f32 0.0, %v1018
  %1020 = vmatmul.bf16.gmra.mxu0 %v408
  %v1021 = vpop.f32.mrf.mxu0
  %v1022 = vadd.f32 0.0, %v1021
  %v1023 = vpop.f32.mrf.mxu0
  %v1024 = vadd.f32 0.0, %v1023
  %1025 = vmatmul.bf16.gmra.mxu0 %v411
  %v1026 = vpop.f32.mrf.mxu0
  %v1027 = vadd.f32 0.0, %v1026
  %v1028 = vpop.f32.mrf.mxu0
  %v1029 = vadd.f32 0.0, %v1028
  %1030 = vmatmul.bf16.gmra.mxu0 %v414
  %v1031 = vpop.f32.mrf.mxu0
  %v1032 = vadd.f32 0.0, %v1031
  %v1033 = vpop.f32.mrf.mxu0
  %v1034 = vadd.f32 0.0, %v1033
  %1035 = vmatmul.bf16.gmra.mxu0 %v417
  %v1036 = vpop.f32.mrf.mxu0
  %v1037 = vadd.f32 0.0, %v1036
  %v1038 = vpop.f32.mrf.mxu0
  %v1039 = vadd.f32 0.0, %v1038
  %1040 = vmatmul.bf16.gmra.mxu0 %v420
  %v1041 = vpop.f32.mrf.mxu0
  %v1042 = vadd.f32 0.0, %v1041
  %v1043 = vpop.f32.mrf.mxu0
  %v1044 = vadd.f32 0.0, %v1043
  %1045 = vmatmul.bf16.gmra.mxu0 %v423
  %v1046 = vpop.f32.mrf.mxu0
  %v1047 = vadd.f32 0.0, %v1046
  %v1048 = vpop.f32.mrf.mxu0
  %v1049 = vadd.f32 0.0, %v1048
  %1050 = vmatmul.bf16.gmra.mxu0 %v426
  %v1051 = vpop.f32.mrf.mxu0
  %v1052 = vadd.f32 0.0, %v1051
  %v1053 = vpop.f32.mrf.mxu0
  %v1054 = vadd.f32 0.0, %v1053
  %1055 = vmatmul.bf16.gmra.mxu0 %v429
  %v1056 = vpop.f32.mrf.mxu0
  %v1057 = vadd.f32 0.0, %v1056
  %v1058 = vpop.f32.mrf.mxu0
  %v1059 = vadd.f32 0.0, %v1058
  %1060 = vmatmul.bf16.gmra.mxu0 %v432
  %v1061 = vpop.f32.mrf.mxu0
  %v1062 = vadd.f32 0.0, %v1061
  %v1063 = vpop.f32.mrf.mxu0
  %v1064 = vadd.f32 0.0, %v1063
  %1065 = vmatmul.bf16.gmra.mxu0 %v435
  %v1066 = vpop.f32.mrf.mxu0
  %v1067 = vadd.f32 0.0, %v1066
  %v1068 = vpop.f32.mrf.mxu0
  %v1069 = vadd.f32 0.0, %v1068
  %1070 = vmatmul.bf16.gmra.mxu0 %v438
  %v1071 = vpop.f32.mrf.mxu0
  %v1072 = vadd.f32 0.0, %v1071
  %v1073 = vpop.f32.mrf.mxu0
  %v1074 = vadd.f32 0.0, %v1073
  %1075 = vmatmul.bf16.gmra.mxu0 %v441
  %v1076 = vpop.f32.mrf.mxu0
  %v1077 = vadd.f32 0.0, %v1076
  %v1078 = vpop.f32.mrf.mxu0
  %v1079 = vadd.f32 0.0, %v1078
  %1080 = vmatmul.bf16.gmra.mxu0 %v444
  %v1081 = vpop.f32.mrf.mxu0
  %v1082 = vadd.f32 0.0, %v1081
  %v1083 = vpop.f32.mrf.mxu0
  %v1084 = vadd.f32 0.0, %v1083
  %1085 = vmatmul.bf16.gmra.mxu0 %v447
  %v1086 = vpop.f32.mrf.mxu0
  %v1087 = vadd.f32 0.0, %v1086
  %v1088 = vpop.f32.mrf.mxu0
  %v1089 = vadd.f32 0.0, %v1088
  %1090 = vmatmul.bf16.gmra.mxu0 %v450
  %v1091 = vpop.f32.mrf.mxu0
  %v1092 = vadd.f32 0.0, %v1091
  %v1093 = vpop.f32.mrf.mxu0
  %v1094 = vadd.f32 0.0, %v1093
  %1095 = vmatmul.bf16.gmra.mxu0 %v453
  %v1096 = vpop.f32.mrf.mxu0
  %v1097 = vadd.f32 0.0, %v1096
  %v1098 = vpop.f32.mrf.mxu0
  %v1099 = vadd.f32 0.0, %v1098
  %1100 = vmatmul.bf16.gmra.mxu0 %v456
  %v1101 = vpop.f32.mrf.mxu0
  %v1102 = vadd.f32 0.0, %v1101
  %v1103 = vpop.f32.mrf.mxu0
  %v1104 = vadd.f32 0.0, %v1103
  %1105 = vmatmul.bf16.gmra.mxu0 %v459
  %v1106 = vpop.f32.mrf.mxu0
  %v1107 = vadd.f32 0.0, %v1106
  %v1108 = vpop.f32.mrf.mxu0
  %v1109 = vadd.f32 0.0, %v1108
  %1110 = vmatmul.bf16.gmra.mxu0 %v462
  %v1111 = vpop.f32.mrf.mxu0
  %v1112 = vadd.f32 0.0, %v1111
  %v1113 = vpop.f32.mrf.mxu0
  %v1114 = vadd.f32 0.0, %v1113
  %1115 = vmatmul.bf16.gmra.mxu0 %v465
  %v1116 = vpop.f32.mrf.mxu0
  %v1117 = vadd.f32 0.0, %v1116
  %v1118 = vpop.f32.mrf.mxu0
  %v1119 = vadd.f32 0.0, %v1118
  %1120 = vmatmul.bf16.gmra.mxu0 %v468
  %v1121 = vpop.f32.mrf.mxu0
  %v1122 = vadd.f32 0.0, %v1121
  %v1123 = vpop.f32.mrf.mxu0
  %v1124 = vadd.f32 0.0, %v1123
  %1125 = vmatmul.bf16.gmra.mxu0 %v471
  %v1126 = vpop.f32.mrf.mxu0
  %v1127 = vadd.f32 0.0, %v1126
  %v1128 = vpop.f32.mrf.mxu0
  %v1129 = vadd.f32 0.0, %v1128
  %1130 = vmatmul.bf16.gmra.mxu0 %v474
  %v1131 = vpop.f32.mrf.mxu0
  %v1132 = vadd.f32 0.0, %v1131
  %v1133 = vpop.f32.mrf.mxu0
  %v1134 = vadd.f32 0.0, %v1133
  %1135 = vmatmul.bf16.gmra.mxu0 %v477
  %v1136 = vpop.f32.mrf.mxu0
  %v1137 = vadd.f32 0.0, %v1136
  %v1138 = vpop.f32.mrf.mxu0
  %v1139 = vadd.f32 0.0, %v1138
  %1140 = vmatmul.bf16.gmra.mxu0 %v480
  %v1141 = vpop.f32.mrf.mxu0
  %v1142 = vadd.f32 0.0, %v1141
  %v1143 = vpop.f32.mrf.mxu0
  %v1144 = vadd.f32 0.0, %v1143
  %1145 = vmatmul.bf16.gmra.mxu0 %v483
  %v1146 = vpop.f32.mrf.mxu0
  %v1147 = vadd.f32 0.0, %v1146
  %v1148 = vpop.f32.mrf.mxu0
  %v1149 = vadd.f32 0.0, %v1148
  %1150 = vmatmul.bf16.gmra.mxu0 %v486
  %v1151 = vpop.f32.mrf.mxu0
  %v1152 = vadd.f32 0.0, %v1151
  %v1153 = vpop.f32.mrf.mxu0
  %v1154 = vadd.f32 0.0, %v1153
  %1155 = vmatmul.bf16.gmra.mxu0 %v489
  %v1156 = vpop.f32.mrf.mxu0
  %v1157 = vadd.f32 0.0, %v1156
  %v1158 = vpop.f32.mrf.mxu0
  %v1159 = vadd.f32 0.0, %v1158
  %1160 = vmatmul.bf16.gmra.mxu0 %v492
  %v1161 = vpop.f32.mrf.mxu0
  %v1162 = vadd.f32 0.0, %v1161
  %v1163 = vpop.f32.mrf.mxu0
  %v1164 = vadd.f32 0.0, %v1163
  %1165 = vmatmul.bf16.gmra.mxu0 %v495
  %v1166 = vpop.f32.mrf.mxu0
  %v1167 = vadd.f32 0.0, %v1166
  %v1168 = vpop.f32.mrf.mxu0
  %v1169 = vadd.f32 0.0, %v1168
  %1170 = vmatmul.bf16.gmra.mxu0 %v498
  %v1171 = vpop.f32.mrf.mxu0
  %v1172 = vadd.f32 0.0, %v1171
  %v1173 = vpop.f32.mrf.mxu0
  %v1174 = vadd.f32 0.0, %v1173
  %1175 = vdwg.mxu0
  %v1176 = vpack.c.bf16 %v679, %v510
  %v1177 = vpack.c.bf16 %v1017, %v848
  %v1178 = vpack.c.bf16 %v681, %v512
  %v1179 = vpack.c.bf16 %v1019, %v850
  %v1180 = vpack.c.bf16 %v684, %v515
  %v1181 = vpack.c.bf16 %v1022, %v853
  %v1182 = vpack.c.bf16 %v686, %v517
  %v1183 = vpack.c.bf16 %v1024, %v855
  %v1184 = vpack.c.bf16 %v689, %v520
  %v1185 = vpack.c.bf16 %v1027, %v858
  %v1186 = vpack.c.bf16 %v691, %v522
  %v1187 = vpack.c.bf16 %v1029, %v860
  %v1188 = vpack.c.bf16 %v694, %v525
  %v1189 = vpack.c.bf16 %v1032, %v863
  %v1190 = vpack.c.bf16 %v696, %v527
  %v1191 = vpack.c.bf16 %v1034, %v865
  %v1192 = vpack.c.bf16 %v699, %v530
  %v1193 = vpack.c.bf16 %v1037, %v868
  %v1194 = vpack.c.bf16 %v701, %v532
  %v1195 = vpack.c.bf16 %v1039, %v870
  %v1196 = vpack.c.bf16 %v704, %v535
  %v1197 = vpack.c.bf16 %v1042, %v873
  %v1198 = vpack.c.bf16 %v706, %v537
  %v1199 = vpack.c.bf16 %v1044, %v875
  %v1200 = vpack.c.bf16 %v709, %v540
  %v1201 = vpack.c.bf16 %v1047, %v878
  %v1202 = vpack.c.bf16 %v711, %v542
  %v1203 = vpack.c.bf16 %v1049, %v880
  %v1204 = vpack.c.bf16 %v714, %v545
  %v1205 = vpack.c.bf16 %v1052, %v883
  %v1206 = vpack.c.bf16 %v716, %v547
  %v1207 = vpack.c.bf16 %v1054, %v885
  %v1208 = vpack.c.bf16 %v719, %v550
  %v1209 = vpack.c.bf16 %v1057, %v888
  %v1210 = vpack.c.bf16 %v721, %v552
  %v1211 = vpack.c.bf16 %v1059, %v890
  %v1212 = vpack.c.bf16 %v724, %v555
  %v1213 = vpack.c.bf16 %v1062, %v893
  %v1214 = vpack.c.bf16 %v726, %v557
  %v1215 = vpack.c.bf16 %v1064, %v895
  %v1216 = vpack.c.bf16 %v729, %v560
  %v1217 = vpack.c.bf16 %v1067, %v898
  %v1218 = vpack.c.bf16 %v731, %v562
  %v1219 = vpack.c.bf16 %v1069, %v900
  %v1220 = vpack.c.bf16 %v734, %v565
  %v1221 = vpack.c.bf16 %v1072, %v903
  %v1222 = vpack.c.bf16 %v736, %v567
  %v1223 = vpack.c.bf16 %v1074, %v905
  %v1224 = vpack.c.bf16 %v739, %v570
  %v1225 = vpack.c.bf16 %v1077, %v908
  %v1226 = vpack.c.bf16 %v741, %v572
  %v1227 = vpack.c.bf16 %v1079, %v910
  %v1228 = vpack.c.bf16 %v744, %v575
  %v1229 = vpack.c.bf16 %v1082, %v913
  %v1230 = vpack.c.bf16 %v746, %v577
  %v1231 = vpack.c.bf16 %v1084, %v915
  %v1232 = vpack.c.bf16 %v749, %v580
  %v1233 = vpack.c.bf16 %v1087, %v918
  %v1234 = vpack.c.bf16 %v751, %v582
  %v1235 = vpack.c.bf16 %v1089, %v920
  %v1236 = vpack.c.bf16 %v754, %v585
  %v1237 = vpack.c.bf16 %v1092, %v923
  %v1238 = vpack.c.bf16 %v756, %v587
  %v1239 = vpack.c.bf16 %v1094, %v925
  %v1240 = vpack.c.bf16 %v759, %v590
  %v1241 = vpack.c.bf16 %v1097, %v928
  %v1242 = vpack.c.bf16 %v761, %v592
  %v1243 = vpack.c.bf16 %v1099, %v930
  %v1244 = vpack.c.bf16 %v764, %v595
  %v1245 = vpack.c.bf16 %v1102, %v933
  %v1246 = vpack.c.bf16 %v766, %v597
  %v1247 = vpack.c.bf16 %v1104, %v935
  %v1248 = vpack.c.bf16 %v769, %v600
  %v1249 = vpack.c.bf16 %v1107, %v938
  %v1250 = vpack.c.bf16 %v771, %v602
  %v1251 = vpack.c.bf16 %v1109, %v940
  %v1252 = vpack.c.bf16 %v774, %v605
  %v1253 = vpack.c.bf16 %v1112, %v943
  %v1254 = vpack.c.bf16 %v776, %v607
  %v1255 = vpack.c.bf16 %v1114, %v945
  %v1256 = vpack.c.bf16 %v779, %v610
  %v1257 = vpack.c.bf16 %v1117, %v948
  %v1258 = vpack.c.bf16 %v781, %v612
  %v1259 = vpack.c.bf16 %v1119, %v950
  %v1260 = vpack.c.bf16 %v784, %v615
  %v1261 = vpack.c.bf16 %v1122, %v953
  %v1262 = vpack.c.bf16 %v786, %v617
  %v1263 = vpack.c.bf16 %v1124, %v955
  %v1264 = vpack.c.bf16 %v789, %v620
  %v1265 = vpack.c.bf16 %v1127, %v958
  %v1266 = vpack.c.bf16 %v791, %v622
  %v1267 = vpack.c.bf16 %v1129, %v960
  %v1268 = vpack.c.bf16 %v794, %v625
  %v1269 = vpack.c.bf16 %v1132, %v963
  %v1270 = vpack.c.bf16 %v796, %v627
  %v1271 = vpack.c.bf16 %v1134, %v965
  %v1272 = vpack.c.bf16 %v799, %v630
  %v1273 = vpack.c.bf16 %v1137, %v968
  %v1274 = vpack.c.bf16 %v801, %v632
  %v1275 = vpack.c.bf16 %v1139, %v970
  %v1276 = vpack.c.bf16 %v804, %v635
  %v1277 = vpack.c.bf16 %v1142, %v973
  %v1278 = vpack.c.bf16 %v806, %v637
  %v1279 = vpack.c.bf16 %v1144, %v975
  %v1280 = vpack.c.bf16 %v809, %v640
  %v1281 = vpack.c.bf16 %v1147, %v978
  %v1282 = vpack.c.bf16 %v811, %v642
  %v1283 = vpack.c.bf16 %v1149, %v980
  %v1284 = vpack.c.bf16 %v814, %v645
  %v1285 = vpack.c.bf16 %v1152, %v983
  %v1286 = vpack.c.bf16 %v816, %v647
  %v1287 = vpack.c.bf16 %v1154, %v985
  %v1288 = vpack.c.bf16 %v819, %v650
  %v1289 = vpack.c.bf16 %v1157, %v988
  %v1290 = vpack.c.bf16 %v821, %v652
  %v1291 = vpack.c.bf16 %v1159, %v990
  %v1292 = vpack.c.bf16 %v824, %v655
  %v1293 = vpack.c.bf16 %v1162, %v993
  %v1294 = vpack.c.bf16 %v826, %v657
  %v1295 = vpack.c.bf16 %v1164, %v995
  %v1296 = vpack.c.bf16 %v829, %v660
  %v1297 = vpack.c.bf16 %v1167, %v998
  %v1298 = vpack.c.bf16 %v831, %v662
  %v1299 = vpack.c.bf16 %v1169, %v1000
  %v1300 = vpack.c.bf16 %v834, %v665
  %v1301 = vpack.c.bf16 %v1172, %v1003
  %v1302 = vpack.c.bf16 %v836, %v667
  %v1303 = vpack.c.bf16 %v1174, %v1005
  %1304 = vst [vmem:[%s3] sm:$0xff] %v1176
  %1305 = vst [vmem:[%s3 + $0x8] sm:$0xff] %v1177
  %1306 = vst [vmem:[%s3 + $0x10] sm:$0xff] %v1178
  %1307 = vst [vmem:[%s3 + $0x18] sm:$0xff] %v1179
  %1308 = vst [vmem:[%s3 + $0x20] sm:$0xff] %v1180
  %1309 = vst [vmem:[%s3 + $0x28] sm:$0xff] %v1181
  %1310 = vst [vmem:[%s3 + $0x30] sm:$0xff] %v1182
  %1311 = vst [vmem:[%s3 + $0x38] sm:$0xff] %v1183
  %1312 = vst [vmem:[%s3 + $0x40] sm:$0xff] %v1184
  %1313 = vst [vmem:[%s3 + $0x48] sm:$0xff] %v1185
  %1314 = vst [vmem:[%s3 + $0x50] sm:$0xff] %v1186
  %1315 = vst [vmem:[%s3 + $0x58] sm:$0xff] %v1187
  %1316 = vst [vmem:[%s3 + $0x60] sm:$0xff] %v1188
  %1317 = vst [vmem:[%s3 + $0x68] sm:$0xff] %v1189
  %1318 = vst [vmem:[%s3 + $0x70] sm:$0xff] %v1190
  %1319 = vst [vmem:[%s3 + $0x78] sm:$0xff] %v1191
  %1320 = vst [vmem:[%s3 + $0x80] sm:$0xff] %v1192
  %1321 = vst [vmem:[%s3 + $0x88] sm:$0xff] %v1193
  %1322 = vst [vmem:[%s3 + $0x90] sm:$0xff] %v1194
  %1323 = vst [vmem:[%s3 + $0x98] sm:$0xff] %v1195
  %1324 = vst [vmem:[%s3 + $0xa0] sm:$0xff] %v1196
  %1325 = vst [vmem:[%s3 + $0xa8] sm:$0xff] %v1197
  %1326 = vst [vmem:[%s3 + $0xb0] sm:$0xff] %v1198
  %1327 = vst [vmem:[%s3 + $0xb8] sm:$0xff] %v1199
  %1328 = vst [vmem:[%s3 + $0xc0] sm:$0xff] %v1200
  %1329 = vst [vmem:[%s3 + $0xc8] sm:$0xff] %v1201
  %1330 = vst [vmem:[%s3 + $0xd0] sm:$0xff] %v1202
  %1331 = vst [vmem:[%s3 + $0xd8] sm:$0xff] %v1203
  %1332 = vst [vmem:[%s3 + $0xe0] sm:$0xff] %v1204
  %1333 = vst [vmem:[%s3 + $0xe8] sm:$0xff] %v1205
  %1334 = vst [vmem:[%s3 + $0xf0] sm:$0xff] %v1206
  %1335 = vst [vmem:[%s3 + $0xf8] sm:$0xff] %v1207
  %1336 = vst [vmem:[%s3 + $0x100] sm:$0xff] %v1208
  %1337 = vst [vmem:[%s3 + $0x108] sm:$0xff] %v1209
  %1338 = vst [vmem:[%s3 + $0x110] sm:$0xff] %v1210
  %1339 = vst [vmem:[%s3 + $0x118] sm:$0xff] %v1211
  %1340 = vst [vmem:[%s3 + $0x120] sm:$0xff] %v1212
  %1341 = vst [vmem:[%s3 + $0x128] sm:$0xff] %v1213
  %1342 = vst [vmem:[%s3 + $0x130] sm:$0xff] %v1214
  %1343 = vst [vmem:[%s3 + $0x138] sm:$0xff] %v1215
  %1344 = vst [vmem:[%s3 + $0x140] sm:$0xff] %v1216
  %1345 = vst [vmem:[%s3 + $0x148] sm:$0xff] %v1217
  %1346 = vst [vmem:[%s3 + $0x150] sm:$0xff] %v1218
  %1347 = vst [vmem:[%s3 + $0x158] sm:$0xff] %v1219
  %1348 = vst [vmem:[%s3 + $0x160] sm:$0xff] %v1220
  %1349 = vst [vmem:[%s3 + $0x168] sm:$0xff] %v1221
  %1350 = vst [vmem:[%s3 + $0x170] sm:$0xff] %v1222
  %1351 = vst [vmem:[%s3 + $0x178] sm:$0xff] %v1223
  %1352 = vst [vmem:[%s3 + $0x180] sm:$0xff] %v1224
  %1353 = vst [vmem:[%s3 + $0x188] sm:$0xff] %v1225
  %1354 = vst [vmem:[%s3 + $0x190] sm:$0xff] %v1226
  %1355 = vst [vmem:[%s3 + $0x198] sm:$0xff] %v1227
  %1356 = vst [vmem:[%s3 + $0x1a0] sm:$0xff] %v1228
  %1357 = vst [vmem:[%s3 + $0x1a8] sm:$0xff] %v1229
  %1358 = vst [vmem:[%s3 + $0x1b0] sm:$0xff] %v1230
  %1359 = vst [vmem:[%s3 + $0x1b8] sm:$0xff] %v1231
  %1360 = vst [vmem:[%s3 + $0x1c0] sm:$0xff] %v1232
  %1361 = vst [vmem:[%s3 + $0x1c8] sm:$0xff] %v1233
  %1362 = vst [vmem:[%s3 + $0x1d0] sm:$0xff] %v1234
  %1363 = vst [vmem:[%s3 + $0x1d8] sm:$0xff] %v1235
  %1364 = vst [vmem:[%s3 + $0x1e0] sm:$0xff] %v1236
  %1365 = vst [vmem:[%s3 + $0x1e8] sm:$0xff] %v1237
  %1366 = vst [vmem:[%s3 + $0x1f0] sm:$0xff] %v1238
  %1367 = vst [vmem:[%s3 + $0x1f8] sm:$0xff] %v1239
  %1368 = vst [vmem:[%s3 + $0x200] sm:$0xff] %v1240
  %1369 = vst [vmem:[%s3 + $0x208] sm:$0xff] %v1241
  %1370 = vst [vmem:[%s3 + $0x210] sm:$0xff] %v1242
  %1371 = vst [vmem:[%s3 + $0x218] sm:$0xff] %v1243
  %1372 = vst [vmem:[%s3 + $0x220] sm:$0xff] %v1244
  %1373 = vst [vmem:[%s3 + $0x228] sm:$0xff] %v1245
  %1374 = vst [vmem:[%s3 + $0x230] sm:$0xff] %v1246
  %1375 = vst [vmem:[%s3 + $0x238] sm:$0xff] %v1247
  %1376 = vst [vmem:[%s3 + $0x240] sm:$0xff] %v1248
  %1377 = vst [vmem:[%s3 + $0x248] sm:$0xff] %v1249
  %1378 = vst [vmem:[%s3 + $0x250] sm:$0xff] %v1250
  %1379 = vst [vmem:[%s3 + $0x258] sm:$0xff] %v1251
  %1380 = vst [vmem:[%s3 + $0x260] sm:$0xff] %v1252
  %1381 = vst [vmem:[%s3 + $0x268] sm:$0xff] %v1253
  %1382 = vst [vmem:[%s3 + $0x270] sm:$0xff] %v1254
  %1383 = vst [vmem:[%s3 + $0x278] sm:$0xff] %v1255
  %1384 = vst [vmem:[%s3 + $0x280] sm:$0xff] %v1256
  %1385 = vst [vmem:[%s3 + $0x288] sm:$0xff] %v1257
  %1386 = vst [vmem:[%s3 + $0x290] sm:$0xff] %v1258
  %1387 = vst [vmem:[%s3 + $0x298] sm:$0xff] %v1259
  %1388 = vst [vmem:[%s3 + $0x2a0] sm:$0xff] %v1260
  %1389 = vst [vmem:[%s3 + $0x2a8] sm:$0xff] %v1261
  %1390 = vst [vmem:[%s3 + $0x2b0] sm:$0xff] %v1262
  %1391 = vst [vmem:[%s3 + $0x2b8] sm:$0xff] %v1263
  %1392 = vst [vmem:[%s3 + $0x2c0] sm:$0xff] %v1264
  %1393 = vst [vmem:[%s3 + $0x2c8] sm:$0xff] %v1265
  %1394 = vst [vmem:[%s3 + $0x2d0] sm:$0xff] %v1266
  %1395 = vst [vmem:[%s3 + $0x2d8] sm:$0xff] %v1267
  %1396 = vst [vmem:[%s3 + $0x2e0] sm:$0xff] %v1268
  %1397 = vst [vmem:[%s3 + $0x2e8] sm:$0xff] %v1269
  %1398 = vst [vmem:[%s3 + $0x2f0] sm:$0xff] %v1270
  %1399 = vst [vmem:[%s3 + $0x2f8] sm:$0xff] %v1271
  %1400 = vst [vmem:[%s3 + $0x300] sm:$0xff] %v1272
  %1401 = vst [vmem:[%s3 + $0x308] sm:$0xff] %v1273
  %1402 = vst [vmem:[%s3 + $0x310] sm:$0xff] %v1274
  %1403 = vst [vmem:[%s3 + $0x318] sm:$0xff] %v1275
  %1404 = vst [vmem:[%s3 + $0x320] sm:$0xff] %v1276
  %1405 = vst [vmem:[%s3 + $0x328] sm:$0xff] %v1277
  %1406 = vst [vmem:[%s3 + $0x330] sm:$0xff] %v1278
  %1407 = vst [vmem:[%s3 + $0x338] sm:$0xff] %v1279
  %1408 = vst [vmem:[%s3 + $0x340] sm:$0xff] %v1280
  %1409 = vst [vmem:[%s3 + $0x348] sm:$0xff] %v1281
  %1410 = vst [vmem:[%s3 + $0x350] sm:$0xff] %v1282
  %1411 = vst [vmem:[%s3 + $0x358] sm:$0xff] %v1283
  %1412 = vst [vmem:[%s3 + $0x360] sm:$0xff] %v1284
  %1413 = vst [vmem:[%s3 + $0x368] sm:$0xff] %v1285
  %1414 = vst [vmem:[%s3 + $0x370] sm:$0xff] %v1286
  %1415 = vst [vmem:[%s3 + $0x378] sm:$0xff] %v1287
  %1416 = vst [vmem:[%s3 + $0x380] sm:$0xff] %v1288
  %1417 = vst [vmem:[%s3 + $0x388] sm:$0xff] %v1289
  %1418 = vst [vmem:[%s3 + $0x390] sm:$0xff] %v1290
  %1419 = vst [vmem:[%s3 + $0x398] sm:$0xff] %v1291
  %1420 = vst [vmem:[%s3 + $0x3a0] sm:$0xff] %v1292
  %1421 = vst [vmem:[%s3 + $0x3a8] sm:$0xff] %v1293
  %1422 = vst [vmem:[%s3 + $0x3b0] sm:$0xff] %v1294
  %1423 = vst [vmem:[%s3 + $0x3b8] sm:$0xff] %v1295
  %1424 = vst [vmem:[%s3 + $0x3c0] sm:$0xff] %v1296
  %1425 = vst [vmem:[%s3 + $0x3c8] sm:$0xff] %v1297
  %1426 = vst [vmem:[%s3 + $0x3d0] sm:$0xff] %v1298
  %1427 = vst [vmem:[%s3 + $0x3d8] sm:$0xff] %v1299
  %1428 = vst [vmem:[%s3 + $0x3e0] sm:$0xff] %v1300
  %1429 = vst [vmem:[%s3 + $0x3e8] sm:$0xff] %v1301
  %1430 = vst [vmem:[%s3 + $0x3f0] sm:$0xff] %v1302
  %1431 = vst [vmem:[%s3 + $0x3f8] sm:$0xff] %v1303
  // Predicated region
  $region14: #{dec_txt_forward.11} parent=0 // pred_check
    _
  $region15: #{dec_txt_forward.11} parent=0 // pred_check_branch
    %1433 = sbr.rel (0) target = $region17
  $region16: #{dec_txt_forward.11} parent=0 // pred_region
    _
  $region17: #{dec_txt_forward.11} parent=0 // pred_fallthru
    _
  // Predicated region
  $region18: #{dec_txt_forward.11} parent=0 // pred_check
    _
  $region19: #{dec_txt_forward.11} parent=0 // pred_check_branch
    %1435 = sbr.rel (0) target = $region21
  $region20: #{dec_txt_forward.11} parent=0 // pred_region
    _
  $region21: #{dec_txt_forward.11} parent=0 // pred_fallthru
    _

// kernel: dec_txt_forward.12
$region0: #{dec_txt_forward.12}
  #allocation0 [shape = 'u32[]', space=smem, size = 0x4, offset = 0x4, fixed_abs, tag = 'smem constant byte address 0x4 - core index']
  #allocation1 [shape = 'u32[72,128]{1,0:T(1,128)}', space=vmem, size = 0x9000, scoped, tag = 'internal scratch']
  %s0 = inlined_call_operand.vmem [shape: bf16[2048,32], index: 0, kind: input, shape index: {}]
  %s1 = inlined_call_operand.vmem [shape: bf16[32,16], index: 1, kind: input, shape index: {}]
  %s2 = inlined_call_operand.vmem [shape: f32[1,32], index: 2, kind: input, shape index: {}]
  %s3 = inlined_call_operand.vmem [shape: bf16[2048,16], index: 3, kind: output, shape index: {}]
  %s4 = sld [smem:[#allocation0]]
  $region45: #{dec_txt_forward.12} parent=0
    _
  %s6 = ssub.s32 1, %s4
  %s7 = scalar_select 0, %s6, %s4
  loop: start=0, step=1, limit=4
  $region2: #{dec_txt_forward.12} parent=0 // loop_pre_header
    _
  $region3: #{dec_txt_forward.12} parent=0 // loop_header
    %s9 = sphi 0, %s13
    %p10 = scmp.ge.s32.totalorder %s9, 4
    %s19 = sphi 0, %s21
    %s22 = sphi 0, %s19
    %s23 = sphi 0, %s22
    %s39 = sphi 0, %s23
    %s43 = sphi 0, %s43
    %s45 = sphi 0, %s43
    %s46 = sphi 0, %s45
    %s60 = sphi 0, %s46
    %s64 = sphi 0, %s64
    %s66 = sphi 0, %s64
    %s67 = sphi 0, %s66
    %s81 = sphi 0, %s67
    %s87 = sphi 0, %s89
    %s90 = sphi 0, %s87
    %s91 = sphi 0, %s90
    %s107 = sphi 0, %s91
  $region4: #{dec_txt_forward.12} parent=0 // loop_header_branch
    %12 = sbr.rel (%p10) target = $region8
  $region5: #{dec_txt_forward.12} parent=0 // loop_body
    %s14 = ssub.s32 %s9, 1
    %s15 = ssub.s32 %s9, 2
    %s16 = sadd.s32 %s9, 1
    %s17 = ssub.s32 %s9, %s16
    %p18 = scmp.eq.s32.totalorder %s17, 0
    %s20 = sadd.s32 %s19, 1
    %s21 = scalar_select %p18, %s19, %s20
    %p24 = pneg %p18
    %p25 = scmp.eq.s32.totalorder %s9, 1
    %p26 = por %p24, %p25
    %p27 = scmp.ne.s32.totalorder %s19, %s22
    %p28 = scmp.eq.s32.totalorder %s9, 0
    %p29 = por %p27, %p28
    %p30 = scmp.ne.s32.totalorder %s19, %s22
    %p31 = scmp.eq.s32.totalorder %s14, 1
    %p32 = por %p30, %p31
    %p33 = scmp.ne.s32.totalorder %s22, %s23
    %p34 = scmp.eq.s32.totalorder %s14, 0
    %p35 = por %p33, %p34
    %p36 = scmp.ne.s32.totalorder %s22, %s23
    %p37 = scmp.eq.s32.totalorder %s15, 1
    %p38 = por %p36, %p37
    %p40 = scmp.ne.s32.totalorder %s23, %s39
    %p41 = scmp.eq.s32.totalorder %s15, 0
    %p42 = por %p40, %p41
    %s44 = sadd.s32 %s43, 1
    %p47 = scmp.eq.s32.totalorder %s9, 1
    %p48 = scmp.ne.s32.totalorder %s43, %s45
    %p49 = scmp.eq.s32.totalorder %s9, 0
    %p50 = por %p48, %p49
    %p51 = scmp.ne.s32.totalorder %s43, %s45
    %p52 = scmp.eq.s32.totalorder %s14, 1
    %p53 = por %p51, %p52
    %p54 = scmp.ne.s32.totalorder %s45, %s46
    %p55 = scmp.eq.s32.totalorder %s14, 0
    %p56 = por %p54, %p55
    %p57 = scmp.ne.s32.totalorder %s45, %s46
    %p58 = scmp.eq.s32.totalorder %s15, 1
    %p59 = por %p57, %p58
    %p61 = scmp.ne.s32.totalorder %s46, %s60
    %p62 = scmp.eq.s32.totalorder %s15, 0
    %p63 = por %p61, %p62
    %s65 = sadd.s32 %s64, 1
    %p68 = scmp.eq.s32.totalorder %s9, 1
    %p69 = scmp.ne.s32.totalorder %s64, %s66
    %p70 = scmp.eq.s32.totalorder %s9, 0
    %p71 = por %p69, %p70
    %p72 = scmp.ne.s32.totalorder %s64, %s66
    %p73 = scmp.eq.s32.totalorder %s14, 1
    %p74 = por %p72, %p73
    %p75 = scmp.ne.s32.totalorder %s66, %s67
    %p76 = scmp.eq.s32.totalorder %s14, 0
    %p77 = por %p75, %p76
    %p78 = scmp.ne.s32.totalorder %s66, %s67
    %p79 = scmp.eq.s32.totalorder %s15, 1
    %p80 = por %p78, %p79
    %p82 = scmp.ne.s32.totalorder %s67, %s81
    %p83 = scmp.eq.s32.totalorder %s15, 0
    %p84 = por %p82, %p83
    %s85 = ssub.s32 %s9, %s16
    %p86 = scmp.eq.s32.totalorder %s85, 0
    %s88 = sadd.s32 %s87, 1
    %s89 = scalar_select %p86, %s87, %s88
    %p92 = pneg %p86
    %p93 = scmp.eq.s32.totalorder %s9, 1
    %p94 = por %p92, %p93
    %p95 = scmp.ne.s32.totalorder %s87, %s90
    %p96 = scmp.eq.s32.totalorder %s9, 0
    %p97 = por %p95, %p96
    %p98 = scmp.ne.s32.totalorder %s87, %s90
    %p99 = scmp.eq.s32.totalorder %s14, 1
    %p100 = por %p98, %p99
    %p101 = scmp.ne.s32.totalorder %s90, %s91
    %p102 = scmp.eq.s32.totalorder %s14, 0
    %p103 = por %p101, %p102
    %p104 = scmp.ne.s32.totalorder %s90, %s91
    %p105 = scmp.eq.s32.totalorder %s15, 1
    %p106 = por %p104, %p105
    %p108 = scmp.ne.s32.totalorder %s91, %s107
    %p109 = scmp.eq.s32.totalorder %s15, 0
    %p110 = por %p108, %p109
    %p111 = scmp.le.s32.totalorder 1, %s9
    %p112 = scmp.lt.s32.totalorder %s9, 3
    %p113 = pnand %p111, %p112
    %p114 = pneg %p113
    // Predicated region
    $region9: #{dec_txt_forward.12} parent=5 // pred_check
      _
    $region10: #{dec_txt_forward.12} parent=5 // pred_check_branch
      %116 = sbr.rel (%p113) target = $region12
    $region11: #{dec_txt_forward.12} parent=5 // pred_region
      %s117 = ssub.s32 %s9, 1
      // Predicated region
      $region13: #{dec_txt_forward.12} parent=11 // pred_check
        %p118 = pneg %p56
      $region14: #{dec_txt_forward.12} parent=11 // pred_check_branch
        %120 = sbr.rel (%p118) target = $region16
      $region15: #{dec_txt_forward.12} parent=11 // pred_region
        _
      $region16: #{dec_txt_forward.12} parent=11 // pred_fallthru
        _
      // Predicated region
      $region17: #{dec_txt_forward.12} parent=11 // pred_check
        %p121 = pneg %p77
      $region18: #{dec_txt_forward.12} parent=11 // pred_check_branch
        %123 = sbr.rel (%p121) target = $region20
      $region19: #{dec_txt_forward.12} parent=11 // pred_region
        _
      $region20: #{dec_txt_forward.12} parent=11 // pred_fallthru
        _
    $region12: #{dec_txt_forward.12} parent=5 // pred_fallthru
      _
    %p124 = scmp.lt.s32.totalorder %s9, 2
    // Predicated region
    $region21: #{dec_txt_forward.12} parent=5 // pred_check
      %p125 = pneg %p124
    $region22: #{dec_txt_forward.12} parent=5 // pred_check_branch
      %127 = sbr.rel (%p125) target = $region24
    $region23: #{dec_txt_forward.12} parent=5 // pred_region
      // Predicated region
      $region25: #{dec_txt_forward.12} parent=23 // pred_check
        %p128 = pneg %p29
      $region26: #{dec_txt_forward.12} parent=23 // pred_check_branch
        %130 = sbr.rel (%p128) target = $region28
      $region27: #{dec_txt_forward.12} parent=23 // pred_region
        %s131 = smul.u32 128, %s9
        %p132 = scmp.lt.s32.totalorder %s131, 255
        %s133 = scalar_select %p132, %s131, 255
        %s134 = smul.addr %s133, 4
        %s135 = scalar_lea.vmem %s0, %s134
        %s136 = smul.u32 128, %s9
      $region28: #{dec_txt_forward.12} parent=23 // pred_fallthru
        _
    $region24: #{dec_txt_forward.12} parent=5 // pred_fallthru
      _
    %p137 = scmp.le.s32.totalorder 1, %s9
    %p138 = scmp.lt.s32.totalorder %s9, 3
    %p139 = pnand %p137, %p138
    %p140 = pneg %p139
    // Predicated region
    $region29: #{dec_txt_forward.12} parent=5 // pred_check
      _
    $region30: #{dec_txt_forward.12} parent=5 // pred_check_branch
      %142 = sbr.rel (%p139) target = $region32
    $region31: #{dec_txt_forward.12} parent=5 // pred_region
      %s143 = ssub.s32 %s9, 1
      %s144 = smul.u32 128, %s14
      %p145 = scmp.lt.s32.totalorder %s144, 255
      %s146 = scalar_select %p145, %s144, 255
      %s147 = smul.addr %s146, 4
      %s148 = scalar_lea.vmem %s0, %s147
      %p149 = pneg %p35
      %p150 = pneg %p32
      %p151 = pneg %p56
      %p152 = pneg %p53
      %p153 = pneg %p77
      %p154 = pneg %p74
      %p155 = pneg %p103
      %p156 = pneg %p100
      %s157 = smul.u32 128, %s14
      %p158 = scmp.lt.s32.totalorder %s157, 255
      %s159 = scalar_select %p158, %s157, 255
      %s160 = smul.addr %s159, 4
      %s161 = scalar_lea.vmem %s3, %s160
      %s162 = smul.u32 128, %s14
      %p163 = scmp.lt.s32.totalorder %s162, 255
      %s164 = scalar_select %p163, %s162, 255
      %s165 = smul.addr %s164, 4
      %s166 = scalar_lea.vmem %s0, %s165
      %s167 = smul.u32 128, %s14
      %s168 = smul.u32 128, %s14
      %p169 = scmp.lt.s32.totalorder %s168, 255
      %s170 = scalar_select %p169, %s168, 255
      %s171 = smul.addr %s170, 4
      %s172 = scalar_lea.vmem %s3, %s171
      %s173 = smul.u32 128, %s14
      %v175 = vld [vmem:[%s166] sm:$0xf]
      %v176 = vld [vmem:[%s166 + $0x4] sm:$0xf]
      %v177 = vld [vmem:[%s166 + $0x8] sm:$0xf]
      %v178 = vld [vmem:[%s166 + $0xc] sm:$0xf]
      %v179 = vld [vmem:[%s166 + $0x10] sm:$0xf]
      %v180 = vld [vmem:[%s166 + $0x14] sm:$0xf]
      %v181 = vld [vmem:[%s166 + $0x18] sm:$0xf]
      %v182 = vld [vmem:[%s166 + $0x1c] sm:$0xf]
      %v183 = vld [vmem:[%s166 + $0x20] sm:$0xf]
      %v184 = vld [vmem:[%s166 + $0x24] sm:$0xf]
      %v185 = vld [vmem:[%s166 + $0x28] sm:$0xf]
      %v186 = vld [vmem:[%s166 + $0x2c] sm:$0xf]
      %v187 = vld [vmem:[%s166 + $0x30] sm:$0xf]
      %v188 = vld [vmem:[%s166 + $0x34] sm:$0xf]
      %v189 = vld [vmem:[%s166 + $0x38] sm:$0xf]
      %v190 = vld [vmem:[%s166 + $0x3c] sm:$0xf]
      %v191 = vld [vmem:[%s166 + $0x40] sm:$0xf]
      %v192 = vld [vmem:[%s166 + $0x44] sm:$0xf]
      %v193 = vld [vmem:[%s166 + $0x48] sm:$0xf]
      %v194 = vld [vmem:[%s166 + $0x4c] sm:$0xf]
      %v195 = vld [vmem:[%s166 + $0x50] sm:$0xf]
      %v196 = vld [vmem:[%s166 + $0x54] sm:$0xf]
      %v197 = vld [vmem:[%s166 + $0x58] sm:$0xf]
      %v198 = vld [vmem:[%s166 + $0x5c] sm:$0xf]
      %v199 = vld [vmem:[%s166 + $0x60] sm:$0xf]
      %v200 = vld [vmem:[%s166 + $0x64] sm:$0xf]
      %v201 = vld [vmem:[%s166 + $0x68] sm:$0xf]
      %v202 = vld [vmem:[%s166 + $0x6c] sm:$0xf]
      %v203 = vld [vmem:[%s166 + $0x70] sm:$0xf]
      %v204 = vld [vmem:[%s166 + $0x74] sm:$0xf]
      %v205 = vld [vmem:[%s166 + $0x78] sm:$0xf]
      %v206 = vld [vmem:[%s166 + $0x7c] sm:$0xf]
      %v207 = vld [vmem:[%s166 + $0x80] sm:$0xf]
      %v208 = vld [vmem:[%s166 + $0x84] sm:$0xf]
      %v209 = vld [vmem:[%s166 + $0x88] sm:$0xf]
      %v210 = vld [vmem:[%s166 + $0x8c] sm:$0xf]
      %v211 = vld [vmem:[%s166 + $0x90] sm:$0xf]
      %v212 = vld [vmem:[%s166 + $0x94] sm:$0xf]
      %v213 = vld [vmem:[%s166 + $0x98] sm:$0xf]
      %v214 = vld [vmem:[%s166 + $0x9c] sm:$0xf]
      %v215 = vld [vmem:[%s166 + $0xa0] sm:$0xf]
      %v216 = vld [vmem:[%s166 + $0xa4] sm:$0xf]
      %v217 = vld [vmem:[%s166 + $0xa8] sm:$0xf]
      %v218 = vld [vmem:[%s166 + $0xac] sm:$0xf]
      %v219 = vld [vmem:[%s166 + $0xb0] sm:$0xf]
      %v220 = vld [vmem:[%s166 + $0xb4] sm:$0xf]
      %v221 = vld [vmem:[%s166 + $0xb8] sm:$0xf]
      %v222 = vld [vmem:[%s166 + $0xbc] sm:$0xf]
      %v223 = vld [vmem:[%s166 + $0xc0] sm:$0xf]
      %v224 = vld [vmem:[%s166 + $0xc4] sm:$0xf]
      %v225 = vld [vmem:[%s166 + $0xc8] sm:$0xf]
      %v226 = vld [vmem:[%s166 + $0xcc] sm:$0xf]
      %v227 = vld [vmem:[%s166 + $0xd0] sm:$0xf]
      %v228 = vld [vmem:[%s166 + $0xd4] sm:$0xf]
      %v229 = vld [vmem:[%s166 + $0xd8] sm:$0xf]
      %v230 = vld [vmem:[%s166 + $0xdc] sm:$0xf]
      %v231 = vld [vmem:[%s166 + $0xe0] sm:$0xf]
      %v232 = vld [vmem:[%s166 + $0xe4] sm:$0xf]
      %v233 = vld [vmem:[%s166 + $0xe8] sm:$0xf]
      %v234 = vld [vmem:[%s166 + $0xec] sm:$0xf]
      %v235 = vld [vmem:[%s166 + $0xf0] sm:$0xf]
      %v236 = vld [vmem:[%s166 + $0xf4] sm:$0xf]
      %v237 = vld [vmem:[%s166 + $0xf8] sm:$0xf]
      %v238 = vld [vmem:[%s166 + $0xfc] sm:$0xf]
      %v239 = vld [vmem:[%s166 + $0x100] sm:$0xf]
      %v240 = vld [vmem:[%s166 + $0x104] sm:$0xf]
      %v241 = vld [vmem:[%s166 + $0x108] sm:$0xf]
      %v242 = vld [vmem:[%s166 + $0x10c] sm:$0xf]
      %v243 = vld [vmem:[%s166 + $0x110] sm:$0xf]
      %v244 = vld [vmem:[%s166 + $0x114] sm:$0xf]
      %v245 = vld [vmem:[%s166 + $0x118] sm:$0xf]
      %v246 = vld [vmem:[%s166 + $0x11c] sm:$0xf]
      %v247 = vld [vmem:[%s166 + $0x120] sm:$0xf]
      %v248 = vld [vmem:[%s166 + $0x124] sm:$0xf]
      %v249 = vld [vmem:[%s166 + $0x128] sm:$0xf]
      %v250 = vld [vmem:[%s166 + $0x12c] sm:$0xf]
      %v251 = vld [vmem:[%s166 + $0x130] sm:$0xf]
      %v252 = vld [vmem:[%s166 + $0x134] sm:$0xf]
      %v253 = vld [vmem:[%s166 + $0x138] sm:$0xf]
      %v254 = vld [vmem:[%s166 + $0x13c] sm:$0xf]
      %v255 = vld [vmem:[%s166 + $0x140] sm:$0xf]
      %v256 = vld [vmem:[%s166 + $0x144] sm:$0xf]
      %v257 = vld [vmem:[%s166 + $0x148] sm:$0xf]
      %v258 = vld [vmem:[%s166 + $0x14c] sm:$0xf]
      %v259 = vld [vmem:[%s166 + $0x150] sm:$0xf]
      %v260 = vld [vmem:[%s166 + $0x154] sm:$0xf]
      %v261 = vld [vmem:[%s166 + $0x158] sm:$0xf]
      %v262 = vld [vmem:[%s166 + $0x15c] sm:$0xf]
      %v263 = vld [vmem:[%s166 + $0x160] sm:$0xf]
      %v264 = vld [vmem:[%s166 + $0x164] sm:$0xf]
      %v265 = vld [vmem:[%s166 + $0x168] sm:$0xf]
      %v266 = vld [vmem:[%s166 + $0x16c] sm:$0xf]
      %v267 = vld [vmem:[%s166 + $0x170] sm:$0xf]
      %v268 = vld [vmem:[%s166 + $0x174] sm:$0xf]
      %v269 = vld [vmem:[%s166 + $0x178] sm:$0xf]
      %v270 = vld [vmem:[%s166 + $0x17c] sm:$0xf]
      %v271 = vld [vmem:[%s166 + $0x180] sm:$0xf]
      %v272 = vld [vmem:[%s166 + $0x184] sm:$0xf]
      %v273 = vld [vmem:[%s166 + $0x188] sm:$0xf]
      %v274 = vld [vmem:[%s166 + $0x18c] sm:$0xf]
      %v275 = vld [vmem:[%s166 + $0x190] sm:$0xf]
      %v276 = vld [vmem:[%s166 + $0x194] sm:$0xf]
      %v277 = vld [vmem:[%s166 + $0x198] sm:$0xf]
      %v278 = vld [vmem:[%s166 + $0x19c] sm:$0xf]
      %v279 = vld [vmem:[%s166 + $0x1a0] sm:$0xf]
      %v280 = vld [vmem:[%s166 + $0x1a4] sm:$0xf]
      %v281 = vld [vmem:[%s166 + $0x1a8] sm:$0xf]
      %v282 = vld [vmem:[%s166 + $0x1ac] sm:$0xf]
      %v283 = vld [vmem:[%s166 + $0x1b0] sm:$0xf]
      %v284 = vld [vmem:[%s166 + $0x1b4] sm:$0xf]
      %v285 = vld [vmem:[%s166 + $0x1b8] sm:$0xf]
      %v286 = vld [vmem:[%s166 + $0x1bc] sm:$0xf]
      %v287 = vld [vmem:[%s166 + $0x1c0] sm:$0xf]
      %v288 = vld [vmem:[%s166 + $0x1c4] sm:$0xf]
      %v289 = vld [vmem:[%s166 + $0x1c8] sm:$0xf]
      %v290 = vld [vmem:[%s166 + $0x1cc] sm:$0xf]
      %v291 = vld [vmem:[%s166 + $0x1d0] sm:$0xf]
      %v292 = vld [vmem:[%s166 + $0x1d4] sm:$0xf]
      %v293 = vld [vmem:[%s166 + $0x1d8] sm:$0xf]
      %v294 = vld [vmem:[%s166 + $0x1dc] sm:$0xf]
      %v295 = vld [vmem:[%s166 + $0x1e0] sm:$0xf]
      %v296 = vld [vmem:[%s166 + $0x1e4] sm:$0xf]
      %v297 = vld [vmem:[%s166 + $0x1e8] sm:$0xf]
      %v298 = vld [vmem:[%s166 + $0x1ec] sm:$0xf]
      %v299 = vld [vmem:[%s166 + $0x1f0] sm:$0xf]
      %v300 = vld [vmem:[%s166 + $0x1f4] sm:$0xf]
      %v301 = vld [vmem:[%s166 + $0x1f8] sm:$0xf]
      %v302 = vld [vmem:[%s166 + $0x1fc] sm:$0xf]
      %v303 = vunpack.c.l.bf16 %v175
      %v304 = vunpack.c.l.bf16 %v176
      %v305 = vunpack.c.l.bf16 %v177
      %v306 = vunpack.c.l.bf16 %v178
      %v307 = vunpack.c.l.bf16 %v179
      %v308 = vunpack.c.l.bf16 %v180
      %v309 = vunpack.c.l.bf16 %v181
      %v310 = vunpack.c.l.bf16 %v182
      %v311 = vunpack.c.l.bf16 %v183
      %v312 = vunpack.c.l.bf16 %v184
      %v313 = vunpack.c.l.bf16 %v185
      %v314 = vunpack.c.l.bf16 %v186
      %v315 = vunpack.c.l.bf16 %v187
      %v316 = vunpack.c.l.bf16 %v188
      %v317 = vunpack.c.l.bf16 %v189
      %v318 = vunpack.c.l.bf16 %v190
      %v319 = vunpack.c.l.bf16 %v191
      %v320 = vunpack.c.l.bf16 %v192
      %v321 = vunpack.c.l.bf16 %v193
      %v322 = vunpack.c.l.bf16 %v194
      %v323 = vunpack.c.l.bf16 %v195
      %v324 = vunpack.c.l.bf16 %v196
      %v325 = vunpack.c.l.bf16 %v197
      %v326 = vunpack.c.l.bf16 %v198
      %v327 = vunpack.c.l.bf16 %v199
      %v328 = vunpack.c.l.bf16 %v200
      %v329 = vunpack.c.l.bf16 %v201
      %v330 = vunpack.c.l.bf16 %v202
      %v331 = vunpack.c.l.bf16 %v203
      %v332 = vunpack.c.l.bf16 %v204
      %v333 = vunpack.c.l.bf16 %v205
      %v334 = vunpack.c.l.bf16 %v206
      %v335 = vunpack.c.l.bf16 %v207
      %v336 = vunpack.c.l.bf16 %v208
      %v337 = vunpack.c.l.bf16 %v209
      %v338 = vunpack.c.l.bf16 %v210
      %v339 = vunpack.c.l.bf16 %v211
      %v340 = vunpack.c.l.bf16 %v212
      %v341 = vunpack.c.l.bf16 %v213
      %v342 = vunpack.c.l.bf16 %v214
      %v343 = vunpack.c.l.bf16 %v215
      %v344 = vunpack.c.l.bf16 %v216
      %v345 = vunpack.c.l.bf16 %v217
      %v346 = vunpack.c.l.bf16 %v218
      %v347 = vunpack.c.l.bf16 %v219
      %v348 = vunpack.c.l.bf16 %v220
      %v349 = vunpack.c.l.bf16 %v221
      %v350 = vunpack.c.l.bf16 %v222
      %v351 = vunpack.c.l.bf16 %v223
      %v352 = vunpack.c.l.bf16 %v224
      %v353 = vunpack.c.l.bf16 %v225
      %v354 = vunpack.c.l.bf16 %v226
      %v355 = vunpack.c.l.bf16 %v227
      %v356 = vunpack.c.l.bf16 %v228
      %v357 = vunpack.c.l.bf16 %v229
      %v358 = vunpack.c.l.bf16 %v230
      %v359 = vunpack.c.l.bf16 %v231
      %v360 = vunpack.c.l.bf16 %v232
      %v361 = vunpack.c.l.bf16 %v233
      %v362 = vunpack.c.l.bf16 %v234
      %v363 = vunpack.c.l.bf16 %v235
      %v364 = vunpack.c.l.bf16 %v236
      %v365 = vunpack.c.l.bf16 %v237
      %v366 = vunpack.c.l.bf16 %v238
      %v367 = vunpack.c.l.bf16 %v239
      %v368 = vunpack.c.l.bf16 %v240
      %v369 = vunpack.c.l.bf16 %v241
      %v370 = vunpack.c.l.bf16 %v242
      %v371 = vunpack.c.l.bf16 %v243
      %v372 = vunpack.c.l.bf16 %v244
      %v373 = vunpack.c.l.bf16 %v245
      %v374 = vunpack.c.l.bf16 %v246
      %v375 = vunpack.c.l.bf16 %v247
      %v376 = vunpack.c.l.bf16 %v248
      %v377 = vunpack.c.l.bf16 %v249
      %v378 = vunpack.c.l.bf16 %v250
      %v379 = vunpack.c.l.bf16 %v251
      %v380 = vunpack.c.l.bf16 %v252
      %v381 = vunpack.c.l.bf16 %v253
      %v382 = vunpack.c.l.bf16 %v254
      %v383 = vunpack.c.l.bf16 %v255
      %v384 = vunpack.c.l.bf16 %v256
      %v385 = vunpack.c.l.bf16 %v257
      %v386 = vunpack.c.l.bf16 %v258
      %v387 = vunpack.c.l.bf16 %v259
      %v388 = vunpack.c.l.bf16 %v260
      %v389 = vunpack.c.l.bf16 %v261
      %v390 = vunpack.c.l.bf16 %v262
      %v391 = vunpack.c.l.bf16 %v263
      %v392 = vunpack.c.l.bf16 %v264
      %v393 = vunpack.c.l.bf16 %v265
      %v394 = vunpack.c.l.bf16 %v266
      %v395 = vunpack.c.l.bf16 %v267
      %v396 = vunpack.c.l.bf16 %v268
      %v397 = vunpack.c.l.bf16 %v269
      %v398 = vunpack.c.l.bf16 %v270
      %v399 = vunpack.c.l.bf16 %v271
      %v400 = vunpack.c.l.bf16 %v272
      %v401 = vunpack.c.l.bf16 %v273
      %v402 = vunpack.c.l.bf16 %v274
      %v403 = vunpack.c.l.bf16 %v275
      %v404 = vunpack.c.l.bf16 %v276
      %v405 = vunpack.c.l.bf16 %v277
      %v406 = vunpack.c.l.bf16 %v278
      %v407 = vunpack.c.l.bf16 %v279
      %v408 = vunpack.c.l.bf16 %v280
      %v409 = vunpack.c.l.bf16 %v281
      %v410 = vunpack.c.l.bf16 %v282
      %v411 = vunpack.c.l.bf16 %v283
      %v412 = vunpack.c.l.bf16 %v284
      %v413 = vunpack.c.l.bf16 %v285
      %v414 = vunpack.c.l.bf16 %v286
      %v415 = vunpack.c.l.bf16 %v287
      %v416 = vunpack.c.l.bf16 %v288
      %v417 = vunpack.c.l.bf16 %v289
      %v418 = vunpack.c.l.bf16 %v290
      %v419 = vunpack.c.l.bf16 %v291
      %v420 = vunpack.c.l.bf16 %v292
      %v421 = vunpack.c.l.bf16 %v293
      %v422 = vunpack.c.l.bf16 %v294
      %v423 = vunpack.c.l.bf16 %v295
      %v424 = vunpack.c.l.bf16 %v296
      %v425 = vunpack.c.l.bf16 %v297
      %v426 = vunpack.c.l.bf16 %v298
      %v427 = vunpack.c.l.bf16 %v299
      %v428 = vunpack.c.l.bf16 %v300
      %v429 = vunpack.c.l.bf16 %v301
      %v430 = vunpack.c.l.bf16 %v302
      %v431 = vld [vmem:[%s2] sm:$0x1]
      %v433 = vperm.slane %v431, 0
      %v435 = vadd.f32 %v303, %v433
      %v436 = vadd.f32 %v304, %v433
      %v437 = vadd.f32 %v305, %v433
      %v438 = vadd.f32 %v306, %v433
      %v439 = vadd.f32 %v307, %v433
      %v440 = vadd.f32 %v308, %v433
      %v441 = vadd.f32 %v309, %v433
      %v442 = vadd.f32 %v310, %v433
      %v443 = vadd.f32 %v311, %v433
      %v444 = vadd.f32 %v312, %v433
      %v445 = vadd.f32 %v313, %v433
      %v446 = vadd.f32 %v314, %v433
      %v447 = vadd.f32 %v315, %v433
      %v448 = vadd.f32 %v316, %v433
      %v449 = vadd.f32 %v317, %v433
      %v450 = vadd.f32 %v318, %v433
      %v451 = vadd.f32 %v319, %v433
      %v452 = vadd.f32 %v320, %v433
      %v453 = vadd.f32 %v321, %v433
      %v454 = vadd.f32 %v322, %v433
      %v455 = vadd.f32 %v323, %v433
      %v456 = vadd.f32 %v324, %v433
      %v457 = vadd.f32 %v325, %v433
      %v458 = vadd.f32 %v326, %v433
      %v459 = vadd.f32 %v327, %v433
      %v460 = vadd.f32 %v328, %v433
      %v461 = vadd.f32 %v329, %v433
      %v462 = vadd.f32 %v330, %v433
      %v463 = vadd.f32 %v331, %v433
      %v464 = vadd.f32 %v332, %v433
      %v465 = vadd.f32 %v333, %v433
      %v466 = vadd.f32 %v334, %v433
      %v467 = vadd.f32 %v335, %v433
      %v468 = vadd.f32 %v336, %v433
      %v469 = vadd.f32 %v337, %v433
      %v470 = vadd.f32 %v338, %v433
      %v471 = vadd.f32 %v339, %v433
      %v472 = vadd.f32 %v340, %v433
      %v473 = vadd.f32 %v341, %v433
      %v474 = vadd.f32 %v342, %v433
      %v475 = vadd.f32 %v343, %v433
      %v476 = vadd.f32 %v344, %v433
      %v477 = vadd.f32 %v345, %v433
      %v478 = vadd.f32 %v346, %v433
      %v479 = vadd.f32 %v347, %v433
      %v480 = vadd.f32 %v348, %v433
      %v481 = vadd.f32 %v349, %v433
      %v482 = vadd.f32 %v350, %v433
      %v483 = vadd.f32 %v351, %v433
      %v484 = vadd.f32 %v352, %v433
      %v485 = vadd.f32 %v353, %v433
      %v486 = vadd.f32 %v354, %v433
      %v487 = vadd.f32 %v355, %v433
      %v488 = vadd.f32 %v356, %v433
      %v489 = vadd.f32 %v357, %v433
      %v490 = vadd.f32 %v358, %v433
      %v491 = vadd.f32 %v359, %v433
      %v492 = vadd.f32 %v360, %v433
      %v493 = vadd.f32 %v361, %v433
      %v494 = vadd.f32 %v362, %v433
      %v495 = vadd.f32 %v363, %v433
      %v496 = vadd.f32 %v364, %v433
      %v497 = vadd.f32 %v365, %v433
      %v498 = vadd.f32 %v366, %v433
      %v499 = vadd.f32 %v367, %v433
      %v500 = vadd.f32 %v368, %v433
      %v501 = vadd.f32 %v369, %v433
      %v502 = vadd.f32 %v370, %v433
      %v503 = vadd.f32 %v371, %v433
      %v504 = vadd.f32 %v372, %v433
      %v505 = vadd.f32 %v373, %v433
      %v506 = vadd.f32 %v374, %v433
      %v507 = vadd.f32 %v375, %v433
      %v508 = vadd.f32 %v376, %v433
      %v509 = vadd.f32 %v377, %v433
      %v510 = vadd.f32 %v378, %v433
      %v511 = vadd.f32 %v379, %v433
      %v512 = vadd.f32 %v380, %v433
      %v513 = vadd.f32 %v381, %v433
      %v514 = vadd.f32 %v382, %v433
      %v515 = vadd.f32 %v383, %v433
      %v516 = vadd.f32 %v384, %v433
      %v517 = vadd.f32 %v385, %v433
      %v518 = vadd.f32 %v386, %v433
      %v519 = vadd.f32 %v387, %v433
      %v520 = vadd.f32 %v388, %v433
      %v521 = vadd.f32 %v389, %v433
      %v522 = vadd.f32 %v390, %v433
      %v523 = vadd.f32 %v391, %v433
      %v524 = vadd.f32 %v392, %v433
      %v525 = vadd.f32 %v393, %v433
      %v526 = vadd.f32 %v394, %v433
      %v527 = vadd.f32 %v395, %v433
      %v528 = vadd.f32 %v396, %v433
      %v529 = vadd.f32 %v397, %v433
      %v530 = vadd.f32 %v398, %v433
      %v531 = vadd.f32 %v399, %v433
      %v532 = vadd.f32 %v400, %v433
      %v533 = vadd.f32 %v401, %v433
      %v534 = vadd.f32 %v402, %v433
      %v535 = vadd.f32 %v403, %v433
      %v536 = vadd.f32 %v404, %v433
      %v537 = vadd.f32 %v405, %v433
      %v538 = vadd.f32 %v406, %v433
      %v539 = vadd.f32 %v407, %v433
      %v540 = vadd.f32 %v408, %v433
      %v541 = vadd.f32 %v409, %v433
      %v542 = vadd.f32 %v410, %v433
      %v543 = vadd.f32 %v411, %v433
      %v544 = vadd.f32 %v412, %v433
      %v545 = vadd.f32 %v413, %v433
      %v546 = vadd.f32 %v414, %v433
      %v547 = vadd.f32 %v415, %v433
      %v548 = vadd.f32 %v416, %v433
      %v549 = vadd.f32 %v417, %v433
      %v550 = vadd.f32 %v418, %v433
      %v551 = vadd.f32 %v419, %v433
      %v552 = vadd.f32 %v420, %v433
      %v553 = vadd.f32 %v421, %v433
      %v554 = vadd.f32 %v422, %v433
      %v555 = vadd.f32 %v423, %v433
      %v556 = vadd.f32 %v424, %v433
      %v557 = vadd.f32 %v425, %v433
      %v558 = vadd.f32 %v426, %v433
      %v559 = vadd.f32 %v427, %v433
      %v560 = vadd.f32 %v428, %v433
      %v561 = vadd.f32 %v429, %v433
      %v562 = vadd.f32 %v430, %v433
      %v563 = vmax.f32 %v435, 0.0
      %v564 = vmax.f32 %v436, 0.0
      %v565 = vmax.f32 %v437, 0.0
      %v566 = vmax.f32 %v438, 0.0
      %v567 = vmax.f32 %v439, 0.0
      %v568 = vmax.f32 %v440, 0.0
      %v569 = vmax.f32 %v441, 0.0
      %v570 = vmax.f32 %v442, 0.0
      %v571 = vmax.f32 %v443, 0.0
      %v572 = vmax.f32 %v444, 0.0
      %v573 = vmax.f32 %v445, 0.0
      %v574 = vmax.f32 %v446, 0.0
      %v575 = vmax.f32 %v447, 0.0
      %v576 = vmax.f32 %v448, 0.0
      %v577 = vmax.f32 %v449, 0.0
      %v578 = vmax.f32 %v450, 0.0
      %v579 = vmax.f32 %v451, 0.0
      %v580 = vmax.f32 %v452, 0.0
      %v581 = vmax.f32 %v453, 0.0
      %v582 = vmax.f32 %v454, 0.0
      %v583 = vmax.f32 %v455, 0.0
      %v584 = vmax.f32 %v456, 0.0
      %v585 = vmax.f32 %v457, 0.0
      %v586 = vmax.f32 %v458, 0.0
      %v587 = vmax.f32 %v459, 0.0
      %v588 = vmax.f32 %v460, 0.0
      %v589 = vmax.f32 %v461, 0.0
      %v590 = vmax.f32 %v462, 0.0
      %v591 = vmax.f32 %v463, 0.0
      %v592 = vmax.f32 %v464, 0.0
      %v593 = vmax.f32 %v465, 0.0
      %v594 = vmax.f32 %v466, 0.0
      %v595 = vmax.f32 %v467, 0.0
      %v596 = vmax.f32 %v468, 0.0
      %v597 = vmax.f32 %v469, 0.0
      %v598 = vmax.f32 %v470, 0.0
      %v599 = vmax.f32 %v471, 0.0
      %v600 = vmax.f32 %v472, 0.0
      %v601 = vmax.f32 %v473, 0.0
      %v602 = vmax.f32 %v474, 0.0
      %v603 = vmax.f32 %v475, 0.0
      %v604 = vmax.f32 %v476, 0.0
      %v605 = vmax.f32 %v477, 0.0
      %v606 = vmax.f32 %v478, 0.0
      %v607 = vmax.f32 %v479, 0.0
      %v608 = vmax.f32 %v480, 0.0
      %v609 = vmax.f32 %v481, 0.0
      %v610 = vmax.f32 %v482, 0.0
      %v611 = vmax.f32 %v483, 0.0
      %v612 = vmax.f32 %v484, 0.0
      %v613 = vmax.f32 %v485, 0.0
      %v614 = vmax.f32 %v486, 0.0
      %v615 = vmax.f32 %v487, 0.0
      %v616 = vmax.f32 %v488, 0.0
      %v617 = vmax.f32 %v489, 0.0
      %v618 = vmax.f32 %v490, 0.0
      %v619 = vmax.f32 %v491, 0.0
      %v620 = vmax.f32 %v492, 0.0
      %v621 = vmax.f32 %v493, 0.0
      %v622 = vmax.f32 %v494, 0.0
      %v623 = vmax.f32 %v495, 0.0
      %v624 = vmax.f32 %v496, 0.0
      %v625 = vmax.f32 %v497, 0.0
      %v626 = vmax.f32 %v498, 0.0
      %v627 = vmax.f32 %v499, 0.0
      %v628 = vmax.f32 %v500, 0.0
      %v629 = vmax.f32 %v501, 0.0
      %v630 = vmax.f32 %v502, 0.0
      %v631 = vmax.f32 %v503, 0.0
      %v632 = vmax.f32 %v504, 0.0
      %v633 = vmax.f32 %v505, 0.0
      %v634 = vmax.f32 %v506, 0.0
      %v635 = vmax.f32 %v507, 0.0
      %v636 = vmax.f32 %v508, 0.0
      %v637 = vmax.f32 %v509, 0.0
      %v638 = vmax.f32 %v510, 0.0
      %v639 = vmax.f32 %v511, 0.0
      %v640 = vmax.f32 %v512, 0.0
      %v641 = vmax.f32 %v513, 0.0
      %v642 = vmax.f32 %v514, 0.0
      %v643 = vmax.f32 %v515, 0.0
      %v644 = vmax.f32 %v516, 0.0
      %v645 = vmax.f32 %v517, 0.0
      %v646 = vmax.f32 %v518, 0.0
      %v647 = vmax.f32 %v519, 0.0
      %v648 = vmax.f32 %v520, 0.0
      %v649 = vmax.f32 %v521, 0.0
      %v650 = vmax.f32 %v522, 0.0
      %v651 = vmax.f32 %v523, 0.0
      %v652 = vmax.f32 %v524, 0.0
      %v653 = vmax.f32 %v525, 0.0
      %v654 = vmax.f32 %v526, 0.0
      %v655 = vmax.f32 %v527, 0.0
      %v656 = vmax.f32 %v528, 0.0
      %v657 = vmax.f32 %v529, 0.0
      %v658 = vmax.f32 %v530, 0.0
      %v659 = vmax.f32 %v531, 0.0
      %v660 = vmax.f32 %v532, 0.0
      %v661 = vmax.f32 %v533, 0.0
      %v662 = vmax.f32 %v534, 0.0
      %v663 = vmax.f32 %v535, 0.0
      %v664 = vmax.f32 %v536, 0.0
      %v665 = vmax.f32 %v537, 0.0
      %v666 = vmax.f32 %v538, 0.0
      %v667 = vmax.f32 %v539, 0.0
      %v668 = vmax.f32 %v540, 0.0
      %v669 = vmax.f32 %v541, 0.0
      %v670 = vmax.f32 %v542, 0.0
      %v671 = vmax.f32 %v543, 0.0
      %v672 = vmax.f32 %v544, 0.0
      %v673 = vmax.f32 %v545, 0.0
      %v674 = vmax.f32 %v546, 0.0
      %v675 = vmax.f32 %v547, 0.0
      %v676 = vmax.f32 %v548, 0.0
      %v677 = vmax.f32 %v549, 0.0
      %v678 = vmax.f32 %v550, 0.0
      %v679 = vmax.f32 %v551, 0.0
      %v680 = vmax.f32 %v552, 0.0
      %v681 = vmax.f32 %v553, 0.0
      %v682 = vmax.f32 %v554, 0.0
      %v683 = vmax.f32 %v555, 0.0
      %v684 = vmax.f32 %v556, 0.0
      %v685 = vmax.f32 %v557, 0.0
      %v686 = vmax.f32 %v558, 0.0
      %v687 = vmax.f32 %v559, 0.0
      %v688 = vmax.f32 %v560, 0.0
      %v689 = vmax.f32 %v561, 0.0
      %v690 = vmax.f32 %v562, 0.0
      %v691 = vpack.c.bf16 %v564, %v563
      %v692 = vpack.c.bf16 %v566, %v565
      %v693 = vpack.c.bf16 %v568, %v567
      %v694 = vpack.c.bf16 %v570, %v569
      %v695 = vpack.c.bf16 %v572, %v571
      %v696 = vpack.c.bf16 %v574, %v573
      %v697 = vpack.c.bf16 %v576, %v575
      %v698 = vpack.c.bf16 %v578, %v577
      %v699 = vpack.c.bf16 %v580, %v579
      %v700 = vpack.c.bf16 %v582, %v581
      %v701 = vpack.c.bf16 %v584, %v583
      %v702 = vpack.c.bf16 %v586, %v585
      %v703 = vpack.c.bf16 %v588, %v587
      %v704 = vpack.c.bf16 %v590, %v589
      %v705 = vpack.c.bf16 %v592, %v591
      %v706 = vpack.c.bf16 %v594, %v593
      %v707 = vpack.c.bf16 %v596, %v595
      %v708 = vpack.c.bf16 %v598, %v597
      %v709 = vpack.c.bf16 %v600, %v599
      %v710 = vpack.c.bf16 %v602, %v601
      %v711 = vpack.c.bf16 %v604, %v603
      %v712 = vpack.c.bf16 %v606, %v605
      %v713 = vpack.c.bf16 %v608, %v607
      %v714 = vpack.c.bf16 %v610, %v609
      %v715 = vpack.c.bf16 %v612, %v611
      %v716 = vpack.c.bf16 %v614, %v613
      %v717 = vpack.c.bf16 %v616, %v615
      %v718 = vpack.c.bf16 %v618, %v617
      %v719 = vpack.c.bf16 %v620, %v619
      %v720 = vpack.c.bf16 %v622, %v621
      %v721 = vpack.c.bf16 %v624, %v623
      %v722 = vpack.c.bf16 %v626, %v625
      %v723 = vpack.c.bf16 %v628, %v627
      %v724 = vpack.c.bf16 %v630, %v629
      %v725 = vpack.c.bf16 %v632, %v631
      %v726 = vpack.c.bf16 %v634, %v633
      %v727 = vpack.c.bf16 %v636, %v635
      %v728 = vpack.c.bf16 %v638, %v637
      %v729 = vpack.c.bf16 %v640, %v639
      %v730 = vpack.c.bf16 %v642, %v641
      %v731 = vpack.c.bf16 %v644, %v643
      %v732 = vpack.c.bf16 %v646, %v645
      %v733 = vpack.c.bf16 %v648, %v647
      %v734 = vpack.c.bf16 %v650, %v649
      %v735 = vpack.c.bf16 %v652, %v651
      %v736 = vpack.c.bf16 %v654, %v653
      %v737 = vpack.c.bf16 %v656, %v655
      %v738 = vpack.c.bf16 %v658, %v657
      %v739 = vpack.c.bf16 %v660, %v659
      %v740 = vpack.c.bf16 %v662, %v661
      %v741 = vpack.c.bf16 %v664, %v663
      %v742 = vpack.c.bf16 %v666, %v665
      %v743 = vpack.c.bf16 %v668, %v667
      %v744 = vpack.c.bf16 %v670, %v669
      %v745 = vpack.c.bf16 %v672, %v671
      %v746 = vpack.c.bf16 %v674, %v673
      %v747 = vpack.c.bf16 %v676, %v675
      %v748 = vpack.c.bf16 %v678, %v677
      %v749 = vpack.c.bf16 %v680, %v679
      %v750 = vpack.c.bf16 %v682, %v681
      %v751 = vpack.c.bf16 %v684, %v683
      %v752 = vpack.c.bf16 %v686, %v685
      %v753 = vpack.c.bf16 %v688, %v687
      %v754 = vpack.c.bf16 %v690, %v689
      %v755 = vld [vmem:[%s1] sm:$0xf]
      %v756 = vld [vmem:[%s1 + $0x4] sm:$0xf]
      %v757 = vld [vmem:[%s1 + $0x8] sm:$0xf]
      %v758 = vld [vmem:[%s1 + $0xc] sm:$0xf]
      %v763 = vunpack.c.l.b16 %v755
      %v764 = vunpack.c.l.b16 %v756
      %v765 = vunpack.c.l.b16 %v757
      %v766 = vunpack.c.l.b16 %v758
      %v767 = vpack.c.b16 %v764, %v763
      %v768 = vpack.c.b16 %v766, %v765
      %vm771 = vcmask 261120
      %v773 = vsel %vm771, %v691, 0
      %v776 = vsel %vm771, %v692, 0
      %v779 = vsel %vm771, %v693, 0
      %v782 = vsel %vm771, %v694, 0
      %v785 = vsel %vm771, %v695, 0
      %v788 = vsel %vm771, %v696, 0
      %v791 = vsel %vm771, %v697, 0
      %v794 = vsel %vm771, %v698, 0
      %v797 = vsel %vm771, %v699, 0
      %v800 = vsel %vm771, %v700, 0
      %v803 = vsel %vm771, %v701, 0
      %v806 = vsel %vm771, %v702, 0
      %v809 = vsel %vm771, %v703, 0
      %v812 = vsel %vm771, %v704, 0
      %v815 = vsel %vm771, %v705, 0
      %v818 = vsel %vm771, %v706, 0
      %v821 = vsel %vm771, %v707, 0
      %v824 = vsel %vm771, %v708, 0
      %v827 = vsel %vm771, %v709, 0
      %v830 = vsel %vm771, %v710, 0
      %v833 = vsel %vm771, %v711, 0
      %v836 = vsel %vm771, %v712, 0
      %v839 = vsel %vm771, %v713, 0
      %v842 = vsel %vm771, %v714, 0
      %v845 = vsel %vm771, %v715, 0
      %v848 = vsel %vm771, %v716, 0
      %v851 = vsel %vm771, %v717, 0
      %v854 = vsel %vm771, %v718, 0
      %v857 = vsel %vm771, %v719, 0
      %v860 = vsel %vm771, %v720, 0
      %v863 = vsel %vm771, %v721, 0
      %v866 = vsel %vm771, %v722, 0
      %v869 = vsel %vm771, %v723, 0
      %v872 = vsel %vm771, %v724, 0
      %v875 = vsel %vm771, %v725, 0
      %v878 = vsel %vm771, %v726, 0
      %v881 = vsel %vm771, %v727, 0
      %v884 = vsel %vm771, %v728, 0
      %v887 = vsel %vm771, %v729, 0
      %v890 = vsel %vm771, %v730, 0
      %v893 = vsel %vm771, %v731, 0
      %v896 = vsel %vm771, %v732, 0
      %v899 = vsel %vm771, %v733, 0
      %v902 = vsel %vm771, %v734, 0
      %v905 = vsel %vm771, %v735, 0
      %v908 = vsel %vm771, %v736, 0
      %v911 = vsel %vm771, %v737, 0
      %v914 = vsel %vm771, %v738, 0
      %v917 = vsel %vm771, %v739, 0
      %v920 = vsel %vm771, %v740, 0
      %v923 = vsel %vm771, %v741, 0
      %v926 = vsel %vm771, %v742, 0
      %v929 = vsel %vm771, %v743, 0
      %v932 = vsel %vm771, %v744, 0
      %v935 = vsel %vm771, %v745, 0
      %v938 = vsel %vm771, %v746, 0
      %v941 = vsel %vm771, %v747, 0
      %v944 = vsel %vm771, %v748, 0
      %v947 = vsel %vm771, %v749, 0
      %v950 = vsel %vm771, %v750, 0
      %v953 = vsel %vm771, %v751, 0
      %v956 = vsel %vm771, %v752, 0
      %v959 = vsel %vm771, %v753, 0
      %v962 = vsel %vm771, %v754, 0
      %964 = vmatpush.bf16.msra.mxu0 0
      %965 = vmatpush.bf16.msra.mxu0 0
      %966 = vmatpush.bf16.msra.mxu0 0
      %967 = vmatpush.bf16.msra.mxu0 0
      %968 = vmatpush.bf16.msra.mxu0 0
      %969 = vmatpush.bf16.msra.mxu0 0
      %970 = vmatpush.bf16.msra.mxu0 %v768
      %971 = vmatpush.bf16.msra.mxu0 %v767
      %972 = vmatmul.bf16.gmra.mxu0 %v773
      %v973 = vpop.f32.mrf.mxu0
      %v974 = vadd.f32 0.0, %v973
      %v975 = vpop.f32.mrf.mxu0
      %v976 = vadd.f32 0.0, %v975
      %977 = vmatmul.bf16.gmra.mxu0 %v776
      %v978 = vpop.f32.mrf.mxu0
      %v979 = vadd.f32 0.0, %v978
      %v980 = vpop.f32.mrf.mxu0
      %v981 = vadd.f32 0.0, %v980
      %982 = vmatmul.bf16.gmra.mxu0 %v779
      %v983 = vpop.f32.mrf.mxu0
      %v984 = vadd.f32 0.0, %v983
      %v985 = vpop.f32.mrf.mxu0
      %v986 = vadd.f32 0.0, %v985
      %987 = vmatmul.bf16.gmra.mxu0 %v782
      %v988 = vpop.f32.mrf.mxu0
      %v989 = vadd.f32 0.0, %v988
      %v990 = vpop.f32.mrf.mxu0
      %v991 = vadd.f32 0.0, %v990
      %992 = vmatmul.bf16.gmra.mxu0 %v785
      %v993 = vpop.f32.mrf.mxu0
      %v994 = vadd.f32 0.0, %v993
      %v995 = vpop.f32.mrf.mxu0
      %v996 = vadd.f32 0.0, %v995
      %997 = vmatmul.bf16.gmra.mxu0 %v788
      %v998 = vpop.f32.mrf.mxu0
      %v999 = vadd.f32 0.0, %v998
      %v1000 = vpop.f32.mrf.mxu0
      %v1001 = vadd.f32 0.0, %v1000
      %1002 = vmatmul.bf16.gmra.mxu0 %v791
      %v1003 = vpop.f32.mrf.mxu0
      %v1004 = vadd.f32 0.0, %v1003
      %v1005 = vpop.f32.mrf.mxu0
      %v1006 = vadd.f32 0.0, %v1005
      %1007 = vmatmul.bf16.gmra.mxu0 %v794
      %v1008 = vpop.f32.mrf.mxu0
      %v1009 = vadd.f32 0.0, %v1008
      %v1010 = vpop.f32.mrf.mxu0
      %v1011 = vadd.f32 0.0, %v1010
      %1012 = vmatmul.bf16.gmra.mxu0 %v797
      %v1013 = vpop.f32.mrf.mxu0
      %v1014 = vadd.f32 0.0, %v1013
      %v1015 = vpop.f32.mrf.mxu0
      %v1016 = vadd.f32 0.0, %v1015
      %1017 = vmatmul.bf16.gmra.mxu0 %v800
      %v1018 = vpop.f32.mrf.mxu0
      %v1019 = vadd.f32 0.0, %v1018
      %v1020 = vpop.f32.mrf.mxu0
      %v1021 = vadd.f32 0.0, %v1020
      %1022 = vmatmul.bf16.gmra.mxu0 %v803
      %v1023 = vpop.f32.mrf.mxu0
      %v1024 = vadd.f32 0.0, %v1023
      %v1025 = vpop.f32.mrf.mxu0
      %v1026 = vadd.f32 0.0, %v1025
      %1027 = vmatmul.bf16.gmra.mxu0 %v806
      %v1028 = vpop.f32.mrf.mxu0
      %v1029 = vadd.f32 0.0, %v1028
      %v1030 = vpop.f32.mrf.mxu0
      %v1031 = vadd.f32 0.0, %v1030
      %1032 = vmatmul.bf16.gmra.mxu0 %v809
      %v1033 = vpop.f32.mrf.mxu0
      %v1034 = vadd.f32 0.0, %v1033
      %v1035 = vpop.f32.mrf.mxu0
      %v1036 = vadd.f32 0.0, %v1035
      %1037 = vmatmul.bf16.gmra.mxu0 %v812
      %v1038 = vpop.f32.mrf.mxu0
      %v1039 = vadd.f32 0.0, %v1038
      %v1040 = vpop.f32.mrf.mxu0
      %v1041 = vadd.f32 0.0, %v1040
      %1042 = vmatmul.bf16.gmra.mxu0 %v815
      %v1043 = vpop.f32.mrf.mxu0
      %v1044 = vadd.f32 0.0, %v1043
      %v1045 = vpop.f32.mrf.mxu0
      %v1046 = vadd.f32 0.0, %v1045
      %1047 = vmatmul.bf16.gmra.mxu0 %v818
      %v1048 = vpop.f32.mrf.mxu0
      %v1049 = vadd.f32 0.0, %v1048
      %v1050 = vpop.f32.mrf.mxu0
      %v1051 = vadd.f32 0.0, %v1050
      %1052 = vmatmul.bf16.gmra.mxu0 %v821
      %v1053 = vpop.f32.mrf.mxu0
      %v1054 = vadd.f32 0.0, %v1053
      %v1055 = vpop.f32.mrf.mxu0
      %v1056 = vadd.f32 0.0, %v1055
      %1057 = vmatmul.bf16.gmra.mxu0 %v824
      %v1058 = vpop.f32.mrf.mxu0
      %v1059 = vadd.f32 0.0, %v1058
      %v1060 = vpop.f32.mrf.mxu0
      %v1061 = vadd.f32 0.0, %v1060
      %1062 = vmatmul.bf16.gmra.mxu0 %v827
      %v1063 = vpop.f32.mrf.mxu0
      %v1064 = vadd.f32 0.0, %v1063
      %v1065 = vpop.f32.mrf.mxu0
      %v1066 = vadd.f32 0.0, %v1065
      %1067 = vmatmul.bf16.gmra.mxu0 %v830
      %v1068 = vpop.f32.mrf.mxu0
      %v1069 = vadd.f32 0.0, %v1068
      %v1070 = vpop.f32.mrf.mxu0
      %v1071 = vadd.f32 0.0, %v1070
      %1072 = vmatmul.bf16.gmra.mxu0 %v833
      %v1073 = vpop.f32.mrf.mxu0
      %v1074 = vadd.f32 0.0, %v1073
      %v1075 = vpop.f32.mrf.mxu0
      %v1076 = vadd.f32 0.0, %v1075
      %1077 = vmatmul.bf16.gmra.mxu0 %v836
      %v1078 = vpop.f32.mrf.mxu0
      %v1079 = vadd.f32 0.0, %v1078
      %v1080 = vpop.f32.mrf.mxu0
      %v1081 = vadd.f32 0.0, %v1080
      %1082 = vmatmul.bf16.gmra.mxu0 %v839
      %v1083 = vpop.f32.mrf.mxu0
      %v1084 = vadd.f32 0.0, %v1083
      %v1085 = vpop.f32.mrf.mxu0
      %v1086 = vadd.f32 0.0, %v1085
      %1087 = vmatmul.bf16.gmra.mxu0 %v842
      %v1088 = vpop.f32.mrf.mxu0
      %v1089 = vadd.f32 0.0, %v1088
      %v1090 = vpop.f32.mrf.mxu0
      %v1091 = vadd.f32 0.0, %v1090
      %1092 = vmatmul.bf16.gmra.mxu0 %v845
      %v1093 = vpop.f32.mrf.mxu0
      %v1094 = vadd.f32 0.0, %v1093
      %v1095 = vpop.f32.mrf.mxu0
      %v1096 = vadd.f32 0.0, %v1095
      %1097 = vmatmul.bf16.gmra.mxu0 %v848
      %v1098 = vpop.f32.mrf.mxu0
      %v1099 = vadd.f32 0.0, %v1098
      %v1100 = vpop.f32.mrf.mxu0
      %v1101 = vadd.f32 0.0, %v1100
      %1102 = vmatmul.bf16.gmra.mxu0 %v851
      %v1103 = vpop.f32.mrf.mxu0
      %v1104 = vadd.f32 0.0, %v1103
      %v1105 = vpop.f32.mrf.mxu0
      %v1106 = vadd.f32 0.0, %v1105
      %1107 = vmatmul.bf16.gmra.mxu0 %v854
      %v1108 = vpop.f32.mrf.mxu0
      %v1109 = vadd.f32 0.0, %v1108
      %v1110 = vpop.f32.mrf.mxu0
      %v1111 = vadd.f32 0.0, %v1110
      %1112 = vmatmul.bf16.gmra.mxu0 %v857
      %v1113 = vpop.f32.mrf.mxu0
      %v1114 = vadd.f32 0.0, %v1113
      %v1115 = vpop.f32.mrf.mxu0
      %v1116 = vadd.f32 0.0, %v1115
      %1117 = vmatmul.bf16.gmra.mxu0 %v860
      %v1118 = vpop.f32.mrf.mxu0
      %v1119 = vadd.f32 0.0, %v1118
      %v1120 = vpop.f32.mrf.mxu0
      %v1121 = vadd.f32 0.0, %v1120
      %1122 = vmatmul.bf16.gmra.mxu0 %v863
      %v1123 = vpop.f32.mrf.mxu0
      %v1124 = vadd.f32 0.0, %v1123
      %v1125 = vpop.f32.mrf.mxu0
      %v1126 = vadd.f32 0.0, %v1125
      %1127 = vmatmul.bf16.gmra.mxu0 %v866
      %v1128 = vpop.f32.mrf.mxu0
      %v1129 = vadd.f32 0.0, %v1128
      %v1130 = vpop.f32.mrf.mxu0
      %v1131 = vadd.f32 0.0, %v1130
      %1132 = vmatmul.bf16.gmra.mxu0 %v869
      %v1133 = vpop.f32.mrf.mxu0
      %v1134 = vadd.f32 0.0, %v1133
      %v1135 = vpop.f32.mrf.mxu0
      %v1136 = vadd.f32 0.0, %v1135
      %1137 = vmatmul.bf16.gmra.mxu0 %v872
      %v1138 = vpop.f32.mrf.mxu0
      %v1139 = vadd.f32 0.0, %v1138
      %v1140 = vpop.f32.mrf.mxu0
      %v1141 = vadd.f32 0.0, %v1140
      %1142 = vmatmul.bf16.gmra.mxu0 %v875
      %v1143 = vpop.f32.mrf.mxu0
      %v1144 = vadd.f32 0.0, %v1143
      %v1145 = vpop.f32.mrf.mxu0
      %v1146 = vadd.f32 0.0, %v1145
      %1147 = vmatmul.bf16.gmra.mxu0 %v878
      %v1148 = vpop.f32.mrf.mxu0
      %v1149 = vadd.f32 0.0, %v1148
      %v1150 = vpop.f32.mrf.mxu0
      %v1151 = vadd.f32 0.0, %v1150
      %1152 = vmatmul.bf16.gmra.mxu0 %v881
      %v1153 = vpop.f32.mrf.mxu0
      %v1154 = vadd.f32 0.0, %v1153
      %v1155 = vpop.f32.mrf.mxu0
      %v1156 = vadd.f32 0.0, %v1155
      %1157 = vmatmul.bf16.gmra.mxu0 %v884
      %v1158 = vpop.f32.mrf.mxu0
      %v1159 = vadd.f32 0.0, %v1158
      %v1160 = vpop.f32.mrf.mxu0
      %v1161 = vadd.f32 0.0, %v1160
      %1162 = vmatmul.bf16.gmra.mxu0 %v887
      %v1163 = vpop.f32.mrf.mxu0
      %v1164 = vadd.f32 0.0, %v1163
      %v1165 = vpop.f32.mrf.mxu0
      %v1166 = vadd.f32 0.0, %v1165
      %1167 = vmatmul.bf16.gmra.mxu0 %v890
      %v1168 = vpop.f32.mrf.mxu0
      %v1169 = vadd.f32 0.0, %v1168
      %v1170 = vpop.f32.mrf.mxu0
      %v1171 = vadd.f32 0.0, %v1170
      %1172 = vmatmul.bf16.gmra.mxu0 %v893
      %v1173 = vpop.f32.mrf.mxu0
      %v1174 = vadd.f32 0.0, %v1173
      %v1175 = vpop.f32.mrf.mxu0
      %v1176 = vadd.f32 0.0, %v1175
      %1177 = vmatmul.bf16.gmra.mxu0 %v896
      %v1178 = vpop.f32.mrf.mxu0
      %v1179 = vadd.f32 0.0, %v1178
      %v1180 = vpop.f32.mrf.mxu0
      %v1181 = vadd.f32 0.0, %v1180
      %1182 = vmatmul.bf16.gmra.mxu0 %v899
      %v1183 = vpop.f32.mrf.mxu0
      %v1184 = vadd.f32 0.0, %v1183
      %v1185 = vpop.f32.mrf.mxu0
      %v1186 = vadd.f32 0.0, %v1185
      %1187 = vmatmul.bf16.gmra.mxu0 %v902
      %v1188 = vpop.f32.mrf.mxu0
      %v1189 = vadd.f32 0.0, %v1188
      %v1190 = vpop.f32.mrf.mxu0
      %v1191 = vadd.f32 0.0, %v1190
      %1192 = vmatmul.bf16.gmra.mxu0 %v905
      %v1193 = vpop.f32.mrf.mxu0
      %v1194 = vadd.f32 0.0, %v1193
      %v1195 = vpop.f32.mrf.mxu0
      %v1196 = vadd.f32 0.0, %v1195
      %1197 = vmatmul.bf16.gmra.mxu0 %v908
      %v1198 = vpop.f32.mrf.mxu0
      %v1199 = vadd.f32 0.0, %v1198
      %v1200 = vpop.f32.mrf.mxu0
      %v1201 = vadd.f32 0.0, %v1200
      %1202 = vmatmul.bf16.gmra.mxu0 %v911
      %v1203 = vpop.f32.mrf.mxu0
      %v1204 = vadd.f32 0.0, %v1203
      %v1205 = vpop.f32.mrf.mxu0
      %v1206 = vadd.f32 0.0, %v1205
      %1207 = vmatmul.bf16.gmra.mxu0 %v914
      %v1208 = vpop.f32.mrf.mxu0
      %v1209 = vadd.f32 0.0, %v1208
      %v1210 = vpop.f32.mrf.mxu0
      %v1211 = vadd.f32 0.0, %v1210
      %1212 = vmatmul.bf16.gmra.mxu0 %v917
      %v1213 = vpop.f32.mrf.mxu0
      %v1214 = vadd.f32 0.0, %v1213
      %v1215 = vpop.f32.mrf.mxu0
      %v1216 = vadd.f32 0.0, %v1215
      %1217 = vmatmul.bf16.gmra.mxu0 %v920
      %v1218 = vpop.f32.mrf.mxu0
      %v1219 = vadd.f32 0.0, %v1218
      %v1220 = vpop.f32.mrf.mxu0
      %v1221 = vadd.f32 0.0, %v1220
      %1222 = vmatmul.bf16.gmra.mxu0 %v923
      %v1223 = vpop.f32.mrf.mxu0
      %v1224 = vadd.f32 0.0, %v1223
      %v1225 = vpop.f32.mrf.mxu0
      %v1226 = vadd.f32 0.0, %v1225
      %1227 = vmatmul.bf16.gmra.mxu0 %v926
      %v1228 = vpop.f32.mrf.mxu0
      %v1229 = vadd.f32 0.0, %v1228
      %v1230 = vpop.f32.mrf.mxu0
      %v1231 = vadd.f32 0.0, %v1230
      %1232 = vmatmul.bf16.gmra.mxu0 %v929
      %v1233 = vpop.f32.mrf.mxu0
      %v1234 = vadd.f32 0.0, %v1233
      %v1235 = vpop.f32.mrf.mxu0
      %v1236 = vadd.f32 0.0, %v1235
      %1237 = vmatmul.bf16.gmra.mxu0 %v932
      %v1238 = vpop.f32.mrf.mxu0
      %v1239 = vadd.f32 0.0, %v1238
      %v1240 = vpop.f32.mrf.mxu0
      %v1241 = vadd.f32 0.0, %v1240
      %1242 = vmatmul.bf16.gmra.mxu0 %v935
      %v1243 = vpop.f32.mrf.mxu0
      %v1244 = vadd.f32 0.0, %v1243
      %v1245 = vpop.f32.mrf.mxu0
      %v1246 = vadd.f32 0.0, %v1245
      %1247 = vmatmul.bf16.gmra.mxu0 %v938
      %v1248 = vpop.f32.mrf.mxu0
      %v1249 = vadd.f32 0.0, %v1248
      %v1250 = vpop.f32.mrf.mxu0
      %v1251 = vadd.f32 0.0, %v1250
      %1252 = vmatmul.bf16.gmra.mxu0 %v941
      %v1253 = vpop.f32.mrf.mxu0
      %v1254 = vadd.f32 0.0, %v1253
      %v1255 = vpop.f32.mrf.mxu0
      %v1256 = vadd.f32 0.0, %v1255
      %1257 = vmatmul.bf16.gmra.mxu0 %v944
      %v1258 = vpop.f32.mrf.mxu0
      %v1259 = vadd.f32 0.0, %v1258
      %v1260 = vpop.f32.mrf.mxu0
      %v1261 = vadd.f32 0.0, %v1260
      %1262 = vmatmul.bf16.gmra.mxu0 %v947
      %v1263 = vpop.f32.mrf.mxu0
      %v1264 = vadd.f32 0.0, %v1263
      %v1265 = vpop.f32.mrf.mxu0
      %v1266 = vadd.f32 0.0, %v1265
      %1267 = vmatmul.bf16.gmra.mxu0 %v950
      %v1268 = vpop.f32.mrf.mxu0
      %v1269 = vadd.f32 0.0, %v1268
      %v1270 = vpop.f32.mrf.mxu0
      %v1271 = vadd.f32 0.0, %v1270
      %1272 = vmatmul.bf16.gmra.mxu0 %v953
      %v1273 = vpop.f32.mrf.mxu0
      %v1274 = vadd.f32 0.0, %v1273
      %v1275 = vpop.f32.mrf.mxu0
      %v1276 = vadd.f32 0.0, %v1275
      %1277 = vmatmul.bf16.gmra.mxu0 %v956
      %v1278 = vpop.f32.mrf.mxu0
      %v1279 = vadd.f32 0.0, %v1278
      %v1280 = vpop.f32.mrf.mxu0
      %v1281 = vadd.f32 0.0, %v1280
      %1282 = vmatmul.bf16.gmra.mxu0 %v959
      %v1283 = vpop.f32.mrf.mxu0
      %v1284 = vadd.f32 0.0, %v1283
      %v1285 = vpop.f32.mrf.mxu0
      %v1286 = vadd.f32 0.0, %v1285
      %1287 = vmatmul.bf16.gmra.mxu0 %v962
      %v1288 = vpop.f32.mrf.mxu0
      %v1289 = vadd.f32 0.0, %v1288
      %v1290 = vpop.f32.mrf.mxu0
      %v1291 = vadd.f32 0.0, %v1290
      %1292 = vdwg.mxu0
      %v1293 = vpack.c.bf16 %v974, %v974
      %v1294 = vpack.c.bf16 %v976, %v976
      %v1295 = vpack.c.bf16 %v979, %v979
      %v1296 = vpack.c.bf16 %v981, %v981
      %v1297 = vpack.c.bf16 %v984, %v984
      %v1298 = vpack.c.bf16 %v986, %v986
      %v1299 = vpack.c.bf16 %v989, %v989
      %v1300 = vpack.c.bf16 %v991, %v991
      %v1301 = vpack.c.bf16 %v994, %v994
      %v1302 = vpack.c.bf16 %v996, %v996
      %v1303 = vpack.c.bf16 %v999, %v999
      %v1304 = vpack.c.bf16 %v1001, %v1001
      %v1305 = vpack.c.bf16 %v1004, %v1004
      %v1306 = vpack.c.bf16 %v1006, %v1006
      %v1307 = vpack.c.bf16 %v1009, %v1009
      %v1308 = vpack.c.bf16 %v1011, %v1011
      %v1309 = vpack.c.bf16 %v1014, %v1014
      %v1310 = vpack.c.bf16 %v1016, %v1016
      %v1311 = vpack.c.bf16 %v1019, %v1019
      %v1312 = vpack.c.bf16 %v1021, %v1021
      %v1313 = vpack.c.bf16 %v1024, %v1024
      %v1314 = vpack.c.bf16 %v1026, %v1026
      %v1315 = vpack.c.bf16 %v1029, %v1029
      %v1316 = vpack.c.bf16 %v1031, %v1031
      %v1317 = vpack.c.bf16 %v1034, %v1034
      %v1318 = vpack.c.bf16 %v1036, %v1036
      %v1319 = vpack.c.bf16 %v1039, %v1039
      %v1320 = vpack.c.bf16 %v1041, %v1041
      %v1321 = vpack.c.bf16 %v1044, %v1044
      %v1322 = vpack.c.bf16 %v1046, %v1046
      %v1323 = vpack.c.bf16 %v1049, %v1049
      %v1324 = vpack.c.bf16 %v1051, %v1051
      %v1325 = vpack.c.bf16 %v1054, %v1054
      %v1326 = vpack.c.bf16 %v1056, %v1056
      %v1327 = vpack.c.bf16 %v1059, %v1059
      %v1328 = vpack.c.bf16 %v1061, %v1061
      %v1329 = vpack.c.bf16 %v1064, %v1064
      %v1330 = vpack.c.bf16 %v1066, %v1066
      %v1331 = vpack.c.bf16 %v1069, %v1069
      %v1332 = vpack.c.bf16 %v1071, %v1071
      %v1333 = vpack.c.bf16 %v1074, %v1074
      %v1334 = vpack.c.bf16 %v1076, %v1076
      %v1335 = vpack.c.bf16 %v1079, %v1079
      %v1336 = vpack.c.bf16 %v1081, %v1081
      %v1337 = vpack.c.bf16 %v1084, %v1084
      %v1338 = vpack.c.bf16 %v1086, %v1086
      %v1339 = vpack.c.bf16 %v1089, %v1089
      %v1340 = vpack.c.bf16 %v1091, %v1091
      %v1341 = vpack.c.bf16 %v1094, %v1094
      %v1342 = vpack.c.bf16 %v1096, %v1096
      %v1343 = vpack.c.bf16 %v1099, %v1099
      %v1344 = vpack.c.bf16 %v1101, %v1101
      %v1345 = vpack.c.bf16 %v1104, %v1104
      %v1346 = vpack.c.bf16 %v1106, %v1106
      %v1347 = vpack.c.bf16 %v1109, %v1109
      %v1348 = vpack.c.bf16 %v1111, %v1111
      %v1349 = vpack.c.bf16 %v1114, %v1114
      %v1350 = vpack.c.bf16 %v1116, %v1116
      %v1351 = vpack.c.bf16 %v1119, %v1119
      %v1352 = vpack.c.bf16 %v1121, %v1121
      %v1353 = vpack.c.bf16 %v1124, %v1124
      %v1354 = vpack.c.bf16 %v1126, %v1126
      %v1355 = vpack.c.bf16 %v1129, %v1129
      %v1356 = vpack.c.bf16 %v1131, %v1131
      %v1357 = vpack.c.bf16 %v1134, %v1134
      %v1358 = vpack.c.bf16 %v1136, %v1136
      %v1359 = vpack.c.bf16 %v1139, %v1139
      %v1360 = vpack.c.bf16 %v1141, %v1141
      %v1361 = vpack.c.bf16 %v1144, %v1144
      %v1362 = vpack.c.bf16 %v1146, %v1146
      %v1363 = vpack.c.bf16 %v1149, %v1149
      %v1364 = vpack.c.bf16 %v1151, %v1151
      %v1365 = vpack.c.bf16 %v1154, %v1154
      %v1366 = vpack.c.bf16 %v1156, %v1156
      %v1367 = vpack.c.bf16 %v1159, %v1159
      %v1368 = vpack.c.bf16 %v1161, %v1161
      %v1369 = vpack.c.bf16 %v1164, %v1164
      %v1370 = vpack.c.bf16 %v1166, %v1166
      %v1371 = vpack.c.bf16 %v1169, %v1169
      %v1372 = vpack.c.bf16 %v1171, %v1171
      %v1373 = vpack.c.bf16 %v1174, %v1174
      %v1374 = vpack.c.bf16 %v1176, %v1176
      %v1375 = vpack.c.bf16 %v1179, %v1179
      %v1376 = vpack.c.bf16 %v1181, %v1181
      %v1377 = vpack.c.bf16 %v1184, %v1184
      %v1378 = vpack.c.bf16 %v1186, %v1186
      %v1379 = vpack.c.bf16 %v1189, %v1189
      %v1380 = vpack.c.bf16 %v1191, %v1191
      %v1381 = vpack.c.bf16 %v1194, %v1194
      %v1382 = vpack.c.bf16 %v1196, %v1196
      %v1383 = vpack.c.bf16 %v1199, %v1199
      %v1384 = vpack.c.bf16 %v1201, %v1201
      %v1385 = vpack.c.bf16 %v1204, %v1204
      %v1386 = vpack.c.bf16 %v1206, %v1206
      %v1387 = vpack.c.bf16 %v1209, %v1209
      %v1388 = vpack.c.bf16 %v1211, %v1211
      %v1389 = vpack.c.bf16 %v1214, %v1214
      %v1390 = vpack.c.bf16 %v1216, %v1216
      %v1391 = vpack.c.bf16 %v1219, %v1219
      %v1392 = vpack.c.bf16 %v1221, %v1221
      %v1393 = vpack.c.bf16 %v1224, %v1224
      %v1394 = vpack.c.bf16 %v1226, %v1226
      %v1395 = vpack.c.bf16 %v1229, %v1229
      %v1396 = vpack.c.bf16 %v1231, %v1231
      %v1397 = vpack.c.bf16 %v1234, %v1234
      %v1398 = vpack.c.bf16 %v1236, %v1236
      %v1399 = vpack.c.bf16 %v1239, %v1239
      %v1400 = vpack.c.bf16 %v1241, %v1241
      %v1401 = vpack.c.bf16 %v1244, %v1244
      %v1402 = vpack.c.bf16 %v1246, %v1246
      %v1403 = vpack.c.bf16 %v1249, %v1249
      %v1404 = vpack.c.bf16 %v1251, %v1251
      %v1405 = vpack.c.bf16 %v1254, %v1254
      %v1406 = vpack.c.bf16 %v1256, %v1256
      %v1407 = vpack.c.bf16 %v1259, %v1259
      %v1408 = vpack.c.bf16 %v1261, %v1261
      %v1409 = vpack.c.bf16 %v1264, %v1264
      %v1410 = vpack.c.bf16 %v1266, %v1266
      %v1411 = vpack.c.bf16 %v1269, %v1269
      %v1412 = vpack.c.bf16 %v1271, %v1271
      %v1413 = vpack.c.bf16 %v1274, %v1274
      %v1414 = vpack.c.bf16 %v1276, %v1276
      %v1415 = vpack.c.bf16 %v1279, %v1279
      %v1416 = vpack.c.bf16 %v1281, %v1281
      %v1417 = vpack.c.bf16 %v1284, %v1284
      %v1418 = vpack.c.bf16 %v1286, %v1286
      %v1419 = vpack.c.bf16 %v1289, %v1289
      %v1420 = vpack.c.bf16 %v1291, %v1291
      %vm1421 = vcmask 125952
      %1422 = vst.msk [vmem:[%s172] sm:$0xf] %vm1421, %v1293
      %1423 = vst.msk [vmem:[%s172 + $0x4] sm:$0xf] %vm1421, %v1294
      %1424 = vst.msk [vmem:[%s172 + $0x8] sm:$0xf] %vm1421, %v1295
      %1425 = vst.msk [vmem:[%s172 + $0xc] sm:$0xf] %vm1421, %v1296
      %1426 = vst.msk [vmem:[%s172 + $0x10] sm:$0xf] %vm1421, %v1297
      %1427 = vst.msk [vmem:[%s172 + $0x14] sm:$0xf] %vm1421, %v1298
      %1428 = vst.msk [vmem:[%s172 + $0x18] sm:$0xf] %vm1421, %v1299
      %1429 = vst.msk [vmem:[%s172 + $0x1c] sm:$0xf] %vm1421, %v1300
      %1430 = vst.msk [vmem:[%s172 + $0x20] sm:$0xf] %vm1421, %v1301
      %1431 = vst.msk [vmem:[%s172 + $0x24] sm:$0xf] %vm1421, %v1302
      %1432 = vst.msk [vmem:[%s172 + $0x28] sm:$0xf] %vm1421, %v1303
      %1433 = vst.msk [vmem:[%s172 + $0x2c] sm:$0xf] %vm1421, %v1304
      %1434 = vst.msk [vmem:[%s172 + $0x30] sm:$0xf] %vm1421, %v1305
      %1435 = vst.msk [vmem:[%s172 + $0x34] sm:$0xf] %vm1421, %v1306
      %1436 = vst.msk [vmem:[%s172 + $0x38] sm:$0xf] %vm1421, %v1307
      %1437 = vst.msk [vmem:[%s172 + $0x3c] sm:$0xf] %vm1421, %v1308
      %1438 = vst.msk [vmem:[%s172 + $0x40] sm:$0xf] %vm1421, %v1309
      %1439 = vst.msk [vmem:[%s172 + $0x44] sm:$0xf] %vm1421, %v1310
      %1440 = vst.msk [vmem:[%s172 + $0x48] sm:$0xf] %vm1421, %v1311
      %1441 = vst.msk [vmem:[%s172 + $0x4c] sm:$0xf] %vm1421, %v1312
      %1442 = vst.msk [vmem:[%s172 + $0x50] sm:$0xf] %vm1421, %v1313
      %1443 = vst.msk [vmem:[%s172 + $0x54] sm:$0xf] %vm1421, %v1314
      %1444 = vst.msk [vmem:[%s172 + $0x58] sm:$0xf] %vm1421, %v1315
      %1445 = vst.msk [vmem:[%s172 + $0x5c] sm:$0xf] %vm1421, %v1316
      %1446 = vst.msk [vmem:[%s172 + $0x60] sm:$0xf] %vm1421, %v1317
      %1447 = vst.msk [vmem:[%s172 + $0x64] sm:$0xf] %vm1421, %v1318
      %1448 = vst.msk [vmem:[%s172 + $0x68] sm:$0xf] %vm1421, %v1319
      %1449 = vst.msk [vmem:[%s172 + $0x6c] sm:$0xf] %vm1421, %v1320
      %1450 = vst.msk [vmem:[%s172 + $0x70] sm:$0xf] %vm1421, %v1321
      %1451 = vst.msk [vmem:[%s172 + $0x74] sm:$0xf] %vm1421, %v1322
      %1452 = vst.msk [vmem:[%s172 + $0x78] sm:$0xf] %vm1421, %v1323
      %1453 = vst.msk [vmem:[%s172 + $0x7c] sm:$0xf] %vm1421, %v1324
      %1454 = vst.msk [vmem:[%s172 + $0x80] sm:$0xf] %vm1421, %v1325
      %1455 = vst.msk [vmem:[%s172 + $0x84] sm:$0xf] %vm1421, %v1326
      %1456 = vst.msk [vmem:[%s172 + $0x88] sm:$0xf] %vm1421, %v1327
      %1457 = vst.msk [vmem:[%s172 + $0x8c] sm:$0xf] %vm1421, %v1328
      %1458 = vst.msk [vmem:[%s172 + $0x90] sm:$0xf] %vm1421, %v1329
      %1459 = vst.msk [vmem:[%s172 + $0x94] sm:$0xf] %vm1421, %v1330
      %1460 = vst.msk [vmem:[%s172 + $0x98] sm:$0xf] %vm1421, %v1331
      %1461 = vst.msk [vmem:[%s172 + $0x9c] sm:$0xf] %vm1421, %v1332
      %1462 = vst.msk [vmem:[%s172 + $0xa0] sm:$0xf] %vm1421, %v1333
      %1463 = vst.msk [vmem:[%s172 + $0xa4] sm:$0xf] %vm1421, %v1334
      %1464 = vst.msk [vmem:[%s172 + $0xa8] sm:$0xf] %vm1421, %v1335
      %1465 = vst.msk [vmem:[%s172 + $0xac] sm:$0xf] %vm1421, %v1336
      %1466 = vst.msk [vmem:[%s172 + $0xb0] sm:$0xf] %vm1421, %v1337
      %1467 = vst.msk [vmem:[%s172 + $0xb4] sm:$0xf] %vm1421, %v1338
      %1468 = vst.msk [vmem:[%s172 + $0xb8] sm:$0xf] %vm1421, %v1339
      %1469 = vst.msk [vmem:[%s172 + $0xbc] sm:$0xf] %vm1421, %v1340
      %1470 = vst.msk [vmem:[%s172 + $0xc0] sm:$0xf] %vm1421, %v1341
      %1471 = vst.msk [vmem:[%s172 + $0xc4] sm:$0xf] %vm1421, %v1342
      %1472 = vst.msk [vmem:[%s172 + $0xc8] sm:$0xf] %vm1421, %v1343
      %1473 = vst.msk [vmem:[%s172 + $0xcc] sm:$0xf] %vm1421, %v1344
      %1474 = vst.msk [vmem:[%s172 + $0xd0] sm:$0xf] %vm1421, %v1345
      %1475 = vst.msk [vmem:[%s172 + $0xd4] sm:$0xf] %vm1421, %v1346
      %1476 = vst.msk [vmem:[%s172 + $0xd8] sm:$0xf] %vm1421, %v1347
      %1477 = vst.msk [vmem:[%s172 + $0xdc] sm:$0xf] %vm1421, %v1348
      %1478 = vst.msk [vmem:[%s172 + $0xe0] sm:$0xf] %vm1421, %v1349
      %1479 = vst.msk [vmem:[%s172 + $0xe4] sm:$0xf] %vm1421, %v1350
      %1480 = vst.msk [vmem:[%s172 + $0xe8] sm:$0xf] %vm1421, %v1351
      %1481 = vst.msk [vmem:[%s172 + $0xec] sm:$0xf] %vm1421, %v1352
      %1482 = vst.msk [vmem:[%s172 + $0xf0] sm:$0xf] %vm1421, %v1353
      %1483 = vst.msk [vmem:[%s172 + $0xf4] sm:$0xf] %vm1421, %v1354
      %1484 = vst.msk [vmem:[%s172 + $0xf8] sm:$0xf] %vm1421, %v1355
      %1485 = vst.msk [vmem:[%s172 + $0xfc] sm:$0xf] %vm1421, %v1356
      %1486 = vst.msk [vmem:[%s172 + $0x100] sm:$0xf] %vm1421, %v1357
      %1487 = vst.msk [vmem:[%s172 + $0x104] sm:$0xf] %vm1421, %v1358
      %1488 = vst.msk [vmem:[%s172 + $0x108] sm:$0xf] %vm1421, %v1359
      %1489 = vst.msk [vmem:[%s172 + $0x10c] sm:$0xf] %vm1421, %v1360
      %1490 = vst.msk [vmem:[%s172 + $0x110] sm:$0xf] %vm1421, %v1361
      %1491 = vst.msk [vmem:[%s172 + $0x114] sm:$0xf] %vm1421, %v1362
      %1492 = vst.msk [vmem:[%s172 + $0x118] sm:$0xf] %vm1421, %v1363
      %1493 = vst.msk [vmem:[%s172 + $0x11c] sm:$0xf] %vm1421, %v1364
      %1494 = vst.msk [vmem:[%s172 + $0x120] sm:$0xf] %vm1421, %v1365
      %1495 = vst.msk [vmem:[%s172 + $0x124] sm:$0xf] %vm1421, %v1366
      %1496 = vst.msk [vmem:[%s172 + $0x128] sm:$0xf] %vm1421, %v1367
      %1497 = vst.msk [vmem:[%s172 + $0x12c] sm:$0xf] %vm1421, %v1368
      %1498 = vst.msk [vmem:[%s172 + $0x130] sm:$0xf] %vm1421, %v1369
      %1499 = vst.msk [vmem:[%s172 + $0x134] sm:$0xf] %vm1421, %v1370
      %1500 = vst.msk [vmem:[%s172 + $0x138] sm:$0xf] %vm1421, %v1371
      %1501 = vst.msk [vmem:[%s172 + $0x13c] sm:$0xf] %vm1421, %v1372
      %1502 = vst.msk [vmem:[%s172 + $0x140] sm:$0xf] %vm1421, %v1373
      %1503 = vst.msk [vmem:[%s172 + $0x144] sm:$0xf] %vm1421, %v1374
      %1504 = vst.msk [vmem:[%s172 + $0x148] sm:$0xf] %vm1421, %v1375
      %1505 = vst.msk [vmem:[%s172 + $0x14c] sm:$0xf] %vm1421, %v1376
      %1506 = vst.msk [vmem:[%s172 + $0x150] sm:$0xf] %vm1421, %v1377
      %1507 = vst.msk [vmem:[%s172 + $0x154] sm:$0xf] %vm1421, %v1378
      %1508 = vst.msk [vmem:[%s172 + $0x158] sm:$0xf] %vm1421, %v1379
      %1509 = vst.msk [vmem:[%s172 + $0x15c] sm:$0xf] %vm1421, %v1380
      %1510 = vst.msk [vmem:[%s172 + $0x160] sm:$0xf] %vm1421, %v1381
      %1511 = vst.msk [vmem:[%s172 + $0x164] sm:$0xf] %vm1421, %v1382
      %1512 = vst.msk [vmem:[%s172 + $0x168] sm:$0xf] %vm1421, %v1383
      %1513 = vst.msk [vmem:[%s172 + $0x16c] sm:$0xf] %vm1421, %v1384
      %1514 = vst.msk [vmem:[%s172 + $0x170] sm:$0xf] %vm1421, %v1385
      %1515 = vst.msk [vmem:[%s172 + $0x174] sm:$0xf] %vm1421, %v1386
      %1516 = vst.msk [vmem:[%s172 + $0x178] sm:$0xf] %vm1421, %v1387
      %1517 = vst.msk [vmem:[%s172 + $0x17c] sm:$0xf] %vm1421, %v1388
      %1518 = vst.msk [vmem:[%s172 + $0x180] sm:$0xf] %vm1421, %v1389
      %1519 = vst.msk [vmem:[%s172 + $0x184] sm:$0xf] %vm1421, %v1390
      %1520 = vst.msk [vmem:[%s172 + $0x188] sm:$0xf] %vm1421, %v1391
      %1521 = vst.msk [vmem:[%s172 + $0x18c] sm:$0xf] %vm1421, %v1392
      %1522 = vst.msk [vmem:[%s172 + $0x190] sm:$0xf] %vm1421, %v1393
      %1523 = vst.msk [vmem:[%s172 + $0x194] sm:$0xf] %vm1421, %v1394
      %1524 = vst.msk [vmem:[%s172 + $0x198] sm:$0xf] %vm1421, %v1395
      %1525 = vst.msk [vmem:[%s172 + $0x19c] sm:$0xf] %vm1421, %v1396
      %1526 = vst.msk [vmem:[%s172 + $0x1a0] sm:$0xf] %vm1421, %v1397
      %1527 = vst.msk [vmem:[%s172 + $0x1a4] sm:$0xf] %vm1421, %v1398
      %1528 = vst.msk [vmem:[%s172 + $0x1a8] sm:$0xf] %vm1421, %v1399
      %1529 = vst.msk [vmem:[%s172 + $0x1ac] sm:$0xf] %vm1421, %v1400
      %1530 = vst.msk [vmem:[%s172 + $0x1b0] sm:$0xf] %vm1421, %v1401
      %1531 = vst.msk [vmem:[%s172 + $0x1b4] sm:$0xf] %vm1421, %v1402
      %1532 = vst.msk [vmem:[%s172 + $0x1b8] sm:$0xf] %vm1421, %v1403
      %1533 = vst.msk [vmem:[%s172 + $0x1bc] sm:$0xf] %vm1421, %v1404
      %1534 = vst.msk [vmem:[%s172 + $0x1c0] sm:$0xf] %vm1421, %v1405
      %1535 = vst.msk [vmem:[%s172 + $0x1c4] sm:$0xf] %vm1421, %v1406
      %1536 = vst.msk [vmem:[%s172 + $0x1c8] sm:$0xf] %vm1421, %v1407
      %1537 = vst.msk [vmem:[%s172 + $0x1cc] sm:$0xf] %vm1421, %v1408
      %1538 = vst.msk [vmem:[%s172 + $0x1d0] sm:$0xf] %vm1421, %v1409
      %1539 = vst.msk [vmem:[%s172 + $0x1d4] sm:$0xf] %vm1421, %v1410
      %1540 = vst.msk [vmem:[%s172 + $0x1d8] sm:$0xf] %vm1421, %v1411
      %1541 = vst.msk [vmem:[%s172 + $0x1dc] sm:$0xf] %vm1421, %v1412
      %1542 = vst.msk [vmem:[%s172 + $0x1e0] sm:$0xf] %vm1421, %v1413
      %1543 = vst.msk [vmem:[%s172 + $0x1e4] sm:$0xf] %vm1421, %v1414
      %1544 = vst.msk [vmem:[%s172 + $0x1e8] sm:$0xf] %vm1421, %v1415
      %1545 = vst.msk [vmem:[%s172 + $0x1ec] sm:$0xf] %vm1421, %v1416
      %1546 = vst.msk [vmem:[%s172 + $0x1f0] sm:$0xf] %vm1421, %v1417
      %1547 = vst.msk [vmem:[%s172 + $0x1f4] sm:$0xf] %vm1421, %v1418
      %1548 = vst.msk [vmem:[%s172 + $0x1f8] sm:$0xf] %vm1421, %v1419
      %1549 = vst.msk [vmem:[%s172 + $0x1fc] sm:$0xf] %vm1421, %v1420
      %s1550 = smul.u32 128, %s14
      %p1551 = scmp.lt.s32.totalorder %s1550, 255
      %s1552 = scalar_select %p1551, %s1550, 255
      %s1553 = smul.addr %s1552, 4
      %s1554 = scalar_lea.vmem %s3, %s1553
      // Predicated region
      $region33: #{dec_txt_forward.12} parent=31 // pred_check
        %p1555 = pneg %p100
      $region34: #{dec_txt_forward.12} parent=31 // pred_check_branch
        %1557 = sbr.rel (%p1555) target = $region36
      $region35: #{dec_txt_forward.12} parent=31 // pred_region
        %s1558 = smul.u32 128, %s14
      $region36: #{dec_txt_forward.12} parent=31 // pred_fallthru
        _
    $region32: #{dec_txt_forward.12} parent=5 // pred_fallthru
      _
    %p1559 = scmp.le.s32.totalorder 2, %s9
    // Predicated region
    $region37: #{dec_txt_forward.12} parent=5 // pred_check
      %p1560 = pneg %p1559
    $region38: #{dec_txt_forward.12} parent=5 // pred_check_branch
      %1562 = sbr.rel (%p1560) target = $region40
    $region39: #{dec_txt_forward.12} parent=5 // pred_region
      %s1563 = ssub.s32 %s9, 2
      // Predicated region
      $region41: #{dec_txt_forward.12} parent=39 // pred_check
        %p1564 = pneg %p106
      $region42: #{dec_txt_forward.12} parent=39 // pred_check_branch
        %1566 = sbr.rel (%p1564) target = $region44
      $region43: #{dec_txt_forward.12} parent=39 // pred_region
        %s1567 = smul.u32 128, %s15
        %p1568 = scmp.lt.s32.totalorder %s1567, 255
        %s1569 = scalar_select %p1568, %s1567, 255
        %s1570 = smul.addr %s1569, 4
        %s1571 = scalar_lea.vmem %s3, %s1570
      $region44: #{dec_txt_forward.12} parent=39 // pred_fallthru
        _
    $region40: #{dec_txt_forward.12} parent=5 // pred_fallthru
      _
  $region6: #{dec_txt_forward.12} parent=0 // loop_footer
    %s13 = sadd.s32 1, %s9
  $region7: #{dec_txt_forward.12} parent=0 // loop_footer_branch
    %8 = sbr.rel target = $region3
  $region8: #{dec_txt_forward.12} parent=0 // loop_exit
    _

// kernel: dec_txt_forward.13
$region0: #{dec_txt_forward.13}
  #allocation0 [shape = 'u32[]', space=smem, size = 0x4, offset = 0x4, fixed_abs, tag = 'smem constant byte address 0x4 - core index']
  #allocation1 [shape = 'u32[72,128]{1,0:T(1,128)}', space=vmem, size = 0x9000, scoped, tag = 'internal scratch']
  %s0 = inlined_call_operand.vmem [shape: bf16[64,128], index: 0, kind: input, shape index: {}]
  %s1 = inlined_call_operand.vmem [shape: bf16[128,128], index: 1, kind: input, shape index: {}]
  %s2 = inlined_call_operand.vmem [shape: f32[1,128], index: 2, kind: input, shape index: {}]
  %s3 = inlined_call_operand.vmem [shape: f32[1,128], index: 3, kind: input, shape index: {}]
  %s4 = inlined_call_operand.hbm [shape: f32[64,128], index: 4, kind: output, shape index: {}]
  %s5 = sld [smem:[#allocation0]]
  $region26: #{dec_txt_forward.13} parent=0
    _
  %s7 = ssub.s32 1, %s5
  %s8 = scalar_select 0, %s7, %s5
  $region1: #{dec_txt_forward.13} parent=0
    #allocation2 [shape = 'u8[32768]{0}', space=vmem, size = 0x8000, scoped, tag = 'output window, operand 0, single buffered']
    #allocation3 [shape = 's32[1]{0}', space=sflag, size = 0x4, scoped, tag = 'scoped memory for dec_txt_forward.13']
    %9 = vsyncpa [#allocation3], 0
    // Predicated region
    $region2: #{dec_txt_forward.13} parent=1 // pred_check
      _
    $region3: #{dec_txt_forward.13} parent=1 // pred_check_branch
      %11 = sbr.rel (0) target = $region5
    $region4: #{dec_txt_forward.13} parent=1 // pred_region
      _
    $region5: #{dec_txt_forward.13} parent=1 // pred_fallthru
      _
    // Predicated region
    $region6: #{dec_txt_forward.13} parent=1 // pred_check
      _
    $region7: #{dec_txt_forward.13} parent=1 // pred_check_branch
      %13 = sbr.rel (0) target = $region9
    $region8: #{dec_txt_forward.13} parent=1 // pred_region
      _
    $region9: #{dec_txt_forward.13} parent=1 // pred_fallthru
      _
    // Predicated region
    $region10: #{dec_txt_forward.13} parent=1 // pred_check
      _
    $region11: #{dec_txt_forward.13} parent=1 // pred_check_branch
      %15 = sbr.rel (0) target = $region13
    $region12: #{dec_txt_forward.13} parent=1 // pred_region
      _
    $region13: #{dec_txt_forward.13} parent=1 // pred_fallthru
      _
    // Predicated region
    $region14: #{dec_txt_forward.13} parent=1 // pred_check
      _
    $region15: #{dec_txt_forward.13} parent=1 // pred_check_branch
      %17 = sbr.rel (0) target = $region17
    $region16: #{dec_txt_forward.13} parent=1 // pred_region
      _
    $region17: #{dec_txt_forward.13} parent=1 // pred_fallthru
      _
    %v18 = vld [vmem:[%s0] sm:$0xf]
    %v19 = vld [vmem:[%s0 + $0x4] sm:$0xf]
    %v20 = vld [vmem:[%s0 + $0x8] sm:$0xf]
    %v21 = vld [vmem:[%s0 + $0xc] sm:$0xf]
    %v22 = vld [vmem:[%s0 + $0x10] sm:$0xf]
    %v23 = vld [vmem:[%s0 + $0x14] sm:$0xf]
    %v24 = vld [vmem:[%s0 + $0x18] sm:$0xf]
    %v25 = vld [vmem:[%s0 + $0x1c] sm:$0xf]
    %v26 = vunpack.c.l.bf16 %v18
    %v27 = vunpack.c.l.bf16 %v19
    %v28 = vunpack.c.l.bf16 %v20
    %v29 = vunpack.c.l.bf16 %v21
    %v30 = vunpack.c.l.bf16 %v22
    %v31 = vunpack.c.l.bf16 %v23
    %v32 = vunpack.c.l.bf16 %v24
    %v33 = vunpack.c.l.bf16 %v25
    %v34 = vld [vmem:[%s2] sm:$0x1]
    %v36 = vperm.slane %v34, 0
    %v38 = vadd.f32 %v26, %v36
    %v39 = vadd.f32 %v27, %v36
    %v40 = vadd.f32 %v28, %v36
    %v41 = vadd.f32 %v29, %v36
    %v42 = vadd.f32 %v30, %v36
    %v43 = vadd.f32 %v31, %v36
    %v44 = vadd.f32 %v32, %v36
    %v45 = vadd.f32 %v33, %v36
    %v46 = vmax.f32 %v38, 0.0
    %v47 = vmax.f32 %v39, 0.0
    %v48 = vmax.f32 %v40, 0.0
    %v49 = vmax.f32 %v41, 0.0
    %v50 = vmax.f32 %v42, 0.0
    %v51 = vmax.f32 %v43, 0.0
    %v52 = vmax.f32 %v44, 0.0
    %v53 = vmax.f32 %v45, 0.0
    %v54 = vpack.c.bf16 %v47, %v46
    %v55 = vpack.c.bf16 %v49, %v48
    %v56 = vpack.c.bf16 %v51, %v50
    %v57 = vpack.c.bf16 %v53, %v52
    %v58 = vld [vmem:[%s1] sm:$0xf]
    %v59 = vld [vmem:[%s1 + $0x4] sm:$0xf]
    %v60 = vld [vmem:[%s1 + $0x8] sm:$0xf]
    %v61 = vld [vmem:[%s1 + $0xc] sm:$0xf]
    %v62 = vld [vmem:[%s1 + $0x10] sm:$0xf]
    %v63 = vld [vmem:[%s1 + $0x14] sm:$0xf]
    %v64 = vld [vmem:[%s1 + $0x18] sm:$0xf]
    %v65 = vld [vmem:[%s1 + $0x1c] sm:$0xf]
    %v66 = vld [vmem:[%s1 + $0x20] sm:$0xf]
    %v67 = vld [vmem:[%s1 + $0x24] sm:$0xf]
    %v68 = vld [vmem:[%s1 + $0x28] sm:$0xf]
    %v69 = vld [vmem:[%s1 + $0x2c] sm:$0xf]
    %v70 = vld [vmem:[%s1 + $0x30] sm:$0xf]
    %v71 = vld [vmem:[%s1 + $0x34] sm:$0xf]
    %v72 = vld [vmem:[%s1 + $0x38] sm:$0xf]
    %v73 = vld [vmem:[%s1 + $0x3c] sm:$0xf]
    %v74 = vld [vmem:[%s3] sm:$0x1]
    %v76 = vperm.slane %v74, 0
    %v94 = vunpack.c.l.b16 %v58
    %v95 = vunpack.c.l.b16 %v59
    %v96 = vunpack.c.l.b16 %v60
    %v97 = vunpack.c.l.b16 %v61
    %v98 = vunpack.c.l.b16 %v62
    %v99 = vunpack.c.l.b16 %v63
    %v100 = vunpack.c.l.b16 %v64
    %v101 = vunpack.c.l.b16 %v65
    %v102 = vunpack.c.l.b16 %v66
    %v103 = vunpack.c.l.b16 %v67
    %v104 = vunpack.c.l.b16 %v68
    %v105 = vunpack.c.l.b16 %v69
    %v106 = vunpack.c.l.b16 %v70
    %v107 = vunpack.c.l.b16 %v71
    %v108 = vunpack.c.l.b16 %v72
    %v109 = vunpack.c.l.b16 %v73
    %v110 = vpack.c.b16 %v95, %v94
    %v111 = vpack.c.b16 %v97, %v96
    %v112 = vpack.c.b16 %v99, %v98
    %v113 = vpack.c.b16 %v101, %v100
    %v114 = vpack.c.b16 %v103, %v102
    %v115 = vpack.c.b16 %v105, %v104
    %v116 = vpack.c.b16 %v107, %v106
    %v117 = vpack.c.b16 %v109, %v108
    %126 = vmatpush.bf16.msra.mxu0 %v117
    %127 = vmatpush.bf16.msra.mxu0 %v116
    %128 = vmatpush.bf16.msra.mxu0 %v115
    %129 = vmatpush.bf16.msra.mxu0 %v114
    %130 = vmatpush.bf16.msra.mxu0 %v113
    %131 = vmatpush.bf16.msra.mxu0 %v112
    %132 = vmatpush.bf16.msra.mxu0 %v111
    %133 = vmatpush.bf16.msra.mxu0 %v110
    %134 = vmatmul.bf16.gmra.mxu0 %v54
    %v135 = vpop.f32.mrf.mxu0
    %v136 = vadd.f32 %v76, %v135
    %v137 = vpop.f32.mrf.mxu0
    %v138 = vadd.f32 %v76, %v137
    %139 = vmatmul.bf16.gmra.mxu0 %v55
    %v140 = vpop.f32.mrf.mxu0
    %v141 = vadd.f32 %v76, %v140
    %v142 = vpop.f32.mrf.mxu0
    %v143 = vadd.f32 %v76, %v142
    %144 = vmatmul.bf16.gmra.mxu0 %v56
    %v145 = vpop.f32.mrf.mxu0
    %v146 = vadd.f32 %v76, %v145
    %v147 = vpop.f32.mrf.mxu0
    %v148 = vadd.f32 %v76, %v147
    %149 = vmatmul.bf16.gmra.mxu0 %v57
    %v150 = vpop.f32.mrf.mxu0
    %v151 = vadd.f32 %v76, %v150
    %v152 = vpop.f32.mrf.mxu0
    %v153 = vadd.f32 %v76, %v152
    %154 = vdwg.mxu0
    %v155 = vand.u32 2147483647, %v136
    %v156 = vand.u32 2147483647, %v138
    %v157 = vand.u32 2147483647, %v141
    %v158 = vand.u32 2147483647, %v143
    %v159 = vand.u32 2147483647, %v146
    %v160 = vand.u32 2147483647, %v148
    %v161 = vand.u32 2147483647, %v151
    %v162 = vand.u32 2147483647, %v153
    %v163 = vsub.f32 0.0, %v155
    %v164 = vsub.f32 0.0, %v156
    %v165 = vsub.f32 0.0, %v157
    %v166 = vsub.f32 0.0, %v158
    %v167 = vsub.f32 0.0, %v159
    %v168 = vsub.f32 0.0, %v160
    %v169 = vsub.f32 0.0, %v161
    %v170 = vsub.f32 0.0, %v162
    %v171 = vmul.f32 %v163, 1.442695
    %v172 = vpow.pop %v171
    %v173 = vmul.f32 %v164, 1.442695
    %v174 = vpow.pop %v173
    %v175 = vmul.f32 %v165, 1.442695
    %v176 = vpow.pop %v175
    %v177 = vmul.f32 %v166, 1.442695
    %v178 = vpow.pop %v177
    %v179 = vmul.f32 %v167, 1.442695
    %v180 = vpow.pop %v179
    %v181 = vmul.f32 %v168, 1.442695
    %v182 = vpow.pop %v181
    %v183 = vmul.f32 %v169, 1.442695
    %v184 = vpow.pop %v183
    %v185 = vmul.f32 %v170, 1.442695
    %v186 = vpow.pop %v185
    %vm187 = vcmp.ge.f32.partialorder %v136, 0.0
    %vm188 = vcmp.ge.f32.partialorder %v138, 0.0
    %vm189 = vcmp.ge.f32.partialorder %v141, 0.0
    %vm190 = vcmp.ge.f32.partialorder %v143, 0.0
    %vm191 = vcmp.ge.f32.partialorder %v146, 0.0
    %vm192 = vcmp.ge.f32.partialorder %v148, 0.0
    %vm193 = vcmp.ge.f32.partialorder %v151, 0.0
    %vm194 = vcmp.ge.f32.partialorder %v153, 0.0
    %v195 = vsel %vm187, 1.0, %v172
    %v196 = vsel %vm188, 1.0, %v174
    %v197 = vsel %vm189, 1.0, %v176
    %v198 = vsel %vm190, 1.0, %v178
    %v199 = vsel %vm191, 1.0, %v180
    %v200 = vsel %vm192, 1.0, %v182
    %v201 = vsel %vm193, 1.0, %v184
    %v202 = vsel %vm194, 1.0, %v186
    %v203 = vadd.f32 %v172, 1.0
    %v204 = vadd.f32 %v174, 1.0
    %v205 = vadd.f32 %v176, 1.0
    %v206 = vadd.f32 %v178, 1.0
    %v207 = vadd.f32 %v180, 1.0
    %v208 = vadd.f32 %v182, 1.0
    %v209 = vadd.f32 %v184, 1.0
    %v210 = vadd.f32 %v186, 1.0
    %v211 = vrcp.pop %v203
    %v212 = vrcp.pop %v204
    %v213 = vrcp.pop %v205
    %v214 = vrcp.pop %v206
    %v215 = vrcp.pop %v207
    %v216 = vrcp.pop %v208
    %v217 = vrcp.pop %v209
    %v218 = vrcp.pop %v210
    %v219 = vmul.f32 %v195, %v211
    %v220 = vmul.f32 %v196, %v212
    %v221 = vmul.f32 %v197, %v213
    %v222 = vmul.f32 %v198, %v214
    %v223 = vmul.f32 %v199, %v215
    %v224 = vmul.f32 %v200, %v216
    %v225 = vmul.f32 %v201, %v217
    %v226 = vmul.f32 %v202, %v218
    %v227 = vmin.f32 %v219, 1.0
    %v228 = vmin.f32 %v220, 1.0
    %v229 = vmin.f32 %v221, 1.0
    %v230 = vmin.f32 %v222, 1.0
    %v231 = vmin.f32 %v223, 1.0
    %v232 = vmin.f32 %v224, 1.0
    %v233 = vmin.f32 %v225, 1.0
    %v234 = vmin.f32 %v226, 1.0
    %235 = vst [vmem:[#allocation2] sm:$0xff] %v227
    %236 = vst [vmem:[#allocation2 + $0x8] sm:$0xff] %v228
    %237 = vst [vmem:[#allocation2 + $0x10] sm:$0xff] %v229
    %238 = vst [vmem:[#allocation2 + $0x18] sm:$0xff] %v230
    %239 = vst [vmem:[#allocation2 + $0x20] sm:$0xff] %v231
    %240 = vst [vmem:[#allocation2 + $0x28] sm:$0xff] %v232
    %241 = vst [vmem:[#allocation2 + $0x30] sm:$0xff] %v233
    %242 = vst [vmem:[#allocation2 + $0x38] sm:$0xff] %v234
    // Predicated region
    $region18: #{dec_txt_forward.13} parent=1 // pred_check
      _
    $region19: #{dec_txt_forward.13} parent=1 // pred_check_branch
      %244 = sbr.rel (0) target = $region21
    $region20: #{dec_txt_forward.13} parent=1 // pred_region
      %246 = vsyncadd [#allocation3], 0
      %s247 = sshll.u32 [#allocation2], 4
      %s248 = int_to_ptr.vmem [resolvable:$true] %s247
      %s249 = sshll.u32 %s4, 4
      %s250 = int_to_ptr.hbm [resolvable:$true] %s249
      %255 = dma.vmem_to_hbm [thread:$0]  %s248, 1024, %s250, [#allocation3], 128, 128, 8
    $region21: #{dec_txt_forward.13} parent=1 // pred_fallthru
      _
    // Predicated region
    $region22: #{dec_txt_forward.13} parent=1 // pred_check
      _
    $region23: #{dec_txt_forward.13} parent=1 // pred_check_branch
      %257 = sbr.rel (0) target = $region25
    $region24: #{dec_txt_forward.13} parent=1 // pred_region
      %259 = dma.done [#allocation3], 1024
    $region25: #{dec_txt_forward.13} parent=1 // pred_fallthru
      _
    %260 = vsyncpa [#allocation3], 1

</llo_original>
